<compile_context>
chip_gen: v7x
topology: tpu7x:2x2x1
jax: 0.10.0
libtpu: 0.0.40
codegen_flags: <defaults>
</compile_context>

<pallas_src>
import math
import jax
import jax.numpy as jnp
from jax.experimental import pallas as pl
from jax.experimental.pallas import tpu as pltpu

# ---- model configuration (small, consistent with the module) ----------------
B = 2             # batch
K_ENC = 4         # summary length K
TGT_LEN = 8       # tgt_len
D_MODEL = 32
N_HEADS = 4
D_KV = 64         # T5Config default d_kv (NOT d_model // n_heads)
D_HEAD_PAD = 128  # per-head columns padded to a full vreg lane width
INNER_PAD = N_HEADS * D_HEAD_PAD        # 512
D_FF = D_MODEL * 4
N_LAYERS = 2
OUT_DIM = 6       # in_dim_numeric
OUT_PAD = 128     # lane-dense padded head output
NUM_BUCKETS = 32
MAX_DISTANCE = 128
LN_EPS = 1e-6
NEG_INF = float(jnp.finfo(jnp.float32).min)


# ---- fused Pallas kernel (one grid step = one batch element) ----------------
def _decoder_kernel(summary_ref, self_bias_ref,
                    ln_self_ref, w_qkv_ref, w_o_self_ref,
                    ln_cross_ref, w_q_cross_ref, w_kv_cross_ref, w_o_cross_ref,
                    ln_ff_ref, wi_ref, wo_ref,
                    ln_final_ref, w_out_ref, b_out_ref,
                    out_ref):
    f32 = jnp.float32
    T = TGT_LEN

    def rms(x, g):
        # T5LayerNorm: RMS norm, no mean subtraction, no bias.
        var = jnp.mean(x * x, axis=-1, keepdims=True)
        return x * jax.lax.rsqrt(var + LN_EPS) * g

    def softmax_rows(s):
        s = s - jnp.max(s, axis=-1, keepdims=True)
        p = jnp.exp(s)
        return p / jnp.sum(p, axis=-1, keepdims=True)

    def qk(q, k):
        # (T, Dh) x (S, Dh) -> (T, S); contraction on last dims, no explicit .T
        return jax.lax.dot_general(q, k, (((1,), (1,)), ((), ())),
                                   preferred_element_type=f32)

    summary_b = summary_ref[0]                    # (K, D)
    hidden = jnp.zeros((T, D_MODEL), f32)         # dec_in = zeros

    for l in range(N_LAYERS):
        # --- T5LayerSelfAttention (no 1/sqrt(d) scaling) -------------------
        n = rms(hidden, ln_self_ref[l])                              # (T, D)
        qkv = jnp.dot(n, w_qkv_ref[l], preferred_element_type=f32)   # (T, 3*IP)

        scores = []
        for h in range(N_HEADS):
            c = h * D_HEAD_PAD
            q_h = qkv[:, c:c + D_HEAD_PAD]
            k_h = qkv[:, INNER_PAD + c:INNER_PAD + c + D_HEAD_PAD]
            scores.append(qk(q_h, k_h) + self_bias_ref[h])           # (T, T)
        probs = softmax_rows(jnp.concatenate(scores, axis=0))        # (H*T, T)

        ctx = []
        for h in range(N_HEADS):
            c = h * D_HEAD_PAD
            v_h = qkv[:, 2 * INNER_PAD + c:2 * INNER_PAD + c + D_HEAD_PAD]
            p_h = probs[h * T:(h + 1) * T, :]
            ctx.append(jnp.dot(p_h, v_h, preferred_element_type=f32))
        ctx = jnp.concatenate(ctx, axis=1)                           # (T, IP)
        hidden = hidden + jnp.dot(ctx, w_o_self_ref[l],
                                  preferred_element_type=f32)

        # --- T5LayerCrossAttention (all-ones encoder mask -> no bias) ------
        n = rms(hidden, ln_cross_ref[l])
        q_all = jnp.dot(n, w_q_cross_ref[l],
                        preferred_element_type=f32)                  # (T, IP)
        kv = jnp.dot(summary_b, w_kv_cross_ref[l],
                     preferred_element_type=f32)                     # (K, 2*IP)

        scores = []
        for h in range(N_HEADS):
            c = h * D_HEAD_PAD
            scores.append(qk(q_all[:, c:c + D_HEAD_PAD],
                             kv[:, c:c + D_HEAD_PAD]))               # (T, K)
        probs = softmax_rows(jnp.concatenate(scores, axis=0))        # (H*T, K)

        ctx = []
        for h in range(N_HEADS):
            c = h * D_HEAD_PAD
            v_h = kv[:, INNER_PAD + c:INNER_PAD + c + D_HEAD_PAD]
            p_h = probs[h * T:(h + 1) * T, :]
            ctx.append(jnp.dot(p_h, v_h, preferred_element_type=f32))
        ctx = jnp.concatenate(ctx, axis=1)
        hidden = hidden + jnp.dot(ctx, w_o_cross_ref[l],
                                  preferred_element_type=f32)

        # --- T5LayerFF (ReLU MLP, T5 default feed_forward_proj="relu") -----
        n = rms(hidden, ln_ff_ref[l])
        mid = jnp.maximum(jnp.dot(n, wi_ref[l],
                                  preferred_element_type=f32), 0.0)
        hidden = hidden + jnp.dot(mid, wo_ref[l],
                                  preferred_element_type=f32)

    # final RMSNorm + padded linear head (single lane-dense store)
    hidden = rms(hidden, ln_final_ref[...])
    out_ref[...] = (jnp.dot(hidden, w_out_ref[...],
                            preferred_element_type=f32) + b_out_ref[...])


def _run_decoder(summary, self_bias, p):
    def full(a):
        return pl.BlockSpec(a.shape, lambda *_: (0,) * a.ndim)

    in_specs = [
        pl.BlockSpec((1, K_ENC, D_MODEL), lambda b: (b, 0, 0)),   # summary
        full(self_bias),
        full(p["ln_self"]), full(p["w_qkv_self"]), full(p["w_o_self"]),
        full(p["ln_cross"]), full(p["w_q_cross"]), full(p["w_kv_cross"]),
        full(p["w_o_cross"]),
        full(p["ln_ff"]), full(p["wi"]), full(p["wo"]),
        full(p["ln_final"]), full(p["w_out"]), full(p["b_out"]),
    ]
    return pl.pallas_call(
        _decoder_kernel,
        out_shape=jax.ShapeDtypeStruct((B * TGT_LEN, OUT_PAD), jnp.float32),
        grid=(B,),
        in_specs=in_specs,
        out_specs=pl.BlockSpec((TGT_LEN, OUT_PAD), lambda b: (b, 0)),
        compiler_params=pltpu.CompilerParams(
            dimension_semantics=("parallel",),
            vmem_limit_bytes=8 * 1024 * 1024),
    )(summary, self_bias,
      p["ln_self"], p["w_qkv_self"], p["w_o_self"],
      p["ln_cross"], p["w_q_cross"], p["w_kv_cross"], p["w_o_cross"],
      p["ln_ff"], p["wi"], p["wo"],
      p["ln_final"], p["w_out"], p["b_out"])


# ---- host-side glue (bias table, lane-aligned weight packing) ---------------
def _relative_position_bucket(rel_pos):
    # decoder: bidirectional = False
    rel_pos = -jnp.minimum(rel_pos, 0)
    max_exact = NUM_BUCKETS // 2
    is_small = rel_pos < max_exact
    rp = jnp.maximum(rel_pos, 1).astype(jnp.float32)
    large = max_exact + (jnp.log(rp / max_exact)
                         / math.log(MAX_DISTANCE / max_exact)
                         * (NUM_BUCKETS - max_exact)).astype(jnp.int32)
    large = jnp.minimum(large, NUM_BUCKETS - 1)
    return jnp.where(is_small, rel_pos, large)


def _self_attention_bias(rel_emb, t):
    """rel_emb: (NUM_BUCKETS, H) -> (H, t, t) = rel-pos bias + causal mask."""
    ctx = jnp.arange(t)[:, None]
    mem = jnp.arange(t)[None, :]
    buckets = _relative_position_bucket(mem - ctx)                # (t, t)
    pos_bias = jnp.transpose(rel_emb[buckets], (2, 0, 1))         # (H, t, t)
    mask_add = jnp.where(mem <= ctx, 0.0, NEG_INF)                # causal
    return pos_bias + mask_add[None]


def _pad_head_cols(w):
    """(D_MODEL, H*D_KV) -> (D_MODEL, H*128): zero-pad each head to 128 lanes."""
    w = w.reshape(D_MODEL, N_HEADS, D_KV)
    w = jnp.pad(w, ((0, 0), (0, 0), (0, D_HEAD_PAD - D_KV)))
    return w.reshape(D_MODEL, INNER_PAD)


def _pad_head_rows(w):
    """(H*D_KV, D_MODEL) -> (H*128, D_MODEL): zero rows at padded positions."""
    w = w.reshape(N_HEADS, D_KV, D_MODEL)
    w = jnp.pad(w, ((0, 0), (0, D_HEAD_PAD - D_KV), (0, 0)))
    return w.reshape(INNER_PAD, D_MODEL)


def _pack_params(params):
    layers = params["layers"]
    stack = lambda f: jnp.stack([f(lp) for lp in layers])
    return {
        "ln_self": stack(lambda lp: lp["ln_self"].reshape(1, D_MODEL)),
        "w_qkv_self": stack(lambda lp: jnp.concatenate(
            [_pad_head_cols(lp["self"]["q"]),
             _pad_head_cols(lp["self"]["k"]),
             _pad_head_cols(lp["self"]["v"])], axis=1)),
        "w_o_self": stack(lambda lp: _pad_head_rows(lp["self"]["o"])),
        "ln_cross": stack(lambda lp: lp["ln_cross"].reshape(1, D_MODEL)),
        "w_q_cross": stack(lambda lp: _pad_head_cols(lp["cross"]["q"])),
        "w_kv_cross": stack(lambda lp: jnp.concatenate(
            [_pad_head_cols(lp["cross"]["k"]),
             _pad_head_cols(lp["cross"]["v"])], axis=1)),
        "w_o_cross": stack(lambda lp: _pad_head_rows(lp["cross"]["o"])),
        "ln_ff": stack(lambda lp: lp["ln_ff"].reshape(1, D_MODEL)),
        "wi": stack(lambda lp: lp["wi"]),
        "wo": stack(lambda lp: lp["wo"]),
        "ln_final": params["ln_final"].reshape(1, D_MODEL),
        "w_out": jnp.zeros((D_MODEL, OUT_PAD), jnp.float32)
                   .at[:, :OUT_DIM].set(params["w_out"]),
        "b_out": jnp.zeros((1, OUT_PAD), jnp.float32)
                   .at[0, :OUT_DIM].set(params["b_out"]),
    }


@jax.jit
def _forward_jit(params, summary):
    packed = _pack_params(params)
    self_bias = _self_attention_bias(params["rel_bias"], TGT_LEN)  # (H, T, T)
    out_pad = _run_decoder(summary, self_bias, packed)             # (B*T, 128)
    return out_pad[:, :OUT_DIM].reshape(B, TGT_LEN, OUT_DIM)


def eye_decoder_t5_forward(params, summary, tgt_len):
    assert tgt_len == TGT_LEN and summary.shape == (B, K_ENC, D_MODEL)
    return _forward_jit(params, summary)


def init_params(key):
    keys = iter(jax.random.split(key, 128))

    def nrm(shape, scale=0.05):
        return scale * jax.random.normal(next(keys), shape, jnp.float32)

    def attn_params():
        return {"q": nrm((D_MODEL, N_HEADS * D_KV)),
                "k": nrm((D_MODEL, N_HEADS * D_KV)),
                "v": nrm((D_MODEL, N_HEADS * D_KV)),
                "o": nrm((N_HEADS * D_KV, D_MODEL))}

    layers = []
    for _ in range(N_LAYERS):
        layers.append({
            "ln_self": 1.0 + nrm((D_MODEL,), 0.1),
            "self": attn_params(),
            "ln_cross": 1.0 + nrm((D_MODEL,), 0.1),
            "cross": attn_params(),
            "ln_ff": 1.0 + nrm((D_MODEL,), 0.1),
            "wi": nrm((D_MODEL, D_FF)),
            "wo": nrm((D_FF, D_MODEL)),
        })
    return {
        "layers": layers,
        "rel_bias": nrm((NUM_BUCKETS, N_HEADS), 0.1),   # layer-0 relative bias
        "ln_final": 1.0 + nrm((D_MODEL,), 0.1),
        "w_out": nrm((D_MODEL, OUT_DIM)),
        "b_out": nrm((OUT_DIM,)),
    }


if __name__ == "__main__":
    key = jax.random.PRNGKey(0)
    pkey, xkey = jax.random.split(key)
    params = init_params(pkey)
    summary = jax.random.normal(xkey, (B, K_ENC, D_MODEL), jnp.float32)

    out = eye_decoder_t5_forward(params, summary, TGT_LEN)
    out = jax.block_until_ready(out)

    assert out.shape == (B, TGT_LEN, OUT_DIM), out.shape
    assert bool(jnp.all(jnp.isfinite(out)))
    print("KERNEL_OK")
</pallas_src>

<mosaic_0001>
module attributes {stable_mosaic.version = 11 : i64} {
  func.func @_decoder_kernel(%arg0: i32, %arg1: memref<1x4x32xf32, #tpu.memory_space<vmem>>, %arg2: memref<4x8x8xf32, #tpu.memory_space<vmem>>, %arg3: memref<2x1x32xf32, #tpu.memory_space<vmem>>, %arg4: memref<2x32x1536xf32, #tpu.memory_space<vmem>>, %arg5: memref<2x512x32xf32, #tpu.memory_space<vmem>>, %arg6: memref<2x1x32xf32, #tpu.memory_space<vmem>>, %arg7: memref<2x32x512xf32, #tpu.memory_space<vmem>>, %arg8: memref<2x32x1024xf32, #tpu.memory_space<vmem>>, %arg9: memref<2x512x32xf32, #tpu.memory_space<vmem>>, %arg10: memref<2x1x32xf32, #tpu.memory_space<vmem>>, %arg11: memref<2x32x128xf32, #tpu.memory_space<vmem>>, %arg12: memref<2x128x32xf32, #tpu.memory_space<vmem>>, %arg13: memref<1x32xf32, #tpu.memory_space<vmem>>, %arg14: memref<32x128xf32, #tpu.memory_space<vmem>>, %arg15: memref<1x128xf32, #tpu.memory_space<vmem>>, %arg16: memref<8x128xf32, #tpu.memory_space<vmem>>) attributes {dimension_semantics = [#tpu.dimension_semantics<parallel>], iteration_bounds = array<i64: 2>, scalar_prefetch = 0 : i64, scratch_operands = 0 : i64, tpu.core_type = #tpu.core_type<tc>, window_params = [{transform_indices = @transform_0, window_bounds = array<i64: 1, 4, 32>}, {pipeline_mode = #tpu.pipeline_mode<synchronous>, transform_indices = @transform_1, window_bounds = array<i64: 4, 8, 8>}, {pipeline_mode = #tpu.pipeline_mode<synchronous>, transform_indices = @transform_2, window_bounds = array<i64: 2, 1, 32>}, {pipeline_mode = #tpu.pipeline_mode<synchronous>, transform_indices = @transform_3, window_bounds = array<i64: 2, 32, 1536>}, {pipeline_mode = #tpu.pipeline_mode<synchronous>, transform_indices = @transform_4, window_bounds = array<i64: 2, 512, 32>}, {pipeline_mode = #tpu.pipeline_mode<synchronous>, transform_indices = @transform_5, window_bounds = array<i64: 2, 1, 32>}, {pipeline_mode = #tpu.pipeline_mode<synchronous>, transform_indices = @transform_6, window_bounds = array<i64: 2, 32, 512>}, {pipeline_mode = #tpu.pipeline_mode<synchronous>, transform_indices = @transform_7, window_bounds = array<i64: 2, 32, 1024>}, {pipeline_mode = #tpu.pipeline_mode<synchronous>, transform_indices = @transform_8, window_bounds = array<i64: 2, 512, 32>}, {pipeline_mode = #tpu.pipeline_mode<synchronous>, transform_indices = @transform_9, window_bounds = array<i64: 2, 1, 32>}, {pipeline_mode = #tpu.pipeline_mode<synchronous>, transform_indices = @transform_10, window_bounds = array<i64: 2, 32, 128>}, {pipeline_mode = #tpu.pipeline_mode<synchronous>, transform_indices = @transform_11, window_bounds = array<i64: 2, 128, 32>}, {pipeline_mode = #tpu.pipeline_mode<synchronous>, transform_indices = @transform_12, window_bounds = array<i64: 1, 32>}, {pipeline_mode = #tpu.pipeline_mode<synchronous>, transform_indices = @transform_13, window_bounds = array<i64: 32, 128>}, {pipeline_mode = #tpu.pipeline_mode<synchronous>, transform_indices = @transform_14, window_bounds = array<i64: 1, 128>}, {transform_indices = @transform_15, window_bounds = array<i64: 8, 128>}]} {
    %c0 = arith.constant 0 : index
    %c0_0 = arith.constant 0 : index
    %c0_1 = arith.constant 0 : index
    %0 = vector.load %arg1[%c0, %c0_0, %c0_1] : memref<1x4x32xf32, #tpu.memory_space<vmem>>, vector<1x4x32xf32>
    %1 = vector.shape_cast %0 : vector<1x4x32xf32> to vector<4x32xf32>
    %cst = arith.constant 0.000000e+00 : f32
    %2 = vector.broadcast %cst : f32 to vector<8x32xf32>
    %c0_2 = arith.constant 0 : index
    %c0_3 = arith.constant 0 : index
    %c0_4 = arith.constant 0 : index
    %3 = vector.load %arg3[%c0_2, %c0_3, %c0_4] : memref<2x1x32xf32, #tpu.memory_space<vmem>>, vector<1x1x32xf32>
    %4 = vector.shape_cast %3 : vector<1x1x32xf32> to vector<1x32xf32>
    %5 = arith.mulf %2, %2 : vector<8x32xf32>
    %cst_5 = arith.constant dense<0.000000e+00> : vector<8xf32>
    %6 = vector.multi_reduction <add>, %5, %cst_5 [1] : vector<8x32xf32> to vector<8xf32>
    %7 = vector.shape_cast %6 : vector<8xf32> to vector<8x1xf32>
    %cst_6 = arith.constant 3.200000e+01 : f32
    %8 = vector.broadcast %cst_6 : f32 to vector<8x1xf32>
    %9 = arith.divf %7, %8 : vector<8x1xf32>
    %cst_7 = arith.constant 9.99999997E-7 : f32
    %10 = vector.broadcast %cst_7 : f32 to vector<8x1xf32>
    %11 = arith.addf %9, %10 : vector<8x1xf32>
    %12 = math.rsqrt %11 : vector<8x1xf32>
    %13 = vector.broadcast %12 : vector<8x1xf32> to vector<8x32xf32>
    %14 = arith.mulf %2, %13 : vector<8x32xf32>
    %15 = vector.broadcast %4 : vector<1x32xf32> to vector<8x32xf32>
    %16 = arith.mulf %14, %15 : vector<8x32xf32>
    %c0_8 = arith.constant 0 : index
    %c0_9 = arith.constant 0 : index
    %c0_10 = arith.constant 0 : index
    %17 = vector.load %arg4[%c0_8, %c0_9, %c0_10] : memref<2x32x1536xf32, #tpu.memory_space<vmem>>, vector<1x32x1536xf32>
    %18 = vector.shape_cast %17 : vector<1x32x1536xf32> to vector<32x1536xf32>
    %cst_11 = arith.constant dense<0.000000e+00> : vector<8x1536xf32>
    %19 = tpu.matmul %16, %18, %cst_11 {dimension_numbers = #tpu.dot_dimension_numbers<[1], [0], [0], [1], [0, 0, 1, 1], [], []>} : vector<8x32xf32>, vector<32x1536xf32>, vector<8x1536xf32> -> vector<8x1536xf32>
    %20 = vector.extract_strided_slice %19 {offsets = [0, 0], sizes = [8, 128], strides = [1, 1]} : vector<8x1536xf32> to vector<8x128xf32>
    %21 = vector.extract_strided_slice %19 {offsets = [0, 512], sizes = [8, 128], strides = [1, 1]} : vector<8x1536xf32> to vector<8x128xf32>
    %cst_12 = arith.constant dense<0.000000e+00> : vector<8x8xf32>
    %22 = tpu.matmul %20, %21, %cst_12 {dimension_numbers = #tpu.dot_dimension_numbers<[1], [1], [0], [0], [0, 0, 1, 0], [], []>} : vector<8x128xf32>, vector<8x128xf32>, vector<8x8xf32> -> vector<8x8xf32>
    %c0_13 = arith.constant 0 : index
    %c0_14 = arith.constant 0 : index
    %c0_15 = arith.constant 0 : index
    %23 = vector.load %arg2[%c0_13, %c0_14, %c0_15] : memref<4x8x8xf32, #tpu.memory_space<vmem>>, vector<1x8x8xf32>
    %24 = vector.shape_cast %23 : vector<1x8x8xf32> to vector<8x8xf32>
    %25 = arith.addf %22, %24 : vector<8x8xf32>
    %26 = vector.extract_strided_slice %19 {offsets = [0, 128], sizes = [8, 128], strides = [1, 1]} : vector<8x1536xf32> to vector<8x128xf32>
    %27 = vector.extract_strided_slice %19 {offsets = [0, 640], sizes = [8, 128], strides = [1, 1]} : vector<8x1536xf32> to vector<8x128xf32>
    %cst_16 = arith.constant dense<0.000000e+00> : vector<8x8xf32>
    %28 = tpu.matmul %26, %27, %cst_16 {dimension_numbers = #tpu.dot_dimension_numbers<[1], [1], [0], [0], [0, 0, 1, 0], [], []>} : vector<8x128xf32>, vector<8x128xf32>, vector<8x8xf32> -> vector<8x8xf32>
    %c1 = arith.constant 1 : index
    %c0_17 = arith.constant 0 : index
    %c0_18 = arith.constant 0 : index
    %29 = vector.load %arg2[%c1, %c0_17, %c0_18] : memref<4x8x8xf32, #tpu.memory_space<vmem>>, vector<1x8x8xf32>
    %30 = vector.shape_cast %29 : vector<1x8x8xf32> to vector<8x8xf32>
    %31 = arith.addf %28, %30 : vector<8x8xf32>
    %32 = vector.extract_strided_slice %19 {offsets = [0, 256], sizes = [8, 128], strides = [1, 1]} : vector<8x1536xf32> to vector<8x128xf32>
    %33 = vector.extract_strided_slice %19 {offsets = [0, 768], sizes = [8, 128], strides = [1, 1]} : vector<8x1536xf32> to vector<8x128xf32>
    %cst_19 = arith.constant dense<0.000000e+00> : vector<8x8xf32>
    %34 = tpu.matmul %32, %33, %cst_19 {dimension_numbers = #tpu.dot_dimension_numbers<[1], [1], [0], [0], [0, 0, 1, 0], [], []>} : vector<8x128xf32>, vector<8x128xf32>, vector<8x8xf32> -> vector<8x8xf32>
    %c2 = arith.constant 2 : index
    %c0_20 = arith.constant 0 : index
    %c0_21 = arith.constant 0 : index
    %35 = vector.load %arg2[%c2, %c0_20, %c0_21] : memref<4x8x8xf32, #tpu.memory_space<vmem>>, vector<1x8x8xf32>
    %36 = vector.shape_cast %35 : vector<1x8x8xf32> to vector<8x8xf32>
    %37 = arith.addf %34, %36 : vector<8x8xf32>
    %38 = vector.extract_strided_slice %19 {offsets = [0, 384], sizes = [8, 128], strides = [1, 1]} : vector<8x1536xf32> to vector<8x128xf32>
    %39 = vector.extract_strided_slice %19 {offsets = [0, 896], sizes = [8, 128], strides = [1, 1]} : vector<8x1536xf32> to vector<8x128xf32>
    %cst_22 = arith.constant dense<0.000000e+00> : vector<8x8xf32>
    %40 = tpu.matmul %38, %39, %cst_22 {dimension_numbers = #tpu.dot_dimension_numbers<[1], [1], [0], [0], [0, 0, 1, 0], [], []>} : vector<8x128xf32>, vector<8x128xf32>, vector<8x8xf32> -> vector<8x8xf32>
    %c3 = arith.constant 3 : index
    %c0_23 = arith.constant 0 : index
    %c0_24 = arith.constant 0 : index
    %41 = vector.load %arg2[%c3, %c0_23, %c0_24] : memref<4x8x8xf32, #tpu.memory_space<vmem>>, vector<1x8x8xf32>
    %42 = vector.shape_cast %41 : vector<1x8x8xf32> to vector<8x8xf32>
    %43 = arith.addf %40, %42 : vector<8x8xf32>
    %44 = tpu.concatenate %25, %31, %37, %43 in 0 : vector<8x8xf32>, vector<8x8xf32>, vector<8x8xf32>, vector<8x8xf32> -> vector<32x8xf32>
    %cst_25 = arith.constant dense<0xFF800000> : vector<32xf32>
    %45 = vector.multi_reduction <maximumf>, %44, %cst_25 [1] : vector<32x8xf32> to vector<32xf32>
    %46 = vector.shape_cast %45 : vector<32xf32> to vector<32x1xf32>
    %47 = vector.broadcast %46 : vector<32x1xf32> to vector<32x8xf32>
    %48 = arith.subf %44, %47 : vector<32x8xf32>
    %49 = math.exp %48 : vector<32x8xf32>
    %cst_26 = arith.constant dense<0.000000e+00> : vector<32xf32>
    %50 = vector.multi_reduction <add>, %49, %cst_26 [1] : vector<32x8xf32> to vector<32xf32>
    %51 = vector.shape_cast %50 : vector<32xf32> to vector<32x1xf32>
    %52 = vector.broadcast %51 : vector<32x1xf32> to vector<32x8xf32>
    %53 = arith.divf %49, %52 : vector<32x8xf32>
    %54 = vector.extract_strided_slice %19 {offsets = [0, 1024], sizes = [8, 128], strides = [1, 1]} : vector<8x1536xf32> to vector<8x128xf32>
    %55 = vector.extract_strided_slice %53 {offsets = [0, 0], sizes = [8, 8], strides = [1, 1]} : vector<32x8xf32> to vector<8x8xf32>
    %cst_27 = arith.constant dense<0.000000e+00> : vector<8x128xf32>
    %56 = tpu.matmul %55, %54, %cst_27 {dimension_numbers = #tpu.dot_dimension_numbers<[1], [0], [0], [1], [0, 0, 1, 1], [], []>} : vector<8x8xf32>, vector<8x128xf32>, vector<8x128xf32> -> vector<8x128xf32>
    %57 = vector.extract_strided_slice %19 {offsets = [0, 1152], sizes = [8, 128], strides = [1, 1]} : vector<8x1536xf32> to vector<8x128xf32>
    %58 = vector.extract_strided_slice %53 {offsets = [8, 0], sizes = [8, 8], strides = [1, 1]} : vector<32x8xf32> to vector<8x8xf32>
    %cst_28 = arith.constant dense<0.000000e+00> : vector<8x128xf32>
    %59 = tpu.matmul %58, %57, %cst_28 {dimension_numbers = #tpu.dot_dimension_numbers<[1], [0], [0], [1], [0, 0, 1, 1], [], []>} : vector<8x8xf32>, vector<8x128xf32>, vector<8x128xf32> -> vector<8x128xf32>
    %60 = vector.extract_strided_slice %19 {offsets = [0, 1280], sizes = [8, 128], strides = [1, 1]} : vector<8x1536xf32> to vector<8x128xf32>
    %61 = vector.extract_strided_slice %53 {offsets = [16, 0], sizes = [8, 8], strides = [1, 1]} : vector<32x8xf32> to vector<8x8xf32>
    %cst_29 = arith.constant dense<0.000000e+00> : vector<8x128xf32>
    %62 = tpu.matmul %61, %60, %cst_29 {dimension_numbers = #tpu.dot_dimension_numbers<[1], [0], [0], [1], [0, 0, 1, 1], [], []>} : vector<8x8xf32>, vector<8x128xf32>, vector<8x128xf32> -> vector<8x128xf32>
    %63 = vector.extract_strided_slice %19 {offsets = [0, 1408], sizes = [8, 128], strides = [1, 1]} : vector<8x1536xf32> to vector<8x128xf32>
    %64 = vector.extract_strided_slice %53 {offsets = [24, 0], sizes = [8, 8], strides = [1, 1]} : vector<32x8xf32> to vector<8x8xf32>
    %cst_30 = arith.constant dense<0.000000e+00> : vector<8x128xf32>
    %65 = tpu.matmul %64, %63, %cst_30 {dimension_numbers = #tpu.dot_dimension_numbers<[1], [0], [0], [1], [0, 0, 1, 1], [], []>} : vector<8x8xf32>, vector<8x128xf32>, vector<8x128xf32> -> vector<8x128xf32>
    %66 = tpu.concatenate %56, %59, %62, %65 in 1 : vector<8x128xf32>, vector<8x128xf32>, vector<8x128xf32>, vector<8x128xf32> -> vector<8x512xf32>
    %c0_31 = arith.constant 0 : index
    %c0_32 = arith.constant 0 : index
    %c0_33 = arith.constant 0 : index
    %67 = vector.load %arg5[%c0_31, %c0_32, %c0_33] : memref<2x512x32xf32, #tpu.memory_space<vmem>>, vector<1x512x32xf32>
    %68 = vector.shape_cast %67 : vector<1x512x32xf32> to vector<512x32xf32>
    %cst_34 = arith.constant dense<0.000000e+00> : vector<8x32xf32>
    %69 = tpu.matmul %66, %68, %cst_34 {dimension_numbers = #tpu.dot_dimension_numbers<[1], [0], [0], [1], [0, 0, 1, 1], [], []>} : vector<8x512xf32>, vector<512x32xf32>, vector<8x32xf32> -> vector<8x32xf32>
    %70 = arith.addf %2, %69 : vector<8x32xf32>
    %c0_35 = arith.constant 0 : index
    %c0_36 = arith.constant 0 : index
    %c0_37 = arith.constant 0 : index
    %71 = vector.load %arg6[%c0_35, %c0_36, %c0_37] : memref<2x1x32xf32, #tpu.memory_space<vmem>>, vector<1x1x32xf32>
    %72 = vector.shape_cast %71 : vector<1x1x32xf32> to vector<1x32xf32>
    %73 = arith.mulf %70, %70 : vector<8x32xf32>
    %cst_38 = arith.constant dense<0.000000e+00> : vector<8xf32>
    %74 = vector.multi_reduction <add>, %73, %cst_38 [1] : vector<8x32xf32> to vector<8xf32>
    %75 = vector.shape_cast %74 : vector<8xf32> to vector<8x1xf32>
    %cst_39 = arith.constant 3.200000e+01 : f32
    %76 = vector.broadcast %cst_39 : f32 to vector<8x1xf32>
    %77 = arith.divf %75, %76 : vector<8x1xf32>
    %cst_40 = arith.constant 9.99999997E-7 : f32
    %78 = vector.broadcast %cst_40 : f32 to vector<8x1xf32>
    %79 = arith.addf %77, %78 : vector<8x1xf32>
    %80 = math.rsqrt %79 : vector<8x1xf32>
    %81 = vector.broadcast %80 : vector<8x1xf32> to vector<8x32xf32>
    %82 = arith.mulf %70, %81 : vector<8x32xf32>
    %83 = vector.broadcast %72 : vector<1x32xf32> to vector<8x32xf32>
    %84 = arith.mulf %82, %83 : vector<8x32xf32>
    %c0_41 = arith.constant 0 : index
    %c0_42 = arith.constant 0 : index
    %c0_43 = arith.constant 0 : index
    %85 = vector.load %arg7[%c0_41, %c0_42, %c0_43] : memref<2x32x512xf32, #tpu.memory_space<vmem>>, vector<1x32x512xf32>
    %86 = vector.shape_cast %85 : vector<1x32x512xf32> to vector<32x512xf32>
    %cst_44 = arith.constant dense<0.000000e+00> : vector<8x512xf32>
    %87 = tpu.matmul %84, %86, %cst_44 {dimension_numbers = #tpu.dot_dimension_numbers<[1], [0], [0], [1], [0, 0, 1, 1], [], []>} : vector<8x32xf32>, vector<32x512xf32>, vector<8x512xf32> -> vector<8x512xf32>
    %c0_45 = arith.constant 0 : index
    %c0_46 = arith.constant 0 : index
    %c0_47 = arith.constant 0 : index
    %88 = vector.load %arg8[%c0_45, %c0_46, %c0_47] : memref<2x32x1024xf32, #tpu.memory_space<vmem>>, vector<1x32x1024xf32>
    %89 = vector.shape_cast %88 : vector<1x32x1024xf32> to vector<32x1024xf32>
    %cst_48 = arith.constant dense<0.000000e+00> : vector<4x1024xf32>
    %90 = tpu.matmul %1, %89, %cst_48 {dimension_numbers = #tpu.dot_dimension_numbers<[1], [0], [0], [1], [0, 0, 1, 1], [], []>} : vector<4x32xf32>, vector<32x1024xf32>, vector<4x1024xf32> -> vector<4x1024xf32>
    %91 = vector.extract_strided_slice %87 {offsets = [0, 0], sizes = [8, 128], strides = [1, 1]} : vector<8x512xf32> to vector<8x128xf32>
    %92 = vector.extract_strided_slice %90 {offsets = [0, 0], sizes = [4, 128], strides = [1, 1]} : vector<4x1024xf32> to vector<4x128xf32>
    %cst_49 = arith.constant dense<0.000000e+00> : vector<8x4xf32>
    %93 = tpu.matmul %91, %92, %cst_49 {dimension_numbers = #tpu.dot_dimension_numbers<[1], [1], [0], [0], [0, 0, 1, 0], [], []>} : vector<8x128xf32>, vector<4x128xf32>, vector<8x4xf32> -> vector<8x4xf32>
    %94 = vector.extract_strided_slice %87 {offsets = [0, 128], sizes = [8, 128], strides = [1, 1]} : vector<8x512xf32> to vector<8x128xf32>
    %95 = vector.extract_strided_slice %90 {offsets = [0, 128], sizes = [4, 128], strides = [1, 1]} : vector<4x1024xf32> to vector<4x128xf32>
    %cst_50 = arith.constant dense<0.000000e+00> : vector<8x4xf32>
    %96 = tpu.matmul %94, %95, %cst_50 {dimension_numbers = #tpu.dot_dimension_numbers<[1], [1], [0], [0], [0, 0, 1, 0], [], []>} : vector<8x128xf32>, vector<4x128xf32>, vector<8x4xf32> -> vector<8x4xf32>
    %97 = vector.extract_strided_slice %87 {offsets = [0, 256], sizes = [8, 128], strides = [1, 1]} : vector<8x512xf32> to vector<8x128xf32>
    %98 = vector.extract_strided_slice %90 {offsets = [0, 256], sizes = [4, 128], strides = [1, 1]} : vector<4x1024xf32> to vector<4x128xf32>
    %cst_51 = arith.constant dense<0.000000e+00> : vector<8x4xf32>
    %99 = tpu.matmul %97, %98, %cst_51 {dimension_numbers = #tpu.dot_dimension_numbers<[1], [1], [0], [0], [0, 0, 1, 0], [], []>} : vector<8x128xf32>, vector<4x128xf32>, vector<8x4xf32> -> vector<8x4xf32>
    %100 = vector.extract_strided_slice %87 {offsets = [0, 384], sizes = [8, 128], strides = [1, 1]} : vector<8x512xf32> to vector<8x128xf32>
    %101 = vector.extract_strided_slice %90 {offsets = [0, 384], sizes = [4, 128], strides = [1, 1]} : vector<4x1024xf32> to vector<4x128xf32>
    %cst_52 = arith.constant dense<0.000000e+00> : vector<8x4xf32>
    %102 = tpu.matmul %100, %101, %cst_52 {dimension_numbers = #tpu.dot_dimension_numbers<[1], [1], [0], [0], [0, 0, 1, 0], [], []>} : vector<8x128xf32>, vector<4x128xf32>, vector<8x4xf32> -> vector<8x4xf32>
    %103 = tpu.concatenate %93, %96, %99, %102 in 0 : vector<8x4xf32>, vector<8x4xf32>, vector<8x4xf32>, vector<8x4xf32> -> vector<32x4xf32>
    %cst_53 = arith.constant dense<0xFF800000> : vector<32xf32>
    %104 = vector.multi_reduction <maximumf>, %103, %cst_53 [1] : vector<32x4xf32> to vector<32xf32>
    %105 = vector.shape_cast %104 : vector<32xf32> to vector<32x1xf32>
    %106 = vector.broadcast %105 : vector<32x1xf32> to vector<32x4xf32>
    %107 = arith.subf %103, %106 : vector<32x4xf32>
    %108 = math.exp %107 : vector<32x4xf32>
    %cst_54 = arith.constant dense<0.000000e+00> : vector<32xf32>
    %109 = vector.multi_reduction <add>, %108, %cst_54 [1] : vector<32x4xf32> to vector<32xf32>
    %110 = vector.shape_cast %109 : vector<32xf32> to vector<32x1xf32>
    %111 = vector.broadcast %110 : vector<32x1xf32> to vector<32x4xf32>
    %112 = arith.divf %108, %111 : vector<32x4xf32>
    %113 = vector.extract_strided_slice %90 {offsets = [0, 512], sizes = [4, 128], strides = [1, 1]} : vector<4x1024xf32> to vector<4x128xf32>
    %114 = vector.extract_strided_slice %112 {offsets = [0, 0], sizes = [8, 4], strides = [1, 1]} : vector<32x4xf32> to vector<8x4xf32>
    %cst_55 = arith.constant dense<0.000000e+00> : vector<8x128xf32>
    %115 = tpu.matmul %114, %113, %cst_55 {dimension_numbers = #tpu.dot_dimension_numbers<[1], [0], [0], [1], [0, 0, 1, 1], [], []>} : vector<8x4xf32>, vector<4x128xf32>, vector<8x128xf32> -> vector<8x128xf32>
    %116 = vector.extract_strided_slice %90 {offsets = [0, 640], sizes = [4, 128], strides = [1, 1]} : vector<4x1024xf32> to vector<4x128xf32>
    %117 = vector.extract_strided_slice %112 {offsets = [8, 0], sizes = [8, 4], strides = [1, 1]} : vector<32x4xf32> to vector<8x4xf32>
    %cst_56 = arith.constant dense<0.000000e+00> : vector<8x128xf32>
    %118 = tpu.matmul %117, %116, %cst_56 {dimension_numbers = #tpu.dot_dimension_numbers<[1], [0], [0], [1], [0, 0, 1, 1], [], []>} : vector<8x4xf32>, vector<4x128xf32>, vector<8x128xf32> -> vector<8x128xf32>
    %119 = vector.extract_strided_slice %90 {offsets = [0, 768], sizes = [4, 128], strides = [1, 1]} : vector<4x1024xf32> to vector<4x128xf32>
    %120 = vector.extract_strided_slice %112 {offsets = [16, 0], sizes = [8, 4], strides = [1, 1]} : vector<32x4xf32> to vector<8x4xf32>
    %cst_57 = arith.constant dense<0.000000e+00> : vector<8x128xf32>
    %121 = tpu.matmul %120, %119, %cst_57 {dimension_numbers = #tpu.dot_dimension_numbers<[1], [0], [0], [1], [0, 0, 1, 1], [], []>} : vector<8x4xf32>, vector<4x128xf32>, vector<8x128xf32> -> vector<8x128xf32>
    %122 = vector.extract_strided_slice %90 {offsets = [0, 896], sizes = [4, 128], strides = [1, 1]} : vector<4x1024xf32> to vector<4x128xf32>
    %123 = vector.extract_strided_slice %112 {offsets = [24, 0], sizes = [8, 4], strides = [1, 1]} : vector<32x4xf32> to vector<8x4xf32>
    %cst_58 = arith.constant dense<0.000000e+00> : vector<8x128xf32>
    %124 = tpu.matmul %123, %122, %cst_58 {dimension_numbers = #tpu.dot_dimension_numbers<[1], [0], [0], [1], [0, 0, 1, 1], [], []>} : vector<8x4xf32>, vector<4x128xf32>, vector<8x128xf32> -> vector<8x128xf32>
    %125 = tpu.concatenate %115, %118, %121, %124 in 1 : vector<8x128xf32>, vector<8x128xf32>, vector<8x128xf32>, vector<8x128xf32> -> vector<8x512xf32>
    %c0_59 = arith.constant 0 : index
    %c0_60 = arith.constant 0 : index
    %c0_61 = arith.constant 0 : index
    %126 = vector.load %arg9[%c0_59, %c0_60, %c0_61] : memref<2x512x32xf32, #tpu.memory_space<vmem>>, vector<1x512x32xf32>
    %127 = vector.shape_cast %126 : vector<1x512x32xf32> to vector<512x32xf32>
    %cst_62 = arith.constant dense<0.000000e+00> : vector<8x32xf32>
    %128 = tpu.matmul %125, %127, %cst_62 {dimension_numbers = #tpu.dot_dimension_numbers<[1], [0], [0], [1], [0, 0, 1, 1], [], []>} : vector<8x512xf32>, vector<512x32xf32>, vector<8x32xf32> -> vector<8x32xf32>
    %129 = arith.addf %70, %128 : vector<8x32xf32>
    %c0_63 = arith.constant 0 : index
    %c0_64 = arith.constant 0 : index
    %c0_65 = arith.constant 0 : index
    %130 = vector.load %arg10[%c0_63, %c0_64, %c0_65] : memref<2x1x32xf32, #tpu.memory_space<vmem>>, vector<1x1x32xf32>
    %131 = vector.shape_cast %130 : vector<1x1x32xf32> to vector<1x32xf32>
    %132 = arith.mulf %129, %129 : vector<8x32xf32>
    %cst_66 = arith.constant dense<0.000000e+00> : vector<8xf32>
    %133 = vector.multi_reduction <add>, %132, %cst_66 [1] : vector<8x32xf32> to vector<8xf32>
    %134 = vector.shape_cast %133 : vector<8xf32> to vector<8x1xf32>
    %cst_67 = arith.constant 3.200000e+01 : f32
    %135 = vector.broadcast %cst_67 : f32 to vector<8x1xf32>
    %136 = arith.divf %134, %135 : vector<8x1xf32>
    %cst_68 = arith.constant 9.99999997E-7 : f32
    %137 = vector.broadcast %cst_68 : f32 to vector<8x1xf32>
    %138 = arith.addf %136, %137 : vector<8x1xf32>
    %139 = math.rsqrt %138 : vector<8x1xf32>
    %140 = vector.broadcast %139 : vector<8x1xf32> to vector<8x32xf32>
    %141 = arith.mulf %129, %140 : vector<8x32xf32>
    %142 = vector.broadcast %131 : vector<1x32xf32> to vector<8x32xf32>
    %143 = arith.mulf %141, %142 : vector<8x32xf32>
    %c0_69 = arith.constant 0 : index
    %c0_70 = arith.constant 0 : index
    %c0_71 = arith.constant 0 : index
    %144 = vector.load %arg11[%c0_69, %c0_70, %c0_71] : memref<2x32x128xf32, #tpu.memory_space<vmem>>, vector<1x32x128xf32>
    %145 = vector.shape_cast %144 : vector<1x32x128xf32> to vector<32x128xf32>
    %cst_72 = arith.constant dense<0.000000e+00> : vector<8x128xf32>
    %146 = tpu.matmul %143, %145, %cst_72 {dimension_numbers = #tpu.dot_dimension_numbers<[1], [0], [0], [1], [0, 0, 1, 1], [], []>} : vector<8x32xf32>, vector<32x128xf32>, vector<8x128xf32> -> vector<8x128xf32>
    %cst_73 = arith.constant 0.000000e+00 : f32
    %147 = vector.broadcast %cst_73 : f32 to vector<8x128xf32>
    %148 = arith.maximumf %146, %147 : vector<8x128xf32>
    %c0_74 = arith.constant 0 : index
    %c0_75 = arith.constant 0 : index
    %c0_76 = arith.constant 0 : index
    %149 = vector.load %arg12[%c0_74, %c0_75, %c0_76] : memref<2x128x32xf32, #tpu.memory_space<vmem>>, vector<1x128x32xf32>
    %150 = vector.shape_cast %149 : vector<1x128x32xf32> to vector<128x32xf32>
    %cst_77 = arith.constant dense<0.000000e+00> : vector<8x32xf32>
    %151 = tpu.matmul %148, %150, %cst_77 {dimension_numbers = #tpu.dot_dimension_numbers<[1], [0], [0], [1], [0, 0, 1, 1], [], []>} : vector<8x128xf32>, vector<128x32xf32>, vector<8x32xf32> -> vector<8x32xf32>
    %152 = arith.addf %129, %151 : vector<8x32xf32>
    %c1_78 = arith.constant 1 : index
    %c0_79 = arith.constant 0 : index
    %c0_80 = arith.constant 0 : index
    %153 = vector.load %arg3[%c1_78, %c0_79, %c0_80] : memref<2x1x32xf32, #tpu.memory_space<vmem>>, vector<1x1x32xf32>
    %154 = vector.shape_cast %153 : vector<1x1x32xf32> to vector<1x32xf32>
    %155 = arith.mulf %152, %152 : vector<8x32xf32>
    %cst_81 = arith.constant dense<0.000000e+00> : vector<8xf32>
    %156 = vector.multi_reduction <add>, %155, %cst_81 [1] : vector<8x32xf32> to vector<8xf32>
    %157 = vector.shape_cast %156 : vector<8xf32> to vector<8x1xf32>
    %cst_82 = arith.constant 3.200000e+01 : f32
    %158 = vector.broadcast %cst_82 : f32 to vector<8x1xf32>
    %159 = arith.divf %157, %158 : vector<8x1xf32>
    %cst_83 = arith.constant 9.99999997E-7 : f32
    %160 = vector.broadcast %cst_83 : f32 to vector<8x1xf32>
    %161 = arith.addf %159, %160 : vector<8x1xf32>
    %162 = math.rsqrt %161 : vector<8x1xf32>
    %163 = vector.broadcast %162 : vector<8x1xf32> to vector<8x32xf32>
    %164 = arith.mulf %152, %163 : vector<8x32xf32>
    %165 = vector.broadcast %154 : vector<1x32xf32> to vector<8x32xf32>
    %166 = arith.mulf %164, %165 : vector<8x32xf32>
    %c1_84 = arith.constant 1 : index
    %c0_85 = arith.constant 0 : index
    %c0_86 = arith.constant 0 : index
    %167 = vector.load %arg4[%c1_84, %c0_85, %c0_86] : memref<2x32x1536xf32, #tpu.memory_space<vmem>>, vector<1x32x1536xf32>
    %168 = vector.shape_cast %167 : vector<1x32x1536xf32> to vector<32x1536xf32>
    %cst_87 = arith.constant dense<0.000000e+00> : vector<8x1536xf32>
    %169 = tpu.matmul %166, %168, %cst_87 {dimension_numbers = #tpu.dot_dimension_numbers<[1], [0], [0], [1], [0, 0, 1, 1], [], []>} : vector<8x32xf32>, vector<32x1536xf32>, vector<8x1536xf32> -> vector<8x1536xf32>
    %170 = vector.extract_strided_slice %169 {offsets = [0, 0], sizes = [8, 128], strides = [1, 1]} : vector<8x1536xf32> to vector<8x128xf32>
    %171 = vector.extract_strided_slice %169 {offsets = [0, 512], sizes = [8, 128], strides = [1, 1]} : vector<8x1536xf32> to vector<8x128xf32>
    %cst_88 = arith.constant dense<0.000000e+00> : vector<8x8xf32>
    %172 = tpu.matmul %170, %171, %cst_88 {dimension_numbers = #tpu.dot_dimension_numbers<[1], [1], [0], [0], [0, 0, 1, 0], [], []>} : vector<8x128xf32>, vector<8x128xf32>, vector<8x8xf32> -> vector<8x8xf32>
    %c0_89 = arith.constant 0 : index
    %c0_90 = arith.constant 0 : index
    %c0_91 = arith.constant 0 : index
    %173 = vector.load %arg2[%c0_89, %c0_90, %c0_91] : memref<4x8x8xf32, #tpu.memory_space<vmem>>, vector<1x8x8xf32>
    %174 = vector.shape_cast %173 : vector<1x8x8xf32> to vector<8x8xf32>
    %175 = arith.addf %172, %174 : vector<8x8xf32>
    %176 = vector.extract_strided_slice %169 {offsets = [0, 128], sizes = [8, 128], strides = [1, 1]} : vector<8x1536xf32> to vector<8x128xf32>
    %177 = vector.extract_strided_slice %169 {offsets = [0, 640], sizes = [8, 128], strides = [1, 1]} : vector<8x1536xf32> to vector<8x128xf32>
    %cst_92 = arith.constant dense<0.000000e+00> : vector<8x8xf32>
    %178 = tpu.matmul %176, %177, %cst_92 {dimension_numbers = #tpu.dot_dimension_numbers<[1], [1], [0], [0], [0, 0, 1, 0], [], []>} : vector<8x128xf32>, vector<8x128xf32>, vector<8x8xf32> -> vector<8x8xf32>
    %c1_93 = arith.constant 1 : index
    %c0_94 = arith.constant 0 : index
    %c0_95 = arith.constant 0 : index
    %179 = vector.load %arg2[%c1_93, %c0_94, %c0_95] : memref<4x8x8xf32, #tpu.memory_space<vmem>>, vector<1x8x8xf32>
    %180 = vector.shape_cast %179 : vector<1x8x8xf32> to vector<8x8xf32>
    %181 = arith.addf %178, %180 : vector<8x8xf32>
    %182 = vector.extract_strided_slice %169 {offsets = [0, 256], sizes = [8, 128], strides = [1, 1]} : vector<8x1536xf32> to vector<8x128xf32>
    %183 = vector.extract_strided_slice %169 {offsets = [0, 768], sizes = [8, 128], strides = [1, 1]} : vector<8x1536xf32> to vector<8x128xf32>
    %cst_96 = arith.constant dense<0.000000e+00> : vector<8x8xf32>
    %184 = tpu.matmul %182, %183, %cst_96 {dimension_numbers = #tpu.dot_dimension_numbers<[1], [1], [0], [0], [0, 0, 1, 0], [], []>} : vector<8x128xf32>, vector<8x128xf32>, vector<8x8xf32> -> vector<8x8xf32>
    %c2_97 = arith.constant 2 : index
    %c0_98 = arith.constant 0 : index
    %c0_99 = arith.constant 0 : index
    %185 = vector.load %arg2[%c2_97, %c0_98, %c0_99] : memref<4x8x8xf32, #tpu.memory_space<vmem>>, vector<1x8x8xf32>
    %186 = vector.shape_cast %185 : vector<1x8x8xf32> to vector<8x8xf32>
    %187 = arith.addf %184, %186 : vector<8x8xf32>
    %188 = vector.extract_strided_slice %169 {offsets = [0, 384], sizes = [8, 128], strides = [1, 1]} : vector<8x1536xf32> to vector<8x128xf32>
    %189 = vector.extract_strided_slice %169 {offsets = [0, 896], sizes = [8, 128], strides = [1, 1]} : vector<8x1536xf32> to vector<8x128xf32>
    %cst_100 = arith.constant dense<0.000000e+00> : vector<8x8xf32>
    %190 = tpu.matmul %188, %189, %cst_100 {dimension_numbers = #tpu.dot_dimension_numbers<[1], [1], [0], [0], [0, 0, 1, 0], [], []>} : vector<8x128xf32>, vector<8x128xf32>, vector<8x8xf32> -> vector<8x8xf32>
    %c3_101 = arith.constant 3 : index
    %c0_102 = arith.constant 0 : index
    %c0_103 = arith.constant 0 : index
    %191 = vector.load %arg2[%c3_101, %c0_102, %c0_103] : memref<4x8x8xf32, #tpu.memory_space<vmem>>, vector<1x8x8xf32>
    %192 = vector.shape_cast %191 : vector<1x8x8xf32> to vector<8x8xf32>
    %193 = arith.addf %190, %192 : vector<8x8xf32>
    %194 = tpu.concatenate %175, %181, %187, %193 in 0 : vector<8x8xf32>, vector<8x8xf32>, vector<8x8xf32>, vector<8x8xf32> -> vector<32x8xf32>
    %cst_104 = arith.constant dense<0xFF800000> : vector<32xf32>
    %195 = vector.multi_reduction <maximumf>, %194, %cst_104 [1] : vector<32x8xf32> to vector<32xf32>
    %196 = vector.shape_cast %195 : vector<32xf32> to vector<32x1xf32>
    %197 = vector.broadcast %196 : vector<32x1xf32> to vector<32x8xf32>
    %198 = arith.subf %194, %197 : vector<32x8xf32>
    %199 = math.exp %198 : vector<32x8xf32>
    %cst_105 = arith.constant dense<0.000000e+00> : vector<32xf32>
    %200 = vector.multi_reduction <add>, %199, %cst_105 [1] : vector<32x8xf32> to vector<32xf32>
    %201 = vector.shape_cast %200 : vector<32xf32> to vector<32x1xf32>
    %202 = vector.broadcast %201 : vector<32x1xf32> to vector<32x8xf32>
    %203 = arith.divf %199, %202 : vector<32x8xf32>
    %204 = vector.extract_strided_slice %169 {offsets = [0, 1024], sizes = [8, 128], strides = [1, 1]} : vector<8x1536xf32> to vector<8x128xf32>
    %205 = vector.extract_strided_slice %203 {offsets = [0, 0], sizes = [8, 8], strides = [1, 1]} : vector<32x8xf32> to vector<8x8xf32>
    %cst_106 = arith.constant dense<0.000000e+00> : vector<8x128xf32>
    %206 = tpu.matmul %205, %204, %cst_106 {dimension_numbers = #tpu.dot_dimension_numbers<[1], [0], [0], [1], [0, 0, 1, 1], [], []>} : vector<8x8xf32>, vector<8x128xf32>, vector<8x128xf32> -> vector<8x128xf32>
    %207 = vector.extract_strided_slice %169 {offsets = [0, 1152], sizes = [8, 128], strides = [1, 1]} : vector<8x1536xf32> to vector<8x128xf32>
    %208 = vector.extract_strided_slice %203 {offsets = [8, 0], sizes = [8, 8], strides = [1, 1]} : vector<32x8xf32> to vector<8x8xf32>
    %cst_107 = arith.constant dense<0.000000e+00> : vector<8x128xf32>
    %209 = tpu.matmul %208, %207, %cst_107 {dimension_numbers = #tpu.dot_dimension_numbers<[1], [0], [0], [1], [0, 0, 1, 1], [], []>} : vector<8x8xf32>, vector<8x128xf32>, vector<8x128xf32> -> vector<8x128xf32>
    %210 = vector.extract_strided_slice %169 {offsets = [0, 1280], sizes = [8, 128], strides = [1, 1]} : vector<8x1536xf32> to vector<8x128xf32>
    %211 = vector.extract_strided_slice %203 {offsets = [16, 0], sizes = [8, 8], strides = [1, 1]} : vector<32x8xf32> to vector<8x8xf32>
    %cst_108 = arith.constant dense<0.000000e+00> : vector<8x128xf32>
    %212 = tpu.matmul %211, %210, %cst_108 {dimension_numbers = #tpu.dot_dimension_numbers<[1], [0], [0], [1], [0, 0, 1, 1], [], []>} : vector<8x8xf32>, vector<8x128xf32>, vector<8x128xf32> -> vector<8x128xf32>
    %213 = vector.extract_strided_slice %169 {offsets = [0, 1408], sizes = [8, 128], strides = [1, 1]} : vector<8x1536xf32> to vector<8x128xf32>
    %214 = vector.extract_strided_slice %203 {offsets = [24, 0], sizes = [8, 8], strides = [1, 1]} : vector<32x8xf32> to vector<8x8xf32>
    %cst_109 = arith.constant dense<0.000000e+00> : vector<8x128xf32>
    %215 = tpu.matmul %214, %213, %cst_109 {dimension_numbers = #tpu.dot_dimension_numbers<[1], [0], [0], [1], [0, 0, 1, 1], [], []>} : vector<8x8xf32>, vector<8x128xf32>, vector<8x128xf32> -> vector<8x128xf32>
    %216 = tpu.concatenate %206, %209, %212, %215 in 1 : vector<8x128xf32>, vector<8x128xf32>, vector<8x128xf32>, vector<8x128xf32> -> vector<8x512xf32>
    %c1_110 = arith.constant 1 : index
    %c0_111 = arith.constant 0 : index
    %c0_112 = arith.constant 0 : index
    %217 = vector.load %arg5[%c1_110, %c0_111, %c0_112] : memref<2x512x32xf32, #tpu.memory_space<vmem>>, vector<1x512x32xf32>
    %218 = vector.shape_cast %217 : vector<1x512x32xf32> to vector<512x32xf32>
    %cst_113 = arith.constant dense<0.000000e+00> : vector<8x32xf32>
    %219 = tpu.matmul %216, %218, %cst_113 {dimension_numbers = #tpu.dot_dimension_numbers<[1], [0], [0], [1], [0, 0, 1, 1], [], []>} : vector<8x512xf32>, vector<512x32xf32>, vector<8x32xf32> -> vector<8x32xf32>
    %220 = arith.addf %152, %219 : vector<8x32xf32>
    %c1_114 = arith.constant 1 : index
    %c0_115 = arith.constant 0 : index
    %c0_116 = arith.constant 0 : index
    %221 = vector.load %arg6[%c1_114, %c0_115, %c0_116] : memref<2x1x32xf32, #tpu.memory_space<vmem>>, vector<1x1x32xf32>
    %222 = vector.shape_cast %221 : vector<1x1x32xf32> to vector<1x32xf32>
    %223 = arith.mulf %220, %220 : vector<8x32xf32>
    %cst_117 = arith.constant dense<0.000000e+00> : vector<8xf32>
    %224 = vector.multi_reduction <add>, %223, %cst_117 [1] : vector<8x32xf32> to vector<8xf32>
    %225 = vector.shape_cast %224 : vector<8xf32> to vector<8x1xf32>
    %cst_118 = arith.constant 3.200000e+01 : f32
    %226 = vector.broadcast %cst_118 : f32 to vector<8x1xf32>
    %227 = arith.divf %225, %226 : vector<8x1xf32>
    %cst_119 = arith.constant 9.99999997E-7 : f32
    %228 = vector.broadcast %cst_119 : f32 to vector<8x1xf32>
    %229 = arith.addf %227, %228 : vector<8x1xf32>
    %230 = math.rsqrt %229 : vector<8x1xf32>
    %231 = vector.broadcast %230 : vector<8x1xf32> to vector<8x32xf32>
    %232 = arith.mulf %220, %231 : vector<8x32xf32>
    %233 = vector.broadcast %222 : vector<1x32xf32> to vector<8x32xf32>
    %234 = arith.mulf %232, %233 : vector<8x32xf32>
    %c1_120 = arith.constant 1 : index
    %c0_121 = arith.constant 0 : index
    %c0_122 = arith.constant 0 : index
    %235 = vector.load %arg7[%c1_120, %c0_121, %c0_122] : memref<2x32x512xf32, #tpu.memory_space<vmem>>, vector<1x32x512xf32>
    %236 = vector.shape_cast %235 : vector<1x32x512xf32> to vector<32x512xf32>
    %cst_123 = arith.constant dense<0.000000e+00> : vector<8x512xf32>
    %237 = tpu.matmul %234, %236, %cst_123 {dimension_numbers = #tpu.dot_dimension_numbers<[1], [0], [0], [1], [0, 0, 1, 1], [], []>} : vector<8x32xf32>, vector<32x512xf32>, vector<8x512xf32> -> vector<8x512xf32>
    %c1_124 = arith.constant 1 : index
    %c0_125 = arith.constant 0 : index
    %c0_126 = arith.constant 0 : index
    %238 = vector.load %arg8[%c1_124, %c0_125, %c0_126] : memref<2x32x1024xf32, #tpu.memory_space<vmem>>, vector<1x32x1024xf32>
    %239 = vector.shape_cast %238 : vector<1x32x1024xf32> to vector<32x1024xf32>
    %cst_127 = arith.constant dense<0.000000e+00> : vector<4x1024xf32>
    %240 = tpu.matmul %1, %239, %cst_127 {dimension_numbers = #tpu.dot_dimension_numbers<[1], [0], [0], [1], [0, 0, 1, 1], [], []>} : vector<4x32xf32>, vector<32x1024xf32>, vector<4x1024xf32> -> vector<4x1024xf32>
    %241 = vector.extract_strided_slice %237 {offsets = [0, 0], sizes = [8, 128], strides = [1, 1]} : vector<8x512xf32> to vector<8x128xf32>
    %242 = vector.extract_strided_slice %240 {offsets = [0, 0], sizes = [4, 128], strides = [1, 1]} : vector<4x1024xf32> to vector<4x128xf32>
    %cst_128 = arith.constant dense<0.000000e+00> : vector<8x4xf32>
    %243 = tpu.matmul %241, %242, %cst_128 {dimension_numbers = #tpu.dot_dimension_numbers<[1], [1], [0], [0], [0, 0, 1, 0], [], []>} : vector<8x128xf32>, vector<4x128xf32>, vector<8x4xf32> -> vector<8x4xf32>
    %244 = vector.extract_strided_slice %237 {offsets = [0, 128], sizes = [8, 128], strides = [1, 1]} : vector<8x512xf32> to vector<8x128xf32>
    %245 = vector.extract_strided_slice %240 {offsets = [0, 128], sizes = [4, 128], strides = [1, 1]} : vector<4x1024xf32> to vector<4x128xf32>
    %cst_129 = arith.constant dense<0.000000e+00> : vector<8x4xf32>
    %246 = tpu.matmul %244, %245, %cst_129 {dimension_numbers = #tpu.dot_dimension_numbers<[1], [1], [0], [0], [0, 0, 1, 0], [], []>} : vector<8x128xf32>, vector<4x128xf32>, vector<8x4xf32> -> vector<8x4xf32>
    %247 = vector.extract_strided_slice %237 {offsets = [0, 256], sizes = [8, 128], strides = [1, 1]} : vector<8x512xf32> to vector<8x128xf32>
    %248 = vector.extract_strided_slice %240 {offsets = [0, 256], sizes = [4, 128], strides = [1, 1]} : vector<4x1024xf32> to vector<4x128xf32>
    %cst_130 = arith.constant dense<0.000000e+00> : vector<8x4xf32>
    %249 = tpu.matmul %247, %248, %cst_130 {dimension_numbers = #tpu.dot_dimension_numbers<[1], [1], [0], [0], [0, 0, 1, 0], [], []>} : vector<8x128xf32>, vector<4x128xf32>, vector<8x4xf32> -> vector<8x4xf32>
    %250 = vector.extract_strided_slice %237 {offsets = [0, 384], sizes = [8, 128], strides = [1, 1]} : vector<8x512xf32> to vector<8x128xf32>
    %251 = vector.extract_strided_slice %240 {offsets = [0, 384], sizes = [4, 128], strides = [1, 1]} : vector<4x1024xf32> to vector<4x128xf32>
    %cst_131 = arith.constant dense<0.000000e+00> : vector<8x4xf32>
    %252 = tpu.matmul %250, %251, %cst_131 {dimension_numbers = #tpu.dot_dimension_numbers<[1], [1], [0], [0], [0, 0, 1, 0], [], []>} : vector<8x128xf32>, vector<4x128xf32>, vector<8x4xf32> -> vector<8x4xf32>
    %253 = tpu.concatenate %243, %246, %249, %252 in 0 : vector<8x4xf32>, vector<8x4xf32>, vector<8x4xf32>, vector<8x4xf32> -> vector<32x4xf32>
    %cst_132 = arith.constant dense<0xFF800000> : vector<32xf32>
    %254 = vector.multi_reduction <maximumf>, %253, %cst_132 [1] : vector<32x4xf32> to vector<32xf32>
    %255 = vector.shape_cast %254 : vector<32xf32> to vector<32x1xf32>
    %256 = vector.broadcast %255 : vector<32x1xf32> to vector<32x4xf32>
    %257 = arith.subf %253, %256 : vector<32x4xf32>
    %258 = math.exp %257 : vector<32x4xf32>
    %cst_133 = arith.constant dense<0.000000e+00> : vector<32xf32>
    %259 = vector.multi_reduction <add>, %258, %cst_133 [1] : vector<32x4xf32> to vector<32xf32>
    %260 = vector.shape_cast %259 : vector<32xf32> to vector<32x1xf32>
    %261 = vector.broadcast %260 : vector<32x1xf32> to vector<32x4xf32>
    %262 = arith.divf %258, %261 : vector<32x4xf32>
    %263 = vector.extract_strided_slice %240 {offsets = [0, 512], sizes = [4, 128], strides = [1, 1]} : vector<4x1024xf32> to vector<4x128xf32>
    %264 = vector.extract_strided_slice %262 {offsets = [0, 0], sizes = [8, 4], strides = [1, 1]} : vector<32x4xf32> to vector<8x4xf32>
    %cst_134 = arith.constant dense<0.000000e+00> : vector<8x128xf32>
    %265 = tpu.matmul %264, %263, %cst_134 {dimension_numbers = #tpu.dot_dimension_numbers<[1], [0], [0], [1], [0, 0, 1, 1], [], []>} : vector<8x4xf32>, vector<4x128xf32>, vector<8x128xf32> -> vector<8x128xf32>
    %266 = vector.extract_strided_slice %240 {offsets = [0, 640], sizes = [4, 128], strides = [1, 1]} : vector<4x1024xf32> to vector<4x128xf32>
    %267 = vector.extract_strided_slice %262 {offsets = [8, 0], sizes = [8, 4], strides = [1, 1]} : vector<32x4xf32> to vector<8x4xf32>
    %cst_135 = arith.constant dense<0.000000e+00> : vector<8x128xf32>
    %268 = tpu.matmul %267, %266, %cst_135 {dimension_numbers = #tpu.dot_dimension_numbers<[1], [0], [0], [1], [0, 0, 1, 1], [], []>} : vector<8x4xf32>, vector<4x128xf32>, vector<8x128xf32> -> vector<8x128xf32>
    %269 = vector.extract_strided_slice %240 {offsets = [0, 768], sizes = [4, 128], strides = [1, 1]} : vector<4x1024xf32> to vector<4x128xf32>
    %270 = vector.extract_strided_slice %262 {offsets = [16, 0], sizes = [8, 4], strides = [1, 1]} : vector<32x4xf32> to vector<8x4xf32>
    %cst_136 = arith.constant dense<0.000000e+00> : vector<8x128xf32>
    %271 = tpu.matmul %270, %269, %cst_136 {dimension_numbers = #tpu.dot_dimension_numbers<[1], [0], [0], [1], [0, 0, 1, 1], [], []>} : vector<8x4xf32>, vector<4x128xf32>, vector<8x128xf32> -> vector<8x128xf32>
    %272 = vector.extract_strided_slice %240 {offsets = [0, 896], sizes = [4, 128], strides = [1, 1]} : vector<4x1024xf32> to vector<4x128xf32>
    %273 = vector.extract_strided_slice %262 {offsets = [24, 0], sizes = [8, 4], strides = [1, 1]} : vector<32x4xf32> to vector<8x4xf32>
    %cst_137 = arith.constant dense<0.000000e+00> : vector<8x128xf32>
    %274 = tpu.matmul %273, %272, %cst_137 {dimension_numbers = #tpu.dot_dimension_numbers<[1], [0], [0], [1], [0, 0, 1, 1], [], []>} : vector<8x4xf32>, vector<4x128xf32>, vector<8x128xf32> -> vector<8x128xf32>
    %275 = tpu.concatenate %265, %268, %271, %274 in 1 : vector<8x128xf32>, vector<8x128xf32>, vector<8x128xf32>, vector<8x128xf32> -> vector<8x512xf32>
    %c1_138 = arith.constant 1 : index
    %c0_139 = arith.constant 0 : index
    %c0_140 = arith.constant 0 : index
    %276 = vector.load %arg9[%c1_138, %c0_139, %c0_140] : memref<2x512x32xf32, #tpu.memory_space<vmem>>, vector<1x512x32xf32>
    %277 = vector.shape_cast %276 : vector<1x512x32xf32> to vector<512x32xf32>
    %cst_141 = arith.constant dense<0.000000e+00> : vector<8x32xf32>
    %278 = tpu.matmul %275, %277, %cst_141 {dimension_numbers = #tpu.dot_dimension_numbers<[1], [0], [0], [1], [0, 0, 1, 1], [], []>} : vector<8x512xf32>, vector<512x32xf32>, vector<8x32xf32> -> vector<8x32xf32>
    %279 = arith.addf %220, %278 : vector<8x32xf32>
    %c1_142 = arith.constant 1 : index
    %c0_143 = arith.constant 0 : index
    %c0_144 = arith.constant 0 : index
    %280 = vector.load %arg10[%c1_142, %c0_143, %c0_144] : memref<2x1x32xf32, #tpu.memory_space<vmem>>, vector<1x1x32xf32>
    %281 = vector.shape_cast %280 : vector<1x1x32xf32> to vector<1x32xf32>
    %282 = arith.mulf %279, %279 : vector<8x32xf32>
    %cst_145 = arith.constant dense<0.000000e+00> : vector<8xf32>
    %283 = vector.multi_reduction <add>, %282, %cst_145 [1] : vector<8x32xf32> to vector<8xf32>
    %284 = vector.shape_cast %283 : vector<8xf32> to vector<8x1xf32>
    %cst_146 = arith.constant 3.200000e+01 : f32
    %285 = vector.broadcast %cst_146 : f32 to vector<8x1xf32>
    %286 = arith.divf %284, %285 : vector<8x1xf32>
    %cst_147 = arith.constant 9.99999997E-7 : f32
    %287 = vector.broadcast %cst_147 : f32 to vector<8x1xf32>
    %288 = arith.addf %286, %287 : vector<8x1xf32>
    %289 = math.rsqrt %288 : vector<8x1xf32>
    %290 = vector.broadcast %289 : vector<8x1xf32> to vector<8x32xf32>
    %291 = arith.mulf %279, %290 : vector<8x32xf32>
    %292 = vector.broadcast %281 : vector<1x32xf32> to vector<8x32xf32>
    %293 = arith.mulf %291, %292 : vector<8x32xf32>
    %c1_148 = arith.constant 1 : index
    %c0_149 = arith.constant 0 : index
    %c0_150 = arith.constant 0 : index
    %294 = vector.load %arg11[%c1_148, %c0_149, %c0_150] : memref<2x32x128xf32, #tpu.memory_space<vmem>>, vector<1x32x128xf32>
    %295 = vector.shape_cast %294 : vector<1x32x128xf32> to vector<32x128xf32>
    %cst_151 = arith.constant dense<0.000000e+00> : vector<8x128xf32>
    %296 = tpu.matmul %293, %295, %cst_151 {dimension_numbers = #tpu.dot_dimension_numbers<[1], [0], [0], [1], [0, 0, 1, 1], [], []>} : vector<8x32xf32>, vector<32x128xf32>, vector<8x128xf32> -> vector<8x128xf32>
    %cst_152 = arith.constant 0.000000e+00 : f32
    %297 = vector.broadcast %cst_152 : f32 to vector<8x128xf32>
    %298 = arith.maximumf %296, %297 : vector<8x128xf32>
    %c1_153 = arith.constant 1 : index
    %c0_154 = arith.constant 0 : index
    %c0_155 = arith.constant 0 : index
    %299 = vector.load %arg12[%c1_153, %c0_154, %c0_155] : memref<2x128x32xf32, #tpu.memory_space<vmem>>, vector<1x128x32xf32>
    %300 = vector.shape_cast %299 : vector<1x128x32xf32> to vector<128x32xf32>
    %cst_156 = arith.constant dense<0.000000e+00> : vector<8x32xf32>
    %301 = tpu.matmul %298, %300, %cst_156 {dimension_numbers = #tpu.dot_dimension_numbers<[1], [0], [0], [1], [0, 0, 1, 1], [], []>} : vector<8x128xf32>, vector<128x32xf32>, vector<8x32xf32> -> vector<8x32xf32>
    %302 = arith.addf %279, %301 : vector<8x32xf32>
    %c0_157 = arith.constant 0 : index
    %c0_158 = arith.constant 0 : index
    %303 = vector.load %arg13[%c0_157, %c0_158] : memref<1x32xf32, #tpu.memory_space<vmem>>, vector<1x32xf32>
    %304 = arith.mulf %302, %302 : vector<8x32xf32>
    %cst_159 = arith.constant dense<0.000000e+00> : vector<8xf32>
    %305 = vector.multi_reduction <add>, %304, %cst_159 [1] : vector<8x32xf32> to vector<8xf32>
    %306 = vector.shape_cast %305 : vector<8xf32> to vector<8x1xf32>
    %cst_160 = arith.constant 3.200000e+01 : f32
    %307 = vector.broadcast %cst_160 : f32 to vector<8x1xf32>
    %308 = arith.divf %306, %307 : vector<8x1xf32>
    %cst_161 = arith.constant 9.99999997E-7 : f32
    %309 = vector.broadcast %cst_161 : f32 to vector<8x1xf32>
    %310 = arith.addf %308, %309 : vector<8x1xf32>
    %311 = math.rsqrt %310 : vector<8x1xf32>
    %312 = vector.broadcast %311 : vector<8x1xf32> to vector<8x32xf32>
    %313 = arith.mulf %302, %312 : vector<8x32xf32>
    %314 = vector.broadcast %303 : vector<1x32xf32> to vector<8x32xf32>
    %315 = arith.mulf %313, %314 : vector<8x32xf32>
    %c0_162 = arith.constant 0 : index
    %c0_163 = arith.constant 0 : index
    %316 = vector.load %arg14[%c0_162, %c0_163] : memref<32x128xf32, #tpu.memory_space<vmem>>, vector<32x128xf32>
    %cst_164 = arith.constant dense<0.000000e+00> : vector<8x128xf32>
    %317 = tpu.matmul %315, %316, %cst_164 {dimension_numbers = #tpu.dot_dimension_numbers<[1], [0], [0], [1], [0, 0, 1, 1], [], []>} : vector<8x32xf32>, vector<32x128xf32>, vector<8x128xf32> -> vector<8x128xf32>
    %c0_165 = arith.constant 0 : index
    %c0_166 = arith.constant 0 : index
    %318 = vector.load %arg15[%c0_165, %c0_166] : memref<1x128xf32, #tpu.memory_space<vmem>>, vector<1x128xf32>
    %319 = vector.broadcast %318 : vector<1x128xf32> to vector<8x128xf32>
    %320 = arith.addf %317, %319 : vector<8x128xf32>
    %c0_167 = arith.constant 0 : index
    %c0_168 = arith.constant 0 : index
    %321 = vector.load %arg16[%c0_167, %c0_168] : memref<8x128xf32, #tpu.memory_space<vmem>>, vector<8x128xf32>
    tpu.vector_store %arg16[%c0_167, %c0_168], %320 {strides = array<i32>} : memref<8x128xf32, #tpu.memory_space<vmem>>, vector<8x128xf32>,
    return
  }
  func.func @transform_0(%arg0: i32) -> (i32, i32, i32) {
    %c0_i32 = arith.constant 0 : i32
    %c0_i32_0 = arith.constant 0 : i32
    %c0_i32_1 = arith.constant 0 : i32
    return %arg0, %c0_i32, %c0_i32_0 : i32, i32, i32
  }
  func.func @transform_1(%arg0: i32) -> (i32, i32, i32) {
    %c0_i32 = arith.constant 0 : i32
    %c0_i32_0 = arith.constant 0 : i32
    %c0_i32_1 = arith.constant 0 : i32
    %c0_i32_2 = arith.constant 0 : i32
    return %c0_i32, %c0_i32_0, %c0_i32_1 : i32, i32, i32
  }
  func.func @transform_2(%arg0: i32) -> (i32, i32, i32) {
    %c0_i32 = arith.constant 0 : i32
    %c0_i32_0 = arith.constant 0 : i32
    %c0_i32_1 = arith.constant 0 : i32
    %c0_i32_2 = arith.constant 0 : i32
    return %c0_i32, %c0_i32_0, %c0_i32_1 : i32, i32, i32
  }
  func.func @transform_3(%arg0: i32) -> (i32, i32, i32) {
    %c0_i32 = arith.constant 0 : i32
    %c0_i32_0 = arith.constant 0 : i32
    %c0_i32_1 = arith.constant 0 : i32
    %c0_i32_2 = arith.constant 0 : i32
    return %c0_i32, %c0_i32_0, %c0_i32_1 : i32, i32, i32
  }
  func.func @transform_4(%arg0: i32) -> (i32, i32, i32) {
    %c0_i32 = arith.constant 0 : i32
    %c0_i32_0 = arith.constant 0 : i32
    %c0_i32_1 = arith.constant 0 : i32
    %c0_i32_2 = arith.constant 0 : i32
    return %c0_i32, %c0_i32_0, %c0_i32_1 : i32, i32, i32
  }
  func.func @transform_5(%arg0: i32) -> (i32, i32, i32) {
    %c0_i32 = arith.constant 0 : i32
    %c0_i32_0 = arith.constant 0 : i32
    %c0_i32_1 = arith.constant 0 : i32
    %c0_i32_2 = arith.constant 0 : i32
    return %c0_i32, %c0_i32_0, %c0_i32_1 : i32, i32, i32
  }
  func.func @transform_6(%arg0: i32) -> (i32, i32, i32) {
    %c0_i32 = arith.constant 0 : i32
    %c0_i32_0 = arith.constant 0 : i32
    %c0_i32_1 = arith.constant 0 : i32
    %c0_i32_2 = arith.constant 0 : i32
    return %c0_i32, %c0_i32_0, %c0_i32_1 : i32, i32, i32
  }
  func.func @transform_7(%arg0: i32) -> (i32, i32, i32) {
    %c0_i32 = arith.constant 0 : i32
    %c0_i32_0 = arith.constant 0 : i32
    %c0_i32_1 = arith.constant 0 : i32
    %c0_i32_2 = arith.constant 0 : i32
    return %c0_i32, %c0_i32_0, %c0_i32_1 : i32, i32, i32
  }
  func.func @transform_8(%arg0: i32) -> (i32, i32, i32) {
    %c0_i32 = arith.constant 0 : i32
    %c0_i32_0 = arith.constant 0 : i32
    %c0_i32_1 = arith.constant 0 : i32
    %c0_i32_2 = arith.constant 0 : i32
    return %c0_i32, %c0_i32_0, %c0_i32_1 : i32, i32, i32
  }
  func.func @transform_9(%arg0: i32) -> (i32, i32, i32) {
    %c0_i32 = arith.constant 0 : i32
    %c0_i32_0 = arith.constant 0 : i32
    %c0_i32_1 = arith.constant 0 : i32
    %c0_i32_2 = arith.constant 0 : i32
    return %c0_i32, %c0_i32_0, %c0_i32_1 : i32, i32, i32
  }
  func.func @transform_10(%arg0: i32) -> (i32, i32, i32) {
    %c0_i32 = arith.constant 0 : i32
    %c0_i32_0 = arith.constant 0 : i32
    %c0_i32_1 = arith.constant 0 : i32
    %c0_i32_2 = arith.constant 0 : i32
    return %c0_i32, %c0_i32_0, %c0_i32_1 : i32, i32, i32
  }
  func.func @transform_11(%arg0: i32) -> (i32, i32, i32) {
    %c0_i32 = arith.constant 0 : i32
    %c0_i32_0 = arith.constant 0 : i32
    %c0_i32_1 = arith.constant 0 : i32
    %c0_i32_2 = arith.constant 0 : i32
    return %c0_i32, %c0_i32_0, %c0_i32_1 : i32, i32, i32
  }
  func.func @transform_12(%arg0: i32) -> (i32, i32) {
    %c0_i32 = arith.constant 0 : i32
    %c0_i32_0 = arith.constant 0 : i32
    %c0_i32_1 = arith.constant 0 : i32
    return %c0_i32, %c0_i32_0 : i32, i32
  }
  func.func @transform_13(%arg0: i32) -> (i32, i32) {
    %c0_i32 = arith.constant 0 : i32
    %c0_i32_0 = arith.constant 0 : i32
    %c0_i32_1 = arith.constant 0 : i32
    return %c0_i32, %c0_i32_0 : i32, i32
  }
  func.func @transform_14(%arg0: i32) -> (i32, i32) {
    %c0_i32 = arith.constant 0 : i32
    %c0_i32_0 = arith.constant 0 : i32
    %c0_i32_1 = arith.constant 0 : i32
    return %c0_i32, %c0_i32_0 : i32, i32
  }
  func.func @transform_15(%arg0: i32) -> (i32, i32) {
    %c0_i32 = arith.constant 0 : i32
    %c0_i32_0 = arith.constant 0 : i32
    return %arg0, %c0_i32 : i32, i32
  }
}

</mosaic_0001>

<llo_original>
// kernel: _forward_jit.1
$region0: #{_forward_jit.1}
  #allocation0 [shape = 'u32[]', space=smem, size = 0x4, offset = 0x4, fixed_abs, tag = 'smem constant byte address 0x4 - core index']
  #allocation1 [shape = 'u32[144,128]{1,0:T(1,128)}', space=vmem, size = 0x12000, scoped, tag = 'internal scratch']
  %s0 = inlined_call_operand.vmem [shape: f32[2,4,32], index: 0, kind: input, shape index: {}]
  %s1 = inlined_call_operand.vmem [shape: f32[4,8,8], index: 1, kind: input, shape index: {}]
  %s2 = inlined_call_operand.vmem [shape: f32[2,1,32], index: 2, kind: input, shape index: {}]
  %s3 = inlined_call_operand.vmem [shape: f32[2,32,1536], index: 3, kind: input, shape index: {}]
  %s4 = inlined_call_operand.vmem [shape: f32[2,512,32], index: 4, kind: input, shape index: {}]
  %s5 = inlined_call_operand.vmem [shape: f32[2,1,32], index: 5, kind: input, shape index: {}]
  %s6 = inlined_call_operand.vmem [shape: f32[2,32,512], index: 6, kind: input, shape index: {}]
  %s7 = inlined_call_operand.vmem [shape: f32[2,32,1024], index: 7, kind: input, shape index: {}]
  %s8 = inlined_call_operand.vmem [shape: f32[2,512,32], index: 8, kind: input, shape index: {}]
  %s9 = inlined_call_operand.vmem [shape: f32[2,1,32], index: 9, kind: input, shape index: {}]
  %s10 = inlined_call_operand.vmem [shape: f32[2,32,128], index: 10, kind: input, shape index: {}]
  %s11 = inlined_call_operand.vmem [shape: f32[2,128,32], index: 11, kind: input, shape index: {}]
  %s12 = inlined_call_operand.vmem [shape: f32[1,32], index: 12, kind: input, shape index: {}]
  %s13 = inlined_call_operand.vmem [shape: f32[32,128], index: 13, kind: input, shape index: {}]
  %s14 = inlined_call_operand.vmem [shape: f32[1,128], index: 14, kind: input, shape index: {}]
  %s15 = inlined_call_operand.vmem [shape: f32[16,128], index: 15, kind: output, shape index: {}]
  %s16 = sld [smem:[#allocation0]]
  $region93: #{_forward_jit.1} parent=0
    _
  %s18 = ssub.s32 1, %s16
  %s19 = scalar_select 0, %s18, %s16
  loop: start=0, step=1, limit=4
  $region2: #{_forward_jit.1} parent=0 // loop_pre_header
    _
  $region3: #{_forward_jit.1} parent=0 // loop_header
    %s21 = sphi 0, %s25
    %p22 = scmp.ge.s32.totalorder %s21, 4
    %s31 = sphi 0, %s33
    %s34 = sphi 0, %s31
    %s35 = sphi 0, %s34
    %s51 = sphi 0, %s35
    %s55 = sphi 0, %s55
    %s57 = sphi 0, %s55
    %s58 = sphi 0, %s57
    %s72 = sphi 0, %s58
    %s76 = sphi 0, %s76
    %s78 = sphi 0, %s76
    %s79 = sphi 0, %s78
    %s93 = sphi 0, %s79
    %s97 = sphi 0, %s97
    %s99 = sphi 0, %s97
    %s100 = sphi 0, %s99
    %s114 = sphi 0, %s100
    %s118 = sphi 0, %s118
    %s120 = sphi 0, %s118
    %s121 = sphi 0, %s120
    %s135 = sphi 0, %s121
    %s139 = sphi 0, %s139
    %s141 = sphi 0, %s139
    %s142 = sphi 0, %s141
    %s156 = sphi 0, %s142
    %s160 = sphi 0, %s160
    %s162 = sphi 0, %s160
    %s163 = sphi 0, %s162
    %s177 = sphi 0, %s163
    %s181 = sphi 0, %s181
    %s183 = sphi 0, %s181
    %s184 = sphi 0, %s183
    %s198 = sphi 0, %s184
    %s202 = sphi 0, %s202
    %s204 = sphi 0, %s202
    %s205 = sphi 0, %s204
    %s219 = sphi 0, %s205
    %s223 = sphi 0, %s223
    %s225 = sphi 0, %s223
    %s226 = sphi 0, %s225
    %s240 = sphi 0, %s226
    %s244 = sphi 0, %s244
    %s246 = sphi 0, %s244
    %s247 = sphi 0, %s246
    %s261 = sphi 0, %s247
    %s265 = sphi 0, %s265
    %s267 = sphi 0, %s265
    %s268 = sphi 0, %s267
    %s282 = sphi 0, %s268
    %s286 = sphi 0, %s286
    %s288 = sphi 0, %s286
    %s289 = sphi 0, %s288
    %s303 = sphi 0, %s289
    %s307 = sphi 0, %s307
    %s309 = sphi 0, %s307
    %s310 = sphi 0, %s309
    %s324 = sphi 0, %s310
    %s328 = sphi 0, %s328
    %s330 = sphi 0, %s328
    %s331 = sphi 0, %s330
    %s345 = sphi 0, %s331
    %s351 = sphi 0, %s353
    %s354 = sphi 0, %s351
    %s355 = sphi 0, %s354
    %s371 = sphi 0, %s355
  $region4: #{_forward_jit.1} parent=0 // loop_header_branch
    %24 = sbr.rel (%p22) target = $region8
  $region5: #{_forward_jit.1} parent=0 // loop_body
    %s26 = ssub.s32 %s21, 1
    %s27 = ssub.s32 %s21, 2
    %s28 = sadd.s32 %s21, 1
    %s29 = ssub.s32 %s21, %s28
    %p30 = scmp.eq.s32.totalorder %s29, 0
    %s32 = sadd.s32 %s31, 1
    %s33 = scalar_select %p30, %s31, %s32
    %p36 = pneg %p30
    %p37 = scmp.eq.s32.totalorder %s21, 1
    %p38 = por %p36, %p37
    %p39 = scmp.ne.s32.totalorder %s31, %s34
    %p40 = scmp.eq.s32.totalorder %s21, 0
    %p41 = por %p39, %p40
    %p42 = scmp.ne.s32.totalorder %s31, %s34
    %p43 = scmp.eq.s32.totalorder %s26, 1
    %p44 = por %p42, %p43
    %p45 = scmp.ne.s32.totalorder %s34, %s35
    %p46 = scmp.eq.s32.totalorder %s26, 0
    %p47 = por %p45, %p46
    %p48 = scmp.ne.s32.totalorder %s34, %s35
    %p49 = scmp.eq.s32.totalorder %s27, 1
    %p50 = por %p48, %p49
    %p52 = scmp.ne.s32.totalorder %s35, %s51
    %p53 = scmp.eq.s32.totalorder %s27, 0
    %p54 = por %p52, %p53
    %s56 = sadd.s32 %s55, 1
    %p59 = scmp.eq.s32.totalorder %s21, 1
    %p60 = scmp.ne.s32.totalorder %s55, %s57
    %p61 = scmp.eq.s32.totalorder %s21, 0
    %p62 = por %p60, %p61
    %p63 = scmp.ne.s32.totalorder %s55, %s57
    %p64 = scmp.eq.s32.totalorder %s26, 1
    %p65 = por %p63, %p64
    %p66 = scmp.ne.s32.totalorder %s57, %s58
    %p67 = scmp.eq.s32.totalorder %s26, 0
    %p68 = por %p66, %p67
    %p69 = scmp.ne.s32.totalorder %s57, %s58
    %p70 = scmp.eq.s32.totalorder %s27, 1
    %p71 = por %p69, %p70
    %p73 = scmp.ne.s32.totalorder %s58, %s72
    %p74 = scmp.eq.s32.totalorder %s27, 0
    %p75 = por %p73, %p74
    %s77 = sadd.s32 %s76, 1
    %p80 = scmp.eq.s32.totalorder %s21, 1
    %p81 = scmp.ne.s32.totalorder %s76, %s78
    %p82 = scmp.eq.s32.totalorder %s21, 0
    %p83 = por %p81, %p82
    %p84 = scmp.ne.s32.totalorder %s76, %s78
    %p85 = scmp.eq.s32.totalorder %s26, 1
    %p86 = por %p84, %p85
    %p87 = scmp.ne.s32.totalorder %s78, %s79
    %p88 = scmp.eq.s32.totalorder %s26, 0
    %p89 = por %p87, %p88
    %p90 = scmp.ne.s32.totalorder %s78, %s79
    %p91 = scmp.eq.s32.totalorder %s27, 1
    %p92 = por %p90, %p91
    %p94 = scmp.ne.s32.totalorder %s79, %s93
    %p95 = scmp.eq.s32.totalorder %s27, 0
    %p96 = por %p94, %p95
    %s98 = sadd.s32 %s97, 1
    %p101 = scmp.eq.s32.totalorder %s21, 1
    %p102 = scmp.ne.s32.totalorder %s97, %s99
    %p103 = scmp.eq.s32.totalorder %s21, 0
    %p104 = por %p102, %p103
    %p105 = scmp.ne.s32.totalorder %s97, %s99
    %p106 = scmp.eq.s32.totalorder %s26, 1
    %p107 = por %p105, %p106
    %p108 = scmp.ne.s32.totalorder %s99, %s100
    %p109 = scmp.eq.s32.totalorder %s26, 0
    %p110 = por %p108, %p109
    %p111 = scmp.ne.s32.totalorder %s99, %s100
    %p112 = scmp.eq.s32.totalorder %s27, 1
    %p113 = por %p111, %p112
    %p115 = scmp.ne.s32.totalorder %s100, %s114
    %p116 = scmp.eq.s32.totalorder %s27, 0
    %p117 = por %p115, %p116
    %s119 = sadd.s32 %s118, 1
    %p122 = scmp.eq.s32.totalorder %s21, 1
    %p123 = scmp.ne.s32.totalorder %s118, %s120
    %p124 = scmp.eq.s32.totalorder %s21, 0
    %p125 = por %p123, %p124
    %p126 = scmp.ne.s32.totalorder %s118, %s120
    %p127 = scmp.eq.s32.totalorder %s26, 1
    %p128 = por %p126, %p127
    %p129 = scmp.ne.s32.totalorder %s120, %s121
    %p130 = scmp.eq.s32.totalorder %s26, 0
    %p131 = por %p129, %p130
    %p132 = scmp.ne.s32.totalorder %s120, %s121
    %p133 = scmp.eq.s32.totalorder %s27, 1
    %p134 = por %p132, %p133
    %p136 = scmp.ne.s32.totalorder %s121, %s135
    %p137 = scmp.eq.s32.totalorder %s27, 0
    %p138 = por %p136, %p137
    %s140 = sadd.s32 %s139, 1
    %p143 = scmp.eq.s32.totalorder %s21, 1
    %p144 = scmp.ne.s32.totalorder %s139, %s141
    %p145 = scmp.eq.s32.totalorder %s21, 0
    %p146 = por %p144, %p145
    %p147 = scmp.ne.s32.totalorder %s139, %s141
    %p148 = scmp.eq.s32.totalorder %s26, 1
    %p149 = por %p147, %p148
    %p150 = scmp.ne.s32.totalorder %s141, %s142
    %p151 = scmp.eq.s32.totalorder %s26, 0
    %p152 = por %p150, %p151
    %p153 = scmp.ne.s32.totalorder %s141, %s142
    %p154 = scmp.eq.s32.totalorder %s27, 1
    %p155 = por %p153, %p154
    %p157 = scmp.ne.s32.totalorder %s142, %s156
    %p158 = scmp.eq.s32.totalorder %s27, 0
    %p159 = por %p157, %p158
    %s161 = sadd.s32 %s160, 1
    %p164 = scmp.eq.s32.totalorder %s21, 1
    %p165 = scmp.ne.s32.totalorder %s160, %s162
    %p166 = scmp.eq.s32.totalorder %s21, 0
    %p167 = por %p165, %p166
    %p168 = scmp.ne.s32.totalorder %s160, %s162
    %p169 = scmp.eq.s32.totalorder %s26, 1
    %p170 = por %p168, %p169
    %p171 = scmp.ne.s32.totalorder %s162, %s163
    %p172 = scmp.eq.s32.totalorder %s26, 0
    %p173 = por %p171, %p172
    %p174 = scmp.ne.s32.totalorder %s162, %s163
    %p175 = scmp.eq.s32.totalorder %s27, 1
    %p176 = por %p174, %p175
    %p178 = scmp.ne.s32.totalorder %s163, %s177
    %p179 = scmp.eq.s32.totalorder %s27, 0
    %p180 = por %p178, %p179
    %s182 = sadd.s32 %s181, 1
    %p185 = scmp.eq.s32.totalorder %s21, 1
    %p186 = scmp.ne.s32.totalorder %s181, %s183
    %p187 = scmp.eq.s32.totalorder %s21, 0
    %p188 = por %p186, %p187
    %p189 = scmp.ne.s32.totalorder %s181, %s183
    %p190 = scmp.eq.s32.totalorder %s26, 1
    %p191 = por %p189, %p190
    %p192 = scmp.ne.s32.totalorder %s183, %s184
    %p193 = scmp.eq.s32.totalorder %s26, 0
    %p194 = por %p192, %p193
    %p195 = scmp.ne.s32.totalorder %s183, %s184
    %p196 = scmp.eq.s32.totalorder %s27, 1
    %p197 = por %p195, %p196
    %p199 = scmp.ne.s32.totalorder %s184, %s198
    %p200 = scmp.eq.s32.totalorder %s27, 0
    %p201 = por %p199, %p200
    %s203 = sadd.s32 %s202, 1
    %p206 = scmp.eq.s32.totalorder %s21, 1
    %p207 = scmp.ne.s32.totalorder %s202, %s204
    %p208 = scmp.eq.s32.totalorder %s21, 0
    %p209 = por %p207, %p208
    %p210 = scmp.ne.s32.totalorder %s202, %s204
    %p211 = scmp.eq.s32.totalorder %s26, 1
    %p212 = por %p210, %p211
    %p213 = scmp.ne.s32.totalorder %s204, %s205
    %p214 = scmp.eq.s32.totalorder %s26, 0
    %p215 = por %p213, %p214
    %p216 = scmp.ne.s32.totalorder %s204, %s205
    %p217 = scmp.eq.s32.totalorder %s27, 1
    %p218 = por %p216, %p217
    %p220 = scmp.ne.s32.totalorder %s205, %s219
    %p221 = scmp.eq.s32.totalorder %s27, 0
    %p222 = por %p220, %p221
    %s224 = sadd.s32 %s223, 1
    %p227 = scmp.eq.s32.totalorder %s21, 1
    %p228 = scmp.ne.s32.totalorder %s223, %s225
    %p229 = scmp.eq.s32.totalorder %s21, 0
    %p230 = por %p228, %p229
    %p231 = scmp.ne.s32.totalorder %s223, %s225
    %p232 = scmp.eq.s32.totalorder %s26, 1
    %p233 = por %p231, %p232
    %p234 = scmp.ne.s32.totalorder %s225, %s226
    %p235 = scmp.eq.s32.totalorder %s26, 0
    %p236 = por %p234, %p235
    %p237 = scmp.ne.s32.totalorder %s225, %s226
    %p238 = scmp.eq.s32.totalorder %s27, 1
    %p239 = por %p237, %p238
    %p241 = scmp.ne.s32.totalorder %s226, %s240
    %p242 = scmp.eq.s32.totalorder %s27, 0
    %p243 = por %p241, %p242
    %s245 = sadd.s32 %s244, 1
    %p248 = scmp.eq.s32.totalorder %s21, 1
    %p249 = scmp.ne.s32.totalorder %s244, %s246
    %p250 = scmp.eq.s32.totalorder %s21, 0
    %p251 = por %p249, %p250
    %p252 = scmp.ne.s32.totalorder %s244, %s246
    %p253 = scmp.eq.s32.totalorder %s26, 1
    %p254 = por %p252, %p253
    %p255 = scmp.ne.s32.totalorder %s246, %s247
    %p256 = scmp.eq.s32.totalorder %s26, 0
    %p257 = por %p255, %p256
    %p258 = scmp.ne.s32.totalorder %s246, %s247
    %p259 = scmp.eq.s32.totalorder %s27, 1
    %p260 = por %p258, %p259
    %p262 = scmp.ne.s32.totalorder %s247, %s261
    %p263 = scmp.eq.s32.totalorder %s27, 0
    %p264 = por %p262, %p263
    %s266 = sadd.s32 %s265, 1
    %p269 = scmp.eq.s32.totalorder %s21, 1
    %p270 = scmp.ne.s32.totalorder %s265, %s267
    %p271 = scmp.eq.s32.totalorder %s21, 0
    %p272 = por %p270, %p271
    %p273 = scmp.ne.s32.totalorder %s265, %s267
    %p274 = scmp.eq.s32.totalorder %s26, 1
    %p275 = por %p273, %p274
    %p276 = scmp.ne.s32.totalorder %s267, %s268
    %p277 = scmp.eq.s32.totalorder %s26, 0
    %p278 = por %p276, %p277
    %p279 = scmp.ne.s32.totalorder %s267, %s268
    %p280 = scmp.eq.s32.totalorder %s27, 1
    %p281 = por %p279, %p280
    %p283 = scmp.ne.s32.totalorder %s268, %s282
    %p284 = scmp.eq.s32.totalorder %s27, 0
    %p285 = por %p283, %p284
    %s287 = sadd.s32 %s286, 1
    %p290 = scmp.eq.s32.totalorder %s21, 1
    %p291 = scmp.ne.s32.totalorder %s286, %s288
    %p292 = scmp.eq.s32.totalorder %s21, 0
    %p293 = por %p291, %p292
    %p294 = scmp.ne.s32.totalorder %s286, %s288
    %p295 = scmp.eq.s32.totalorder %s26, 1
    %p296 = por %p294, %p295
    %p297 = scmp.ne.s32.totalorder %s288, %s289
    %p298 = scmp.eq.s32.totalorder %s26, 0
    %p299 = por %p297, %p298
    %p300 = scmp.ne.s32.totalorder %s288, %s289
    %p301 = scmp.eq.s32.totalorder %s27, 1
    %p302 = por %p300, %p301
    %p304 = scmp.ne.s32.totalorder %s289, %s303
    %p305 = scmp.eq.s32.totalorder %s27, 0
    %p306 = por %p304, %p305
    %s308 = sadd.s32 %s307, 1
    %p311 = scmp.eq.s32.totalorder %s21, 1
    %p312 = scmp.ne.s32.totalorder %s307, %s309
    %p313 = scmp.eq.s32.totalorder %s21, 0
    %p314 = por %p312, %p313
    %p315 = scmp.ne.s32.totalorder %s307, %s309
    %p316 = scmp.eq.s32.totalorder %s26, 1
    %p317 = por %p315, %p316
    %p318 = scmp.ne.s32.totalorder %s309, %s310
    %p319 = scmp.eq.s32.totalorder %s26, 0
    %p320 = por %p318, %p319
    %p321 = scmp.ne.s32.totalorder %s309, %s310
    %p322 = scmp.eq.s32.totalorder %s27, 1
    %p323 = por %p321, %p322
    %p325 = scmp.ne.s32.totalorder %s310, %s324
    %p326 = scmp.eq.s32.totalorder %s27, 0
    %p327 = por %p325, %p326
    %s329 = sadd.s32 %s328, 1
    %p332 = scmp.eq.s32.totalorder %s21, 1
    %p333 = scmp.ne.s32.totalorder %s328, %s330
    %p334 = scmp.eq.s32.totalorder %s21, 0
    %p335 = por %p333, %p334
    %p336 = scmp.ne.s32.totalorder %s328, %s330
    %p337 = scmp.eq.s32.totalorder %s26, 1
    %p338 = por %p336, %p337
    %p339 = scmp.ne.s32.totalorder %s330, %s331
    %p340 = scmp.eq.s32.totalorder %s26, 0
    %p341 = por %p339, %p340
    %p342 = scmp.ne.s32.totalorder %s330, %s331
    %p343 = scmp.eq.s32.totalorder %s27, 1
    %p344 = por %p342, %p343
    %p346 = scmp.ne.s32.totalorder %s331, %s345
    %p347 = scmp.eq.s32.totalorder %s27, 0
    %p348 = por %p346, %p347
    %s349 = ssub.s32 %s21, %s28
    %p350 = scmp.eq.s32.totalorder %s349, 0
    %s352 = sadd.s32 %s351, 1
    %s353 = scalar_select %p350, %s351, %s352
    %p356 = pneg %p350
    %p357 = scmp.eq.s32.totalorder %s21, 1
    %p358 = por %p356, %p357
    %p359 = scmp.ne.s32.totalorder %s351, %s354
    %p360 = scmp.eq.s32.totalorder %s21, 0
    %p361 = por %p359, %p360
    %p362 = scmp.ne.s32.totalorder %s351, %s354
    %p363 = scmp.eq.s32.totalorder %s26, 1
    %p364 = por %p362, %p363
    %p365 = scmp.ne.s32.totalorder %s354, %s355
    %p366 = scmp.eq.s32.totalorder %s26, 0
    %p367 = por %p365, %p366
    %p368 = scmp.ne.s32.totalorder %s354, %s355
    %p369 = scmp.eq.s32.totalorder %s27, 1
    %p370 = por %p368, %p369
    %p372 = scmp.ne.s32.totalorder %s355, %s371
    %p373 = scmp.eq.s32.totalorder %s27, 0
    %p374 = por %p372, %p373
    %p375 = scmp.le.s32.totalorder 1, %s21
    %p376 = scmp.lt.s32.totalorder %s21, 3
    %p377 = pnand %p375, %p376
    %p378 = pneg %p377
    // Predicated region
    $region9: #{_forward_jit.1} parent=5 // pred_check
      _
    $region10: #{_forward_jit.1} parent=5 // pred_check_branch
      %380 = sbr.rel (%p377) target = $region12
    $region11: #{_forward_jit.1} parent=5 // pred_region
      %s381 = ssub.s32 %s21, 1
      // Predicated region
      $region13: #{_forward_jit.1} parent=11 // pred_check
        %p382 = pneg %p68
      $region14: #{_forward_jit.1} parent=11 // pred_check_branch
        %384 = sbr.rel (%p382) target = $region16
      $region15: #{_forward_jit.1} parent=11 // pred_region
        _
      $region16: #{_forward_jit.1} parent=11 // pred_fallthru
        _
      // Predicated region
      $region17: #{_forward_jit.1} parent=11 // pred_check
        %p385 = pneg %p89
      $region18: #{_forward_jit.1} parent=11 // pred_check_branch
        %387 = sbr.rel (%p385) target = $region20
      $region19: #{_forward_jit.1} parent=11 // pred_region
        _
      $region20: #{_forward_jit.1} parent=11 // pred_fallthru
        _
      // Predicated region
      $region21: #{_forward_jit.1} parent=11 // pred_check
        %p388 = pneg %p110
      $region22: #{_forward_jit.1} parent=11 // pred_check_branch
        %390 = sbr.rel (%p388) target = $region24
      $region23: #{_forward_jit.1} parent=11 // pred_region
        _
      $region24: #{_forward_jit.1} parent=11 // pred_fallthru
        _
      // Predicated region
      $region25: #{_forward_jit.1} parent=11 // pred_check
        %p391 = pneg %p131
      $region26: #{_forward_jit.1} parent=11 // pred_check_branch
        %393 = sbr.rel (%p391) target = $region28
      $region27: #{_forward_jit.1} parent=11 // pred_region
        _
      $region28: #{_forward_jit.1} parent=11 // pred_fallthru
        _
      // Predicated region
      $region29: #{_forward_jit.1} parent=11 // pred_check
        %p394 = pneg %p152
      $region30: #{_forward_jit.1} parent=11 // pred_check_branch
        %396 = sbr.rel (%p394) target = $region32
      $region31: #{_forward_jit.1} parent=11 // pred_region
        _
      $region32: #{_forward_jit.1} parent=11 // pred_fallthru
        _
      // Predicated region
      $region33: #{_forward_jit.1} parent=11 // pred_check
        %p397 = pneg %p173
      $region34: #{_forward_jit.1} parent=11 // pred_check_branch
        %399 = sbr.rel (%p397) target = $region36
      $region35: #{_forward_jit.1} parent=11 // pred_region
        _
      $region36: #{_forward_jit.1} parent=11 // pred_fallthru
        _
      // Predicated region
      $region37: #{_forward_jit.1} parent=11 // pred_check
        %p400 = pneg %p194
      $region38: #{_forward_jit.1} parent=11 // pred_check_branch
        %402 = sbr.rel (%p400) target = $region40
      $region39: #{_forward_jit.1} parent=11 // pred_region
        _
      $region40: #{_forward_jit.1} parent=11 // pred_fallthru
        _
      // Predicated region
      $region41: #{_forward_jit.1} parent=11 // pred_check
        %p403 = pneg %p215
      $region42: #{_forward_jit.1} parent=11 // pred_check_branch
        %405 = sbr.rel (%p403) target = $region44
      $region43: #{_forward_jit.1} parent=11 // pred_region
        _
      $region44: #{_forward_jit.1} parent=11 // pred_fallthru
        _
      // Predicated region
      $region45: #{_forward_jit.1} parent=11 // pred_check
        %p406 = pneg %p236
      $region46: #{_forward_jit.1} parent=11 // pred_check_branch
        %408 = sbr.rel (%p406) target = $region48
      $region47: #{_forward_jit.1} parent=11 // pred_region
        _
      $region48: #{_forward_jit.1} parent=11 // pred_fallthru
        _
      // Predicated region
      $region49: #{_forward_jit.1} parent=11 // pred_check
        %p409 = pneg %p257
      $region50: #{_forward_jit.1} parent=11 // pred_check_branch
        %411 = sbr.rel (%p409) target = $region52
      $region51: #{_forward_jit.1} parent=11 // pred_region
        _
      $region52: #{_forward_jit.1} parent=11 // pred_fallthru
        _
      // Predicated region
      $region53: #{_forward_jit.1} parent=11 // pred_check
        %p412 = pneg %p278
      $region54: #{_forward_jit.1} parent=11 // pred_check_branch
        %414 = sbr.rel (%p412) target = $region56
      $region55: #{_forward_jit.1} parent=11 // pred_region
        _
      $region56: #{_forward_jit.1} parent=11 // pred_fallthru
        _
      // Predicated region
      $region57: #{_forward_jit.1} parent=11 // pred_check
        %p415 = pneg %p299
      $region58: #{_forward_jit.1} parent=11 // pred_check_branch
        %417 = sbr.rel (%p415) target = $region60
      $region59: #{_forward_jit.1} parent=11 // pred_region
        _
      $region60: #{_forward_jit.1} parent=11 // pred_fallthru
        _
      // Predicated region
      $region61: #{_forward_jit.1} parent=11 // pred_check
        %p418 = pneg %p320
      $region62: #{_forward_jit.1} parent=11 // pred_check_branch
        %420 = sbr.rel (%p418) target = $region64
      $region63: #{_forward_jit.1} parent=11 // pred_region
        _
      $region64: #{_forward_jit.1} parent=11 // pred_fallthru
        _
      // Predicated region
      $region65: #{_forward_jit.1} parent=11 // pred_check
        %p421 = pneg %p341
      $region66: #{_forward_jit.1} parent=11 // pred_check_branch
        %423 = sbr.rel (%p421) target = $region68
      $region67: #{_forward_jit.1} parent=11 // pred_region
        _
      $region68: #{_forward_jit.1} parent=11 // pred_fallthru
        _
    $region12: #{_forward_jit.1} parent=5 // pred_fallthru
      _
    %p424 = scmp.lt.s32.totalorder %s21, 2
    // Predicated region
    $region69: #{_forward_jit.1} parent=5 // pred_check
      %p425 = pneg %p424
    $region70: #{_forward_jit.1} parent=5 // pred_check_branch
      %427 = sbr.rel (%p425) target = $region72
    $region71: #{_forward_jit.1} parent=5 // pred_region
      // Predicated region
      $region73: #{_forward_jit.1} parent=71 // pred_check
        %p428 = pneg %p41
      $region74: #{_forward_jit.1} parent=71 // pred_check_branch
        %430 = sbr.rel (%p428) target = $region76
      $region75: #{_forward_jit.1} parent=71 // pred_region
        %p431 = scmp.lt.s32.totalorder %s21, 1
        %s432 = scalar_select %p431, %s21, 1
        %s433 = smul.addr %s432, 4
        %s434 = scalar_lea.vmem %s0, %s433
      $region76: #{_forward_jit.1} parent=71 // pred_fallthru
        _
    $region72: #{_forward_jit.1} parent=5 // pred_fallthru
      _
    %p435 = scmp.le.s32.totalorder 1, %s21
    %p436 = scmp.lt.s32.totalorder %s21, 3
    %p437 = pnand %p435, %p436
    %p438 = pneg %p437
    // Predicated region
    $region77: #{_forward_jit.1} parent=5 // pred_check
      _
    $region78: #{_forward_jit.1} parent=5 // pred_check_branch
      %440 = sbr.rel (%p437) target = $region80
    $region79: #{_forward_jit.1} parent=5 // pred_region
      %s441 = ssub.s32 %s21, 1
      %p442 = scmp.lt.s32.totalorder %s26, 1
      %s443 = scalar_select %p442, %s26, 1
      %s444 = smul.addr %s443, 4
      %s445 = scalar_lea.vmem %s0, %s444
      %p446 = pneg %p47
      %p447 = pneg %p44
      %p448 = pneg %p68
      %p449 = pneg %p65
      %p450 = pneg %p89
      %p451 = pneg %p86
      %p452 = pneg %p110
      %p453 = pneg %p107
      %p454 = pneg %p131
      %p455 = pneg %p128
      %p456 = pneg %p152
      %p457 = pneg %p149
      %p458 = pneg %p173
      %p459 = pneg %p170
      %p460 = pneg %p194
      %p461 = pneg %p191
      %p462 = pneg %p215
      %p463 = pneg %p212
      %p464 = pneg %p236
      %p465 = pneg %p233
      %p466 = pneg %p257
      %p467 = pneg %p254
      %p468 = pneg %p278
      %p469 = pneg %p275
      %p470 = pneg %p299
      %p471 = pneg %p296
      %p472 = pneg %p320
      %p473 = pneg %p317
      %p474 = pneg %p341
      %p475 = pneg %p338
      %p476 = pneg %p367
      %p477 = pneg %p364
      %p478 = scmp.lt.s32.totalorder %s26, 1
      %s479 = scalar_select %p478, %s26, 1
      %s480 = smul.addr %s479, 8
      %s481 = scalar_lea.vmem %s15, %s480
      %p482 = scmp.lt.s32.totalorder %s26, 1
      %s483 = scalar_select %p482, %s26, 1
      %s484 = smul.addr %s483, 4
      %s485 = scalar_lea.vmem %s0, %s484
      %p486 = scmp.lt.s32.totalorder %s26, 1
      %s487 = scalar_select %p486, %s26, 1
      %s488 = smul.addr %s487, 8
      %s489 = scalar_lea.vmem %s15, %s488
      %v490 = vld [vmem:[%s485] sm:$0xf]
      %v491 = vld [vmem:[%s2] sm:$0x1]
      %492 = vadd.xlane.f32.xlu0 0.0
      %v493 = vpop.xlane.xlu0 %492
      %v494 = vrcp.pop 32.0
      %v495 = vmul.f32 %v493, %v494
      %v496 = vadd.f32 %v495, 1e-06
      %v497 = vrsqrt.pop %v496
      %v498 = vmul.f32 %v497, 0.0
      %v500 = vlaneseq
      %v501 = vshrl.u32 %v500, 7
      %v502 = vsub.s32 0, %v501
      %v503 = vrot.slane %v491, %v502
      %v505 = vmul.f32 %v498, %v503
      %v506 = vld [vmem:[%s3] sm:$0xff]
      %v507 = vld [vmem:[%s3 + $0x8] sm:$0xff]
      %v508 = vld [vmem:[%s3 + $0x10] sm:$0xff]
      %v509 = vld [vmem:[%s3 + $0x18] sm:$0xff]
      %v510 = vld [vmem:[%s3 + $0x20] sm:$0xff]
      %v511 = vld [vmem:[%s3 + $0x28] sm:$0xff]
      %v512 = vld [vmem:[%s3 + $0x30] sm:$0xff]
      %v513 = vld [vmem:[%s3 + $0x38] sm:$0xff]
      %v514 = vld [vmem:[%s3 + $0x40] sm:$0xff]
      %v515 = vld [vmem:[%s3 + $0x48] sm:$0xff]
      %v516 = vld [vmem:[%s3 + $0x50] sm:$0xff]
      %v517 = vld [vmem:[%s3 + $0x58] sm:$0xff]
      %v518 = vld [vmem:[%s3 + $0x60] sm:$0xff]
      %v519 = vld [vmem:[%s3 + $0x68] sm:$0xff]
      %v520 = vld [vmem:[%s3 + $0x70] sm:$0xff]
      %v521 = vld [vmem:[%s3 + $0x78] sm:$0xff]
      %v522 = vld [vmem:[%s3 + $0x80] sm:$0xff]
      %v523 = vld [vmem:[%s3 + $0x88] sm:$0xff]
      %v524 = vld [vmem:[%s3 + $0x90] sm:$0xff]
      %v525 = vld [vmem:[%s3 + $0x98] sm:$0xff]
      %v526 = vld [vmem:[%s3 + $0xa0] sm:$0xff]
      %v527 = vld [vmem:[%s3 + $0xa8] sm:$0xff]
      %v528 = vld [vmem:[%s3 + $0xb0] sm:$0xff]
      %v529 = vld [vmem:[%s3 + $0xb8] sm:$0xff]
      %v530 = vld [vmem:[%s3 + $0xc0] sm:$0xff]
      %v531 = vld [vmem:[%s3 + $0xc8] sm:$0xff]
      %v532 = vld [vmem:[%s3 + $0xd0] sm:$0xff]
      %v533 = vld [vmem:[%s3 + $0xd8] sm:$0xff]
      %v534 = vld [vmem:[%s3 + $0xe0] sm:$0xff]
      %v535 = vld [vmem:[%s3 + $0xe8] sm:$0xff]
      %v536 = vld [vmem:[%s3 + $0xf0] sm:$0xff]
      %v537 = vld [vmem:[%s3 + $0xf8] sm:$0xff]
      %v538 = vld [vmem:[%s3 + $0x100] sm:$0xff]
      %v539 = vld [vmem:[%s3 + $0x108] sm:$0xff]
      %v540 = vld [vmem:[%s3 + $0x110] sm:$0xff]
      %v541 = vld [vmem:[%s3 + $0x118] sm:$0xff]
      %v542 = vld [vmem:[%s3 + $0x120] sm:$0xff]
      %v543 = vld [vmem:[%s3 + $0x128] sm:$0xff]
      %v544 = vld [vmem:[%s3 + $0x130] sm:$0xff]
      %v545 = vld [vmem:[%s3 + $0x138] sm:$0xff]
      %v546 = vld [vmem:[%s3 + $0x140] sm:$0xff]
      %v547 = vld [vmem:[%s3 + $0x148] sm:$0xff]
      %v548 = vld [vmem:[%s3 + $0x150] sm:$0xff]
      %v549 = vld [vmem:[%s3 + $0x158] sm:$0xff]
      %v550 = vld [vmem:[%s3 + $0x160] sm:$0xff]
      %v551 = vld [vmem:[%s3 + $0x168] sm:$0xff]
      %v552 = vld [vmem:[%s3 + $0x170] sm:$0xff]
      %v553 = vld [vmem:[%s3 + $0x178] sm:$0xff]
      %vm554 = vcmask 261120
      %v556 = vsel %vm554, %v505, 0
      %558 = vmatprep.subr.mxu0 %v507
      %559 = vmatpush1.msra.mxu0 %v506
      %560 = vmatprep.subr.mxu0 %v519
      %561 = vmatpush1.msra.mxu0 %v518
      %562 = vmatprep.subr.mxu0 %v531
      %563 = vmatpush1.msra.mxu0 %v530
      %564 = vmatprep.subr.mxu0 %v543
      %565 = vmatpush1.msra.mxu0 %v542
      %566 = vmatprep.subr.mxu0 0.0
      %567 = vmatpush1.msra.mxu0 0.0
      %568 = vmatprep.subr.mxu0 0.0
      %569 = vmatpush1.msra.mxu0 0.0
      %570 = vmatprep.subr.mxu0 0.0
      %571 = vmatpush1.msra.mxu0 0.0
      %572 = vmatprep.subr.mxu0 0.0
      %573 = vmatpush1.msra.mxu0 0.0
      %574 = vmatprep.subr.mxu0 0.0
      %575 = vmatpush1.msra.mxu0 0.0
      %576 = vmatprep.subr.mxu0 0.0
      %577 = vmatpush1.msra.mxu0 0.0
      %578 = vmatprep.subr.mxu0 0.0
      %579 = vmatpush1.msra.mxu0 0.0
      %580 = vmatprep.subr.mxu0 0.0
      %581 = vmatpush1.msra.mxu0 0.0
      %582 = vmatprep.subr.mxu0 0.0
      %583 = vmatpush1.msra.mxu0 0.0
      %584 = vmatprep.subr.mxu0 0.0
      %585 = vmatpush1.msra.mxu0 0.0
      %586 = vmatprep.subr.mxu0 0.0
      %587 = vmatpush1.msra.mxu0 0.0
      %588 = vmatprep.subr.mxu0 0.0
      %589 = vmatpush1.msra.mxu0 0.0
      %590 = vmatprep.subr.mxu0 0.0
      %591 = vmatpush1.msra.mxu0 0.0
      %592 = vmatprep.subr.mxu0 0.0
      %593 = vmatpush1.msra.mxu0 0.0
      %594 = vmatprep.subr.mxu0 0.0
      %595 = vmatpush1.msra.mxu0 0.0
      %596 = vmatprep.subr.mxu0 0.0
      %597 = vmatpush1.msra.mxu0 0.0
      %598 = vmatprep.subr.mxu0 0.0
      %599 = vmatpush1.msra.mxu0 0.0
      %600 = vmatprep.subr.mxu0 0.0
      %601 = vmatpush1.msra.mxu0 0.0
      %602 = vmatprep.subr.mxu0 0.0
      %603 = vmatpush1.msra.mxu0 0.0
      %604 = vmatprep.subr.mxu0 0.0
      %605 = vmatpush1.msra.mxu0 0.0
      %606 = vmatprep.subr.mxu0 0.0
      %607 = vmatpush1.msra.mxu0 0.0
      %608 = vmatprep.subr.mxu0 0.0
      %609 = vmatpush1.msra.mxu0 0.0
      %610 = vmatprep.subr.mxu0 0.0
      %611 = vmatpush1.msra.mxu0 0.0
      %612 = vmatprep.subr.mxu0 0.0
      %613 = vmatpush1.msra.mxu0 0.0
      %614 = vmatprep.subr.mxu0 0.0
      %615 = vmatpush1.msra.mxu0 0.0
      %616 = vmatprep.subr.mxu0 0.0
      %617 = vmatpush1.msra.mxu0 0.0
      %618 = vmatprep.subr.mxu0 0.0
      %619 = vmatpush1.msra.mxu0 0.0
      %620 = vmatprep.subr.mxu0 0.0
      %621 = vmatpush1.msra.mxu0 0.0
      %622 = vmatprep.mubr.f32.mxu0 0.0
      %623 = vmatmul.mubr.f32.gmra.mrb[0].mxu0 %v556
      %v624 = vpop.f32.mrb[0].mxu0
      %v625 = vadd.f32 0.0, %v624
      %v626 = vpop.f32.mrb[0].mxu0
      %v627 = vadd.f32 0.0, %v626
      %628 = vdwg.mxu0
      %629 = vmatprep.subr.mxu0 %v509
      %630 = vmatpush1.msra.mxu0 %v508
      %631 = vmatprep.subr.mxu0 %v521
      %632 = vmatpush1.msra.mxu0 %v520
      %633 = vmatprep.subr.mxu0 %v533
      %634 = vmatpush1.msra.mxu0 %v532
      %635 = vmatprep.subr.mxu0 %v545
      %636 = vmatpush1.msra.mxu0 %v544
      %637 = vmatprep.subr.mxu0 0.0
      %638 = vmatpush1.msra.mxu0 0.0
      %639 = vmatprep.subr.mxu0 0.0
      %640 = vmatpush1.msra.mxu0 0.0
      %641 = vmatprep.subr.mxu0 0.0
      %642 = vmatpush1.msra.mxu0 0.0
      %643 = vmatprep.subr.mxu0 0.0
      %644 = vmatpush1.msra.mxu0 0.0
      %645 = vmatprep.subr.mxu0 0.0
      %646 = vmatpush1.msra.mxu0 0.0
      %647 = vmatprep.subr.mxu0 0.0
      %648 = vmatpush1.msra.mxu0 0.0
      %649 = vmatprep.subr.mxu0 0.0
      %650 = vmatpush1.msra.mxu0 0.0
      %651 = vmatprep.subr.mxu0 0.0
      %652 = vmatpush1.msra.mxu0 0.0
      %653 = vmatprep.subr.mxu0 0.0
      %654 = vmatpush1.msra.mxu0 0.0
      %655 = vmatprep.subr.mxu0 0.0
      %656 = vmatpush1.msra.mxu0 0.0
      %657 = vmatprep.subr.mxu0 0.0
      %658 = vmatpush1.msra.mxu0 0.0
      %659 = vmatprep.subr.mxu0 0.0
      %660 = vmatpush1.msra.mxu0 0.0
      %661 = vmatprep.subr.mxu0 0.0
      %662 = vmatpush1.msra.mxu0 0.0
      %663 = vmatprep.subr.mxu0 0.0
      %664 = vmatpush1.msra.mxu0 0.0
      %665 = vmatprep.subr.mxu0 0.0
      %666 = vmatpush1.msra.mxu0 0.0
      %667 = vmatprep.subr.mxu0 0.0
      %668 = vmatpush1.msra.mxu0 0.0
      %669 = vmatprep.subr.mxu0 0.0
      %670 = vmatpush1.msra.mxu0 0.0
      %671 = vmatprep.subr.mxu0 0.0
      %672 = vmatpush1.msra.mxu0 0.0
      %673 = vmatprep.subr.mxu0 0.0
      %674 = vmatpush1.msra.mxu0 0.0
      %675 = vmatprep.subr.mxu0 0.0
      %676 = vmatpush1.msra.mxu0 0.0
      %677 = vmatprep.subr.mxu0 0.0
      %678 = vmatpush1.msra.mxu0 0.0
      %679 = vmatprep.subr.mxu0 0.0
      %680 = vmatpush1.msra.mxu0 0.0
      %681 = vmatprep.subr.mxu0 0.0
      %682 = vmatpush1.msra.mxu0 0.0
      %683 = vmatprep.subr.mxu0 0.0
      %684 = vmatpush1.msra.mxu0 0.0
      %685 = vmatprep.subr.mxu0 0.0
      %686 = vmatpush1.msra.mxu0 0.0
      %687 = vmatprep.subr.mxu0 0.0
      %688 = vmatpush1.msra.mxu0 0.0
      %689 = vmatprep.subr.mxu0 0.0
      %690 = vmatpush1.msra.mxu0 0.0
      %691 = vmatprep.subr.mxu0 0.0
      %692 = vmatpush1.msra.mxu0 0.0
      %693 = vmatprep.mubr.f32.mxu0 0.0
      %694 = vmatmul.mubr.f32.gmra.mrb[0].mxu0 %v556
      %v695 = vpop.f32.mrb[0].mxu0
      %v696 = vadd.f32 0.0, %v695
      %v697 = vpop.f32.mrb[0].mxu0
      %v698 = vadd.f32 0.0, %v697
      %699 = vdwg.mxu0
      %700 = vmatprep.subr.mxu0 %v511
      %701 = vmatpush1.msra.mxu0 %v510
      %702 = vmatprep.subr.mxu0 %v523
      %703 = vmatpush1.msra.mxu0 %v522
      %704 = vmatprep.subr.mxu0 %v535
      %705 = vmatpush1.msra.mxu0 %v534
      %706 = vmatprep.subr.mxu0 %v547
      %707 = vmatpush1.msra.mxu0 %v546
      %708 = vmatprep.subr.mxu0 0.0
      %709 = vmatpush1.msra.mxu0 0.0
      %710 = vmatprep.subr.mxu0 0.0
      %711 = vmatpush1.msra.mxu0 0.0
      %712 = vmatprep.subr.mxu0 0.0
      %713 = vmatpush1.msra.mxu0 0.0
      %714 = vmatprep.subr.mxu0 0.0
      %715 = vmatpush1.msra.mxu0 0.0
      %716 = vmatprep.subr.mxu0 0.0
      %717 = vmatpush1.msra.mxu0 0.0
      %718 = vmatprep.subr.mxu0 0.0
      %719 = vmatpush1.msra.mxu0 0.0
      %720 = vmatprep.subr.mxu0 0.0
      %721 = vmatpush1.msra.mxu0 0.0
      %722 = vmatprep.subr.mxu0 0.0
      %723 = vmatpush1.msra.mxu0 0.0
      %724 = vmatprep.subr.mxu0 0.0
      %725 = vmatpush1.msra.mxu0 0.0
      %726 = vmatprep.subr.mxu0 0.0
      %727 = vmatpush1.msra.mxu0 0.0
      %728 = vmatprep.subr.mxu0 0.0
      %729 = vmatpush1.msra.mxu0 0.0
      %730 = vmatprep.subr.mxu0 0.0
      %731 = vmatpush1.msra.mxu0 0.0
      %732 = vmatprep.subr.mxu0 0.0
      %733 = vmatpush1.msra.mxu0 0.0
      %734 = vmatprep.subr.mxu0 0.0
      %735 = vmatpush1.msra.mxu0 0.0
      %736 = vmatprep.subr.mxu0 0.0
      %737 = vmatpush1.msra.mxu0 0.0
      %738 = vmatprep.subr.mxu0 0.0
      %739 = vmatpush1.msra.mxu0 0.0
      %740 = vmatprep.subr.mxu0 0.0
      %741 = vmatpush1.msra.mxu0 0.0
      %742 = vmatprep.subr.mxu0 0.0
      %743 = vmatpush1.msra.mxu0 0.0
      %744 = vmatprep.subr.mxu0 0.0
      %745 = vmatpush1.msra.mxu0 0.0
      %746 = vmatprep.subr.mxu0 0.0
      %747 = vmatpush1.msra.mxu0 0.0
      %748 = vmatprep.subr.mxu0 0.0
      %749 = vmatpush1.msra.mxu0 0.0
      %750 = vmatprep.subr.mxu0 0.0
      %751 = vmatpush1.msra.mxu0 0.0
      %752 = vmatprep.subr.mxu0 0.0
      %753 = vmatpush1.msra.mxu0 0.0
      %754 = vmatprep.subr.mxu0 0.0
      %755 = vmatpush1.msra.mxu0 0.0
      %756 = vmatprep.subr.mxu0 0.0
      %757 = vmatpush1.msra.mxu0 0.0
      %758 = vmatprep.subr.mxu0 0.0
      %759 = vmatpush1.msra.mxu0 0.0
      %760 = vmatprep.subr.mxu0 0.0
      %761 = vmatpush1.msra.mxu0 0.0
      %762 = vmatprep.subr.mxu0 0.0
      %763 = vmatpush1.msra.mxu0 0.0
      %764 = vmatprep.mubr.f32.mxu0 0.0
      %765 = vmatmul.mubr.f32.gmra.mrb[0].mxu0 %v556
      %v766 = vpop.f32.mrb[0].mxu0
      %v767 = vadd.f32 0.0, %v766
      %v768 = vpop.f32.mrb[0].mxu0
      %v769 = vadd.f32 0.0, %v768
      %770 = vdwg.mxu0
      %771 = vmatprep.subr.mxu0 %v513
      %772 = vmatpush1.msra.mxu0 %v512
      %773 = vmatprep.subr.mxu0 %v525
      %774 = vmatpush1.msra.mxu0 %v524
      %775 = vmatprep.subr.mxu0 %v537
      %776 = vmatpush1.msra.mxu0 %v536
      %777 = vmatprep.subr.mxu0 %v549
      %778 = vmatpush1.msra.mxu0 %v548
      %779 = vmatprep.subr.mxu0 0.0
      %780 = vmatpush1.msra.mxu0 0.0
      %781 = vmatprep.subr.mxu0 0.0
      %782 = vmatpush1.msra.mxu0 0.0
      %783 = vmatprep.subr.mxu0 0.0
      %784 = vmatpush1.msra.mxu0 0.0
      %785 = vmatprep.subr.mxu0 0.0
      %786 = vmatpush1.msra.mxu0 0.0
      %787 = vmatprep.subr.mxu0 0.0
      %788 = vmatpush1.msra.mxu0 0.0
      %789 = vmatprep.subr.mxu0 0.0
      %790 = vmatpush1.msra.mxu0 0.0
      %791 = vmatprep.subr.mxu0 0.0
      %792 = vmatpush1.msra.mxu0 0.0
      %793 = vmatprep.subr.mxu0 0.0
      %794 = vmatpush1.msra.mxu0 0.0
      %795 = vmatprep.subr.mxu0 0.0
      %796 = vmatpush1.msra.mxu0 0.0
      %797 = vmatprep.subr.mxu0 0.0
      %798 = vmatpush1.msra.mxu0 0.0
      %799 = vmatprep.subr.mxu0 0.0
      %800 = vmatpush1.msra.mxu0 0.0
      %801 = vmatprep.subr.mxu0 0.0
      %802 = vmatpush1.msra.mxu0 0.0
      %803 = vmatprep.subr.mxu0 0.0
      %804 = vmatpush1.msra.mxu0 0.0
      %805 = vmatprep.subr.mxu0 0.0
      %806 = vmatpush1.msra.mxu0 0.0
      %807 = vmatprep.subr.mxu0 0.0
      %808 = vmatpush1.msra.mxu0 0.0
      %809 = vmatprep.subr.mxu0 0.0
      %810 = vmatpush1.msra.mxu0 0.0
      %811 = vmatprep.subr.mxu0 0.0
      %812 = vmatpush1.msra.mxu0 0.0
      %813 = vmatprep.subr.mxu0 0.0
      %814 = vmatpush1.msra.mxu0 0.0
      %815 = vmatprep.subr.mxu0 0.0
      %816 = vmatpush1.msra.mxu0 0.0
      %817 = vmatprep.subr.mxu0 0.0
      %818 = vmatpush1.msra.mxu0 0.0
      %819 = vmatprep.subr.mxu0 0.0
      %820 = vmatpush1.msra.mxu0 0.0
      %821 = vmatprep.subr.mxu0 0.0
      %822 = vmatpush1.msra.mxu0 0.0
      %823 = vmatprep.subr.mxu0 0.0
      %824 = vmatpush1.msra.mxu0 0.0
      %825 = vmatprep.subr.mxu0 0.0
      %826 = vmatpush1.msra.mxu0 0.0
      %827 = vmatprep.subr.mxu0 0.0
      %828 = vmatpush1.msra.mxu0 0.0
      %829 = vmatprep.subr.mxu0 0.0
      %830 = vmatpush1.msra.mxu0 0.0
      %831 = vmatprep.subr.mxu0 0.0
      %832 = vmatpush1.msra.mxu0 0.0
      %833 = vmatprep.subr.mxu0 0.0
      %834 = vmatpush1.msra.mxu0 0.0
      %835 = vmatprep.mubr.f32.mxu0 0.0
      %836 = vmatmul.mubr.f32.gmra.mrb[0].mxu0 %v556
      %v837 = vpop.f32.mrb[0].mxu0
      %v838 = vadd.f32 0.0, %v837
      %v839 = vpop.f32.mrb[0].mxu0
      %v840 = vadd.f32 0.0, %v839
      %841 = vdwg.mxu0
      %842 = vmatprep.subr.mxu0 %v515
      %843 = vmatpush1.msra.mxu0 %v514
      %844 = vmatprep.subr.mxu0 %v527
      %845 = vmatpush1.msra.mxu0 %v526
      %846 = vmatprep.subr.mxu0 %v539
      %847 = vmatpush1.msra.mxu0 %v538
      %848 = vmatprep.subr.mxu0 %v551
      %849 = vmatpush1.msra.mxu0 %v550
      %850 = vmatprep.subr.mxu0 0.0
      %851 = vmatpush1.msra.mxu0 0.0
      %852 = vmatprep.subr.mxu0 0.0
      %853 = vmatpush1.msra.mxu0 0.0
      %854 = vmatprep.subr.mxu0 0.0
      %855 = vmatpush1.msra.mxu0 0.0
      %856 = vmatprep.subr.mxu0 0.0
      %857 = vmatpush1.msra.mxu0 0.0
      %858 = vmatprep.subr.mxu0 0.0
      %859 = vmatpush1.msra.mxu0 0.0
      %860 = vmatprep.subr.mxu0 0.0
      %861 = vmatpush1.msra.mxu0 0.0
      %862 = vmatprep.subr.mxu0 0.0
      %863 = vmatpush1.msra.mxu0 0.0
      %864 = vmatprep.subr.mxu0 0.0
      %865 = vmatpush1.msra.mxu0 0.0
      %866 = vmatprep.subr.mxu0 0.0
      %867 = vmatpush1.msra.mxu0 0.0
      %868 = vmatprep.subr.mxu0 0.0
      %869 = vmatpush1.msra.mxu0 0.0
      %870 = vmatprep.subr.mxu0 0.0
      %871 = vmatpush1.msra.mxu0 0.0
      %872 = vmatprep.subr.mxu0 0.0
      %873 = vmatpush1.msra.mxu0 0.0
      %874 = vmatprep.subr.mxu0 0.0
      %875 = vmatpush1.msra.mxu0 0.0
      %876 = vmatprep.subr.mxu0 0.0
      %877 = vmatpush1.msra.mxu0 0.0
      %878 = vmatprep.subr.mxu0 0.0
      %879 = vmatpush1.msra.mxu0 0.0
      %880 = vmatprep.subr.mxu0 0.0
      %881 = vmatpush1.msra.mxu0 0.0
      %882 = vmatprep.subr.mxu0 0.0
      %883 = vmatpush1.msra.mxu0 0.0
      %884 = vmatprep.subr.mxu0 0.0
      %885 = vmatpush1.msra.mxu0 0.0
      %886 = vmatprep.subr.mxu0 0.0
      %887 = vmatpush1.msra.mxu0 0.0
      %888 = vmatprep.subr.mxu0 0.0
      %889 = vmatpush1.msra.mxu0 0.0
      %890 = vmatprep.subr.mxu0 0.0
      %891 = vmatpush1.msra.mxu0 0.0
      %892 = vmatprep.subr.mxu0 0.0
      %893 = vmatpush1.msra.mxu0 0.0
      %894 = vmatprep.subr.mxu0 0.0
      %895 = vmatpush1.msra.mxu0 0.0
      %896 = vmatprep.subr.mxu0 0.0
      %897 = vmatpush1.msra.mxu0 0.0
      %898 = vmatprep.subr.mxu0 0.0
      %899 = vmatpush1.msra.mxu0 0.0
      %900 = vmatprep.subr.mxu0 0.0
      %901 = vmatpush1.msra.mxu0 0.0
      %902 = vmatprep.subr.mxu0 0.0
      %903 = vmatpush1.msra.mxu0 0.0
      %904 = vmatprep.subr.mxu0 0.0
      %905 = vmatpush1.msra.mxu0 0.0
      %906 = vmatprep.mubr.f32.mxu0 0.0
      %907 = vmatmul.mubr.f32.gmra.mrb[0].mxu0 %v556
      %v908 = vpop.f32.mrb[0].mxu0
      %v909 = vadd.f32 0.0, %v908
      %v910 = vpop.f32.mrb[0].mxu0
      %v911 = vadd.f32 0.0, %v910
      %912 = vdwg.mxu0
      %913 = vmatprep.subr.mxu0 %v517
      %914 = vmatpush1.msra.mxu0 %v516
      %915 = vmatprep.subr.mxu0 %v529
      %916 = vmatpush1.msra.mxu0 %v528
      %917 = vmatprep.subr.mxu0 %v541
      %918 = vmatpush1.msra.mxu0 %v540
      %919 = vmatprep.subr.mxu0 %v553
      %920 = vmatpush1.msra.mxu0 %v552
      %921 = vmatprep.subr.mxu0 0.0
      %922 = vmatpush1.msra.mxu0 0.0
      %923 = vmatprep.subr.mxu0 0.0
      %924 = vmatpush1.msra.mxu0 0.0
      %925 = vmatprep.subr.mxu0 0.0
      %926 = vmatpush1.msra.mxu0 0.0
      %927 = vmatprep.subr.mxu0 0.0
      %928 = vmatpush1.msra.mxu0 0.0
      %929 = vmatprep.subr.mxu0 0.0
      %930 = vmatpush1.msra.mxu0 0.0
      %931 = vmatprep.subr.mxu0 0.0
      %932 = vmatpush1.msra.mxu0 0.0
      %933 = vmatprep.subr.mxu0 0.0
      %934 = vmatpush1.msra.mxu0 0.0
      %935 = vmatprep.subr.mxu0 0.0
      %936 = vmatpush1.msra.mxu0 0.0
      %937 = vmatprep.subr.mxu0 0.0
      %938 = vmatpush1.msra.mxu0 0.0
      %939 = vmatprep.subr.mxu0 0.0
      %940 = vmatpush1.msra.mxu0 0.0
      %941 = vmatprep.subr.mxu0 0.0
      %942 = vmatpush1.msra.mxu0 0.0
      %943 = vmatprep.subr.mxu0 0.0
      %944 = vmatpush1.msra.mxu0 0.0
      %945 = vmatprep.subr.mxu0 0.0
      %946 = vmatpush1.msra.mxu0 0.0
      %947 = vmatprep.subr.mxu0 0.0
      %948 = vmatpush1.msra.mxu0 0.0
      %949 = vmatprep.subr.mxu0 0.0
      %950 = vmatpush1.msra.mxu0 0.0
      %951 = vmatprep.subr.mxu0 0.0
      %952 = vmatpush1.msra.mxu0 0.0
      %953 = vmatprep.subr.mxu0 0.0
      %954 = vmatpush1.msra.mxu0 0.0
      %955 = vmatprep.subr.mxu0 0.0
      %956 = vmatpush1.msra.mxu0 0.0
      %957 = vmatprep.subr.mxu0 0.0
      %958 = vmatpush1.msra.mxu0 0.0
      %959 = vmatprep.subr.mxu0 0.0
      %960 = vmatpush1.msra.mxu0 0.0
      %961 = vmatprep.subr.mxu0 0.0
      %962 = vmatpush1.msra.mxu0 0.0
      %963 = vmatprep.subr.mxu0 0.0
      %964 = vmatpush1.msra.mxu0 0.0
      %965 = vmatprep.subr.mxu0 0.0
      %966 = vmatpush1.msra.mxu0 0.0
      %967 = vmatprep.subr.mxu0 0.0
      %968 = vmatpush1.msra.mxu0 0.0
      %969 = vmatprep.subr.mxu0 0.0
      %970 = vmatpush1.msra.mxu0 0.0
      %971 = vmatprep.subr.mxu0 0.0
      %972 = vmatpush1.msra.mxu0 0.0
      %973 = vmatprep.subr.mxu0 0.0
      %974 = vmatpush1.msra.mxu0 0.0
      %975 = vmatprep.subr.mxu0 0.0
      %976 = vmatpush1.msra.mxu0 0.0
      %977 = vmatprep.mubr.f32.mxu0 0.0
      %978 = vmatmul.mubr.f32.gmra.mrb[0].mxu0 %v556
      %v979 = vpop.f32.mrb[0].mxu0
      %v980 = vadd.f32 0.0, %v979
      %v981 = vpop.f32.mrb[0].mxu0
      %v982 = vadd.f32 0.0, %v981
      %983 = vdwg.mxu0
      %v984 = vld [vmem:[%s1] sm:$0xff]
      %985 = vmatprep.subr.mxu0 0.0
      %986 = vmatpush1.xpose.msra.mxu0 %v767
      %987 = vmatprep.subr.mxu0 0.0
      %988 = vmatpush1.xpose.msra.mxu0 0.0
      %989 = vmatprep.subr.mxu0 0.0
      %990 = vmatpush1.xpose.msra.mxu0 0.0
      %991 = vmatprep.subr.mxu0 0.0
      %992 = vmatpush1.xpose.msra.mxu0 0.0
      %993 = vmatprep.subr.mxu0 0.0
      %994 = vmatpush1.xpose.msra.mxu0 0.0
      %995 = vmatprep.subr.mxu0 0.0
      %996 = vmatpush1.xpose.msra.mxu0 0.0
      %997 = vmatprep.subr.mxu0 0.0
      %998 = vmatpush1.xpose.msra.mxu0 0.0
      %999 = vmatprep.subr.mxu0 0.0
      %1000 = vmatpush1.xpose.msra.mxu0 0.0
      %1001 = vmatprep.subr.mxu0 0.0
      %1002 = vmatpush1.xpose.msra.mxu0 0.0
      %1003 = vmatprep.subr.mxu0 0.0
      %1004 = vmatpush1.xpose.msra.mxu0 0.0
      %1005 = vmatprep.subr.mxu0 0.0
      %1006 = vmatpush1.xpose.msra.mxu0 0.0
      %1007 = vmatprep.subr.mxu0 0.0
      %1008 = vmatpush1.xpose.msra.mxu0 0.0
      %1009 = vmatprep.subr.mxu0 0.0
      %1010 = vmatpush1.xpose.msra.mxu0 0.0
      %1011 = vmatprep.subr.mxu0 0.0
      %1012 = vmatpush1.xpose.msra.mxu0 0.0
      %1013 = vmatprep.subr.mxu0 0.0
      %1014 = vmatpush1.xpose.msra.mxu0 0.0
      %1015 = vmatprep.subr.mxu0 0.0
      %1016 = vmatpush1.xpose.msra.mxu0 0.0
      %1017 = vmatprep.subr.mxu0 0.0
      %1018 = vmatpush1.xpose.msra.mxu0 0.0
      %1019 = vmatprep.subr.mxu0 0.0
      %1020 = vmatpush1.xpose.msra.mxu0 0.0
      %1021 = vmatprep.subr.mxu0 0.0
      %1022 = vmatpush1.xpose.msra.mxu0 0.0
      %1023 = vmatprep.subr.mxu0 0.0
      %1024 = vmatpush1.xpose.msra.mxu0 0.0
      %1025 = vmatprep.subr.mxu0 0.0
      %1026 = vmatpush1.xpose.msra.mxu0 0.0
      %1027 = vmatprep.subr.mxu0 0.0
      %1028 = vmatpush1.xpose.msra.mxu0 0.0
      %1029 = vmatprep.subr.mxu0 0.0
      %1030 = vmatpush1.xpose.msra.mxu0 0.0
      %1031 = vmatprep.subr.mxu0 0.0
      %1032 = vmatpush1.xpose.msra.mxu0 0.0
      %1033 = vmatprep.subr.mxu0 0.0
      %1034 = vmatpush1.xpose.msra.mxu0 0.0
      %1035 = vmatprep.subr.mxu0 0.0
      %1036 = vmatpush1.xpose.msra.mxu0 0.0
      %1037 = vmatprep.subr.mxu0 0.0
      %1038 = vmatpush1.xpose.msra.mxu0 0.0
      %1039 = vmatprep.subr.mxu0 0.0
      %1040 = vmatpush1.xpose.msra.mxu0 0.0
      %1041 = vmatprep.subr.mxu0 0.0
      %1042 = vmatpush1.xpose.msra.mxu0 0.0
      %1043 = vmatprep.subr.mxu0 0.0
      %1044 = vmatpush1.xpose.msra.mxu0 0.0
      %1045 = vmatprep.subr.mxu0 0.0
      %1046 = vmatpush1.xpose.msra.mxu0 0.0
      %1047 = vmatprep.subr.mxu0 0.0
      %1048 = vmatpush1.xpose.msra.mxu0 0.0
      %1049 = vmatprep.mubr.f32.mxu0 0.0
      %1050 = vmatmul.mubr.f32.gmra.mrb[0].mxu0 %v625
      %v1051 = vpop.f32.mrb[0].mxu0
      %v1052 = vadd.f32 %v984, %v1051
      %v1053 = vpop.f32.mrb[0].mxu0
      %1054 = vdwg.mxu0
      %s1055 = scalar_lea.vmem %s1, 8
      %v1056 = vld [vmem:[%s1055] sm:$0xff]
      %1057 = vmatprep.subr.mxu0 0.0
      %1058 = vmatpush1.xpose.msra.mxu0 %v769
      %1059 = vmatprep.subr.mxu0 0.0
      %1060 = vmatpush1.xpose.msra.mxu0 0.0
      %1061 = vmatprep.subr.mxu0 0.0
      %1062 = vmatpush1.xpose.msra.mxu0 0.0
      %1063 = vmatprep.subr.mxu0 0.0
      %1064 = vmatpush1.xpose.msra.mxu0 0.0
      %1065 = vmatprep.subr.mxu0 0.0
      %1066 = vmatpush1.xpose.msra.mxu0 0.0
      %1067 = vmatprep.subr.mxu0 0.0
      %1068 = vmatpush1.xpose.msra.mxu0 0.0
      %1069 = vmatprep.subr.mxu0 0.0
      %1070 = vmatpush1.xpose.msra.mxu0 0.0
      %1071 = vmatprep.subr.mxu0 0.0
      %1072 = vmatpush1.xpose.msra.mxu0 0.0
      %1073 = vmatprep.subr.mxu0 0.0
      %1074 = vmatpush1.xpose.msra.mxu0 0.0
      %1075 = vmatprep.subr.mxu0 0.0
      %1076 = vmatpush1.xpose.msra.mxu0 0.0
      %1077 = vmatprep.subr.mxu0 0.0
      %1078 = vmatpush1.xpose.msra.mxu0 0.0
      %1079 = vmatprep.subr.mxu0 0.0
      %1080 = vmatpush1.xpose.msra.mxu0 0.0
      %1081 = vmatprep.subr.mxu0 0.0
      %1082 = vmatpush1.xpose.msra.mxu0 0.0
      %1083 = vmatprep.subr.mxu0 0.0
      %1084 = vmatpush1.xpose.msra.mxu0 0.0
      %1085 = vmatprep.subr.mxu0 0.0
      %1086 = vmatpush1.xpose.msra.mxu0 0.0
      %1087 = vmatprep.subr.mxu0 0.0
      %1088 = vmatpush1.xpose.msra.mxu0 0.0
      %1089 = vmatprep.subr.mxu0 0.0
      %1090 = vmatpush1.xpose.msra.mxu0 0.0
      %1091 = vmatprep.subr.mxu0 0.0
      %1092 = vmatpush1.xpose.msra.mxu0 0.0
      %1093 = vmatprep.subr.mxu0 0.0
      %1094 = vmatpush1.xpose.msra.mxu0 0.0
      %1095 = vmatprep.subr.mxu0 0.0
      %1096 = vmatpush1.xpose.msra.mxu0 0.0
      %1097 = vmatprep.subr.mxu0 0.0
      %1098 = vmatpush1.xpose.msra.mxu0 0.0
      %1099 = vmatprep.subr.mxu0 0.0
      %1100 = vmatpush1.xpose.msra.mxu0 0.0
      %1101 = vmatprep.subr.mxu0 0.0
      %1102 = vmatpush1.xpose.msra.mxu0 0.0
      %1103 = vmatprep.subr.mxu0 0.0
      %1104 = vmatpush1.xpose.msra.mxu0 0.0
      %1105 = vmatprep.subr.mxu0 0.0
      %1106 = vmatpush1.xpose.msra.mxu0 0.0
      %1107 = vmatprep.subr.mxu0 0.0
      %1108 = vmatpush1.xpose.msra.mxu0 0.0
      %1109 = vmatprep.subr.mxu0 0.0
      %1110 = vmatpush1.xpose.msra.mxu0 0.0
      %1111 = vmatprep.subr.mxu0 0.0
      %1112 = vmatpush1.xpose.msra.mxu0 0.0
      %1113 = vmatprep.subr.mxu0 0.0
      %1114 = vmatpush1.xpose.msra.mxu0 0.0
      %1115 = vmatprep.subr.mxu0 0.0
      %1116 = vmatpush1.xpose.msra.mxu0 0.0
      %1117 = vmatprep.subr.mxu0 0.0
      %1118 = vmatpush1.xpose.msra.mxu0 0.0
      %1119 = vmatprep.subr.mxu0 0.0
      %1120 = vmatpush1.xpose.msra.mxu0 0.0
      %1121 = vmatprep.mubr.f32.mxu0 0.0
      %1122 = vmatmul.mubr.f32.gmra.mrb[0].mxu0 %v627
      %v1123 = vpop.f32.mrb[0].mxu0
      %v1124 = vadd.f32 %v1056, %v1123
      %v1125 = vpop.f32.mrb[0].mxu0
      %1126 = vdwg.mxu0
      %s1127 = scalar_lea.vmem %s1, 16
      %v1128 = vld [vmem:[%s1127] sm:$0xff]
      %1129 = vmatprep.subr.mxu0 0.0
      %1130 = vmatpush1.xpose.msra.mxu0 %v838
      %1131 = vmatprep.subr.mxu0 0.0
      %1132 = vmatpush1.xpose.msra.mxu0 0.0
      %1133 = vmatprep.subr.mxu0 0.0
      %1134 = vmatpush1.xpose.msra.mxu0 0.0
      %1135 = vmatprep.subr.mxu0 0.0
      %1136 = vmatpush1.xpose.msra.mxu0 0.0
      %1137 = vmatprep.subr.mxu0 0.0
      %1138 = vmatpush1.xpose.msra.mxu0 0.0
      %1139 = vmatprep.subr.mxu0 0.0
      %1140 = vmatpush1.xpose.msra.mxu0 0.0
      %1141 = vmatprep.subr.mxu0 0.0
      %1142 = vmatpush1.xpose.msra.mxu0 0.0
      %1143 = vmatprep.subr.mxu0 0.0
      %1144 = vmatpush1.xpose.msra.mxu0 0.0
      %1145 = vmatprep.subr.mxu0 0.0
      %1146 = vmatpush1.xpose.msra.mxu0 0.0
      %1147 = vmatprep.subr.mxu0 0.0
      %1148 = vmatpush1.xpose.msra.mxu0 0.0
      %1149 = vmatprep.subr.mxu0 0.0
      %1150 = vmatpush1.xpose.msra.mxu0 0.0
      %1151 = vmatprep.subr.mxu0 0.0
      %1152 = vmatpush1.xpose.msra.mxu0 0.0
      %1153 = vmatprep.subr.mxu0 0.0
      %1154 = vmatpush1.xpose.msra.mxu0 0.0
      %1155 = vmatprep.subr.mxu0 0.0
      %1156 = vmatpush1.xpose.msra.mxu0 0.0
      %1157 = vmatprep.subr.mxu0 0.0
      %1158 = vmatpush1.xpose.msra.mxu0 0.0
      %1159 = vmatprep.subr.mxu0 0.0
      %1160 = vmatpush1.xpose.msra.mxu0 0.0
      %1161 = vmatprep.subr.mxu0 0.0
      %1162 = vmatpush1.xpose.msra.mxu0 0.0
      %1163 = vmatprep.subr.mxu0 0.0
      %1164 = vmatpush1.xpose.msra.mxu0 0.0
      %1165 = vmatprep.subr.mxu0 0.0
      %1166 = vmatpush1.xpose.msra.mxu0 0.0
      %1167 = vmatprep.subr.mxu0 0.0
      %1168 = vmatpush1.xpose.msra.mxu0 0.0
      %1169 = vmatprep.subr.mxu0 0.0
      %1170 = vmatpush1.xpose.msra.mxu0 0.0
      %1171 = vmatprep.subr.mxu0 0.0
      %1172 = vmatpush1.xpose.msra.mxu0 0.0
      %1173 = vmatprep.subr.mxu0 0.0
      %1174 = vmatpush1.xpose.msra.mxu0 0.0
      %1175 = vmatprep.subr.mxu0 0.0
      %1176 = vmatpush1.xpose.msra.mxu0 0.0
      %1177 = vmatprep.subr.mxu0 0.0
      %1178 = vmatpush1.xpose.msra.mxu0 0.0
      %1179 = vmatprep.subr.mxu0 0.0
      %1180 = vmatpush1.xpose.msra.mxu0 0.0
      %1181 = vmatprep.subr.mxu0 0.0
      %1182 = vmatpush1.xpose.msra.mxu0 0.0
      %1183 = vmatprep.subr.mxu0 0.0
      %1184 = vmatpush1.xpose.msra.mxu0 0.0
      %1185 = vmatprep.subr.mxu0 0.0
      %1186 = vmatpush1.xpose.msra.mxu0 0.0
      %1187 = vmatprep.subr.mxu0 0.0
      %1188 = vmatpush1.xpose.msra.mxu0 0.0
      %1189 = vmatprep.subr.mxu0 0.0
      %1190 = vmatpush1.xpose.msra.mxu0 0.0
      %1191 = vmatprep.subr.mxu0 0.0
      %1192 = vmatpush1.xpose.msra.mxu0 0.0
      %1193 = vmatprep.mubr.f32.mxu0 0.0
      %1194 = vmatmul.mubr.f32.gmra.mrb[0].mxu0 %v696
      %v1195 = vpop.f32.mrb[0].mxu0
      %v1196 = vadd.f32 %v1128, %v1195
      %v1197 = vpop.f32.mrb[0].mxu0
      %1198 = vdwg.mxu0
      %s1199 = scalar_lea.vmem %s1, 24
      %v1200 = vld [vmem:[%s1199] sm:$0xff]
      %1201 = vmatprep.subr.mxu0 0.0
      %1202 = vmatpush1.xpose.msra.mxu0 %v840
      %1203 = vmatprep.subr.mxu0 0.0
      %1204 = vmatpush1.xpose.msra.mxu0 0.0
      %1205 = vmatprep.subr.mxu0 0.0
      %1206 = vmatpush1.xpose.msra.mxu0 0.0
      %1207 = vmatprep.subr.mxu0 0.0
      %1208 = vmatpush1.xpose.msra.mxu0 0.0
      %1209 = vmatprep.subr.mxu0 0.0
      %1210 = vmatpush1.xpose.msra.mxu0 0.0
      %1211 = vmatprep.subr.mxu0 0.0
      %1212 = vmatpush1.xpose.msra.mxu0 0.0
      %1213 = vmatprep.subr.mxu0 0.0
      %1214 = vmatpush1.xpose.msra.mxu0 0.0
      %1215 = vmatprep.subr.mxu0 0.0
      %1216 = vmatpush1.xpose.msra.mxu0 0.0
      %1217 = vmatprep.subr.mxu0 0.0
      %1218 = vmatpush1.xpose.msra.mxu0 0.0
      %1219 = vmatprep.subr.mxu0 0.0
      %1220 = vmatpush1.xpose.msra.mxu0 0.0
      %1221 = vmatprep.subr.mxu0 0.0
      %1222 = vmatpush1.xpose.msra.mxu0 0.0
      %1223 = vmatprep.subr.mxu0 0.0
      %1224 = vmatpush1.xpose.msra.mxu0 0.0
      %1225 = vmatprep.subr.mxu0 0.0
      %1226 = vmatpush1.xpose.msra.mxu0 0.0
      %1227 = vmatprep.subr.mxu0 0.0
      %1228 = vmatpush1.xpose.msra.mxu0 0.0
      %1229 = vmatprep.subr.mxu0 0.0
      %1230 = vmatpush1.xpose.msra.mxu0 0.0
      %1231 = vmatprep.subr.mxu0 0.0
      %1232 = vmatpush1.xpose.msra.mxu0 0.0
      %1233 = vmatprep.subr.mxu0 0.0
      %1234 = vmatpush1.xpose.msra.mxu0 0.0
      %1235 = vmatprep.subr.mxu0 0.0
      %1236 = vmatpush1.xpose.msra.mxu0 0.0
      %1237 = vmatprep.subr.mxu0 0.0
      %1238 = vmatpush1.xpose.msra.mxu0 0.0
      %1239 = vmatprep.subr.mxu0 0.0
      %1240 = vmatpush1.xpose.msra.mxu0 0.0
      %1241 = vmatprep.subr.mxu0 0.0
      %1242 = vmatpush1.xpose.msra.mxu0 0.0
      %1243 = vmatprep.subr.mxu0 0.0
      %1244 = vmatpush1.xpose.msra.mxu0 0.0
      %1245 = vmatprep.subr.mxu0 0.0
      %1246 = vmatpush1.xpose.msra.mxu0 0.0
      %1247 = vmatprep.subr.mxu0 0.0
      %1248 = vmatpush1.xpose.msra.mxu0 0.0
      %1249 = vmatprep.subr.mxu0 0.0
      %1250 = vmatpush1.xpose.msra.mxu0 0.0
      %1251 = vmatprep.subr.mxu0 0.0
      %1252 = vmatpush1.xpose.msra.mxu0 0.0
      %1253 = vmatprep.subr.mxu0 0.0
      %1254 = vmatpush1.xpose.msra.mxu0 0.0
      %1255 = vmatprep.subr.mxu0 0.0
      %1256 = vmatpush1.xpose.msra.mxu0 0.0
      %1257 = vmatprep.subr.mxu0 0.0
      %1258 = vmatpush1.xpose.msra.mxu0 0.0
      %1259 = vmatprep.subr.mxu0 0.0
      %1260 = vmatpush1.xpose.msra.mxu0 0.0
      %1261 = vmatprep.subr.mxu0 0.0
      %1262 = vmatpush1.xpose.msra.mxu0 0.0
      %1263 = vmatprep.subr.mxu0 0.0
      %1264 = vmatpush1.xpose.msra.mxu0 0.0
      %1265 = vmatprep.mubr.f32.mxu0 0.0
      %1266 = vmatmul.mubr.f32.gmra.mrb[0].mxu0 %v698
      %v1267 = vpop.f32.mrb[0].mxu0
      %v1268 = vadd.f32 %v1200, %v1267
      %v1269 = vpop.f32.mrb[0].mxu0
      %1270 = vdwg.mxu0
      %vm1271 = vcmask 64512
      %v1272 = vsel %vm1271, %v1052, -inf
      %1273 = vmax.xlane.f32.xlu0 %v1272
      %v1274 = vpop.xlane.xlu0 %1273
      %v1275 = vsel %vm1271, %v1124, -inf
      %1276 = vmax.xlane.f32.xlu0 %v1275
      %v1277 = vpop.xlane.xlu0 %1276
      %v1278 = vsel %vm1271, %v1196, -inf
      %1279 = vmax.xlane.f32.xlu0 %v1278
      %v1280 = vpop.xlane.xlu0 %1279
      %v1281 = vsel %vm1271, %v1268, -inf
      %1282 = vmax.xlane.f32.xlu0 %v1281
      %v1283 = vpop.xlane.xlu0 %1282
      %v1284 = vsub.f32 %v1052, %v1274
      %v1285 = vsub.f32 %v1124, %v1277
      %v1286 = vsub.f32 %v1196, %v1280
      %v1287 = vsub.f32 %v1268, %v1283
      %v1288 = vmul.f32 %v1284, 1.442695
      %v1289 = vpow.pop %v1288
      %v1290 = vmul.f32 %v1285, 1.442695
      %v1291 = vpow.pop %v1290
      %v1292 = vmul.f32 %v1286, 1.442695
      %v1293 = vpow.pop %v1292
      %v1294 = vmul.f32 %v1287, 1.442695
      %v1295 = vpow.pop %v1294
      %v1296 = vsel %vm1271, %v1289, 0.0
      %1297 = vadd.xlane.f32.xlu0 %v1296
      %v1298 = vpop.xlane.xlu0 %1297
      %v1299 = vsel %vm1271, %v1291, 0.0
      %1300 = vadd.xlane.f32.xlu0 %v1299
      %v1301 = vpop.xlane.xlu0 %1300
      %v1302 = vsel %vm1271, %v1293, 0.0
      %1303 = vadd.xlane.f32.xlu0 %v1302
      %v1304 = vpop.xlane.xlu0 %1303
      %v1305 = vsel %vm1271, %v1295, 0.0
      %1306 = vadd.xlane.f32.xlu0 %v1305
      %v1307 = vpop.xlane.xlu0 %1306
      %v1308 = vrcp.pop %v1298
      %v1309 = vmul.f32 %v1289, %v1308
      %v1310 = vrcp.pop %v1301
      %v1311 = vmul.f32 %v1291, %v1310
      %v1312 = vrcp.pop %v1304
      %v1313 = vmul.f32 %v1293, %v1312
      %v1314 = vrcp.pop %v1307
      %v1315 = vmul.f32 %v1295, %v1314
      %v1317 = vsel %vm1271, %v1309, 0
      %1319 = vmatprep.subr.mxu0 0.0
      %1320 = vmatpush1.msra.mxu0 %v909
      %1321 = vmatprep.subr.mxu0 0.0
      %1322 = vmatpush1.msra.mxu0 0.0
      %1323 = vmatprep.subr.mxu0 0.0
      %1324 = vmatpush1.msra.mxu0 0.0
      %1325 = vmatprep.subr.mxu0 0.0
      %1326 = vmatpush1.msra.mxu0 0.0
      %1327 = vmatprep.subr.mxu0 0.0
      %1328 = vmatpush1.msra.mxu0 0.0
      %1329 = vmatprep.subr.mxu0 0.0
      %1330 = vmatpush1.msra.mxu0 0.0
      %1331 = vmatprep.subr.mxu0 0.0
      %1332 = vmatpush1.msra.mxu0 0.0
      %1333 = vmatprep.subr.mxu0 0.0
      %1334 = vmatpush1.msra.mxu0 0.0
      %1335 = vmatprep.subr.mxu0 0.0
      %1336 = vmatpush1.msra.mxu0 0.0
      %1337 = vmatprep.subr.mxu0 0.0
      %1338 = vmatpush1.msra.mxu0 0.0
      %1339 = vmatprep.subr.mxu0 0.0
      %1340 = vmatpush1.msra.mxu0 0.0
      %1341 = vmatprep.subr.mxu0 0.0
      %1342 = vmatpush1.msra.mxu0 0.0
      %1343 = vmatprep.subr.mxu0 0.0
      %1344 = vmatpush1.msra.mxu0 0.0
      %1345 = vmatprep.subr.mxu0 0.0
      %1346 = vmatpush1.msra.mxu0 0.0
      %1347 = vmatprep.subr.mxu0 0.0
      %1348 = vmatpush1.msra.mxu0 0.0
      %1349 = vmatprep.subr.mxu0 0.0
      %1350 = vmatpush1.msra.mxu0 0.0
      %1351 = vmatprep.subr.mxu0 0.0
      %1352 = vmatpush1.msra.mxu0 0.0
      %1353 = vmatprep.subr.mxu0 0.0
      %1354 = vmatpush1.msra.mxu0 0.0
      %1355 = vmatprep.subr.mxu0 0.0
      %1356 = vmatpush1.msra.mxu0 0.0
      %1357 = vmatprep.subr.mxu0 0.0
      %1358 = vmatpush1.msra.mxu0 0.0
      %1359 = vmatprep.subr.mxu0 0.0
      %1360 = vmatpush1.msra.mxu0 0.0
      %1361 = vmatprep.subr.mxu0 0.0
      %1362 = vmatpush1.msra.mxu0 0.0
      %1363 = vmatprep.subr.mxu0 0.0
      %1364 = vmatpush1.msra.mxu0 0.0
      %1365 = vmatprep.subr.mxu0 0.0
      %1366 = vmatpush1.msra.mxu0 0.0
      %1367 = vmatprep.subr.mxu0 0.0
      %1368 = vmatpush1.msra.mxu0 0.0
      %1369 = vmatprep.subr.mxu0 0.0
      %1370 = vmatpush1.msra.mxu0 0.0
      %1371 = vmatprep.subr.mxu0 0.0
      %1372 = vmatpush1.msra.mxu0 0.0
      %1373 = vmatprep.subr.mxu0 0.0
      %1374 = vmatpush1.msra.mxu0 0.0
      %1375 = vmatprep.subr.mxu0 0.0
      %1376 = vmatpush1.msra.mxu0 0.0
      %1377 = vmatprep.subr.mxu0 0.0
      %1378 = vmatpush1.msra.mxu0 0.0
      %1379 = vmatprep.subr.mxu0 0.0
      %1380 = vmatpush1.msra.mxu0 0.0
      %1381 = vmatprep.subr.mxu0 0.0
      %1382 = vmatpush1.msra.mxu0 0.0
      %1383 = vmatprep.mubr.f32.mxu0 0.0
      %1384 = vmatmul.mubr.f32.gmra.mrb[0].mxu0 %v1317
      %v1385 = vpop.f32.mrb[0].mxu0
      %v1386 = vadd.f32 0.0, %v1385
      %v1387 = vpop.f32.mrb[0].mxu0
      %1388 = vdwg.mxu0
      %v1390 = vsel %vm1271, %v1311, 0
      %1392 = vmatprep.subr.mxu0 0.0
      %1393 = vmatpush1.msra.mxu0 %v911
      %1394 = vmatprep.subr.mxu0 0.0
      %1395 = vmatpush1.msra.mxu0 0.0
      %1396 = vmatprep.subr.mxu0 0.0
      %1397 = vmatpush1.msra.mxu0 0.0
      %1398 = vmatprep.subr.mxu0 0.0
      %1399 = vmatpush1.msra.mxu0 0.0
      %1400 = vmatprep.subr.mxu0 0.0
      %1401 = vmatpush1.msra.mxu0 0.0
      %1402 = vmatprep.subr.mxu0 0.0
      %1403 = vmatpush1.msra.mxu0 0.0
      %1404 = vmatprep.subr.mxu0 0.0
      %1405 = vmatpush1.msra.mxu0 0.0
      %1406 = vmatprep.subr.mxu0 0.0
      %1407 = vmatpush1.msra.mxu0 0.0
      %1408 = vmatprep.subr.mxu0 0.0
      %1409 = vmatpush1.msra.mxu0 0.0
      %1410 = vmatprep.subr.mxu0 0.0
      %1411 = vmatpush1.msra.mxu0 0.0
      %1412 = vmatprep.subr.mxu0 0.0
      %1413 = vmatpush1.msra.mxu0 0.0
      %1414 = vmatprep.subr.mxu0 0.0
      %1415 = vmatpush1.msra.mxu0 0.0
      %1416 = vmatprep.subr.mxu0 0.0
      %1417 = vmatpush1.msra.mxu0 0.0
      %1418 = vmatprep.subr.mxu0 0.0
      %1419 = vmatpush1.msra.mxu0 0.0
      %1420 = vmatprep.subr.mxu0 0.0
      %1421 = vmatpush1.msra.mxu0 0.0
      %1422 = vmatprep.subr.mxu0 0.0
      %1423 = vmatpush1.msra.mxu0 0.0
      %1424 = vmatprep.subr.mxu0 0.0
      %1425 = vmatpush1.msra.mxu0 0.0
      %1426 = vmatprep.subr.mxu0 0.0
      %1427 = vmatpush1.msra.mxu0 0.0
      %1428 = vmatprep.subr.mxu0 0.0
      %1429 = vmatpush1.msra.mxu0 0.0
      %1430 = vmatprep.subr.mxu0 0.0
      %1431 = vmatpush1.msra.mxu0 0.0
      %1432 = vmatprep.subr.mxu0 0.0
      %1433 = vmatpush1.msra.mxu0 0.0
      %1434 = vmatprep.subr.mxu0 0.0
      %1435 = vmatpush1.msra.mxu0 0.0
      %1436 = vmatprep.subr.mxu0 0.0
      %1437 = vmatpush1.msra.mxu0 0.0
      %1438 = vmatprep.subr.mxu0 0.0
      %1439 = vmatpush1.msra.mxu0 0.0
      %1440 = vmatprep.subr.mxu0 0.0
      %1441 = vmatpush1.msra.mxu0 0.0
      %1442 = vmatprep.subr.mxu0 0.0
      %1443 = vmatpush1.msra.mxu0 0.0
      %1444 = vmatprep.subr.mxu0 0.0
      %1445 = vmatpush1.msra.mxu0 0.0
      %1446 = vmatprep.subr.mxu0 0.0
      %1447 = vmatpush1.msra.mxu0 0.0
      %1448 = vmatprep.subr.mxu0 0.0
      %1449 = vmatpush1.msra.mxu0 0.0
      %1450 = vmatprep.subr.mxu0 0.0
      %1451 = vmatpush1.msra.mxu0 0.0
      %1452 = vmatprep.subr.mxu0 0.0
      %1453 = vmatpush1.msra.mxu0 0.0
      %1454 = vmatprep.subr.mxu0 0.0
      %1455 = vmatpush1.msra.mxu0 0.0
      %1456 = vmatprep.mubr.f32.mxu0 0.0
      %1457 = vmatmul.mubr.f32.gmra.mrb[0].mxu0 %v1390
      %v1458 = vpop.f32.mrb[0].mxu0
      %v1459 = vadd.f32 0.0, %v1458
      %v1460 = vpop.f32.mrb[0].mxu0
      %1461 = vdwg.mxu0
      %v1463 = vsel %vm1271, %v1313, 0
      %1465 = vmatprep.subr.mxu0 0.0
      %1466 = vmatpush1.msra.mxu0 %v980
      %1467 = vmatprep.subr.mxu0 0.0
      %1468 = vmatpush1.msra.mxu0 0.0
      %1469 = vmatprep.subr.mxu0 0.0
      %1470 = vmatpush1.msra.mxu0 0.0
      %1471 = vmatprep.subr.mxu0 0.0
      %1472 = vmatpush1.msra.mxu0 0.0
      %1473 = vmatprep.subr.mxu0 0.0
      %1474 = vmatpush1.msra.mxu0 0.0
      %1475 = vmatprep.subr.mxu0 0.0
      %1476 = vmatpush1.msra.mxu0 0.0
      %1477 = vmatprep.subr.mxu0 0.0
      %1478 = vmatpush1.msra.mxu0 0.0
      %1479 = vmatprep.subr.mxu0 0.0
      %1480 = vmatpush1.msra.mxu0 0.0
      %1481 = vmatprep.subr.mxu0 0.0
      %1482 = vmatpush1.msra.mxu0 0.0
      %1483 = vmatprep.subr.mxu0 0.0
      %1484 = vmatpush1.msra.mxu0 0.0
      %1485 = vmatprep.subr.mxu0 0.0
      %1486 = vmatpush1.msra.mxu0 0.0
      %1487 = vmatprep.subr.mxu0 0.0
      %1488 = vmatpush1.msra.mxu0 0.0
      %1489 = vmatprep.subr.mxu0 0.0
      %1490 = vmatpush1.msra.mxu0 0.0
      %1491 = vmatprep.subr.mxu0 0.0
      %1492 = vmatpush1.msra.mxu0 0.0
      %1493 = vmatprep.subr.mxu0 0.0
      %1494 = vmatpush1.msra.mxu0 0.0
      %1495 = vmatprep.subr.mxu0 0.0
      %1496 = vmatpush1.msra.mxu0 0.0
      %1497 = vmatprep.subr.mxu0 0.0
      %1498 = vmatpush1.msra.mxu0 0.0
      %1499 = vmatprep.subr.mxu0 0.0
      %1500 = vmatpush1.msra.mxu0 0.0
      %1501 = vmatprep.subr.mxu0 0.0
      %1502 = vmatpush1.msra.mxu0 0.0
      %1503 = vmatprep.subr.mxu0 0.0
      %1504 = vmatpush1.msra.mxu0 0.0
      %1505 = vmatprep.subr.mxu0 0.0
      %1506 = vmatpush1.msra.mxu0 0.0
      %1507 = vmatprep.subr.mxu0 0.0
      %1508 = vmatpush1.msra.mxu0 0.0
      %1509 = vmatprep.subr.mxu0 0.0
      %1510 = vmatpush1.msra.mxu0 0.0
      %1511 = vmatprep.subr.mxu0 0.0
      %1512 = vmatpush1.msra.mxu0 0.0
      %1513 = vmatprep.subr.mxu0 0.0
      %1514 = vmatpush1.msra.mxu0 0.0
      %1515 = vmatprep.subr.mxu0 0.0
      %1516 = vmatpush1.msra.mxu0 0.0
      %1517 = vmatprep.subr.mxu0 0.0
      %1518 = vmatpush1.msra.mxu0 0.0
      %1519 = vmatprep.subr.mxu0 0.0
      %1520 = vmatpush1.msra.mxu0 0.0
      %1521 = vmatprep.subr.mxu0 0.0
      %1522 = vmatpush1.msra.mxu0 0.0
      %1523 = vmatprep.subr.mxu0 0.0
      %1524 = vmatpush1.msra.mxu0 0.0
      %1525 = vmatprep.subr.mxu0 0.0
      %1526 = vmatpush1.msra.mxu0 0.0
      %1527 = vmatprep.subr.mxu0 0.0
      %1528 = vmatpush1.msra.mxu0 0.0
      %1529 = vmatprep.mubr.f32.mxu0 0.0
      %1530 = vmatmul.mubr.f32.gmra.mrb[0].mxu0 %v1463
      %v1531 = vpop.f32.mrb[0].mxu0
      %v1532 = vadd.f32 0.0, %v1531
      %v1533 = vpop.f32.mrb[0].mxu0
      %1534 = vdwg.mxu0
      %v1536 = vsel %vm1271, %v1315, 0
      %1538 = vmatprep.subr.mxu0 0.0
      %1539 = vmatpush1.msra.mxu0 %v982
      %1540 = vmatprep.subr.mxu0 0.0
      %1541 = vmatpush1.msra.mxu0 0.0
      %1542 = vmatprep.subr.mxu0 0.0
      %1543 = vmatpush1.msra.mxu0 0.0
      %1544 = vmatprep.subr.mxu0 0.0
      %1545 = vmatpush1.msra.mxu0 0.0
      %1546 = vmatprep.subr.mxu0 0.0
      %1547 = vmatpush1.msra.mxu0 0.0
      %1548 = vmatprep.subr.mxu0 0.0
      %1549 = vmatpush1.msra.mxu0 0.0
      %1550 = vmatprep.subr.mxu0 0.0
      %1551 = vmatpush1.msra.mxu0 0.0
      %1552 = vmatprep.subr.mxu0 0.0
      %1553 = vmatpush1.msra.mxu0 0.0
      %1554 = vmatprep.subr.mxu0 0.0
      %1555 = vmatpush1.msra.mxu0 0.0
      %1556 = vmatprep.subr.mxu0 0.0
      %1557 = vmatpush1.msra.mxu0 0.0
      %1558 = vmatprep.subr.mxu0 0.0
      %1559 = vmatpush1.msra.mxu0 0.0
      %1560 = vmatprep.subr.mxu0 0.0
      %1561 = vmatpush1.msra.mxu0 0.0
      %1562 = vmatprep.subr.mxu0 0.0
      %1563 = vmatpush1.msra.mxu0 0.0
      %1564 = vmatprep.subr.mxu0 0.0
      %1565 = vmatpush1.msra.mxu0 0.0
      %1566 = vmatprep.subr.mxu0 0.0
      %1567 = vmatpush1.msra.mxu0 0.0
      %1568 = vmatprep.subr.mxu0 0.0
      %1569 = vmatpush1.msra.mxu0 0.0
      %1570 = vmatprep.subr.mxu0 0.0
      %1571 = vmatpush1.msra.mxu0 0.0
      %1572 = vmatprep.subr.mxu0 0.0
      %1573 = vmatpush1.msra.mxu0 0.0
      %1574 = vmatprep.subr.mxu0 0.0
      %1575 = vmatpush1.msra.mxu0 0.0
      %1576 = vmatprep.subr.mxu0 0.0
      %1577 = vmatpush1.msra.mxu0 0.0
      %1578 = vmatprep.subr.mxu0 0.0
      %1579 = vmatpush1.msra.mxu0 0.0
      %1580 = vmatprep.subr.mxu0 0.0
      %1581 = vmatpush1.msra.mxu0 0.0
      %1582 = vmatprep.subr.mxu0 0.0
      %1583 = vmatpush1.msra.mxu0 0.0
      %1584 = vmatprep.subr.mxu0 0.0
      %1585 = vmatpush1.msra.mxu0 0.0
      %1586 = vmatprep.subr.mxu0 0.0
      %1587 = vmatpush1.msra.mxu0 0.0
      %1588 = vmatprep.subr.mxu0 0.0
      %1589 = vmatpush1.msra.mxu0 0.0
      %1590 = vmatprep.subr.mxu0 0.0
      %1591 = vmatpush1.msra.mxu0 0.0
      %1592 = vmatprep.subr.mxu0 0.0
      %1593 = vmatpush1.msra.mxu0 0.0
      %1594 = vmatprep.subr.mxu0 0.0
      %1595 = vmatpush1.msra.mxu0 0.0
      %1596 = vmatprep.subr.mxu0 0.0
      %1597 = vmatpush1.msra.mxu0 0.0
      %1598 = vmatprep.subr.mxu0 0.0
      %1599 = vmatpush1.msra.mxu0 0.0
      %1600 = vmatprep.subr.mxu0 0.0
      %1601 = vmatpush1.msra.mxu0 0.0
      %1602 = vmatprep.mubr.f32.mxu0 0.0
      %1603 = vmatmul.mubr.f32.gmra.mrb[0].mxu0 %v1536
      %v1604 = vpop.f32.mrb[0].mxu0
      %v1605 = vadd.f32 0.0, %v1604
      %v1606 = vpop.f32.mrb[0].mxu0
      %1607 = vdwg.mxu0
      %v1608 = vld [vmem:[%s4] sm:$0xff]
      %v1609 = vld [vmem:[%s4 + $0x8] sm:$0xff]
      %v1610 = vld [vmem:[%s4 + $0x10] sm:$0xff]
      %v1611 = vld [vmem:[%s4 + $0x18] sm:$0xff]
      %v1612 = vld [vmem:[%s4 + $0x20] sm:$0xff]
      %v1613 = vld [vmem:[%s4 + $0x28] sm:$0xff]
      %v1614 = vld [vmem:[%s4 + $0x30] sm:$0xff]
      %v1615 = vld [vmem:[%s4 + $0x38] sm:$0xff]
      %v1616 = vld [vmem:[%s4 + $0x40] sm:$0xff]
      %v1617 = vld [vmem:[%s4 + $0x48] sm:$0xff]
      %v1618 = vld [vmem:[%s4 + $0x50] sm:$0xff]
      %v1619 = vld [vmem:[%s4 + $0x58] sm:$0xff]
      %v1620 = vld [vmem:[%s4 + $0x60] sm:$0xff]
      %v1621 = vld [vmem:[%s4 + $0x68] sm:$0xff]
      %v1622 = vld [vmem:[%s4 + $0x70] sm:$0xff]
      %v1623 = vld [vmem:[%s4 + $0x78] sm:$0xff]
      %v1624 = vld [vmem:[%s4 + $0x80] sm:$0xff]
      %v1625 = vld [vmem:[%s4 + $0x88] sm:$0xff]
      %v1626 = vld [vmem:[%s4 + $0x90] sm:$0xff]
      %v1627 = vld [vmem:[%s4 + $0x98] sm:$0xff]
      %v1628 = vld [vmem:[%s4 + $0xa0] sm:$0xff]
      %v1629 = vld [vmem:[%s4 + $0xa8] sm:$0xff]
      %v1630 = vld [vmem:[%s4 + $0xb0] sm:$0xff]
      %v1631 = vld [vmem:[%s4 + $0xb8] sm:$0xff]
      %v1632 = vld [vmem:[%s4 + $0xc0] sm:$0xff]
      %v1633 = vld [vmem:[%s4 + $0xc8] sm:$0xff]
      %v1634 = vld [vmem:[%s4 + $0xd0] sm:$0xff]
      %v1635 = vld [vmem:[%s4 + $0xd8] sm:$0xff]
      %v1636 = vld [vmem:[%s4 + $0xe0] sm:$0xff]
      %v1637 = vld [vmem:[%s4 + $0xe8] sm:$0xff]
      %v1638 = vld [vmem:[%s4 + $0xf0] sm:$0xff]
      %v1639 = vld [vmem:[%s4 + $0xf8] sm:$0xff]
      %v1640 = vld [vmem:[%s4 + $0x100] sm:$0xff]
      %v1641 = vld [vmem:[%s4 + $0x108] sm:$0xff]
      %v1642 = vld [vmem:[%s4 + $0x110] sm:$0xff]
      %v1643 = vld [vmem:[%s4 + $0x118] sm:$0xff]
      %v1644 = vld [vmem:[%s4 + $0x120] sm:$0xff]
      %v1645 = vld [vmem:[%s4 + $0x128] sm:$0xff]
      %v1646 = vld [vmem:[%s4 + $0x130] sm:$0xff]
      %v1647 = vld [vmem:[%s4 + $0x138] sm:$0xff]
      %v1648 = vld [vmem:[%s4 + $0x140] sm:$0xff]
      %v1649 = vld [vmem:[%s4 + $0x148] sm:$0xff]
      %v1650 = vld [vmem:[%s4 + $0x150] sm:$0xff]
      %v1651 = vld [vmem:[%s4 + $0x158] sm:$0xff]
      %v1652 = vld [vmem:[%s4 + $0x160] sm:$0xff]
      %v1653 = vld [vmem:[%s4 + $0x168] sm:$0xff]
      %v1654 = vld [vmem:[%s4 + $0x170] sm:$0xff]
      %v1655 = vld [vmem:[%s4 + $0x178] sm:$0xff]
      %v1656 = vld [vmem:[%s4 + $0x180] sm:$0xff]
      %v1657 = vld [vmem:[%s4 + $0x188] sm:$0xff]
      %v1658 = vld [vmem:[%s4 + $0x190] sm:$0xff]
      %v1659 = vld [vmem:[%s4 + $0x198] sm:$0xff]
      %v1660 = vld [vmem:[%s4 + $0x1a0] sm:$0xff]
      %v1661 = vld [vmem:[%s4 + $0x1a8] sm:$0xff]
      %v1662 = vld [vmem:[%s4 + $0x1b0] sm:$0xff]
      %v1663 = vld [vmem:[%s4 + $0x1b8] sm:$0xff]
      %v1664 = vld [vmem:[%s4 + $0x1c0] sm:$0xff]
      %v1665 = vld [vmem:[%s4 + $0x1c8] sm:$0xff]
      %v1666 = vld [vmem:[%s4 + $0x1d0] sm:$0xff]
      %v1667 = vld [vmem:[%s4 + $0x1d8] sm:$0xff]
      %v1668 = vld [vmem:[%s4 + $0x1e0] sm:$0xff]
      %v1669 = vld [vmem:[%s4 + $0x1e8] sm:$0xff]
      %v1670 = vld [vmem:[%s4 + $0x1f0] sm:$0xff]
      %v1671 = vld [vmem:[%s4 + $0x1f8] sm:$0xff]
      %1672 = vmatprep.subr.mxu0 0.0
      %1673 = vmatpush1.msra.mxu0 %v1608
      %1674 = vmatprep.subr.mxu0 0.0
      %1675 = vmatpush1.msra.mxu0 %v1609
      %1676 = vmatprep.subr.mxu0 0.0
      %1677 = vmatpush1.msra.mxu0 %v1610
      %1678 = vmatprep.subr.mxu0 0.0
      %1679 = vmatpush1.msra.mxu0 %v1611
      %1680 = vmatprep.subr.mxu0 0.0
      %1681 = vmatpush1.msra.mxu0 %v1612
      %1682 = vmatprep.subr.mxu0 0.0
      %1683 = vmatpush1.msra.mxu0 %v1613
      %1684 = vmatprep.subr.mxu0 0.0
      %1685 = vmatpush1.msra.mxu0 %v1614
      %1686 = vmatprep.subr.mxu0 0.0
      %1687 = vmatpush1.msra.mxu0 %v1615
      %1688 = vmatprep.subr.mxu0 0.0
      %1689 = vmatpush1.msra.mxu0 %v1616
      %1690 = vmatprep.subr.mxu0 0.0
      %1691 = vmatpush1.msra.mxu0 %v1617
      %1692 = vmatprep.subr.mxu0 0.0
      %1693 = vmatpush1.msra.mxu0 %v1618
      %1694 = vmatprep.subr.mxu0 0.0
      %1695 = vmatpush1.msra.mxu0 %v1619
      %1696 = vmatprep.subr.mxu0 0.0
      %1697 = vmatpush1.msra.mxu0 %v1620
      %1698 = vmatprep.subr.mxu0 0.0
      %1699 = vmatpush1.msra.mxu0 %v1621
      %1700 = vmatprep.subr.mxu0 0.0
      %1701 = vmatpush1.msra.mxu0 %v1622
      %1702 = vmatprep.subr.mxu0 0.0
      %1703 = vmatpush1.msra.mxu0 %v1623
      %1704 = vmatprep.subr.mxu0 0.0
      %1705 = vmatpush1.msra.mxu0 %v1624
      %1706 = vmatprep.subr.mxu0 0.0
      %1707 = vmatpush1.msra.mxu0 %v1625
      %1708 = vmatprep.subr.mxu0 0.0
      %1709 = vmatpush1.msra.mxu0 %v1626
      %1710 = vmatprep.subr.mxu0 0.0
      %1711 = vmatpush1.msra.mxu0 %v1627
      %1712 = vmatprep.subr.mxu0 0.0
      %1713 = vmatpush1.msra.mxu0 %v1628
      %1714 = vmatprep.subr.mxu0 0.0
      %1715 = vmatpush1.msra.mxu0 %v1629
      %1716 = vmatprep.subr.mxu0 0.0
      %1717 = vmatpush1.msra.mxu0 %v1630
      %1718 = vmatprep.subr.mxu0 0.0
      %1719 = vmatpush1.msra.mxu0 %v1631
      %1720 = vmatprep.subr.mxu0 0.0
      %1721 = vmatpush1.msra.mxu0 %v1632
      %1722 = vmatprep.subr.mxu0 0.0
      %1723 = vmatpush1.msra.mxu0 %v1633
      %1724 = vmatprep.subr.mxu0 0.0
      %1725 = vmatpush1.msra.mxu0 %v1634
      %1726 = vmatprep.subr.mxu0 0.0
      %1727 = vmatpush1.msra.mxu0 %v1635
      %1728 = vmatprep.subr.mxu0 0.0
      %1729 = vmatpush1.msra.mxu0 %v1636
      %1730 = vmatprep.subr.mxu0 0.0
      %1731 = vmatpush1.msra.mxu0 %v1637
      %1732 = vmatprep.subr.mxu0 0.0
      %1733 = vmatpush1.msra.mxu0 %v1638
      %1734 = vmatprep.subr.mxu0 0.0
      %1735 = vmatpush1.msra.mxu0 %v1639
      %1736 = vmatprep.mubr.f32.mxu0 %v1459
      %1737 = vmatmul.mubr.f32.gmra.mrb[0].mxu0 %v1386
      %v1738 = vpop.f32.mrb[0].mxu0
      %v1739 = vadd.f32 0.0, %v1738
      %v1740 = vpop.f32.mrb[0].mxu0
      %1741 = vdwg.mxu0
      %1742 = vmatprep.subr.mxu0 0.0
      %1743 = vmatpush1.msra.mxu0 %v1640
      %1744 = vmatprep.subr.mxu0 0.0
      %1745 = vmatpush1.msra.mxu0 %v1641
      %1746 = vmatprep.subr.mxu0 0.0
      %1747 = vmatpush1.msra.mxu0 %v1642
      %1748 = vmatprep.subr.mxu0 0.0
      %1749 = vmatpush1.msra.mxu0 %v1643
      %1750 = vmatprep.subr.mxu0 0.0
      %1751 = vmatpush1.msra.mxu0 %v1644
      %1752 = vmatprep.subr.mxu0 0.0
      %1753 = vmatpush1.msra.mxu0 %v1645
      %1754 = vmatprep.subr.mxu0 0.0
      %1755 = vmatpush1.msra.mxu0 %v1646
      %1756 = vmatprep.subr.mxu0 0.0
      %1757 = vmatpush1.msra.mxu0 %v1647
      %1758 = vmatprep.subr.mxu0 0.0
      %1759 = vmatpush1.msra.mxu0 %v1648
      %1760 = vmatprep.subr.mxu0 0.0
      %1761 = vmatpush1.msra.mxu0 %v1649
      %1762 = vmatprep.subr.mxu0 0.0
      %1763 = vmatpush1.msra.mxu0 %v1650
      %1764 = vmatprep.subr.mxu0 0.0
      %1765 = vmatpush1.msra.mxu0 %v1651
      %1766 = vmatprep.subr.mxu0 0.0
      %1767 = vmatpush1.msra.mxu0 %v1652
      %1768 = vmatprep.subr.mxu0 0.0
      %1769 = vmatpush1.msra.mxu0 %v1653
      %1770 = vmatprep.subr.mxu0 0.0
      %1771 = vmatpush1.msra.mxu0 %v1654
      %1772 = vmatprep.subr.mxu0 0.0
      %1773 = vmatpush1.msra.mxu0 %v1655
      %1774 = vmatprep.subr.mxu0 0.0
      %1775 = vmatpush1.msra.mxu0 %v1656
      %1776 = vmatprep.subr.mxu0 0.0
      %1777 = vmatpush1.msra.mxu0 %v1657
      %1778 = vmatprep.subr.mxu0 0.0
      %1779 = vmatpush1.msra.mxu0 %v1658
      %1780 = vmatprep.subr.mxu0 0.0
      %1781 = vmatpush1.msra.mxu0 %v1659
      %1782 = vmatprep.subr.mxu0 0.0
      %1783 = vmatpush1.msra.mxu0 %v1660
      %1784 = vmatprep.subr.mxu0 0.0
      %1785 = vmatpush1.msra.mxu0 %v1661
      %1786 = vmatprep.subr.mxu0 0.0
      %1787 = vmatpush1.msra.mxu0 %v1662
      %1788 = vmatprep.subr.mxu0 0.0
      %1789 = vmatpush1.msra.mxu0 %v1663
      %1790 = vmatprep.subr.mxu0 0.0
      %1791 = vmatpush1.msra.mxu0 %v1664
      %1792 = vmatprep.subr.mxu0 0.0
      %1793 = vmatpush1.msra.mxu0 %v1665
      %1794 = vmatprep.subr.mxu0 0.0
      %1795 = vmatpush1.msra.mxu0 %v1666
      %1796 = vmatprep.subr.mxu0 0.0
      %1797 = vmatpush1.msra.mxu0 %v1667
      %1798 = vmatprep.subr.mxu0 0.0
      %1799 = vmatpush1.msra.mxu0 %v1668
      %1800 = vmatprep.subr.mxu0 0.0
      %1801 = vmatpush1.msra.mxu0 %v1669
      %1802 = vmatprep.subr.mxu0 0.0
      %1803 = vmatpush1.msra.mxu0 %v1670
      %1804 = vmatprep.subr.mxu0 0.0
      %1805 = vmatpush1.msra.mxu0 %v1671
      %1806 = vmatprep.mubr.f32.mxu0 %v1605
      %1807 = vmatmul.mubr.f32.gmra.mrb[0].mxu0 %v1532
      %v1808 = vpop.f32.mrb[0].mxu0
      %v1809 = vadd.f32 %v1739, %v1808
      %v1810 = vpop.f32.mrb[0].mxu0
      %1811 = vdwg.mxu0
      %v1812 = vld [vmem:[%s5] sm:$0x1]
      %v1813 = vmul.f32 %v1809, %v1809
      %v1814 = vsel %vm554, %v1813, 0.0
      %1815 = vadd.xlane.f32.xlu0 %v1814
      %v1816 = vpop.xlane.xlu0 %1815
      %v1817 = vmul.f32 %v1816, %v494
      %v1818 = vadd.f32 %v1817, 1e-06
      %v1819 = vrsqrt.pop %v1818
      %v1820 = vmul.f32 %v1809, %v1819
      %v1822 = vlaneseq
      %v1823 = vshrl.u32 %v1822, 7
      %v1824 = vsub.s32 0, %v1823
      %v1825 = vrot.slane %v1812, %v1824
      %v1827 = vmul.f32 %v1820, %v1825
      %v1828 = vld [vmem:[%s6] sm:$0xff]
      %v1829 = vld [vmem:[%s6 + $0x8] sm:$0xff]
      %v1830 = vld [vmem:[%s6 + $0x10] sm:$0xff]
      %v1831 = vld [vmem:[%s6 + $0x18] sm:$0xff]
      %v1832 = vld [vmem:[%s6 + $0x20] sm:$0xff]
      %v1833 = vld [vmem:[%s6 + $0x28] sm:$0xff]
      %v1834 = vld [vmem:[%s6 + $0x30] sm:$0xff]
      %v1835 = vld [vmem:[%s6 + $0x38] sm:$0xff]
      %v1836 = vld [vmem:[%s6 + $0x40] sm:$0xff]
      %v1837 = vld [vmem:[%s6 + $0x48] sm:$0xff]
      %v1838 = vld [vmem:[%s6 + $0x50] sm:$0xff]
      %v1839 = vld [vmem:[%s6 + $0x58] sm:$0xff]
      %v1840 = vld [vmem:[%s6 + $0x60] sm:$0xff]
      %v1841 = vld [vmem:[%s6 + $0x68] sm:$0xff]
      %v1842 = vld [vmem:[%s6 + $0x70] sm:$0xff]
      %v1843 = vld [vmem:[%s6 + $0x78] sm:$0xff]
      %v1845 = vsel %vm554, %v1827, 0
      %1847 = vmatprep.subr.mxu0 %v1829
      %1848 = vmatpush1.msra.mxu0 %v1828
      %1849 = vmatprep.subr.mxu0 %v1833
      %1850 = vmatpush1.msra.mxu0 %v1832
      %1851 = vmatprep.subr.mxu0 %v1837
      %1852 = vmatpush1.msra.mxu0 %v1836
      %1853 = vmatprep.subr.mxu0 %v1841
      %1854 = vmatpush1.msra.mxu0 %v1840
      %1855 = vmatprep.subr.mxu0 0.0
      %1856 = vmatpush1.msra.mxu0 0.0
      %1857 = vmatprep.subr.mxu0 0.0
      %1858 = vmatpush1.msra.mxu0 0.0
      %1859 = vmatprep.subr.mxu0 0.0
      %1860 = vmatpush1.msra.mxu0 0.0
      %1861 = vmatprep.subr.mxu0 0.0
      %1862 = vmatpush1.msra.mxu0 0.0
      %1863 = vmatprep.subr.mxu0 0.0
      %1864 = vmatpush1.msra.mxu0 0.0
      %1865 = vmatprep.subr.mxu0 0.0
      %1866 = vmatpush1.msra.mxu0 0.0
      %1867 = vmatprep.subr.mxu0 0.0
      %1868 = vmatpush1.msra.mxu0 0.0
      %1869 = vmatprep.subr.mxu0 0.0
      %1870 = vmatpush1.msra.mxu0 0.0
      %1871 = vmatprep.subr.mxu0 0.0
      %1872 = vmatpush1.msra.mxu0 0.0
      %1873 = vmatprep.subr.mxu0 0.0
      %1874 = vmatpush1.msra.mxu0 0.0
      %1875 = vmatprep.subr.mxu0 0.0
      %1876 = vmatpush1.msra.mxu0 0.0
      %1877 = vmatprep.subr.mxu0 0.0
      %1878 = vmatpush1.msra.mxu0 0.0
      %1879 = vmatprep.subr.mxu0 0.0
      %1880 = vmatpush1.msra.mxu0 0.0
      %1881 = vmatprep.subr.mxu0 0.0
      %1882 = vmatpush1.msra.mxu0 0.0
      %1883 = vmatprep.subr.mxu0 0.0
      %1884 = vmatpush1.msra.mxu0 0.0
      %1885 = vmatprep.subr.mxu0 0.0
      %1886 = vmatpush1.msra.mxu0 0.0
      %1887 = vmatprep.subr.mxu0 0.0
      %1888 = vmatpush1.msra.mxu0 0.0
      %1889 = vmatprep.subr.mxu0 0.0
      %1890 = vmatpush1.msra.mxu0 0.0
      %1891 = vmatprep.subr.mxu0 0.0
      %1892 = vmatpush1.msra.mxu0 0.0
      %1893 = vmatprep.subr.mxu0 0.0
      %1894 = vmatpush1.msra.mxu0 0.0
      %1895 = vmatprep.subr.mxu0 0.0
      %1896 = vmatpush1.msra.mxu0 0.0
      %1897 = vmatprep.subr.mxu0 0.0
      %1898 = vmatpush1.msra.mxu0 0.0
      %1899 = vmatprep.subr.mxu0 0.0
      %1900 = vmatpush1.msra.mxu0 0.0
      %1901 = vmatprep.subr.mxu0 0.0
      %1902 = vmatpush1.msra.mxu0 0.0
      %1903 = vmatprep.subr.mxu0 0.0
      %1904 = vmatpush1.msra.mxu0 0.0
      %1905 = vmatprep.subr.mxu0 0.0
      %1906 = vmatpush1.msra.mxu0 0.0
      %1907 = vmatprep.subr.mxu0 0.0
      %1908 = vmatpush1.msra.mxu0 0.0
      %1909 = vmatprep.subr.mxu0 0.0
      %1910 = vmatpush1.msra.mxu0 0.0
      %1911 = vmatprep.mubr.f32.mxu0 0.0
      %1912 = vmatmul.mubr.f32.gmra.mrb[0].mxu0 %v1845
      %v1913 = vpop.f32.mrb[0].mxu0
      %v1914 = vadd.f32 0.0, %v1913
      %v1915 = vpop.f32.mrb[0].mxu0
      %v1916 = vadd.f32 0.0, %v1915
      %1917 = vdwg.mxu0
      %1918 = vmatprep.subr.mxu0 %v1831
      %1919 = vmatpush1.msra.mxu0 %v1830
      %1920 = vmatprep.subr.mxu0 %v1835
      %1921 = vmatpush1.msra.mxu0 %v1834
      %1922 = vmatprep.subr.mxu0 %v1839
      %1923 = vmatpush1.msra.mxu0 %v1838
      %1924 = vmatprep.subr.mxu0 %v1843
      %1925 = vmatpush1.msra.mxu0 %v1842
      %1926 = vmatprep.subr.mxu0 0.0
      %1927 = vmatpush1.msra.mxu0 0.0
      %1928 = vmatprep.subr.mxu0 0.0
      %1929 = vmatpush1.msra.mxu0 0.0
      %1930 = vmatprep.subr.mxu0 0.0
      %1931 = vmatpush1.msra.mxu0 0.0
      %1932 = vmatprep.subr.mxu0 0.0
      %1933 = vmatpush1.msra.mxu0 0.0
      %1934 = vmatprep.subr.mxu0 0.0
      %1935 = vmatpush1.msra.mxu0 0.0
      %1936 = vmatprep.subr.mxu0 0.0
      %1937 = vmatpush1.msra.mxu0 0.0
      %1938 = vmatprep.subr.mxu0 0.0
      %1939 = vmatpush1.msra.mxu0 0.0
      %1940 = vmatprep.subr.mxu0 0.0
      %1941 = vmatpush1.msra.mxu0 0.0
      %1942 = vmatprep.subr.mxu0 0.0
      %1943 = vmatpush1.msra.mxu0 0.0
      %1944 = vmatprep.subr.mxu0 0.0
      %1945 = vmatpush1.msra.mxu0 0.0
      %1946 = vmatprep.subr.mxu0 0.0
      %1947 = vmatpush1.msra.mxu0 0.0
      %1948 = vmatprep.subr.mxu0 0.0
      %1949 = vmatpush1.msra.mxu0 0.0
      %1950 = vmatprep.subr.mxu0 0.0
      %1951 = vmatpush1.msra.mxu0 0.0
      %1952 = vmatprep.subr.mxu0 0.0
      %1953 = vmatpush1.msra.mxu0 0.0
      %1954 = vmatprep.subr.mxu0 0.0
      %1955 = vmatpush1.msra.mxu0 0.0
      %1956 = vmatprep.subr.mxu0 0.0
      %1957 = vmatpush1.msra.mxu0 0.0
      %1958 = vmatprep.subr.mxu0 0.0
      %1959 = vmatpush1.msra.mxu0 0.0
      %1960 = vmatprep.subr.mxu0 0.0
      %1961 = vmatpush1.msra.mxu0 0.0
      %1962 = vmatprep.subr.mxu0 0.0
      %1963 = vmatpush1.msra.mxu0 0.0
      %1964 = vmatprep.subr.mxu0 0.0
      %1965 = vmatpush1.msra.mxu0 0.0
      %1966 = vmatprep.subr.mxu0 0.0
      %1967 = vmatpush1.msra.mxu0 0.0
      %1968 = vmatprep.subr.mxu0 0.0
      %1969 = vmatpush1.msra.mxu0 0.0
      %1970 = vmatprep.subr.mxu0 0.0
      %1971 = vmatpush1.msra.mxu0 0.0
      %1972 = vmatprep.subr.mxu0 0.0
      %1973 = vmatpush1.msra.mxu0 0.0
      %1974 = vmatprep.subr.mxu0 0.0
      %1975 = vmatpush1.msra.mxu0 0.0
      %1976 = vmatprep.subr.mxu0 0.0
      %1977 = vmatpush1.msra.mxu0 0.0
      %1978 = vmatprep.subr.mxu0 0.0
      %1979 = vmatpush1.msra.mxu0 0.0
      %1980 = vmatprep.subr.mxu0 0.0
      %1981 = vmatpush1.msra.mxu0 0.0
      %1982 = vmatprep.mubr.f32.mxu0 0.0
      %1983 = vmatmul.mubr.f32.gmra.mrb[0].mxu0 %v1845
      %v1984 = vpop.f32.mrb[0].mxu0
      %v1985 = vadd.f32 0.0, %v1984
      %v1986 = vpop.f32.mrb[0].mxu0
      %v1987 = vadd.f32 0.0, %v1986
      %1988 = vdwg.mxu0
      %v1989 = vld [vmem:[%s7] sm:$0xff]
      %v1990 = vld [vmem:[%s7 + $0x8] sm:$0xff]
      %v1991 = vld [vmem:[%s7 + $0x10] sm:$0xff]
      %v1992 = vld [vmem:[%s7 + $0x18] sm:$0xff]
      %v1993 = vld [vmem:[%s7 + $0x20] sm:$0xff]
      %v1994 = vld [vmem:[%s7 + $0x28] sm:$0xff]
      %v1995 = vld [vmem:[%s7 + $0x30] sm:$0xff]
      %v1996 = vld [vmem:[%s7 + $0x38] sm:$0xff]
      %v1997 = vld [vmem:[%s7 + $0x40] sm:$0xff]
      %v1998 = vld [vmem:[%s7 + $0x48] sm:$0xff]
      %v1999 = vld [vmem:[%s7 + $0x50] sm:$0xff]
      %v2000 = vld [vmem:[%s7 + $0x58] sm:$0xff]
      %v2001 = vld [vmem:[%s7 + $0x60] sm:$0xff]
      %v2002 = vld [vmem:[%s7 + $0x68] sm:$0xff]
      %v2003 = vld [vmem:[%s7 + $0x70] sm:$0xff]
      %v2004 = vld [vmem:[%s7 + $0x78] sm:$0xff]
      %v2005 = vld [vmem:[%s7 + $0x80] sm:$0xff]
      %v2006 = vld [vmem:[%s7 + $0x88] sm:$0xff]
      %v2007 = vld [vmem:[%s7 + $0x90] sm:$0xff]
      %v2008 = vld [vmem:[%s7 + $0x98] sm:$0xff]
      %v2009 = vld [vmem:[%s7 + $0xa0] sm:$0xff]
      %v2010 = vld [vmem:[%s7 + $0xa8] sm:$0xff]
      %v2011 = vld [vmem:[%s7 + $0xb0] sm:$0xff]
      %v2012 = vld [vmem:[%s7 + $0xb8] sm:$0xff]
      %v2013 = vld [vmem:[%s7 + $0xc0] sm:$0xff]
      %v2014 = vld [vmem:[%s7 + $0xc8] sm:$0xff]
      %v2015 = vld [vmem:[%s7 + $0xd0] sm:$0xff]
      %v2016 = vld [vmem:[%s7 + $0xd8] sm:$0xff]
      %v2017 = vld [vmem:[%s7 + $0xe0] sm:$0xff]
      %v2018 = vld [vmem:[%s7 + $0xe8] sm:$0xff]
      %v2019 = vld [vmem:[%s7 + $0xf0] sm:$0xff]
      %v2020 = vld [vmem:[%s7 + $0xf8] sm:$0xff]
      %v2022 = vsel %vm554, %v490, 0
      %2024 = vmatprep.subr.mxu0 %v1990
      %2025 = vmatpush1.msra.mxu0 %v1989
      %2026 = vmatprep.subr.mxu0 %v1998
      %2027 = vmatpush1.msra.mxu0 %v1997
      %2028 = vmatprep.subr.mxu0 %v2006
      %2029 = vmatpush1.msra.mxu0 %v2005
      %2030 = vmatprep.subr.mxu0 %v2014
      %2031 = vmatpush1.msra.mxu0 %v2013
      %2032 = vmatprep.subr.mxu0 0.0
      %2033 = vmatpush1.msra.mxu0 0.0
      %2034 = vmatprep.subr.mxu0 0.0
      %2035 = vmatpush1.msra.mxu0 0.0
      %2036 = vmatprep.subr.mxu0 0.0
      %2037 = vmatpush1.msra.mxu0 0.0
      %2038 = vmatprep.subr.mxu0 0.0
      %2039 = vmatpush1.msra.mxu0 0.0
      %2040 = vmatprep.subr.mxu0 0.0
      %2041 = vmatpush1.msra.mxu0 0.0
      %2042 = vmatprep.subr.mxu0 0.0
      %2043 = vmatpush1.msra.mxu0 0.0
      %2044 = vmatprep.subr.mxu0 0.0
      %2045 = vmatpush1.msra.mxu0 0.0
      %2046 = vmatprep.subr.mxu0 0.0
      %2047 = vmatpush1.msra.mxu0 0.0
      %2048 = vmatprep.subr.mxu0 0.0
      %2049 = vmatpush1.msra.mxu0 0.0
      %2050 = vmatprep.subr.mxu0 0.0
      %2051 = vmatpush1.msra.mxu0 0.0
      %2052 = vmatprep.subr.mxu0 0.0
      %2053 = vmatpush1.msra.mxu0 0.0
      %2054 = vmatprep.subr.mxu0 0.0
      %2055 = vmatpush1.msra.mxu0 0.0
      %2056 = vmatprep.subr.mxu0 0.0
      %2057 = vmatpush1.msra.mxu0 0.0
      %2058 = vmatprep.subr.mxu0 0.0
      %2059 = vmatpush1.msra.mxu0 0.0
      %2060 = vmatprep.subr.mxu0 0.0
      %2061 = vmatpush1.msra.mxu0 0.0
      %2062 = vmatprep.subr.mxu0 0.0
      %2063 = vmatpush1.msra.mxu0 0.0
      %2064 = vmatprep.subr.mxu0 0.0
      %2065 = vmatpush1.msra.mxu0 0.0
      %2066 = vmatprep.subr.mxu0 0.0
      %2067 = vmatpush1.msra.mxu0 0.0
      %2068 = vmatprep.subr.mxu0 0.0
      %2069 = vmatpush1.msra.mxu0 0.0
      %2070 = vmatprep.subr.mxu0 0.0
      %2071 = vmatpush1.msra.mxu0 0.0
      %2072 = vmatprep.subr.mxu0 0.0
      %2073 = vmatpush1.msra.mxu0 0.0
      %2074 = vmatprep.subr.mxu0 0.0
      %2075 = vmatpush1.msra.mxu0 0.0
      %2076 = vmatprep.subr.mxu0 0.0
      %2077 = vmatpush1.msra.mxu0 0.0
      %2078 = vmatprep.subr.mxu0 0.0
      %2079 = vmatpush1.msra.mxu0 0.0
      %2080 = vmatprep.subr.mxu0 0.0
      %2081 = vmatpush1.msra.mxu0 0.0
      %2082 = vmatprep.subr.mxu0 0.0
      %2083 = vmatpush1.msra.mxu0 0.0
      %2084 = vmatprep.subr.mxu0 0.0
      %2085 = vmatpush1.msra.mxu0 0.0
      %2086 = vmatprep.subr.mxu0 0.0
      %2087 = vmatpush1.msra.mxu0 0.0
      %2088 = vmatprep.mubr.f32.mxu0 0.0
      %2089 = vmatmul.mubr.f32.gmra.mrb[0].mxu0 %v2022
      %v2090 = vpop.f32.mrb[0].mxu0
      %v2091 = vadd.f32 0.0, %v2090
      %v2092 = vpop.f32.mrb[0].mxu0
      %v2093 = vadd.f32 0.0, %v2092
      %2094 = vdwg.mxu0
      %2095 = vmatprep.subr.mxu0 %v1992
      %2096 = vmatpush1.msra.mxu0 %v1991
      %2097 = vmatprep.subr.mxu0 %v2000
      %2098 = vmatpush1.msra.mxu0 %v1999
      %2099 = vmatprep.subr.mxu0 %v2008
      %2100 = vmatpush1.msra.mxu0 %v2007
      %2101 = vmatprep.subr.mxu0 %v2016
      %2102 = vmatpush1.msra.mxu0 %v2015
      %2103 = vmatprep.subr.mxu0 0.0
      %2104 = vmatpush1.msra.mxu0 0.0
      %2105 = vmatprep.subr.mxu0 0.0
      %2106 = vmatpush1.msra.mxu0 0.0
      %2107 = vmatprep.subr.mxu0 0.0
      %2108 = vmatpush1.msra.mxu0 0.0
      %2109 = vmatprep.subr.mxu0 0.0
      %2110 = vmatpush1.msra.mxu0 0.0
      %2111 = vmatprep.subr.mxu0 0.0
      %2112 = vmatpush1.msra.mxu0 0.0
      %2113 = vmatprep.subr.mxu0 0.0
      %2114 = vmatpush1.msra.mxu0 0.0
      %2115 = vmatprep.subr.mxu0 0.0
      %2116 = vmatpush1.msra.mxu0 0.0
      %2117 = vmatprep.subr.mxu0 0.0
      %2118 = vmatpush1.msra.mxu0 0.0
      %2119 = vmatprep.subr.mxu0 0.0
      %2120 = vmatpush1.msra.mxu0 0.0
      %2121 = vmatprep.subr.mxu0 0.0
      %2122 = vmatpush1.msra.mxu0 0.0
      %2123 = vmatprep.subr.mxu0 0.0
      %2124 = vmatpush1.msra.mxu0 0.0
      %2125 = vmatprep.subr.mxu0 0.0
      %2126 = vmatpush1.msra.mxu0 0.0
      %2127 = vmatprep.subr.mxu0 0.0
      %2128 = vmatpush1.msra.mxu0 0.0
      %2129 = vmatprep.subr.mxu0 0.0
      %2130 = vmatpush1.msra.mxu0 0.0
      %2131 = vmatprep.subr.mxu0 0.0
      %2132 = vmatpush1.msra.mxu0 0.0
      %2133 = vmatprep.subr.mxu0 0.0
      %2134 = vmatpush1.msra.mxu0 0.0
      %2135 = vmatprep.subr.mxu0 0.0
      %2136 = vmatpush1.msra.mxu0 0.0
      %2137 = vmatprep.subr.mxu0 0.0
      %2138 = vmatpush1.msra.mxu0 0.0
      %2139 = vmatprep.subr.mxu0 0.0
      %2140 = vmatpush1.msra.mxu0 0.0
      %2141 = vmatprep.subr.mxu0 0.0
      %2142 = vmatpush1.msra.mxu0 0.0
      %2143 = vmatprep.subr.mxu0 0.0
      %2144 = vmatpush1.msra.mxu0 0.0
      %2145 = vmatprep.subr.mxu0 0.0
      %2146 = vmatpush1.msra.mxu0 0.0
      %2147 = vmatprep.subr.mxu0 0.0
      %2148 = vmatpush1.msra.mxu0 0.0
      %2149 = vmatprep.subr.mxu0 0.0
      %2150 = vmatpush1.msra.mxu0 0.0
      %2151 = vmatprep.subr.mxu0 0.0
      %2152 = vmatpush1.msra.mxu0 0.0
      %2153 = vmatprep.subr.mxu0 0.0
      %2154 = vmatpush1.msra.mxu0 0.0
      %2155 = vmatprep.subr.mxu0 0.0
      %2156 = vmatpush1.msra.mxu0 0.0
      %2157 = vmatprep.subr.mxu0 0.0
      %2158 = vmatpush1.msra.mxu0 0.0
      %2159 = vmatprep.mubr.f32.mxu0 0.0
      %2160 = vmatmul.mubr.f32.gmra.mrb[0].mxu0 %v2022
      %v2161 = vpop.f32.mrb[0].mxu0
      %v2162 = vadd.f32 0.0, %v2161
      %v2163 = vpop.f32.mrb[0].mxu0
      %v2164 = vadd.f32 0.0, %v2163
      %2165 = vdwg.mxu0
      %2166 = vmatprep.subr.mxu0 %v1994
      %2167 = vmatpush1.msra.mxu0 %v1993
      %2168 = vmatprep.subr.mxu0 %v2002
      %2169 = vmatpush1.msra.mxu0 %v2001
      %2170 = vmatprep.subr.mxu0 %v2010
      %2171 = vmatpush1.msra.mxu0 %v2009
      %2172 = vmatprep.subr.mxu0 %v2018
      %2173 = vmatpush1.msra.mxu0 %v2017
      %2174 = vmatprep.subr.mxu0 0.0
      %2175 = vmatpush1.msra.mxu0 0.0
      %2176 = vmatprep.subr.mxu0 0.0
      %2177 = vmatpush1.msra.mxu0 0.0
      %2178 = vmatprep.subr.mxu0 0.0
      %2179 = vmatpush1.msra.mxu0 0.0
      %2180 = vmatprep.subr.mxu0 0.0
      %2181 = vmatpush1.msra.mxu0 0.0
      %2182 = vmatprep.subr.mxu0 0.0
      %2183 = vmatpush1.msra.mxu0 0.0
      %2184 = vmatprep.subr.mxu0 0.0
      %2185 = vmatpush1.msra.mxu0 0.0
      %2186 = vmatprep.subr.mxu0 0.0
      %2187 = vmatpush1.msra.mxu0 0.0
      %2188 = vmatprep.subr.mxu0 0.0
      %2189 = vmatpush1.msra.mxu0 0.0
      %2190 = vmatprep.subr.mxu0 0.0
      %2191 = vmatpush1.msra.mxu0 0.0
      %2192 = vmatprep.subr.mxu0 0.0
      %2193 = vmatpush1.msra.mxu0 0.0
      %2194 = vmatprep.subr.mxu0 0.0
      %2195 = vmatpush1.msra.mxu0 0.0
      %2196 = vmatprep.subr.mxu0 0.0
      %2197 = vmatpush1.msra.mxu0 0.0
      %2198 = vmatprep.subr.mxu0 0.0
      %2199 = vmatpush1.msra.mxu0 0.0
      %2200 = vmatprep.subr.mxu0 0.0
      %2201 = vmatpush1.msra.mxu0 0.0
      %2202 = vmatprep.subr.mxu0 0.0
      %2203 = vmatpush1.msra.mxu0 0.0
      %2204 = vmatprep.subr.mxu0 0.0
      %2205 = vmatpush1.msra.mxu0 0.0
      %2206 = vmatprep.subr.mxu0 0.0
      %2207 = vmatpush1.msra.mxu0 0.0
      %2208 = vmatprep.subr.mxu0 0.0
      %2209 = vmatpush1.msra.mxu0 0.0
      %2210 = vmatprep.subr.mxu0 0.0
      %2211 = vmatpush1.msra.mxu0 0.0
      %2212 = vmatprep.subr.mxu0 0.0
      %2213 = vmatpush1.msra.mxu0 0.0
      %2214 = vmatprep.subr.mxu0 0.0
      %2215 = vmatpush1.msra.mxu0 0.0
      %2216 = vmatprep.subr.mxu0 0.0
      %2217 = vmatpush1.msra.mxu0 0.0
      %2218 = vmatprep.subr.mxu0 0.0
      %2219 = vmatpush1.msra.mxu0 0.0
      %2220 = vmatprep.subr.mxu0 0.0
      %2221 = vmatpush1.msra.mxu0 0.0
      %2222 = vmatprep.subr.mxu0 0.0
      %2223 = vmatpush1.msra.mxu0 0.0
      %2224 = vmatprep.subr.mxu0 0.0
      %2225 = vmatpush1.msra.mxu0 0.0
      %2226 = vmatprep.subr.mxu0 0.0
      %2227 = vmatpush1.msra.mxu0 0.0
      %2228 = vmatprep.subr.mxu0 0.0
      %2229 = vmatpush1.msra.mxu0 0.0
      %2230 = vmatprep.mubr.f32.mxu0 0.0
      %2231 = vmatmul.mubr.f32.gmra.mrb[0].mxu0 %v2022
      %v2232 = vpop.f32.mrb[0].mxu0
      %v2233 = vadd.f32 0.0, %v2232
      %v2234 = vpop.f32.mrb[0].mxu0
      %v2235 = vadd.f32 0.0, %v2234
      %2236 = vdwg.mxu0
      %2237 = vmatprep.subr.mxu0 %v1996
      %2238 = vmatpush1.msra.mxu0 %v1995
      %2239 = vmatprep.subr.mxu0 %v2004
      %2240 = vmatpush1.msra.mxu0 %v2003
      %2241 = vmatprep.subr.mxu0 %v2012
      %2242 = vmatpush1.msra.mxu0 %v2011
      %2243 = vmatprep.subr.mxu0 %v2020
      %2244 = vmatpush1.msra.mxu0 %v2019
      %2245 = vmatprep.subr.mxu0 0.0
      %2246 = vmatpush1.msra.mxu0 0.0
      %2247 = vmatprep.subr.mxu0 0.0
      %2248 = vmatpush1.msra.mxu0 0.0
      %2249 = vmatprep.subr.mxu0 0.0
      %2250 = vmatpush1.msra.mxu0 0.0
      %2251 = vmatprep.subr.mxu0 0.0
      %2252 = vmatpush1.msra.mxu0 0.0
      %2253 = vmatprep.subr.mxu0 0.0
      %2254 = vmatpush1.msra.mxu0 0.0
      %2255 = vmatprep.subr.mxu0 0.0
      %2256 = vmatpush1.msra.mxu0 0.0
      %2257 = vmatprep.subr.mxu0 0.0
      %2258 = vmatpush1.msra.mxu0 0.0
      %2259 = vmatprep.subr.mxu0 0.0
      %2260 = vmatpush1.msra.mxu0 0.0
      %2261 = vmatprep.subr.mxu0 0.0
      %2262 = vmatpush1.msra.mxu0 0.0
      %2263 = vmatprep.subr.mxu0 0.0
      %2264 = vmatpush1.msra.mxu0 0.0
      %2265 = vmatprep.subr.mxu0 0.0
      %2266 = vmatpush1.msra.mxu0 0.0
      %2267 = vmatprep.subr.mxu0 0.0
      %2268 = vmatpush1.msra.mxu0 0.0
      %2269 = vmatprep.subr.mxu0 0.0
      %2270 = vmatpush1.msra.mxu0 0.0
      %2271 = vmatprep.subr.mxu0 0.0
      %2272 = vmatpush1.msra.mxu0 0.0
      %2273 = vmatprep.subr.mxu0 0.0
      %2274 = vmatpush1.msra.mxu0 0.0
      %2275 = vmatprep.subr.mxu0 0.0
      %2276 = vmatpush1.msra.mxu0 0.0
      %2277 = vmatprep.subr.mxu0 0.0
      %2278 = vmatpush1.msra.mxu0 0.0
      %2279 = vmatprep.subr.mxu0 0.0
      %2280 = vmatpush1.msra.mxu0 0.0
      %2281 = vmatprep.subr.mxu0 0.0
      %2282 = vmatpush1.msra.mxu0 0.0
      %2283 = vmatprep.subr.mxu0 0.0
      %2284 = vmatpush1.msra.mxu0 0.0
      %2285 = vmatprep.subr.mxu0 0.0
      %2286 = vmatpush1.msra.mxu0 0.0
      %2287 = vmatprep.subr.mxu0 0.0
      %2288 = vmatpush1.msra.mxu0 0.0
      %2289 = vmatprep.subr.mxu0 0.0
      %2290 = vmatpush1.msra.mxu0 0.0
      %2291 = vmatprep.subr.mxu0 0.0
      %2292 = vmatpush1.msra.mxu0 0.0
      %2293 = vmatprep.subr.mxu0 0.0
      %2294 = vmatpush1.msra.mxu0 0.0
      %2295 = vmatprep.subr.mxu0 0.0
      %2296 = vmatpush1.msra.mxu0 0.0
      %2297 = vmatprep.subr.mxu0 0.0
      %2298 = vmatpush1.msra.mxu0 0.0
      %2299 = vmatprep.subr.mxu0 0.0
      %2300 = vmatpush1.msra.mxu0 0.0
      %2301 = vmatprep.mubr.f32.mxu0 0.0
      %2302 = vmatmul.mubr.f32.gmra.mrb[0].mxu0 %v2022
      %v2303 = vpop.f32.mrb[0].mxu0
      %v2304 = vadd.f32 0.0, %v2303
      %v2305 = vpop.f32.mrb[0].mxu0
      %v2306 = vadd.f32 0.0, %v2305
      %2307 = vdwg.mxu0
      %2308 = vmatprep.subr.mxu0 0.0
      %2309 = vmatpush1.xpose.msra.mxu0 %v2091
      %2310 = vmatprep.subr.mxu0 0.0
      %2311 = vmatpush1.xpose.msra.mxu0 0.0
      %2312 = vmatprep.subr.mxu0 0.0
      %2313 = vmatpush1.xpose.msra.mxu0 0.0
      %2314 = vmatprep.subr.mxu0 0.0
      %2315 = vmatpush1.xpose.msra.mxu0 0.0
      %2316 = vmatprep.subr.mxu0 0.0
      %2317 = vmatpush1.xpose.msra.mxu0 0.0
      %2318 = vmatprep.subr.mxu0 0.0
      %2319 = vmatpush1.xpose.msra.mxu0 0.0
      %2320 = vmatprep.subr.mxu0 0.0
      %2321 = vmatpush1.xpose.msra.mxu0 0.0
      %2322 = vmatprep.subr.mxu0 0.0
      %2323 = vmatpush1.xpose.msra.mxu0 0.0
      %2324 = vmatprep.subr.mxu0 0.0
      %2325 = vmatpush1.xpose.msra.mxu0 0.0
      %2326 = vmatprep.subr.mxu0 0.0
      %2327 = vmatpush1.xpose.msra.mxu0 0.0
      %2328 = vmatprep.subr.mxu0 0.0
      %2329 = vmatpush1.xpose.msra.mxu0 0.0
      %2330 = vmatprep.subr.mxu0 0.0
      %2331 = vmatpush1.xpose.msra.mxu0 0.0
      %2332 = vmatprep.subr.mxu0 0.0
      %2333 = vmatpush1.xpose.msra.mxu0 0.0
      %2334 = vmatprep.subr.mxu0 0.0
      %2335 = vmatpush1.xpose.msra.mxu0 0.0
      %2336 = vmatprep.subr.mxu0 0.0
      %2337 = vmatpush1.xpose.msra.mxu0 0.0
      %2338 = vmatprep.subr.mxu0 0.0
      %2339 = vmatpush1.xpose.msra.mxu0 0.0
      %2340 = vmatprep.subr.mxu0 0.0
      %2341 = vmatpush1.xpose.msra.mxu0 0.0
      %2342 = vmatprep.subr.mxu0 0.0
      %2343 = vmatpush1.xpose.msra.mxu0 0.0
      %2344 = vmatprep.subr.mxu0 0.0
      %2345 = vmatpush1.xpose.msra.mxu0 0.0
      %2346 = vmatprep.subr.mxu0 0.0
      %2347 = vmatpush1.xpose.msra.mxu0 0.0
      %2348 = vmatprep.subr.mxu0 0.0
      %2349 = vmatpush1.xpose.msra.mxu0 0.0
      %2350 = vmatprep.subr.mxu0 0.0
      %2351 = vmatpush1.xpose.msra.mxu0 0.0
      %2352 = vmatprep.subr.mxu0 0.0
      %2353 = vmatpush1.xpose.msra.mxu0 0.0
      %2354 = vmatprep.subr.mxu0 0.0
      %2355 = vmatpush1.xpose.msra.mxu0 0.0
      %2356 = vmatprep.subr.mxu0 0.0
      %2357 = vmatpush1.xpose.msra.mxu0 0.0
      %2358 = vmatprep.subr.mxu0 0.0
      %2359 = vmatpush1.xpose.msra.mxu0 0.0
      %2360 = vmatprep.subr.mxu0 0.0
      %2361 = vmatpush1.xpose.msra.mxu0 0.0
      %2362 = vmatprep.subr.mxu0 0.0
      %2363 = vmatpush1.xpose.msra.mxu0 0.0
      %2364 = vmatprep.subr.mxu0 0.0
      %2365 = vmatpush1.xpose.msra.mxu0 0.0
      %2366 = vmatprep.subr.mxu0 0.0
      %2367 = vmatpush1.xpose.msra.mxu0 0.0
      %2368 = vmatprep.subr.mxu0 0.0
      %2369 = vmatpush1.xpose.msra.mxu0 0.0
      %2370 = vmatprep.subr.mxu0 0.0
      %2371 = vmatpush1.xpose.msra.mxu0 0.0
      %2372 = vmatprep.mubr.f32.mxu0 0.0
      %2373 = vmatmul.mubr.f32.gmra.mrb[0].mxu0 %v1914
      %v2374 = vpop.f32.mrb[0].mxu0
      %v2375 = vadd.f32 0.0, %v2374
      %v2376 = vpop.f32.mrb[0].mxu0
      %2377 = vdwg.mxu0
      %2378 = vmatprep.subr.mxu0 0.0
      %2379 = vmatpush1.xpose.msra.mxu0 %v2093
      %2380 = vmatprep.subr.mxu0 0.0
      %2381 = vmatpush1.xpose.msra.mxu0 0.0
      %2382 = vmatprep.subr.mxu0 0.0
      %2383 = vmatpush1.xpose.msra.mxu0 0.0
      %2384 = vmatprep.subr.mxu0 0.0
      %2385 = vmatpush1.xpose.msra.mxu0 0.0
      %2386 = vmatprep.subr.mxu0 0.0
      %2387 = vmatpush1.xpose.msra.mxu0 0.0
      %2388 = vmatprep.subr.mxu0 0.0
      %2389 = vmatpush1.xpose.msra.mxu0 0.0
      %2390 = vmatprep.subr.mxu0 0.0
      %2391 = vmatpush1.xpose.msra.mxu0 0.0
      %2392 = vmatprep.subr.mxu0 0.0
      %2393 = vmatpush1.xpose.msra.mxu0 0.0
      %2394 = vmatprep.subr.mxu0 0.0
      %2395 = vmatpush1.xpose.msra.mxu0 0.0
      %2396 = vmatprep.subr.mxu0 0.0
      %2397 = vmatpush1.xpose.msra.mxu0 0.0
      %2398 = vmatprep.subr.mxu0 0.0
      %2399 = vmatpush1.xpose.msra.mxu0 0.0
      %2400 = vmatprep.subr.mxu0 0.0
      %2401 = vmatpush1.xpose.msra.mxu0 0.0
      %2402 = vmatprep.subr.mxu0 0.0
      %2403 = vmatpush1.xpose.msra.mxu0 0.0
      %2404 = vmatprep.subr.mxu0 0.0
      %2405 = vmatpush1.xpose.msra.mxu0 0.0
      %2406 = vmatprep.subr.mxu0 0.0
      %2407 = vmatpush1.xpose.msra.mxu0 0.0
      %2408 = vmatprep.subr.mxu0 0.0
      %2409 = vmatpush1.xpose.msra.mxu0 0.0
      %2410 = vmatprep.subr.mxu0 0.0
      %2411 = vmatpush1.xpose.msra.mxu0 0.0
      %2412 = vmatprep.subr.mxu0 0.0
      %2413 = vmatpush1.xpose.msra.mxu0 0.0
      %2414 = vmatprep.subr.mxu0 0.0
      %2415 = vmatpush1.xpose.msra.mxu0 0.0
      %2416 = vmatprep.subr.mxu0 0.0
      %2417 = vmatpush1.xpose.msra.mxu0 0.0
      %2418 = vmatprep.subr.mxu0 0.0
      %2419 = vmatpush1.xpose.msra.mxu0 0.0
      %2420 = vmatprep.subr.mxu0 0.0
      %2421 = vmatpush1.xpose.msra.mxu0 0.0
      %2422 = vmatprep.subr.mxu0 0.0
      %2423 = vmatpush1.xpose.msra.mxu0 0.0
      %2424 = vmatprep.subr.mxu0 0.0
      %2425 = vmatpush1.xpose.msra.mxu0 0.0
      %2426 = vmatprep.subr.mxu0 0.0
      %2427 = vmatpush1.xpose.msra.mxu0 0.0
      %2428 = vmatprep.subr.mxu0 0.0
      %2429 = vmatpush1.xpose.msra.mxu0 0.0
      %2430 = vmatprep.subr.mxu0 0.0
      %2431 = vmatpush1.xpose.msra.mxu0 0.0
      %2432 = vmatprep.subr.mxu0 0.0
      %2433 = vmatpush1.xpose.msra.mxu0 0.0
      %2434 = vmatprep.subr.mxu0 0.0
      %2435 = vmatpush1.xpose.msra.mxu0 0.0
      %2436 = vmatprep.subr.mxu0 0.0
      %2437 = vmatpush1.xpose.msra.mxu0 0.0
      %2438 = vmatprep.subr.mxu0 0.0
      %2439 = vmatpush1.xpose.msra.mxu0 0.0
      %2440 = vmatprep.subr.mxu0 0.0
      %2441 = vmatpush1.xpose.msra.mxu0 0.0
      %2442 = vmatprep.mubr.f32.mxu0 0.0
      %2443 = vmatmul.mubr.f32.gmra.mrb[0].mxu0 %v1916
      %v2444 = vpop.f32.mrb[0].mxu0
      %v2445 = vadd.f32 0.0, %v2444
      %v2446 = vpop.f32.mrb[0].mxu0
      %2447 = vdwg.mxu0
      %2448 = vmatprep.subr.mxu0 0.0
      %2449 = vmatpush1.xpose.msra.mxu0 %v2162
      %2450 = vmatprep.subr.mxu0 0.0
      %2451 = vmatpush1.xpose.msra.mxu0 0.0
      %2452 = vmatprep.subr.mxu0 0.0
      %2453 = vmatpush1.xpose.msra.mxu0 0.0
      %2454 = vmatprep.subr.mxu0 0.0
      %2455 = vmatpush1.xpose.msra.mxu0 0.0
      %2456 = vmatprep.subr.mxu0 0.0
      %2457 = vmatpush1.xpose.msra.mxu0 0.0
      %2458 = vmatprep.subr.mxu0 0.0
      %2459 = vmatpush1.xpose.msra.mxu0 0.0
      %2460 = vmatprep.subr.mxu0 0.0
      %2461 = vmatpush1.xpose.msra.mxu0 0.0
      %2462 = vmatprep.subr.mxu0 0.0
      %2463 = vmatpush1.xpose.msra.mxu0 0.0
      %2464 = vmatprep.subr.mxu0 0.0
      %2465 = vmatpush1.xpose.msra.mxu0 0.0
      %2466 = vmatprep.subr.mxu0 0.0
      %2467 = vmatpush1.xpose.msra.mxu0 0.0
      %2468 = vmatprep.subr.mxu0 0.0
      %2469 = vmatpush1.xpose.msra.mxu0 0.0
      %2470 = vmatprep.subr.mxu0 0.0
      %2471 = vmatpush1.xpose.msra.mxu0 0.0
      %2472 = vmatprep.subr.mxu0 0.0
      %2473 = vmatpush1.xpose.msra.mxu0 0.0
      %2474 = vmatprep.subr.mxu0 0.0
      %2475 = vmatpush1.xpose.msra.mxu0 0.0
      %2476 = vmatprep.subr.mxu0 0.0
      %2477 = vmatpush1.xpose.msra.mxu0 0.0
      %2478 = vmatprep.subr.mxu0 0.0
      %2479 = vmatpush1.xpose.msra.mxu0 0.0
      %2480 = vmatprep.subr.mxu0 0.0
      %2481 = vmatpush1.xpose.msra.mxu0 0.0
      %2482 = vmatprep.subr.mxu0 0.0
      %2483 = vmatpush1.xpose.msra.mxu0 0.0
      %2484 = vmatprep.subr.mxu0 0.0
      %2485 = vmatpush1.xpose.msra.mxu0 0.0
      %2486 = vmatprep.subr.mxu0 0.0
      %2487 = vmatpush1.xpose.msra.mxu0 0.0
      %2488 = vmatprep.subr.mxu0 0.0
      %2489 = vmatpush1.xpose.msra.mxu0 0.0
      %2490 = vmatprep.subr.mxu0 0.0
      %2491 = vmatpush1.xpose.msra.mxu0 0.0
      %2492 = vmatprep.subr.mxu0 0.0
      %2493 = vmatpush1.xpose.msra.mxu0 0.0
      %2494 = vmatprep.subr.mxu0 0.0
      %2495 = vmatpush1.xpose.msra.mxu0 0.0
      %2496 = vmatprep.subr.mxu0 0.0
      %2497 = vmatpush1.xpose.msra.mxu0 0.0
      %2498 = vmatprep.subr.mxu0 0.0
      %2499 = vmatpush1.xpose.msra.mxu0 0.0
      %2500 = vmatprep.subr.mxu0 0.0
      %2501 = vmatpush1.xpose.msra.mxu0 0.0
      %2502 = vmatprep.subr.mxu0 0.0
      %2503 = vmatpush1.xpose.msra.mxu0 0.0
      %2504 = vmatprep.subr.mxu0 0.0
      %2505 = vmatpush1.xpose.msra.mxu0 0.0
      %2506 = vmatprep.subr.mxu0 0.0
      %2507 = vmatpush1.xpose.msra.mxu0 0.0
      %2508 = vmatprep.subr.mxu0 0.0
      %2509 = vmatpush1.xpose.msra.mxu0 0.0
      %2510 = vmatprep.subr.mxu0 0.0
      %2511 = vmatpush1.xpose.msra.mxu0 0.0
      %2512 = vmatprep.mubr.f32.mxu0 0.0
      %2513 = vmatmul.mubr.f32.gmra.mrb[0].mxu0 %v1985
      %v2514 = vpop.f32.mrb[0].mxu0
      %v2515 = vadd.f32 0.0, %v2514
      %v2516 = vpop.f32.mrb[0].mxu0
      %2517 = vdwg.mxu0
      %2518 = vmatprep.subr.mxu0 0.0
      %2519 = vmatpush1.xpose.msra.mxu0 %v2164
      %2520 = vmatprep.subr.mxu0 0.0
      %2521 = vmatpush1.xpose.msra.mxu0 0.0
      %2522 = vmatprep.subr.mxu0 0.0
      %2523 = vmatpush1.xpose.msra.mxu0 0.0
      %2524 = vmatprep.subr.mxu0 0.0
      %2525 = vmatpush1.xpose.msra.mxu0 0.0
      %2526 = vmatprep.subr.mxu0 0.0
      %2527 = vmatpush1.xpose.msra.mxu0 0.0
      %2528 = vmatprep.subr.mxu0 0.0
      %2529 = vmatpush1.xpose.msra.mxu0 0.0
      %2530 = vmatprep.subr.mxu0 0.0
      %2531 = vmatpush1.xpose.msra.mxu0 0.0
      %2532 = vmatprep.subr.mxu0 0.0
      %2533 = vmatpush1.xpose.msra.mxu0 0.0
      %2534 = vmatprep.subr.mxu0 0.0
      %2535 = vmatpush1.xpose.msra.mxu0 0.0
      %2536 = vmatprep.subr.mxu0 0.0
      %2537 = vmatpush1.xpose.msra.mxu0 0.0
      %2538 = vmatprep.subr.mxu0 0.0
      %2539 = vmatpush1.xpose.msra.mxu0 0.0
      %2540 = vmatprep.subr.mxu0 0.0
      %2541 = vmatpush1.xpose.msra.mxu0 0.0
      %2542 = vmatprep.subr.mxu0 0.0
      %2543 = vmatpush1.xpose.msra.mxu0 0.0
      %2544 = vmatprep.subr.mxu0 0.0
      %2545 = vmatpush1.xpose.msra.mxu0 0.0
      %2546 = vmatprep.subr.mxu0 0.0
      %2547 = vmatpush1.xpose.msra.mxu0 0.0
      %2548 = vmatprep.subr.mxu0 0.0
      %2549 = vmatpush1.xpose.msra.mxu0 0.0
      %2550 = vmatprep.subr.mxu0 0.0
      %2551 = vmatpush1.xpose.msra.mxu0 0.0
      %2552 = vmatprep.subr.mxu0 0.0
      %2553 = vmatpush1.xpose.msra.mxu0 0.0
      %2554 = vmatprep.subr.mxu0 0.0
      %2555 = vmatpush1.xpose.msra.mxu0 0.0
      %2556 = vmatprep.subr.mxu0 0.0
      %2557 = vmatpush1.xpose.msra.mxu0 0.0
      %2558 = vmatprep.subr.mxu0 0.0
      %2559 = vmatpush1.xpose.msra.mxu0 0.0
      %2560 = vmatprep.subr.mxu0 0.0
      %2561 = vmatpush1.xpose.msra.mxu0 0.0
      %2562 = vmatprep.subr.mxu0 0.0
      %2563 = vmatpush1.xpose.msra.mxu0 0.0
      %2564 = vmatprep.subr.mxu0 0.0
      %2565 = vmatpush1.xpose.msra.mxu0 0.0
      %2566 = vmatprep.subr.mxu0 0.0
      %2567 = vmatpush1.xpose.msra.mxu0 0.0
      %2568 = vmatprep.subr.mxu0 0.0
      %2569 = vmatpush1.xpose.msra.mxu0 0.0
      %2570 = vmatprep.subr.mxu0 0.0
      %2571 = vmatpush1.xpose.msra.mxu0 0.0
      %2572 = vmatprep.subr.mxu0 0.0
      %2573 = vmatpush1.xpose.msra.mxu0 0.0
      %2574 = vmatprep.subr.mxu0 0.0
      %2575 = vmatpush1.xpose.msra.mxu0 0.0
      %2576 = vmatprep.subr.mxu0 0.0
      %2577 = vmatpush1.xpose.msra.mxu0 0.0
      %2578 = vmatprep.subr.mxu0 0.0
      %2579 = vmatpush1.xpose.msra.mxu0 0.0
      %2580 = vmatprep.subr.mxu0 0.0
      %2581 = vmatpush1.xpose.msra.mxu0 0.0
      %2582 = vmatprep.mubr.f32.mxu0 0.0
      %2583 = vmatmul.mubr.f32.gmra.mrb[0].mxu0 %v1987
      %v2584 = vpop.f32.mrb[0].mxu0
      %v2585 = vadd.f32 0.0, %v2584
      %v2586 = vpop.f32.mrb[0].mxu0
      %2587 = vdwg.mxu0
      %vm2588 = vcmask 31744
      %v2589 = vsel %vm2588, %v2375, -inf
      %2590 = vmax.xlane.f32.xlu0 %v2589
      %v2591 = vpop.xlane.xlu0 %2590
      %v2592 = vsel %vm2588, %v2445, -inf
      %2593 = vmax.xlane.f32.xlu0 %v2592
      %v2594 = vpop.xlane.xlu0 %2593
      %v2595 = vsel %vm2588, %v2515, -inf
      %2596 = vmax.xlane.f32.xlu0 %v2595
      %v2597 = vpop.xlane.xlu0 %2596
      %v2598 = vsel %vm2588, %v2585, -inf
      %2599 = vmax.xlane.f32.xlu0 %v2598
      %v2600 = vpop.xlane.xlu0 %2599
      %v2601 = vsub.f32 %v2375, %v2591
      %v2602 = vsub.f32 %v2445, %v2594
      %v2603 = vsub.f32 %v2515, %v2597
      %v2604 = vsub.f32 %v2585, %v2600
      %v2605 = vmul.f32 %v2601, 1.442695
      %v2606 = vpow.pop %v2605
      %v2607 = vmul.f32 %v2602, 1.442695
      %v2608 = vpow.pop %v2607
      %v2609 = vmul.f32 %v2603, 1.442695
      %v2610 = vpow.pop %v2609
      %v2611 = vmul.f32 %v2604, 1.442695
      %v2612 = vpow.pop %v2611
      %v2613 = vsel %vm2588, %v2606, 0.0
      %2614 = vadd.xlane.f32.xlu0 %v2613
      %v2615 = vpop.xlane.xlu0 %2614
      %v2616 = vsel %vm2588, %v2608, 0.0
      %2617 = vadd.xlane.f32.xlu0 %v2616
      %v2618 = vpop.xlane.xlu0 %2617
      %v2619 = vsel %vm2588, %v2610, 0.0
      %2620 = vadd.xlane.f32.xlu0 %v2619
      %v2621 = vpop.xlane.xlu0 %2620
      %v2622 = vsel %vm2588, %v2612, 0.0
      %2623 = vadd.xlane.f32.xlu0 %v2622
      %v2624 = vpop.xlane.xlu0 %2623
      %v2625 = vrcp.pop %v2615
      %v2626 = vmul.f32 %v2606, %v2625
      %v2627 = vrcp.pop %v2618
      %v2628 = vmul.f32 %v2608, %v2627
      %v2629 = vrcp.pop %v2621
      %v2630 = vmul.f32 %v2610, %v2629
      %v2631 = vrcp.pop %v2624
      %v2632 = vmul.f32 %v2612, %v2631
      %v2634 = vsel %vm2588, %v2626, 0
      %vm2636 = vcmask 1043456
      %v2638 = vsel %vm2636, %v2233, 0
      %2640 = vmatprep.subr.mxu0 0.0
      %2641 = vmatpush1.msra.mxu0 %v2638
      %2642 = vmatprep.subr.mxu0 0.0
      %2643 = vmatpush1.msra.mxu0 0.0
      %2644 = vmatprep.subr.mxu0 0.0
      %2645 = vmatpush1.msra.mxu0 0.0
      %2646 = vmatprep.subr.mxu0 0.0
      %2647 = vmatpush1.msra.mxu0 0.0
      %2648 = vmatprep.subr.mxu0 0.0
      %2649 = vmatpush1.msra.mxu0 0.0
      %2650 = vmatprep.subr.mxu0 0.0
      %2651 = vmatpush1.msra.mxu0 0.0
      %2652 = vmatprep.subr.mxu0 0.0
      %2653 = vmatpush1.msra.mxu0 0.0
      %2654 = vmatprep.subr.mxu0 0.0
      %2655 = vmatpush1.msra.mxu0 0.0
      %2656 = vmatprep.subr.mxu0 0.0
      %2657 = vmatpush1.msra.mxu0 0.0
      %2658 = vmatprep.subr.mxu0 0.0
      %2659 = vmatpush1.msra.mxu0 0.0
      %2660 = vmatprep.subr.mxu0 0.0
      %2661 = vmatpush1.msra.mxu0 0.0
      %2662 = vmatprep.subr.mxu0 0.0
      %2663 = vmatpush1.msra.mxu0 0.0
      %2664 = vmatprep.subr.mxu0 0.0
      %2665 = vmatpush1.msra.mxu0 0.0
      %2666 = vmatprep.subr.mxu0 0.0
      %2667 = vmatpush1.msra.mxu0 0.0
      %2668 = vmatprep.subr.mxu0 0.0
      %2669 = vmatpush1.msra.mxu0 0.0
      %2670 = vmatprep.subr.mxu0 0.0
      %2671 = vmatpush1.msra.mxu0 0.0
      %2672 = vmatprep.subr.mxu0 0.0
      %2673 = vmatpush1.msra.mxu0 0.0
      %2674 = vmatprep.subr.mxu0 0.0
      %2675 = vmatpush1.msra.mxu0 0.0
      %2676 = vmatprep.subr.mxu0 0.0
      %2677 = vmatpush1.msra.mxu0 0.0
      %2678 = vmatprep.subr.mxu0 0.0
      %2679 = vmatpush1.msra.mxu0 0.0
      %2680 = vmatprep.subr.mxu0 0.0
      %2681 = vmatpush1.msra.mxu0 0.0
      %2682 = vmatprep.subr.mxu0 0.0
      %2683 = vmatpush1.msra.mxu0 0.0
      %2684 = vmatprep.subr.mxu0 0.0
      %2685 = vmatpush1.msra.mxu0 0.0
      %2686 = vmatprep.subr.mxu0 0.0
      %2687 = vmatpush1.msra.mxu0 0.0
      %2688 = vmatprep.subr.mxu0 0.0
      %2689 = vmatpush1.msra.mxu0 0.0
      %2690 = vmatprep.subr.mxu0 0.0
      %2691 = vmatpush1.msra.mxu0 0.0
      %2692 = vmatprep.subr.mxu0 0.0
      %2693 = vmatpush1.msra.mxu0 0.0
      %2694 = vmatprep.subr.mxu0 0.0
      %2695 = vmatpush1.msra.mxu0 0.0
      %2696 = vmatprep.subr.mxu0 0.0
      %2697 = vmatpush1.msra.mxu0 0.0
      %2698 = vmatprep.subr.mxu0 0.0
      %2699 = vmatpush1.msra.mxu0 0.0
      %2700 = vmatprep.subr.mxu0 0.0
      %2701 = vmatpush1.msra.mxu0 0.0
      %2702 = vmatprep.subr.mxu0 0.0
      %2703 = vmatpush1.msra.mxu0 0.0
      %2704 = vmatprep.mubr.f32.mxu0 0.0
      %2705 = vmatmul.mubr.f32.gmra.mrb[0].mxu0 %v2634
      %v2706 = vpop.f32.mrb[0].mxu0
      %v2707 = vadd.f32 0.0, %v2706
      %v2708 = vpop.f32.mrb[0].mxu0
      %2709 = vdwg.mxu0
      %v2711 = vsel %vm2588, %v2628, 0
      %v2714 = vsel %vm2636, %v2235, 0
      %2716 = vmatprep.subr.mxu0 0.0
      %2717 = vmatpush1.msra.mxu0 %v2714
      %2718 = vmatprep.subr.mxu0 0.0
      %2719 = vmatpush1.msra.mxu0 0.0
      %2720 = vmatprep.subr.mxu0 0.0
      %2721 = vmatpush1.msra.mxu0 0.0
      %2722 = vmatprep.subr.mxu0 0.0
      %2723 = vmatpush1.msra.mxu0 0.0
      %2724 = vmatprep.subr.mxu0 0.0
      %2725 = vmatpush1.msra.mxu0 0.0
      %2726 = vmatprep.subr.mxu0 0.0
      %2727 = vmatpush1.msra.mxu0 0.0
      %2728 = vmatprep.subr.mxu0 0.0
      %2729 = vmatpush1.msra.mxu0 0.0
      %2730 = vmatprep.subr.mxu0 0.0
      %2731 = vmatpush1.msra.mxu0 0.0
      %2732 = vmatprep.subr.mxu0 0.0
      %2733 = vmatpush1.msra.mxu0 0.0
      %2734 = vmatprep.subr.mxu0 0.0
      %2735 = vmatpush1.msra.mxu0 0.0
      %2736 = vmatprep.subr.mxu0 0.0
      %2737 = vmatpush1.msra.mxu0 0.0
      %2738 = vmatprep.subr.mxu0 0.0
      %2739 = vmatpush1.msra.mxu0 0.0
      %2740 = vmatprep.subr.mxu0 0.0
      %2741 = vmatpush1.msra.mxu0 0.0
      %2742 = vmatprep.subr.mxu0 0.0
      %2743 = vmatpush1.msra.mxu0 0.0
      %2744 = vmatprep.subr.mxu0 0.0
      %2745 = vmatpush1.msra.mxu0 0.0
      %2746 = vmatprep.subr.mxu0 0.0
      %2747 = vmatpush1.msra.mxu0 0.0
      %2748 = vmatprep.subr.mxu0 0.0
      %2749 = vmatpush1.msra.mxu0 0.0
      %2750 = vmatprep.subr.mxu0 0.0
      %2751 = vmatpush1.msra.mxu0 0.0
      %2752 = vmatprep.subr.mxu0 0.0
      %2753 = vmatpush1.msra.mxu0 0.0
      %2754 = vmatprep.subr.mxu0 0.0
      %2755 = vmatpush1.msra.mxu0 0.0
      %2756 = vmatprep.subr.mxu0 0.0
      %2757 = vmatpush1.msra.mxu0 0.0
      %2758 = vmatprep.subr.mxu0 0.0
      %2759 = vmatpush1.msra.mxu0 0.0
      %2760 = vmatprep.subr.mxu0 0.0
      %2761 = vmatpush1.msra.mxu0 0.0
      %2762 = vmatprep.subr.mxu0 0.0
      %2763 = vmatpush1.msra.mxu0 0.0
      %2764 = vmatprep.subr.mxu0 0.0
      %2765 = vmatpush1.msra.mxu0 0.0
      %2766 = vmatprep.subr.mxu0 0.0
      %2767 = vmatpush1.msra.mxu0 0.0
      %2768 = vmatprep.subr.mxu0 0.0
      %2769 = vmatpush1.msra.mxu0 0.0
      %2770 = vmatprep.subr.mxu0 0.0
      %2771 = vmatpush1.msra.mxu0 0.0
      %2772 = vmatprep.subr.mxu0 0.0
      %2773 = vmatpush1.msra.mxu0 0.0
      %2774 = vmatprep.subr.mxu0 0.0
      %2775 = vmatpush1.msra.mxu0 0.0
      %2776 = vmatprep.subr.mxu0 0.0
      %2777 = vmatpush1.msra.mxu0 0.0
      %2778 = vmatprep.subr.mxu0 0.0
      %2779 = vmatpush1.msra.mxu0 0.0
      %2780 = vmatprep.mubr.f32.mxu0 0.0
      %2781 = vmatmul.mubr.f32.gmra.mrb[0].mxu0 %v2711
      %v2782 = vpop.f32.mrb[0].mxu0
      %v2783 = vadd.f32 0.0, %v2782
      %v2784 = vpop.f32.mrb[0].mxu0
      %2785 = vdwg.mxu0
      %v2787 = vsel %vm2588, %v2630, 0
      %v2790 = vsel %vm2636, %v2304, 0
      %2792 = vmatprep.subr.mxu0 0.0
      %2793 = vmatpush1.msra.mxu0 %v2790
      %2794 = vmatprep.subr.mxu0 0.0
      %2795 = vmatpush1.msra.mxu0 0.0
      %2796 = vmatprep.subr.mxu0 0.0
      %2797 = vmatpush1.msra.mxu0 0.0
      %2798 = vmatprep.subr.mxu0 0.0
      %2799 = vmatpush1.msra.mxu0 0.0
      %2800 = vmatprep.subr.mxu0 0.0
      %2801 = vmatpush1.msra.mxu0 0.0
      %2802 = vmatprep.subr.mxu0 0.0
      %2803 = vmatpush1.msra.mxu0 0.0
      %2804 = vmatprep.subr.mxu0 0.0
      %2805 = vmatpush1.msra.mxu0 0.0
      %2806 = vmatprep.subr.mxu0 0.0
      %2807 = vmatpush1.msra.mxu0 0.0
      %2808 = vmatprep.subr.mxu0 0.0
      %2809 = vmatpush1.msra.mxu0 0.0
      %2810 = vmatprep.subr.mxu0 0.0
      %2811 = vmatpush1.msra.mxu0 0.0
      %2812 = vmatprep.subr.mxu0 0.0
      %2813 = vmatpush1.msra.mxu0 0.0
      %2814 = vmatprep.subr.mxu0 0.0
      %2815 = vmatpush1.msra.mxu0 0.0
      %2816 = vmatprep.subr.mxu0 0.0
      %2817 = vmatpush1.msra.mxu0 0.0
      %2818 = vmatprep.subr.mxu0 0.0
      %2819 = vmatpush1.msra.mxu0 0.0
      %2820 = vmatprep.subr.mxu0 0.0
      %2821 = vmatpush1.msra.mxu0 0.0
      %2822 = vmatprep.subr.mxu0 0.0
      %2823 = vmatpush1.msra.mxu0 0.0
      %2824 = vmatprep.subr.mxu0 0.0
      %2825 = vmatpush1.msra.mxu0 0.0
      %2826 = vmatprep.subr.mxu0 0.0
      %2827 = vmatpush1.msra.mxu0 0.0
      %2828 = vmatprep.subr.mxu0 0.0
      %2829 = vmatpush1.msra.mxu0 0.0
      %2830 = vmatprep.subr.mxu0 0.0
      %2831 = vmatpush1.msra.mxu0 0.0
      %2832 = vmatprep.subr.mxu0 0.0
      %2833 = vmatpush1.msra.mxu0 0.0
      %2834 = vmatprep.subr.mxu0 0.0
      %2835 = vmatpush1.msra.mxu0 0.0
      %2836 = vmatprep.subr.mxu0 0.0
      %2837 = vmatpush1.msra.mxu0 0.0
      %2838 = vmatprep.subr.mxu0 0.0
      %2839 = vmatpush1.msra.mxu0 0.0
      %2840 = vmatprep.subr.mxu0 0.0
      %2841 = vmatpush1.msra.mxu0 0.0
      %2842 = vmatprep.subr.mxu0 0.0
      %2843 = vmatpush1.msra.mxu0 0.0
      %2844 = vmatprep.subr.mxu0 0.0
      %2845 = vmatpush1.msra.mxu0 0.0
      %2846 = vmatprep.subr.mxu0 0.0
      %2847 = vmatpush1.msra.mxu0 0.0
      %2848 = vmatprep.subr.mxu0 0.0
      %2849 = vmatpush1.msra.mxu0 0.0
      %2850 = vmatprep.subr.mxu0 0.0
      %2851 = vmatpush1.msra.mxu0 0.0
      %2852 = vmatprep.subr.mxu0 0.0
      %2853 = vmatpush1.msra.mxu0 0.0
      %2854 = vmatprep.subr.mxu0 0.0
      %2855 = vmatpush1.msra.mxu0 0.0
      %2856 = vmatprep.mubr.f32.mxu0 0.0
      %2857 = vmatmul.mubr.f32.gmra.mrb[0].mxu0 %v2787
      %v2858 = vpop.f32.mrb[0].mxu0
      %v2859 = vadd.f32 0.0, %v2858
      %v2860 = vpop.f32.mrb[0].mxu0
      %2861 = vdwg.mxu0
      %v2863 = vsel %vm2588, %v2632, 0
      %v2866 = vsel %vm2636, %v2306, 0
      %2868 = vmatprep.subr.mxu0 0.0
      %2869 = vmatpush1.msra.mxu0 %v2866
      %2870 = vmatprep.subr.mxu0 0.0
      %2871 = vmatpush1.msra.mxu0 0.0
      %2872 = vmatprep.subr.mxu0 0.0
      %2873 = vmatpush1.msra.mxu0 0.0
      %2874 = vmatprep.subr.mxu0 0.0
      %2875 = vmatpush1.msra.mxu0 0.0
      %2876 = vmatprep.subr.mxu0 0.0
      %2877 = vmatpush1.msra.mxu0 0.0
      %2878 = vmatprep.subr.mxu0 0.0
      %2879 = vmatpush1.msra.mxu0 0.0
      %2880 = vmatprep.subr.mxu0 0.0
      %2881 = vmatpush1.msra.mxu0 0.0
      %2882 = vmatprep.subr.mxu0 0.0
      %2883 = vmatpush1.msra.mxu0 0.0
      %2884 = vmatprep.subr.mxu0 0.0
      %2885 = vmatpush1.msra.mxu0 0.0
      %2886 = vmatprep.subr.mxu0 0.0
      %2887 = vmatpush1.msra.mxu0 0.0
      %2888 = vmatprep.subr.mxu0 0.0
      %2889 = vmatpush1.msra.mxu0 0.0
      %2890 = vmatprep.subr.mxu0 0.0
      %2891 = vmatpush1.msra.mxu0 0.0
      %2892 = vmatprep.subr.mxu0 0.0
      %2893 = vmatpush1.msra.mxu0 0.0
      %2894 = vmatprep.subr.mxu0 0.0
      %2895 = vmatpush1.msra.mxu0 0.0
      %2896 = vmatprep.subr.mxu0 0.0
      %2897 = vmatpush1.msra.mxu0 0.0
      %2898 = vmatprep.subr.mxu0 0.0
      %2899 = vmatpush1.msra.mxu0 0.0
      %2900 = vmatprep.subr.mxu0 0.0
      %2901 = vmatpush1.msra.mxu0 0.0
      %2902 = vmatprep.subr.mxu0 0.0
      %2903 = vmatpush1.msra.mxu0 0.0
      %2904 = vmatprep.subr.mxu0 0.0
      %2905 = vmatpush1.msra.mxu0 0.0
      %2906 = vmatprep.subr.mxu0 0.0
      %2907 = vmatpush1.msra.mxu0 0.0
      %2908 = vmatprep.subr.mxu0 0.0
      %2909 = vmatpush1.msra.mxu0 0.0
      %2910 = vmatprep.subr.mxu0 0.0
      %2911 = vmatpush1.msra.mxu0 0.0
      %2912 = vmatprep.subr.mxu0 0.0
      %2913 = vmatpush1.msra.mxu0 0.0
      %2914 = vmatprep.subr.mxu0 0.0
      %2915 = vmatpush1.msra.mxu0 0.0
      %2916 = vmatprep.subr.mxu0 0.0
      %2917 = vmatpush1.msra.mxu0 0.0
      %2918 = vmatprep.subr.mxu0 0.0
      %2919 = vmatpush1.msra.mxu0 0.0
      %2920 = vmatprep.subr.mxu0 0.0
      %2921 = vmatpush1.msra.mxu0 0.0
      %2922 = vmatprep.subr.mxu0 0.0
      %2923 = vmatpush1.msra.mxu0 0.0
      %2924 = vmatprep.subr.mxu0 0.0
      %2925 = vmatpush1.msra.mxu0 0.0
      %2926 = vmatprep.subr.mxu0 0.0
      %2927 = vmatpush1.msra.mxu0 0.0
      %2928 = vmatprep.subr.mxu0 0.0
      %2929 = vmatpush1.msra.mxu0 0.0
      %2930 = vmatprep.subr.mxu0 0.0
      %2931 = vmatpush1.msra.mxu0 0.0
      %2932 = vmatprep.mubr.f32.mxu0 0.0
      %2933 = vmatmul.mubr.f32.gmra.mrb[0].mxu0 %v2863
      %v2934 = vpop.f32.mrb[0].mxu0
      %v2935 = vadd.f32 0.0, %v2934
      %v2936 = vpop.f32.mrb[0].mxu0
      %2937 = vdwg.mxu0
      %v2938 = vld [vmem:[%s8] sm:$0xff]
      %v2939 = vld [vmem:[%s8 + $0x8] sm:$0xff]
      %v2940 = vld [vmem:[%s8 + $0x10] sm:$0xff]
      %v2941 = vld [vmem:[%s8 + $0x18] sm:$0xff]
      %v2942 = vld [vmem:[%s8 + $0x20] sm:$0xff]
      %v2943 = vld [vmem:[%s8 + $0x28] sm:$0xff]
      %v2944 = vld [vmem:[%s8 + $0x30] sm:$0xff]
      %v2945 = vld [vmem:[%s8 + $0x38] sm:$0xff]
      %v2946 = vld [vmem:[%s8 + $0x40] sm:$0xff]
      %v2947 = vld [vmem:[%s8 + $0x48] sm:$0xff]
      %v2948 = vld [vmem:[%s8 + $0x50] sm:$0xff]
      %v2949 = vld [vmem:[%s8 + $0x58] sm:$0xff]
      %v2950 = vld [vmem:[%s8 + $0x60] sm:$0xff]
      %v2951 = vld [vmem:[%s8 + $0x68] sm:$0xff]
      %v2952 = vld [vmem:[%s8 + $0x70] sm:$0xff]
      %v2953 = vld [vmem:[%s8 + $0x78] sm:$0xff]
      %v2954 = vld [vmem:[%s8 + $0x80] sm:$0xff]
      %v2955 = vld [vmem:[%s8 + $0x88] sm:$0xff]
      %v2956 = vld [vmem:[%s8 + $0x90] sm:$0xff]
      %v2957 = vld [vmem:[%s8 + $0x98] sm:$0xff]
      %v2958 = vld [vmem:[%s8 + $0xa0] sm:$0xff]
      %v2959 = vld [vmem:[%s8 + $0xa8] sm:$0xff]
      %v2960 = vld [vmem:[%s8 + $0xb0] sm:$0xff]
      %v2961 = vld [vmem:[%s8 + $0xb8] sm:$0xff]
      %v2962 = vld [vmem:[%s8 + $0xc0] sm:$0xff]
      %v2963 = vld [vmem:[%s8 + $0xc8] sm:$0xff]
      %v2964 = vld [vmem:[%s8 + $0xd0] sm:$0xff]
      %v2965 = vld [vmem:[%s8 + $0xd8] sm:$0xff]
      %v2966 = vld [vmem:[%s8 + $0xe0] sm:$0xff]
      %v2967 = vld [vmem:[%s8 + $0xe8] sm:$0xff]
      %v2968 = vld [vmem:[%s8 + $0xf0] sm:$0xff]
      %v2969 = vld [vmem:[%s8 + $0xf8] sm:$0xff]
      %v2970 = vld [vmem:[%s8 + $0x100] sm:$0xff]
      %v2971 = vld [vmem:[%s8 + $0x108] sm:$0xff]
      %v2972 = vld [vmem:[%s8 + $0x110] sm:$0xff]
      %v2973 = vld [vmem:[%s8 + $0x118] sm:$0xff]
      %v2974 = vld [vmem:[%s8 + $0x120] sm:$0xff]
      %v2975 = vld [vmem:[%s8 + $0x128] sm:$0xff]
      %v2976 = vld [vmem:[%s8 + $0x130] sm:$0xff]
      %v2977 = vld [vmem:[%s8 + $0x138] sm:$0xff]
      %v2978 = vld [vmem:[%s8 + $0x140] sm:$0xff]
      %v2979 = vld [vmem:[%s8 + $0x148] sm:$0xff]
      %v2980 = vld [vmem:[%s8 + $0x150] sm:$0xff]
      %v2981 = vld [vmem:[%s8 + $0x158] sm:$0xff]
      %v2982 = vld [vmem:[%s8 + $0x160] sm:$0xff]
      %v2983 = vld [vmem:[%s8 + $0x168] sm:$0xff]
      %v2984 = vld [vmem:[%s8 + $0x170] sm:$0xff]
      %v2985 = vld [vmem:[%s8 + $0x178] sm:$0xff]
      %v2986 = vld [vmem:[%s8 + $0x180] sm:$0xff]
      %v2987 = vld [vmem:[%s8 + $0x188] sm:$0xff]
      %v2988 = vld [vmem:[%s8 + $0x190] sm:$0xff]
      %v2989 = vld [vmem:[%s8 + $0x198] sm:$0xff]
      %v2990 = vld [vmem:[%s8 + $0x1a0] sm:$0xff]
      %v2991 = vld [vmem:[%s8 + $0x1a8] sm:$0xff]
      %v2992 = vld [vmem:[%s8 + $0x1b0] sm:$0xff]
      %v2993 = vld [vmem:[%s8 + $0x1b8] sm:$0xff]
      %v2994 = vld [vmem:[%s8 + $0x1c0] sm:$0xff]
      %v2995 = vld [vmem:[%s8 + $0x1c8] sm:$0xff]
      %v2996 = vld [vmem:[%s8 + $0x1d0] sm:$0xff]
      %v2997 = vld [vmem:[%s8 + $0x1d8] sm:$0xff]
      %v2998 = vld [vmem:[%s8 + $0x1e0] sm:$0xff]
      %v2999 = vld [vmem:[%s8 + $0x1e8] sm:$0xff]
      %v3000 = vld [vmem:[%s8 + $0x1f0] sm:$0xff]
      %v3001 = vld [vmem:[%s8 + $0x1f8] sm:$0xff]
      %3002 = vmatprep.subr.mxu0 0.0
      %3003 = vmatpush1.msra.mxu0 %v2938
      %3004 = vmatprep.subr.mxu0 0.0
      %3005 = vmatpush1.msra.mxu0 %v2939
      %3006 = vmatprep.subr.mxu0 0.0
      %3007 = vmatpush1.msra.mxu0 %v2940
      %3008 = vmatprep.subr.mxu0 0.0
      %3009 = vmatpush1.msra.mxu0 %v2941
      %3010 = vmatprep.subr.mxu0 0.0
      %3011 = vmatpush1.msra.mxu0 %v2942
      %3012 = vmatprep.subr.mxu0 0.0
      %3013 = vmatpush1.msra.mxu0 %v2943
      %3014 = vmatprep.subr.mxu0 0.0
      %3015 = vmatpush1.msra.mxu0 %v2944
      %3016 = vmatprep.subr.mxu0 0.0
      %3017 = vmatpush1.msra.mxu0 %v2945
      %3018 = vmatprep.subr.mxu0 0.0
      %3019 = vmatpush1.msra.mxu0 %v2946
      %3020 = vmatprep.subr.mxu0 0.0
      %3021 = vmatpush1.msra.mxu0 %v2947
      %3022 = vmatprep.subr.mxu0 0.0
      %3023 = vmatpush1.msra.mxu0 %v2948
      %3024 = vmatprep.subr.mxu0 0.0
      %3025 = vmatpush1.msra.mxu0 %v2949
      %3026 = vmatprep.subr.mxu0 0.0
      %3027 = vmatpush1.msra.mxu0 %v2950
      %3028 = vmatprep.subr.mxu0 0.0
      %3029 = vmatpush1.msra.mxu0 %v2951
      %3030 = vmatprep.subr.mxu0 0.0
      %3031 = vmatpush1.msra.mxu0 %v2952
      %3032 = vmatprep.subr.mxu0 0.0
      %3033 = vmatpush1.msra.mxu0 %v2953
      %3034 = vmatprep.subr.mxu0 0.0
      %3035 = vmatpush1.msra.mxu0 %v2954
      %3036 = vmatprep.subr.mxu0 0.0
      %3037 = vmatpush1.msra.mxu0 %v2955
      %3038 = vmatprep.subr.mxu0 0.0
      %3039 = vmatpush1.msra.mxu0 %v2956
      %3040 = vmatprep.subr.mxu0 0.0
      %3041 = vmatpush1.msra.mxu0 %v2957
      %3042 = vmatprep.subr.mxu0 0.0
      %3043 = vmatpush1.msra.mxu0 %v2958
      %3044 = vmatprep.subr.mxu0 0.0
      %3045 = vmatpush1.msra.mxu0 %v2959
      %3046 = vmatprep.subr.mxu0 0.0
      %3047 = vmatpush1.msra.mxu0 %v2960
      %3048 = vmatprep.subr.mxu0 0.0
      %3049 = vmatpush1.msra.mxu0 %v2961
      %3050 = vmatprep.subr.mxu0 0.0
      %3051 = vmatpush1.msra.mxu0 %v2962
      %3052 = vmatprep.subr.mxu0 0.0
      %3053 = vmatpush1.msra.mxu0 %v2963
      %3054 = vmatprep.subr.mxu0 0.0
      %3055 = vmatpush1.msra.mxu0 %v2964
      %3056 = vmatprep.subr.mxu0 0.0
      %3057 = vmatpush1.msra.mxu0 %v2965
      %3058 = vmatprep.subr.mxu0 0.0
      %3059 = vmatpush1.msra.mxu0 %v2966
      %3060 = vmatprep.subr.mxu0 0.0
      %3061 = vmatpush1.msra.mxu0 %v2967
      %3062 = vmatprep.subr.mxu0 0.0
      %3063 = vmatpush1.msra.mxu0 %v2968
      %3064 = vmatprep.subr.mxu0 0.0
      %3065 = vmatpush1.msra.mxu0 %v2969
      %3066 = vmatprep.mubr.f32.mxu0 %v2783
      %3067 = vmatmul.mubr.f32.gmra.mrb[0].mxu0 %v2707
      %v3068 = vpop.f32.mrb[0].mxu0
      %v3069 = vadd.f32 0.0, %v3068
      %v3070 = vpop.f32.mrb[0].mxu0
      %3071 = vdwg.mxu0
      %3072 = vmatprep.subr.mxu0 0.0
      %3073 = vmatpush1.msra.mxu0 %v2970
      %3074 = vmatprep.subr.mxu0 0.0
      %3075 = vmatpush1.msra.mxu0 %v2971
      %3076 = vmatprep.subr.mxu0 0.0
      %3077 = vmatpush1.msra.mxu0 %v2972
      %3078 = vmatprep.subr.mxu0 0.0
      %3079 = vmatpush1.msra.mxu0 %v2973
      %3080 = vmatprep.subr.mxu0 0.0
      %3081 = vmatpush1.msra.mxu0 %v2974
      %3082 = vmatprep.subr.mxu0 0.0
      %3083 = vmatpush1.msra.mxu0 %v2975
      %3084 = vmatprep.subr.mxu0 0.0
      %3085 = vmatpush1.msra.mxu0 %v2976
      %3086 = vmatprep.subr.mxu0 0.0
      %3087 = vmatpush1.msra.mxu0 %v2977
      %3088 = vmatprep.subr.mxu0 0.0
      %3089 = vmatpush1.msra.mxu0 %v2978
      %3090 = vmatprep.subr.mxu0 0.0
      %3091 = vmatpush1.msra.mxu0 %v2979
      %3092 = vmatprep.subr.mxu0 0.0
      %3093 = vmatpush1.msra.mxu0 %v2980
      %3094 = vmatprep.subr.mxu0 0.0
      %3095 = vmatpush1.msra.mxu0 %v2981
      %3096 = vmatprep.subr.mxu0 0.0
      %3097 = vmatpush1.msra.mxu0 %v2982
      %3098 = vmatprep.subr.mxu0 0.0
      %3099 = vmatpush1.msra.mxu0 %v2983
      %3100 = vmatprep.subr.mxu0 0.0
      %3101 = vmatpush1.msra.mxu0 %v2984
      %3102 = vmatprep.subr.mxu0 0.0
      %3103 = vmatpush1.msra.mxu0 %v2985
      %3104 = vmatprep.subr.mxu0 0.0
      %3105 = vmatpush1.msra.mxu0 %v2986
      %3106 = vmatprep.subr.mxu0 0.0
      %3107 = vmatpush1.msra.mxu0 %v2987
      %3108 = vmatprep.subr.mxu0 0.0
      %3109 = vmatpush1.msra.mxu0 %v2988
      %3110 = vmatprep.subr.mxu0 0.0
      %3111 = vmatpush1.msra.mxu0 %v2989
      %3112 = vmatprep.subr.mxu0 0.0
      %3113 = vmatpush1.msra.mxu0 %v2990
      %3114 = vmatprep.subr.mxu0 0.0
      %3115 = vmatpush1.msra.mxu0 %v2991
      %3116 = vmatprep.subr.mxu0 0.0
      %3117 = vmatpush1.msra.mxu0 %v2992
      %3118 = vmatprep.subr.mxu0 0.0
      %3119 = vmatpush1.msra.mxu0 %v2993
      %3120 = vmatprep.subr.mxu0 0.0
      %3121 = vmatpush1.msra.mxu0 %v2994
      %3122 = vmatprep.subr.mxu0 0.0
      %3123 = vmatpush1.msra.mxu0 %v2995
      %3124 = vmatprep.subr.mxu0 0.0
      %3125 = vmatpush1.msra.mxu0 %v2996
      %3126 = vmatprep.subr.mxu0 0.0
      %3127 = vmatpush1.msra.mxu0 %v2997
      %3128 = vmatprep.subr.mxu0 0.0
      %3129 = vmatpush1.msra.mxu0 %v2998
      %3130 = vmatprep.subr.mxu0 0.0
      %3131 = vmatpush1.msra.mxu0 %v2999
      %3132 = vmatprep.subr.mxu0 0.0
      %3133 = vmatpush1.msra.mxu0 %v3000
      %3134 = vmatprep.subr.mxu0 0.0
      %3135 = vmatpush1.msra.mxu0 %v3001
      %3136 = vmatprep.mubr.f32.mxu0 %v2935
      %3137 = vmatmul.mubr.f32.gmra.mrb[0].mxu0 %v2859
      %v3138 = vpop.f32.mrb[0].mxu0
      %v3139 = vadd.f32 %v3069, %v3138
      %v3140 = vpop.f32.mrb[0].mxu0
      %3141 = vdwg.mxu0
      %v3142 = vadd.f32 %v1809, %v3139
      %v3143 = vld [vmem:[%s9] sm:$0x1]
      %v3144 = vmul.f32 %v3142, %v3142
      %v3145 = vsel %vm554, %v3144, 0.0
      %3146 = vadd.xlane.f32.xlu0 %v3145
      %v3147 = vpop.xlane.xlu0 %3146
      %v3148 = vmul.f32 %v3147, %v494
      %v3149 = vadd.f32 %v3148, 1e-06
      %v3150 = vrsqrt.pop %v3149
      %v3151 = vmul.f32 %v3142, %v3150
      %v3153 = vlaneseq
      %v3154 = vshrl.u32 %v3153, 7
      %v3155 = vsub.s32 0, %v3154
      %v3156 = vrot.slane %v3143, %v3155
      %v3158 = vmul.f32 %v3151, %v3156
      %v3159 = vld [vmem:[%s10] sm:$0xff]
      %v3160 = vld [vmem:[%s10 + $0x8] sm:$0xff]
      %v3161 = vld [vmem:[%s10 + $0x10] sm:$0xff]
      %v3162 = vld [vmem:[%s10 + $0x18] sm:$0xff]
      %v3164 = vsel %vm554, %v3158, 0
      %3166 = vmatprep.subr.mxu0 0.0
      %3167 = vmatpush1.msra.mxu0 %v3159
      %3168 = vmatprep.subr.mxu0 0.0
      %3169 = vmatpush1.msra.mxu0 %v3160
      %3170 = vmatprep.subr.mxu0 0.0
      %3171 = vmatpush1.msra.mxu0 %v3161
      %3172 = vmatprep.subr.mxu0 0.0
      %3173 = vmatpush1.msra.mxu0 %v3162
      %3174 = vmatprep.subr.mxu0 0.0
      %3175 = vmatpush1.msra.mxu0 0.0
      %3176 = vmatprep.subr.mxu0 0.0
      %3177 = vmatpush1.msra.mxu0 0.0
      %3178 = vmatprep.subr.mxu0 0.0
      %3179 = vmatpush1.msra.mxu0 0.0
      %3180 = vmatprep.subr.mxu0 0.0
      %3181 = vmatpush1.msra.mxu0 0.0
      %3182 = vmatprep.subr.mxu0 0.0
      %3183 = vmatpush1.msra.mxu0 0.0
      %3184 = vmatprep.subr.mxu0 0.0
      %3185 = vmatpush1.msra.mxu0 0.0
      %3186 = vmatprep.subr.mxu0 0.0
      %3187 = vmatpush1.msra.mxu0 0.0
      %3188 = vmatprep.subr.mxu0 0.0
      %3189 = vmatpush1.msra.mxu0 0.0
      %3190 = vmatprep.subr.mxu0 0.0
      %3191 = vmatpush1.msra.mxu0 0.0
      %3192 = vmatprep.subr.mxu0 0.0
      %3193 = vmatpush1.msra.mxu0 0.0
      %3194 = vmatprep.subr.mxu0 0.0
      %3195 = vmatpush1.msra.mxu0 0.0
      %3196 = vmatprep.subr.mxu0 0.0
      %3197 = vmatpush1.msra.mxu0 0.0
      %3198 = vmatprep.subr.mxu0 0.0
      %3199 = vmatpush1.msra.mxu0 0.0
      %3200 = vmatprep.subr.mxu0 0.0
      %3201 = vmatpush1.msra.mxu0 0.0
      %3202 = vmatprep.subr.mxu0 0.0
      %3203 = vmatpush1.msra.mxu0 0.0
      %3204 = vmatprep.subr.mxu0 0.0
      %3205 = vmatpush1.msra.mxu0 0.0
      %3206 = vmatprep.subr.mxu0 0.0
      %3207 = vmatpush1.msra.mxu0 0.0
      %3208 = vmatprep.subr.mxu0 0.0
      %3209 = vmatpush1.msra.mxu0 0.0
      %3210 = vmatprep.subr.mxu0 0.0
      %3211 = vmatpush1.msra.mxu0 0.0
      %3212 = vmatprep.subr.mxu0 0.0
      %3213 = vmatpush1.msra.mxu0 0.0
      %3214 = vmatprep.subr.mxu0 0.0
      %3215 = vmatpush1.msra.mxu0 0.0
      %3216 = vmatprep.subr.mxu0 0.0
      %3217 = vmatpush1.msra.mxu0 0.0
      %3218 = vmatprep.subr.mxu0 0.0
      %3219 = vmatpush1.msra.mxu0 0.0
      %3220 = vmatprep.subr.mxu0 0.0
      %3221 = vmatpush1.msra.mxu0 0.0
      %3222 = vmatprep.subr.mxu0 0.0
      %3223 = vmatpush1.msra.mxu0 0.0
      %3224 = vmatprep.subr.mxu0 0.0
      %3225 = vmatpush1.msra.mxu0 0.0
      %3226 = vmatprep.subr.mxu0 0.0
      %3227 = vmatpush1.msra.mxu0 0.0
      %3228 = vmatprep.subr.mxu0 0.0
      %3229 = vmatpush1.msra.mxu0 0.0
      %3230 = vmatprep.mubr.f32.mxu0 0.0
      %3231 = vmatmul.mubr.f32.gmra.mrb[0].mxu0 %v3164
      %v3232 = vpop.f32.mrb[0].mxu0
      %v3233 = vadd.f32 0.0, %v3232
      %v3234 = vpop.f32.mrb[0].mxu0
      %3235 = vdwg.mxu0
      %v3236 = vmax.f32 %v3233, 0.0
      %v3237 = vld [vmem:[%s11] sm:$0xff]
      %v3238 = vld [vmem:[%s11 + $0x8] sm:$0xff]
      %v3239 = vld [vmem:[%s11 + $0x10] sm:$0xff]
      %v3240 = vld [vmem:[%s11 + $0x18] sm:$0xff]
      %v3241 = vld [vmem:[%s11 + $0x20] sm:$0xff]
      %v3242 = vld [vmem:[%s11 + $0x28] sm:$0xff]
      %v3243 = vld [vmem:[%s11 + $0x30] sm:$0xff]
      %v3244 = vld [vmem:[%s11 + $0x38] sm:$0xff]
      %v3245 = vld [vmem:[%s11 + $0x40] sm:$0xff]
      %v3246 = vld [vmem:[%s11 + $0x48] sm:$0xff]
      %v3247 = vld [vmem:[%s11 + $0x50] sm:$0xff]
      %v3248 = vld [vmem:[%s11 + $0x58] sm:$0xff]
      %v3249 = vld [vmem:[%s11 + $0x60] sm:$0xff]
      %v3250 = vld [vmem:[%s11 + $0x68] sm:$0xff]
      %v3251 = vld [vmem:[%s11 + $0x70] sm:$0xff]
      %v3252 = vld [vmem:[%s11 + $0x78] sm:$0xff]
      %3253 = vmatprep.subr.mxu0 0.0
      %3254 = vmatpush1.msra.mxu0 %v3237
      %3255 = vmatprep.subr.mxu0 0.0
      %3256 = vmatpush1.msra.mxu0 %v3238
      %3257 = vmatprep.subr.mxu0 0.0
      %3258 = vmatpush1.msra.mxu0 %v3239
      %3259 = vmatprep.subr.mxu0 0.0
      %3260 = vmatpush1.msra.mxu0 %v3240
      %3261 = vmatprep.subr.mxu0 0.0
      %3262 = vmatpush1.msra.mxu0 %v3241
      %3263 = vmatprep.subr.mxu0 0.0
      %3264 = vmatpush1.msra.mxu0 %v3242
      %3265 = vmatprep.subr.mxu0 0.0
      %3266 = vmatpush1.msra.mxu0 %v3243
      %3267 = vmatprep.subr.mxu0 0.0
      %3268 = vmatpush1.msra.mxu0 %v3244
      %3269 = vmatprep.subr.mxu0 0.0
      %3270 = vmatpush1.msra.mxu0 %v3245
      %3271 = vmatprep.subr.mxu0 0.0
      %3272 = vmatpush1.msra.mxu0 %v3246
      %3273 = vmatprep.subr.mxu0 0.0
      %3274 = vmatpush1.msra.mxu0 %v3247
      %3275 = vmatprep.subr.mxu0 0.0
      %3276 = vmatpush1.msra.mxu0 %v3248
      %3277 = vmatprep.subr.mxu0 0.0
      %3278 = vmatpush1.msra.mxu0 %v3249
      %3279 = vmatprep.subr.mxu0 0.0
      %3280 = vmatpush1.msra.mxu0 %v3250
      %3281 = vmatprep.subr.mxu0 0.0
      %3282 = vmatpush1.msra.mxu0 %v3251
      %3283 = vmatprep.subr.mxu0 0.0
      %3284 = vmatpush1.msra.mxu0 %v3252
      %3285 = vmatprep.subr.mxu0 0.0
      %3286 = vmatpush1.msra.mxu0 0.0
      %3287 = vmatprep.subr.mxu0 0.0
      %3288 = vmatpush1.msra.mxu0 0.0
      %3289 = vmatprep.subr.mxu0 0.0
      %3290 = vmatpush1.msra.mxu0 0.0
      %3291 = vmatprep.subr.mxu0 0.0
      %3292 = vmatpush1.msra.mxu0 0.0
      %3293 = vmatprep.subr.mxu0 0.0
      %3294 = vmatpush1.msra.mxu0 0.0
      %3295 = vmatprep.subr.mxu0 0.0
      %3296 = vmatpush1.msra.mxu0 0.0
      %3297 = vmatprep.subr.mxu0 0.0
      %3298 = vmatpush1.msra.mxu0 0.0
      %3299 = vmatprep.subr.mxu0 0.0
      %3300 = vmatpush1.msra.mxu0 0.0
      %3301 = vmatprep.subr.mxu0 0.0
      %3302 = vmatpush1.msra.mxu0 0.0
      %3303 = vmatprep.subr.mxu0 0.0
      %3304 = vmatpush1.msra.mxu0 0.0
      %3305 = vmatprep.subr.mxu0 0.0
      %3306 = vmatpush1.msra.mxu0 0.0
      %3307 = vmatprep.subr.mxu0 0.0
      %3308 = vmatpush1.msra.mxu0 0.0
      %3309 = vmatprep.subr.mxu0 0.0
      %3310 = vmatpush1.msra.mxu0 0.0
      %3311 = vmatprep.subr.mxu0 0.0
      %3312 = vmatpush1.msra.mxu0 0.0
      %3313 = vmatprep.subr.mxu0 0.0
      %3314 = vmatpush1.msra.mxu0 0.0
      %3315 = vmatprep.subr.mxu0 0.0
      %3316 = vmatpush1.msra.mxu0 0.0
      %3317 = vmatprep.mubr.f32.mxu0 0.0
      %3318 = vmatmul.mubr.f32.gmra.mrb[0].mxu0 %v3236
      %v3319 = vpop.f32.mrb[0].mxu0
      %v3320 = vadd.f32 0.0, %v3319
      %v3321 = vpop.f32.mrb[0].mxu0
      %3322 = vdwg.mxu0
      %v3323 = vadd.f32 %v3142, %v3320
      %s3324 = scalar_lea.vmem %s2, 1
      %v3325 = vld [vmem:[%s3324] sm:$0x1]
      %v3326 = vmul.f32 %v3323, %v3323
      %v3327 = vsel %vm554, %v3326, 0.0
      %3328 = vadd.xlane.f32.xlu0 %v3327
      %v3329 = vpop.xlane.xlu0 %3328
      %v3330 = vmul.f32 %v3329, %v494
      %v3331 = vadd.f32 %v3330, 1e-06
      %v3332 = vrsqrt.pop %v3331
      %v3333 = vmul.f32 %v3323, %v3332
      %v3335 = vlaneseq
      %v3336 = vshrl.u32 %v3335, 7
      %v3337 = vsub.s32 0, %v3336
      %v3338 = vrot.slane %v3325, %v3337
      %v3340 = vmul.f32 %v3333, %v3338
      %s3341 = scalar_lea.vmem %s3, 384
      %v3342 = vld [vmem:[%s3341] sm:$0xff]
      %v3343 = vld [vmem:[%s3341 + $0x8] sm:$0xff]
      %v3344 = vld [vmem:[%s3341 + $0x10] sm:$0xff]
      %v3345 = vld [vmem:[%s3341 + $0x18] sm:$0xff]
      %v3346 = vld [vmem:[%s3341 + $0x20] sm:$0xff]
      %v3347 = vld [vmem:[%s3341 + $0x28] sm:$0xff]
      %v3348 = vld [vmem:[%s3341 + $0x30] sm:$0xff]
      %v3349 = vld [vmem:[%s3341 + $0x38] sm:$0xff]
      %v3350 = vld [vmem:[%s3341 + $0x40] sm:$0xff]
      %v3351 = vld [vmem:[%s3341 + $0x48] sm:$0xff]
      %v3352 = vld [vmem:[%s3341 + $0x50] sm:$0xff]
      %v3353 = vld [vmem:[%s3341 + $0x58] sm:$0xff]
      %v3354 = vld [vmem:[%s3341 + $0x60] sm:$0xff]
      %v3355 = vld [vmem:[%s3341 + $0x68] sm:$0xff]
      %v3356 = vld [vmem:[%s3341 + $0x70] sm:$0xff]
      %v3357 = vld [vmem:[%s3341 + $0x78] sm:$0xff]
      %v3358 = vld [vmem:[%s3341 + $0x80] sm:$0xff]
      %v3359 = vld [vmem:[%s3341 + $0x88] sm:$0xff]
      %v3360 = vld [vmem:[%s3341 + $0x90] sm:$0xff]
      %v3361 = vld [vmem:[%s3341 + $0x98] sm:$0xff]
      %v3362 = vld [vmem:[%s3341 + $0xa0] sm:$0xff]
      %v3363 = vld [vmem:[%s3341 + $0xa8] sm:$0xff]
      %v3364 = vld [vmem:[%s3341 + $0xb0] sm:$0xff]
      %v3365 = vld [vmem:[%s3341 + $0xb8] sm:$0xff]
      %v3366 = vld [vmem:[%s3341 + $0xc0] sm:$0xff]
      %v3367 = vld [vmem:[%s3341 + $0xc8] sm:$0xff]
      %v3368 = vld [vmem:[%s3341 + $0xd0] sm:$0xff]
      %v3369 = vld [vmem:[%s3341 + $0xd8] sm:$0xff]
      %v3370 = vld [vmem:[%s3341 + $0xe0] sm:$0xff]
      %v3371 = vld [vmem:[%s3341 + $0xe8] sm:$0xff]
      %v3372 = vld [vmem:[%s3341 + $0xf0] sm:$0xff]
      %v3373 = vld [vmem:[%s3341 + $0xf8] sm:$0xff]
      %v3374 = vld [vmem:[%s3341 + $0x100] sm:$0xff]
      %v3375 = vld [vmem:[%s3341 + $0x108] sm:$0xff]
      %v3376 = vld [vmem:[%s3341 + $0x110] sm:$0xff]
      %v3377 = vld [vmem:[%s3341 + $0x118] sm:$0xff]
      %v3378 = vld [vmem:[%s3341 + $0x120] sm:$0xff]
      %v3379 = vld [vmem:[%s3341 + $0x128] sm:$0xff]
      %v3380 = vld [vmem:[%s3341 + $0x130] sm:$0xff]
      %v3381 = vld [vmem:[%s3341 + $0x138] sm:$0xff]
      %v3382 = vld [vmem:[%s3341 + $0x140] sm:$0xff]
      %v3383 = vld [vmem:[%s3341 + $0x148] sm:$0xff]
      %v3384 = vld [vmem:[%s3341 + $0x150] sm:$0xff]
      %v3385 = vld [vmem:[%s3341 + $0x158] sm:$0xff]
      %v3386 = vld [vmem:[%s3341 + $0x160] sm:$0xff]
      %v3387 = vld [vmem:[%s3341 + $0x168] sm:$0xff]
      %v3388 = vld [vmem:[%s3341 + $0x170] sm:$0xff]
      %v3389 = vld [vmem:[%s3341 + $0x178] sm:$0xff]
      %v3391 = vsel %vm554, %v3340, 0
      %3393 = vmatprep.subr.mxu0 %v3343
      %3394 = vmatpush1.msra.mxu0 %v3342
      %3395 = vmatprep.subr.mxu0 %v3355
      %3396 = vmatpush1.msra.mxu0 %v3354
      %3397 = vmatprep.subr.mxu0 %v3367
      %3398 = vmatpush1.msra.mxu0 %v3366
      %3399 = vmatprep.subr.mxu0 %v3379
      %3400 = vmatpush1.msra.mxu0 %v3378
      %3401 = vmatprep.subr.mxu0 0.0
      %3402 = vmatpush1.msra.mxu0 0.0
      %3403 = vmatprep.subr.mxu0 0.0
      %3404 = vmatpush1.msra.mxu0 0.0
      %3405 = vmatprep.subr.mxu0 0.0
      %3406 = vmatpush1.msra.mxu0 0.0
      %3407 = vmatprep.subr.mxu0 0.0
      %3408 = vmatpush1.msra.mxu0 0.0
      %3409 = vmatprep.subr.mxu0 0.0
      %3410 = vmatpush1.msra.mxu0 0.0
      %3411 = vmatprep.subr.mxu0 0.0
      %3412 = vmatpush1.msra.mxu0 0.0
      %3413 = vmatprep.subr.mxu0 0.0
      %3414 = vmatpush1.msra.mxu0 0.0
      %3415 = vmatprep.subr.mxu0 0.0
      %3416 = vmatpush1.msra.mxu0 0.0
      %3417 = vmatprep.subr.mxu0 0.0
      %3418 = vmatpush1.msra.mxu0 0.0
      %3419 = vmatprep.subr.mxu0 0.0
      %3420 = vmatpush1.msra.mxu0 0.0
      %3421 = vmatprep.subr.mxu0 0.0
      %3422 = vmatpush1.msra.mxu0 0.0
      %3423 = vmatprep.subr.mxu0 0.0
      %3424 = vmatpush1.msra.mxu0 0.0
      %3425 = vmatprep.subr.mxu0 0.0
      %3426 = vmatpush1.msra.mxu0 0.0
      %3427 = vmatprep.subr.mxu0 0.0
      %3428 = vmatpush1.msra.mxu0 0.0
      %3429 = vmatprep.subr.mxu0 0.0
      %3430 = vmatpush1.msra.mxu0 0.0
      %3431 = vmatprep.subr.mxu0 0.0
      %3432 = vmatpush1.msra.mxu0 0.0
      %3433 = vmatprep.subr.mxu0 0.0
      %3434 = vmatpush1.msra.mxu0 0.0
      %3435 = vmatprep.subr.mxu0 0.0
      %3436 = vmatpush1.msra.mxu0 0.0
      %3437 = vmatprep.subr.mxu0 0.0
      %3438 = vmatpush1.msra.mxu0 0.0
      %3439 = vmatprep.subr.mxu0 0.0
      %3440 = vmatpush1.msra.mxu0 0.0
      %3441 = vmatprep.subr.mxu0 0.0
      %3442 = vmatpush1.msra.mxu0 0.0
      %3443 = vmatprep.subr.mxu0 0.0
      %3444 = vmatpush1.msra.mxu0 0.0
      %3445 = vmatprep.subr.mxu0 0.0
      %3446 = vmatpush1.msra.mxu0 0.0
      %3447 = vmatprep.subr.mxu0 0.0
      %3448 = vmatpush1.msra.mxu0 0.0
      %3449 = vmatprep.subr.mxu0 0.0
      %3450 = vmatpush1.msra.mxu0 0.0
      %3451 = vmatprep.subr.mxu0 0.0
      %3452 = vmatpush1.msra.mxu0 0.0
      %3453 = vmatprep.subr.mxu0 0.0
      %3454 = vmatpush1.msra.mxu0 0.0
      %3455 = vmatprep.subr.mxu0 0.0
      %3456 = vmatpush1.msra.mxu0 0.0
      %3457 = vmatprep.mubr.f32.mxu0 0.0
      %3458 = vmatmul.mubr.f32.gmra.mrb[0].mxu0 %v3391
      %v3459 = vpop.f32.mrb[0].mxu0
      %v3460 = vadd.f32 0.0, %v3459
      %v3461 = vpop.f32.mrb[0].mxu0
      %v3462 = vadd.f32 0.0, %v3461
      %3463 = vdwg.mxu0
      %3464 = vmatprep.subr.mxu0 %v3345
      %3465 = vmatpush1.msra.mxu0 %v3344
      %3466 = vmatprep.subr.mxu0 %v3357
      %3467 = vmatpush1.msra.mxu0 %v3356
      %3468 = vmatprep.subr.mxu0 %v3369
      %3469 = vmatpush1.msra.mxu0 %v3368
      %3470 = vmatprep.subr.mxu0 %v3381
      %3471 = vmatpush1.msra.mxu0 %v3380
      %3472 = vmatprep.subr.mxu0 0.0
      %3473 = vmatpush1.msra.mxu0 0.0
      %3474 = vmatprep.subr.mxu0 0.0
      %3475 = vmatpush1.msra.mxu0 0.0
      %3476 = vmatprep.subr.mxu0 0.0
      %3477 = vmatpush1.msra.mxu0 0.0
      %3478 = vmatprep.subr.mxu0 0.0
      %3479 = vmatpush1.msra.mxu0 0.0
      %3480 = vmatprep.subr.mxu0 0.0
      %3481 = vmatpush1.msra.mxu0 0.0
      %3482 = vmatprep.subr.mxu0 0.0
      %3483 = vmatpush1.msra.mxu0 0.0
      %3484 = vmatprep.subr.mxu0 0.0
      %3485 = vmatpush1.msra.mxu0 0.0
      %3486 = vmatprep.subr.mxu0 0.0
      %3487 = vmatpush1.msra.mxu0 0.0
      %3488 = vmatprep.subr.mxu0 0.0
      %3489 = vmatpush1.msra.mxu0 0.0
      %3490 = vmatprep.subr.mxu0 0.0
      %3491 = vmatpush1.msra.mxu0 0.0
      %3492 = vmatprep.subr.mxu0 0.0
      %3493 = vmatpush1.msra.mxu0 0.0
      %3494 = vmatprep.subr.mxu0 0.0
      %3495 = vmatpush1.msra.mxu0 0.0
      %3496 = vmatprep.subr.mxu0 0.0
      %3497 = vmatpush1.msra.mxu0 0.0
      %3498 = vmatprep.subr.mxu0 0.0
      %3499 = vmatpush1.msra.mxu0 0.0
      %3500 = vmatprep.subr.mxu0 0.0
      %3501 = vmatpush1.msra.mxu0 0.0
      %3502 = vmatprep.subr.mxu0 0.0
      %3503 = vmatpush1.msra.mxu0 0.0
      %3504 = vmatprep.subr.mxu0 0.0
      %3505 = vmatpush1.msra.mxu0 0.0
      %3506 = vmatprep.subr.mxu0 0.0
      %3507 = vmatpush1.msra.mxu0 0.0
      %3508 = vmatprep.subr.mxu0 0.0
      %3509 = vmatpush1.msra.mxu0 0.0
      %3510 = vmatprep.subr.mxu0 0.0
      %3511 = vmatpush1.msra.mxu0 0.0
      %3512 = vmatprep.subr.mxu0 0.0
      %3513 = vmatpush1.msra.mxu0 0.0
      %3514 = vmatprep.subr.mxu0 0.0
      %3515 = vmatpush1.msra.mxu0 0.0
      %3516 = vmatprep.subr.mxu0 0.0
      %3517 = vmatpush1.msra.mxu0 0.0
      %3518 = vmatprep.subr.mxu0 0.0
      %3519 = vmatpush1.msra.mxu0 0.0
      %3520 = vmatprep.subr.mxu0 0.0
      %3521 = vmatpush1.msra.mxu0 0.0
      %3522 = vmatprep.subr.mxu0 0.0
      %3523 = vmatpush1.msra.mxu0 0.0
      %3524 = vmatprep.subr.mxu0 0.0
      %3525 = vmatpush1.msra.mxu0 0.0
      %3526 = vmatprep.subr.mxu0 0.0
      %3527 = vmatpush1.msra.mxu0 0.0
      %3528 = vmatprep.mubr.f32.mxu0 0.0
      %3529 = vmatmul.mubr.f32.gmra.mrb[0].mxu0 %v3391
      %v3530 = vpop.f32.mrb[0].mxu0
      %v3531 = vadd.f32 0.0, %v3530
      %v3532 = vpop.f32.mrb[0].mxu0
      %v3533 = vadd.f32 0.0, %v3532
      %3534 = vdwg.mxu0
      %3535 = vmatprep.subr.mxu0 %v3347
      %3536 = vmatpush1.msra.mxu0 %v3346
      %3537 = vmatprep.subr.mxu0 %v3359
      %3538 = vmatpush1.msra.mxu0 %v3358
      %3539 = vmatprep.subr.mxu0 %v3371
      %3540 = vmatpush1.msra.mxu0 %v3370
      %3541 = vmatprep.subr.mxu0 %v3383
      %3542 = vmatpush1.msra.mxu0 %v3382
      %3543 = vmatprep.subr.mxu0 0.0
      %3544 = vmatpush1.msra.mxu0 0.0
      %3545 = vmatprep.subr.mxu0 0.0
      %3546 = vmatpush1.msra.mxu0 0.0
      %3547 = vmatprep.subr.mxu0 0.0
      %3548 = vmatpush1.msra.mxu0 0.0
      %3549 = vmatprep.subr.mxu0 0.0
      %3550 = vmatpush1.msra.mxu0 0.0
      %3551 = vmatprep.subr.mxu0 0.0
      %3552 = vmatpush1.msra.mxu0 0.0
      %3553 = vmatprep.subr.mxu0 0.0
      %3554 = vmatpush1.msra.mxu0 0.0
      %3555 = vmatprep.subr.mxu0 0.0
      %3556 = vmatpush1.msra.mxu0 0.0
      %3557 = vmatprep.subr.mxu0 0.0
      %3558 = vmatpush1.msra.mxu0 0.0
      %3559 = vmatprep.subr.mxu0 0.0
      %3560 = vmatpush1.msra.mxu0 0.0
      %3561 = vmatprep.subr.mxu0 0.0
      %3562 = vmatpush1.msra.mxu0 0.0
      %3563 = vmatprep.subr.mxu0 0.0
      %3564 = vmatpush1.msra.mxu0 0.0
      %3565 = vmatprep.subr.mxu0 0.0
      %3566 = vmatpush1.msra.mxu0 0.0
      %3567 = vmatprep.subr.mxu0 0.0
      %3568 = vmatpush1.msra.mxu0 0.0
      %3569 = vmatprep.subr.mxu0 0.0
      %3570 = vmatpush1.msra.mxu0 0.0
      %3571 = vmatprep.subr.mxu0 0.0
      %3572 = vmatpush1.msra.mxu0 0.0
      %3573 = vmatprep.subr.mxu0 0.0
      %3574 = vmatpush1.msra.mxu0 0.0
      %3575 = vmatprep.subr.mxu0 0.0
      %3576 = vmatpush1.msra.mxu0 0.0
      %3577 = vmatprep.subr.mxu0 0.0
      %3578 = vmatpush1.msra.mxu0 0.0
      %3579 = vmatprep.subr.mxu0 0.0
      %3580 = vmatpush1.msra.mxu0 0.0
      %3581 = vmatprep.subr.mxu0 0.0
      %3582 = vmatpush1.msra.mxu0 0.0
      %3583 = vmatprep.subr.mxu0 0.0
      %3584 = vmatpush1.msra.mxu0 0.0
      %3585 = vmatprep.subr.mxu0 0.0
      %3586 = vmatpush1.msra.mxu0 0.0
      %3587 = vmatprep.subr.mxu0 0.0
      %3588 = vmatpush1.msra.mxu0 0.0
      %3589 = vmatprep.subr.mxu0 0.0
      %3590 = vmatpush1.msra.mxu0 0.0
      %3591 = vmatprep.subr.mxu0 0.0
      %3592 = vmatpush1.msra.mxu0 0.0
      %3593 = vmatprep.subr.mxu0 0.0
      %3594 = vmatpush1.msra.mxu0 0.0
      %3595 = vmatprep.subr.mxu0 0.0
      %3596 = vmatpush1.msra.mxu0 0.0
      %3597 = vmatprep.subr.mxu0 0.0
      %3598 = vmatpush1.msra.mxu0 0.0
      %3599 = vmatprep.mubr.f32.mxu0 0.0
      %3600 = vmatmul.mubr.f32.gmra.mrb[0].mxu0 %v3391
      %v3601 = vpop.f32.mrb[0].mxu0
      %v3602 = vadd.f32 0.0, %v3601
      %v3603 = vpop.f32.mrb[0].mxu0
      %v3604 = vadd.f32 0.0, %v3603
      %3605 = vdwg.mxu0
      %3606 = vmatprep.subr.mxu0 %v3349
      %3607 = vmatpush1.msra.mxu0 %v3348
      %3608 = vmatprep.subr.mxu0 %v3361
      %3609 = vmatpush1.msra.mxu0 %v3360
      %3610 = vmatprep.subr.mxu0 %v3373
      %3611 = vmatpush1.msra.mxu0 %v3372
      %3612 = vmatprep.subr.mxu0 %v3385
      %3613 = vmatpush1.msra.mxu0 %v3384
      %3614 = vmatprep.subr.mxu0 0.0
      %3615 = vmatpush1.msra.mxu0 0.0
      %3616 = vmatprep.subr.mxu0 0.0
      %3617 = vmatpush1.msra.mxu0 0.0
      %3618 = vmatprep.subr.mxu0 0.0
      %3619 = vmatpush1.msra.mxu0 0.0
      %3620 = vmatprep.subr.mxu0 0.0
      %3621 = vmatpush1.msra.mxu0 0.0
      %3622 = vmatprep.subr.mxu0 0.0
      %3623 = vmatpush1.msra.mxu0 0.0
      %3624 = vmatprep.subr.mxu0 0.0
      %3625 = vmatpush1.msra.mxu0 0.0
      %3626 = vmatprep.subr.mxu0 0.0
      %3627 = vmatpush1.msra.mxu0 0.0
      %3628 = vmatprep.subr.mxu0 0.0
      %3629 = vmatpush1.msra.mxu0 0.0
      %3630 = vmatprep.subr.mxu0 0.0
      %3631 = vmatpush1.msra.mxu0 0.0
      %3632 = vmatprep.subr.mxu0 0.0
      %3633 = vmatpush1.msra.mxu0 0.0
      %3634 = vmatprep.subr.mxu0 0.0
      %3635 = vmatpush1.msra.mxu0 0.0
      %3636 = vmatprep.subr.mxu0 0.0
      %3637 = vmatpush1.msra.mxu0 0.0
      %3638 = vmatprep.subr.mxu0 0.0
      %3639 = vmatpush1.msra.mxu0 0.0
      %3640 = vmatprep.subr.mxu0 0.0
      %3641 = vmatpush1.msra.mxu0 0.0
      %3642 = vmatprep.subr.mxu0 0.0
      %3643 = vmatpush1.msra.mxu0 0.0
      %3644 = vmatprep.subr.mxu0 0.0
      %3645 = vmatpush1.msra.mxu0 0.0
      %3646 = vmatprep.subr.mxu0 0.0
      %3647 = vmatpush1.msra.mxu0 0.0
      %3648 = vmatprep.subr.mxu0 0.0
      %3649 = vmatpush1.msra.mxu0 0.0
      %3650 = vmatprep.subr.mxu0 0.0
      %3651 = vmatpush1.msra.mxu0 0.0
      %3652 = vmatprep.subr.mxu0 0.0
      %3653 = vmatpush1.msra.mxu0 0.0
      %3654 = vmatprep.subr.mxu0 0.0
      %3655 = vmatpush1.msra.mxu0 0.0
      %3656 = vmatprep.subr.mxu0 0.0
      %3657 = vmatpush1.msra.mxu0 0.0
      %3658 = vmatprep.subr.mxu0 0.0
      %3659 = vmatpush1.msra.mxu0 0.0
      %3660 = vmatprep.subr.mxu0 0.0
      %3661 = vmatpush1.msra.mxu0 0.0
      %3662 = vmatprep.subr.mxu0 0.0
      %3663 = vmatpush1.msra.mxu0 0.0
      %3664 = vmatprep.subr.mxu0 0.0
      %3665 = vmatpush1.msra.mxu0 0.0
      %3666 = vmatprep.subr.mxu0 0.0
      %3667 = vmatpush1.msra.mxu0 0.0
      %3668 = vmatprep.subr.mxu0 0.0
      %3669 = vmatpush1.msra.mxu0 0.0
      %3670 = vmatprep.mubr.f32.mxu0 0.0
      %3671 = vmatmul.mubr.f32.gmra.mrb[0].mxu0 %v3391
      %v3672 = vpop.f32.mrb[0].mxu0
      %v3673 = vadd.f32 0.0, %v3672
      %v3674 = vpop.f32.mrb[0].mxu0
      %v3675 = vadd.f32 0.0, %v3674
      %3676 = vdwg.mxu0
      %3677 = vmatprep.subr.mxu0 %v3351
      %3678 = vmatpush1.msra.mxu0 %v3350
      %3679 = vmatprep.subr.mxu0 %v3363
      %3680 = vmatpush1.msra.mxu0 %v3362
      %3681 = vmatprep.subr.mxu0 %v3375
      %3682 = vmatpush1.msra.mxu0 %v3374
      %3683 = vmatprep.subr.mxu0 %v3387
      %3684 = vmatpush1.msra.mxu0 %v3386
      %3685 = vmatprep.subr.mxu0 0.0
      %3686 = vmatpush1.msra.mxu0 0.0
      %3687 = vmatprep.subr.mxu0 0.0
      %3688 = vmatpush1.msra.mxu0 0.0
      %3689 = vmatprep.subr.mxu0 0.0
      %3690 = vmatpush1.msra.mxu0 0.0
      %3691 = vmatprep.subr.mxu0 0.0
      %3692 = vmatpush1.msra.mxu0 0.0
      %3693 = vmatprep.subr.mxu0 0.0
      %3694 = vmatpush1.msra.mxu0 0.0
      %3695 = vmatprep.subr.mxu0 0.0
      %3696 = vmatpush1.msra.mxu0 0.0
      %3697 = vmatprep.subr.mxu0 0.0
      %3698 = vmatpush1.msra.mxu0 0.0
      %3699 = vmatprep.subr.mxu0 0.0
      %3700 = vmatpush1.msra.mxu0 0.0
      %3701 = vmatprep.subr.mxu0 0.0
      %3702 = vmatpush1.msra.mxu0 0.0
      %3703 = vmatprep.subr.mxu0 0.0
      %3704 = vmatpush1.msra.mxu0 0.0
      %3705 = vmatprep.subr.mxu0 0.0
      %3706 = vmatpush1.msra.mxu0 0.0
      %3707 = vmatprep.subr.mxu0 0.0
      %3708 = vmatpush1.msra.mxu0 0.0
      %3709 = vmatprep.subr.mxu0 0.0
      %3710 = vmatpush1.msra.mxu0 0.0
      %3711 = vmatprep.subr.mxu0 0.0
      %3712 = vmatpush1.msra.mxu0 0.0
      %3713 = vmatprep.subr.mxu0 0.0
      %3714 = vmatpush1.msra.mxu0 0.0
      %3715 = vmatprep.subr.mxu0 0.0
      %3716 = vmatpush1.msra.mxu0 0.0
      %3717 = vmatprep.subr.mxu0 0.0
      %3718 = vmatpush1.msra.mxu0 0.0
      %3719 = vmatprep.subr.mxu0 0.0
      %3720 = vmatpush1.msra.mxu0 0.0
      %3721 = vmatprep.subr.mxu0 0.0
      %3722 = vmatpush1.msra.mxu0 0.0
      %3723 = vmatprep.subr.mxu0 0.0
      %3724 = vmatpush1.msra.mxu0 0.0
      %3725 = vmatprep.subr.mxu0 0.0
      %3726 = vmatpush1.msra.mxu0 0.0
      %3727 = vmatprep.subr.mxu0 0.0
      %3728 = vmatpush1.msra.mxu0 0.0
      %3729 = vmatprep.subr.mxu0 0.0
      %3730 = vmatpush1.msra.mxu0 0.0
      %3731 = vmatprep.subr.mxu0 0.0
      %3732 = vmatpush1.msra.mxu0 0.0
      %3733 = vmatprep.subr.mxu0 0.0
      %3734 = vmatpush1.msra.mxu0 0.0
      %3735 = vmatprep.subr.mxu0 0.0
      %3736 = vmatpush1.msra.mxu0 0.0
      %3737 = vmatprep.subr.mxu0 0.0
      %3738 = vmatpush1.msra.mxu0 0.0
      %3739 = vmatprep.subr.mxu0 0.0
      %3740 = vmatpush1.msra.mxu0 0.0
      %3741 = vmatprep.mubr.f32.mxu0 0.0
      %3742 = vmatmul.mubr.f32.gmra.mrb[0].mxu0 %v3391
      %v3743 = vpop.f32.mrb[0].mxu0
      %v3744 = vadd.f32 0.0, %v3743
      %v3745 = vpop.f32.mrb[0].mxu0
      %v3746 = vadd.f32 0.0, %v3745
      %3747 = vdwg.mxu0
      %3748 = vmatprep.subr.mxu0 %v3353
      %3749 = vmatpush1.msra.mxu0 %v3352
      %3750 = vmatprep.subr.mxu0 %v3365
      %3751 = vmatpush1.msra.mxu0 %v3364
      %3752 = vmatprep.subr.mxu0 %v3377
      %3753 = vmatpush1.msra.mxu0 %v3376
      %3754 = vmatprep.subr.mxu0 %v3389
      %3755 = vmatpush1.msra.mxu0 %v3388
      %3756 = vmatprep.subr.mxu0 0.0
      %3757 = vmatpush1.msra.mxu0 0.0
      %3758 = vmatprep.subr.mxu0 0.0
      %3759 = vmatpush1.msra.mxu0 0.0
      %3760 = vmatprep.subr.mxu0 0.0
      %3761 = vmatpush1.msra.mxu0 0.0
      %3762 = vmatprep.subr.mxu0 0.0
      %3763 = vmatpush1.msra.mxu0 0.0
      %3764 = vmatprep.subr.mxu0 0.0
      %3765 = vmatpush1.msra.mxu0 0.0
      %3766 = vmatprep.subr.mxu0 0.0
      %3767 = vmatpush1.msra.mxu0 0.0
      %3768 = vmatprep.subr.mxu0 0.0
      %3769 = vmatpush1.msra.mxu0 0.0
      %3770 = vmatprep.subr.mxu0 0.0
      %3771 = vmatpush1.msra.mxu0 0.0
      %3772 = vmatprep.subr.mxu0 0.0
      %3773 = vmatpush1.msra.mxu0 0.0
      %3774 = vmatprep.subr.mxu0 0.0
      %3775 = vmatpush1.msra.mxu0 0.0
      %3776 = vmatprep.subr.mxu0 0.0
      %3777 = vmatpush1.msra.mxu0 0.0
      %3778 = vmatprep.subr.mxu0 0.0
      %3779 = vmatpush1.msra.mxu0 0.0
      %3780 = vmatprep.subr.mxu0 0.0
      %3781 = vmatpush1.msra.mxu0 0.0
      %3782 = vmatprep.subr.mxu0 0.0
      %3783 = vmatpush1.msra.mxu0 0.0
      %3784 = vmatprep.subr.mxu0 0.0
      %3785 = vmatpush1.msra.mxu0 0.0
      %3786 = vmatprep.subr.mxu0 0.0
      %3787 = vmatpush1.msra.mxu0 0.0
      %3788 = vmatprep.subr.mxu0 0.0
      %3789 = vmatpush1.msra.mxu0 0.0
      %3790 = vmatprep.subr.mxu0 0.0
      %3791 = vmatpush1.msra.mxu0 0.0
      %3792 = vmatprep.subr.mxu0 0.0
      %3793 = vmatpush1.msra.mxu0 0.0
      %3794 = vmatprep.subr.mxu0 0.0
      %3795 = vmatpush1.msra.mxu0 0.0
      %3796 = vmatprep.subr.mxu0 0.0
      %3797 = vmatpush1.msra.mxu0 0.0
      %3798 = vmatprep.subr.mxu0 0.0
      %3799 = vmatpush1.msra.mxu0 0.0
      %3800 = vmatprep.subr.mxu0 0.0
      %3801 = vmatpush1.msra.mxu0 0.0
      %3802 = vmatprep.subr.mxu0 0.0
      %3803 = vmatpush1.msra.mxu0 0.0
      %3804 = vmatprep.subr.mxu0 0.0
      %3805 = vmatpush1.msra.mxu0 0.0
      %3806 = vmatprep.subr.mxu0 0.0
      %3807 = vmatpush1.msra.mxu0 0.0
      %3808 = vmatprep.subr.mxu0 0.0
      %3809 = vmatpush1.msra.mxu0 0.0
      %3810 = vmatprep.subr.mxu0 0.0
      %3811 = vmatpush1.msra.mxu0 0.0
      %3812 = vmatprep.mubr.f32.mxu0 0.0
      %3813 = vmatmul.mubr.f32.gmra.mrb[0].mxu0 %v3391
      %v3814 = vpop.f32.mrb[0].mxu0
      %v3815 = vadd.f32 0.0, %v3814
      %v3816 = vpop.f32.mrb[0].mxu0
      %v3817 = vadd.f32 0.0, %v3816
      %3818 = vdwg.mxu0
      %3819 = vmatprep.subr.mxu0 0.0
      %3820 = vmatpush1.xpose.msra.mxu0 %v3602
      %3821 = vmatprep.subr.mxu0 0.0
      %3822 = vmatpush1.xpose.msra.mxu0 0.0
      %3823 = vmatprep.subr.mxu0 0.0
      %3824 = vmatpush1.xpose.msra.mxu0 0.0
      %3825 = vmatprep.subr.mxu0 0.0
      %3826 = vmatpush1.xpose.msra.mxu0 0.0
      %3827 = vmatprep.subr.mxu0 0.0
      %3828 = vmatpush1.xpose.msra.mxu0 0.0
      %3829 = vmatprep.subr.mxu0 0.0
      %3830 = vmatpush1.xpose.msra.mxu0 0.0
      %3831 = vmatprep.subr.mxu0 0.0
      %3832 = vmatpush1.xpose.msra.mxu0 0.0
      %3833 = vmatprep.subr.mxu0 0.0
      %3834 = vmatpush1.xpose.msra.mxu0 0.0
      %3835 = vmatprep.subr.mxu0 0.0
      %3836 = vmatpush1.xpose.msra.mxu0 0.0
      %3837 = vmatprep.subr.mxu0 0.0
      %3838 = vmatpush1.xpose.msra.mxu0 0.0
      %3839 = vmatprep.subr.mxu0 0.0
      %3840 = vmatpush1.xpose.msra.mxu0 0.0
      %3841 = vmatprep.subr.mxu0 0.0
      %3842 = vmatpush1.xpose.msra.mxu0 0.0
      %3843 = vmatprep.subr.mxu0 0.0
      %3844 = vmatpush1.xpose.msra.mxu0 0.0
      %3845 = vmatprep.subr.mxu0 0.0
      %3846 = vmatpush1.xpose.msra.mxu0 0.0
      %3847 = vmatprep.subr.mxu0 0.0
      %3848 = vmatpush1.xpose.msra.mxu0 0.0
      %3849 = vmatprep.subr.mxu0 0.0
      %3850 = vmatpush1.xpose.msra.mxu0 0.0
      %3851 = vmatprep.subr.mxu0 0.0
      %3852 = vmatpush1.xpose.msra.mxu0 0.0
      %3853 = vmatprep.subr.mxu0 0.0
      %3854 = vmatpush1.xpose.msra.mxu0 0.0
      %3855 = vmatprep.subr.mxu0 0.0
      %3856 = vmatpush1.xpose.msra.mxu0 0.0
      %3857 = vmatprep.subr.mxu0 0.0
      %3858 = vmatpush1.xpose.msra.mxu0 0.0
      %3859 = vmatprep.subr.mxu0 0.0
      %3860 = vmatpush1.xpose.msra.mxu0 0.0
      %3861 = vmatprep.subr.mxu0 0.0
      %3862 = vmatpush1.xpose.msra.mxu0 0.0
      %3863 = vmatprep.subr.mxu0 0.0
      %3864 = vmatpush1.xpose.msra.mxu0 0.0
      %3865 = vmatprep.subr.mxu0 0.0
      %3866 = vmatpush1.xpose.msra.mxu0 0.0
      %3867 = vmatprep.subr.mxu0 0.0
      %3868 = vmatpush1.xpose.msra.mxu0 0.0
      %3869 = vmatprep.subr.mxu0 0.0
      %3870 = vmatpush1.xpose.msra.mxu0 0.0
      %3871 = vmatprep.subr.mxu0 0.0
      %3872 = vmatpush1.xpose.msra.mxu0 0.0
      %3873 = vmatprep.subr.mxu0 0.0
      %3874 = vmatpush1.xpose.msra.mxu0 0.0
      %3875 = vmatprep.subr.mxu0 0.0
      %3876 = vmatpush1.xpose.msra.mxu0 0.0
      %3877 = vmatprep.subr.mxu0 0.0
      %3878 = vmatpush1.xpose.msra.mxu0 0.0
      %3879 = vmatprep.subr.mxu0 0.0
      %3880 = vmatpush1.xpose.msra.mxu0 0.0
      %3881 = vmatprep.subr.mxu0 0.0
      %3882 = vmatpush1.xpose.msra.mxu0 0.0
      %3883 = vmatprep.mubr.f32.mxu0 0.0
      %3884 = vmatmul.mubr.f32.gmra.mrb[0].mxu0 %v3460
      %v3885 = vpop.f32.mrb[0].mxu0
      %v3886 = vadd.f32 %v984, %v3885
      %v3887 = vpop.f32.mrb[0].mxu0
      %3888 = vdwg.mxu0
      %3889 = vmatprep.subr.mxu0 0.0
      %3890 = vmatpush1.xpose.msra.mxu0 %v3604
      %3891 = vmatprep.subr.mxu0 0.0
      %3892 = vmatpush1.xpose.msra.mxu0 0.0
      %3893 = vmatprep.subr.mxu0 0.0
      %3894 = vmatpush1.xpose.msra.mxu0 0.0
      %3895 = vmatprep.subr.mxu0 0.0
      %3896 = vmatpush1.xpose.msra.mxu0 0.0
      %3897 = vmatprep.subr.mxu0 0.0
      %3898 = vmatpush1.xpose.msra.mxu0 0.0
      %3899 = vmatprep.subr.mxu0 0.0
      %3900 = vmatpush1.xpose.msra.mxu0 0.0
      %3901 = vmatprep.subr.mxu0 0.0
      %3902 = vmatpush1.xpose.msra.mxu0 0.0
      %3903 = vmatprep.subr.mxu0 0.0
      %3904 = vmatpush1.xpose.msra.mxu0 0.0
      %3905 = vmatprep.subr.mxu0 0.0
      %3906 = vmatpush1.xpose.msra.mxu0 0.0
      %3907 = vmatprep.subr.mxu0 0.0
      %3908 = vmatpush1.xpose.msra.mxu0 0.0
      %3909 = vmatprep.subr.mxu0 0.0
      %3910 = vmatpush1.xpose.msra.mxu0 0.0
      %3911 = vmatprep.subr.mxu0 0.0
      %3912 = vmatpush1.xpose.msra.mxu0 0.0
      %3913 = vmatprep.subr.mxu0 0.0
      %3914 = vmatpush1.xpose.msra.mxu0 0.0
      %3915 = vmatprep.subr.mxu0 0.0
      %3916 = vmatpush1.xpose.msra.mxu0 0.0
      %3917 = vmatprep.subr.mxu0 0.0
      %3918 = vmatpush1.xpose.msra.mxu0 0.0
      %3919 = vmatprep.subr.mxu0 0.0
      %3920 = vmatpush1.xpose.msra.mxu0 0.0
      %3921 = vmatprep.subr.mxu0 0.0
      %3922 = vmatpush1.xpose.msra.mxu0 0.0
      %3923 = vmatprep.subr.mxu0 0.0
      %3924 = vmatpush1.xpose.msra.mxu0 0.0
      %3925 = vmatprep.subr.mxu0 0.0
      %3926 = vmatpush1.xpose.msra.mxu0 0.0
      %3927 = vmatprep.subr.mxu0 0.0
      %3928 = vmatpush1.xpose.msra.mxu0 0.0
      %3929 = vmatprep.subr.mxu0 0.0
      %3930 = vmatpush1.xpose.msra.mxu0 0.0
      %3931 = vmatprep.subr.mxu0 0.0
      %3932 = vmatpush1.xpose.msra.mxu0 0.0
      %3933 = vmatprep.subr.mxu0 0.0
      %3934 = vmatpush1.xpose.msra.mxu0 0.0
      %3935 = vmatprep.subr.mxu0 0.0
      %3936 = vmatpush1.xpose.msra.mxu0 0.0
      %3937 = vmatprep.subr.mxu0 0.0
      %3938 = vmatpush1.xpose.msra.mxu0 0.0
      %3939 = vmatprep.subr.mxu0 0.0
      %3940 = vmatpush1.xpose.msra.mxu0 0.0
      %3941 = vmatprep.subr.mxu0 0.0
      %3942 = vmatpush1.xpose.msra.mxu0 0.0
      %3943 = vmatprep.subr.mxu0 0.0
      %3944 = vmatpush1.xpose.msra.mxu0 0.0
      %3945 = vmatprep.subr.mxu0 0.0
      %3946 = vmatpush1.xpose.msra.mxu0 0.0
      %3947 = vmatprep.subr.mxu0 0.0
      %3948 = vmatpush1.xpose.msra.mxu0 0.0
      %3949 = vmatprep.subr.mxu0 0.0
      %3950 = vmatpush1.xpose.msra.mxu0 0.0
      %3951 = vmatprep.subr.mxu0 0.0
      %3952 = vmatpush1.xpose.msra.mxu0 0.0
      %3953 = vmatprep.mubr.f32.mxu0 0.0
      %3954 = vmatmul.mubr.f32.gmra.mrb[0].mxu0 %v3462
      %v3955 = vpop.f32.mrb[0].mxu0
      %v3956 = vadd.f32 %v1056, %v3955
      %v3957 = vpop.f32.mrb[0].mxu0
      %3958 = vdwg.mxu0
      %3959 = vmatprep.subr.mxu0 0.0
      %3960 = vmatpush1.xpose.msra.mxu0 %v3673
      %3961 = vmatprep.subr.mxu0 0.0
      %3962 = vmatpush1.xpose.msra.mxu0 0.0
      %3963 = vmatprep.subr.mxu0 0.0
      %3964 = vmatpush1.xpose.msra.mxu0 0.0
      %3965 = vmatprep.subr.mxu0 0.0
      %3966 = vmatpush1.xpose.msra.mxu0 0.0
      %3967 = vmatprep.subr.mxu0 0.0
      %3968 = vmatpush1.xpose.msra.mxu0 0.0
      %3969 = vmatprep.subr.mxu0 0.0
      %3970 = vmatpush1.xpose.msra.mxu0 0.0
      %3971 = vmatprep.subr.mxu0 0.0
      %3972 = vmatpush1.xpose.msra.mxu0 0.0
      %3973 = vmatprep.subr.mxu0 0.0
      %3974 = vmatpush1.xpose.msra.mxu0 0.0
      %3975 = vmatprep.subr.mxu0 0.0
      %3976 = vmatpush1.xpose.msra.mxu0 0.0
      %3977 = vmatprep.subr.mxu0 0.0
      %3978 = vmatpush1.xpose.msra.mxu0 0.0
      %3979 = vmatprep.subr.mxu0 0.0
      %3980 = vmatpush1.xpose.msra.mxu0 0.0
      %3981 = vmatprep.subr.mxu0 0.0
      %3982 = vmatpush1.xpose.msra.mxu0 0.0
      %3983 = vmatprep.subr.mxu0 0.0
      %3984 = vmatpush1.xpose.msra.mxu0 0.0
      %3985 = vmatprep.subr.mxu0 0.0
      %3986 = vmatpush1.xpose.msra.mxu0 0.0
      %3987 = vmatprep.subr.mxu0 0.0
      %3988 = vmatpush1.xpose.msra.mxu0 0.0
      %3989 = vmatprep.subr.mxu0 0.0
      %3990 = vmatpush1.xpose.msra.mxu0 0.0
      %3991 = vmatprep.subr.mxu0 0.0
      %3992 = vmatpush1.xpose.msra.mxu0 0.0
      %3993 = vmatprep.subr.mxu0 0.0
      %3994 = vmatpush1.xpose.msra.mxu0 0.0
      %3995 = vmatprep.subr.mxu0 0.0
      %3996 = vmatpush1.xpose.msra.mxu0 0.0
      %3997 = vmatprep.subr.mxu0 0.0
      %3998 = vmatpush1.xpose.msra.mxu0 0.0
      %3999 = vmatprep.subr.mxu0 0.0
      %4000 = vmatpush1.xpose.msra.mxu0 0.0
      %4001 = vmatprep.subr.mxu0 0.0
      %4002 = vmatpush1.xpose.msra.mxu0 0.0
      %4003 = vmatprep.subr.mxu0 0.0
      %4004 = vmatpush1.xpose.msra.mxu0 0.0
      %4005 = vmatprep.subr.mxu0 0.0
      %4006 = vmatpush1.xpose.msra.mxu0 0.0
      %4007 = vmatprep.subr.mxu0 0.0
      %4008 = vmatpush1.xpose.msra.mxu0 0.0
      %4009 = vmatprep.subr.mxu0 0.0
      %4010 = vmatpush1.xpose.msra.mxu0 0.0
      %4011 = vmatprep.subr.mxu0 0.0
      %4012 = vmatpush1.xpose.msra.mxu0 0.0
      %4013 = vmatprep.subr.mxu0 0.0
      %4014 = vmatpush1.xpose.msra.mxu0 0.0
      %4015 = vmatprep.subr.mxu0 0.0
      %4016 = vmatpush1.xpose.msra.mxu0 0.0
      %4017 = vmatprep.subr.mxu0 0.0
      %4018 = vmatpush1.xpose.msra.mxu0 0.0
      %4019 = vmatprep.subr.mxu0 0.0
      %4020 = vmatpush1.xpose.msra.mxu0 0.0
      %4021 = vmatprep.subr.mxu0 0.0
      %4022 = vmatpush1.xpose.msra.mxu0 0.0
      %4023 = vmatprep.mubr.f32.mxu0 0.0
      %4024 = vmatmul.mubr.f32.gmra.mrb[0].mxu0 %v3531
      %v4025 = vpop.f32.mrb[0].mxu0
      %v4026 = vadd.f32 %v1128, %v4025
      %v4027 = vpop.f32.mrb[0].mxu0
      %4028 = vdwg.mxu0
      %4029 = vmatprep.subr.mxu0 0.0
      %4030 = vmatpush1.xpose.msra.mxu0 %v3675
      %4031 = vmatprep.subr.mxu0 0.0
      %4032 = vmatpush1.xpose.msra.mxu0 0.0
      %4033 = vmatprep.subr.mxu0 0.0
      %4034 = vmatpush1.xpose.msra.mxu0 0.0
      %4035 = vmatprep.subr.mxu0 0.0
      %4036 = vmatpush1.xpose.msra.mxu0 0.0
      %4037 = vmatprep.subr.mxu0 0.0
      %4038 = vmatpush1.xpose.msra.mxu0 0.0
      %4039 = vmatprep.subr.mxu0 0.0
      %4040 = vmatpush1.xpose.msra.mxu0 0.0
      %4041 = vmatprep.subr.mxu0 0.0
      %4042 = vmatpush1.xpose.msra.mxu0 0.0
      %4043 = vmatprep.subr.mxu0 0.0
      %4044 = vmatpush1.xpose.msra.mxu0 0.0
      %4045 = vmatprep.subr.mxu0 0.0
      %4046 = vmatpush1.xpose.msra.mxu0 0.0
      %4047 = vmatprep.subr.mxu0 0.0
      %4048 = vmatpush1.xpose.msra.mxu0 0.0
      %4049 = vmatprep.subr.mxu0 0.0
      %4050 = vmatpush1.xpose.msra.mxu0 0.0
      %4051 = vmatprep.subr.mxu0 0.0
      %4052 = vmatpush1.xpose.msra.mxu0 0.0
      %4053 = vmatprep.subr.mxu0 0.0
      %4054 = vmatpush1.xpose.msra.mxu0 0.0
      %4055 = vmatprep.subr.mxu0 0.0
      %4056 = vmatpush1.xpose.msra.mxu0 0.0
      %4057 = vmatprep.subr.mxu0 0.0
      %4058 = vmatpush1.xpose.msra.mxu0 0.0
      %4059 = vmatprep.subr.mxu0 0.0
      %4060 = vmatpush1.xpose.msra.mxu0 0.0
      %4061 = vmatprep.subr.mxu0 0.0
      %4062 = vmatpush1.xpose.msra.mxu0 0.0
      %4063 = vmatprep.subr.mxu0 0.0
      %4064 = vmatpush1.xpose.msra.mxu0 0.0
      %4065 = vmatprep.subr.mxu0 0.0
      %4066 = vmatpush1.xpose.msra.mxu0 0.0
      %4067 = vmatprep.subr.mxu0 0.0
      %4068 = vmatpush1.xpose.msra.mxu0 0.0
      %4069 = vmatprep.subr.mxu0 0.0
      %4070 = vmatpush1.xpose.msra.mxu0 0.0
      %4071 = vmatprep.subr.mxu0 0.0
      %4072 = vmatpush1.xpose.msra.mxu0 0.0
      %4073 = vmatprep.subr.mxu0 0.0
      %4074 = vmatpush1.xpose.msra.mxu0 0.0
      %4075 = vmatprep.subr.mxu0 0.0
      %4076 = vmatpush1.xpose.msra.mxu0 0.0
      %4077 = vmatprep.subr.mxu0 0.0
      %4078 = vmatpush1.xpose.msra.mxu0 0.0
      %4079 = vmatprep.subr.mxu0 0.0
      %4080 = vmatpush1.xpose.msra.mxu0 0.0
      %4081 = vmatprep.subr.mxu0 0.0
      %4082 = vmatpush1.xpose.msra.mxu0 0.0
      %4083 = vmatprep.subr.mxu0 0.0
      %4084 = vmatpush1.xpose.msra.mxu0 0.0
      %4085 = vmatprep.subr.mxu0 0.0
      %4086 = vmatpush1.xpose.msra.mxu0 0.0
      %4087 = vmatprep.subr.mxu0 0.0
      %4088 = vmatpush1.xpose.msra.mxu0 0.0
      %4089 = vmatprep.subr.mxu0 0.0
      %4090 = vmatpush1.xpose.msra.mxu0 0.0
      %4091 = vmatprep.subr.mxu0 0.0
      %4092 = vmatpush1.xpose.msra.mxu0 0.0
      %4093 = vmatprep.mubr.f32.mxu0 0.0
      %4094 = vmatmul.mubr.f32.gmra.mrb[0].mxu0 %v3533
      %v4095 = vpop.f32.mrb[0].mxu0
      %v4096 = vadd.f32 %v1200, %v4095
      %v4097 = vpop.f32.mrb[0].mxu0
      %4098 = vdwg.mxu0
      %v4099 = vsel %vm1271, %v3886, -inf
      %4100 = vmax.xlane.f32.xlu0 %v4099
      %v4101 = vpop.xlane.xlu0 %4100
      %v4102 = vsel %vm1271, %v3956, -inf
      %4103 = vmax.xlane.f32.xlu0 %v4102
      %v4104 = vpop.xlane.xlu0 %4103
      %v4105 = vsel %vm1271, %v4026, -inf
      %4106 = vmax.xlane.f32.xlu0 %v4105
      %v4107 = vpop.xlane.xlu0 %4106
      %v4108 = vsel %vm1271, %v4096, -inf
      %4109 = vmax.xlane.f32.xlu0 %v4108
      %v4110 = vpop.xlane.xlu0 %4109
      %v4111 = vsub.f32 %v3886, %v4101
      %v4112 = vsub.f32 %v3956, %v4104
      %v4113 = vsub.f32 %v4026, %v4107
      %v4114 = vsub.f32 %v4096, %v4110
      %v4115 = vmul.f32 %v4111, 1.442695
      %v4116 = vpow.pop %v4115
      %v4117 = vmul.f32 %v4112, 1.442695
      %v4118 = vpow.pop %v4117
      %v4119 = vmul.f32 %v4113, 1.442695
      %v4120 = vpow.pop %v4119
      %v4121 = vmul.f32 %v4114, 1.442695
      %v4122 = vpow.pop %v4121
      %v4123 = vsel %vm1271, %v4116, 0.0
      %4124 = vadd.xlane.f32.xlu0 %v4123
      %v4125 = vpop.xlane.xlu0 %4124
      %v4126 = vsel %vm1271, %v4118, 0.0
      %4127 = vadd.xlane.f32.xlu0 %v4126
      %v4128 = vpop.xlane.xlu0 %4127
      %v4129 = vsel %vm1271, %v4120, 0.0
      %4130 = vadd.xlane.f32.xlu0 %v4129
      %v4131 = vpop.xlane.xlu0 %4130
      %v4132 = vsel %vm1271, %v4122, 0.0
      %4133 = vadd.xlane.f32.xlu0 %v4132
      %v4134 = vpop.xlane.xlu0 %4133
      %v4135 = vrcp.pop %v4125
      %v4136 = vmul.f32 %v4116, %v4135
      %v4137 = vrcp.pop %v4128
      %v4138 = vmul.f32 %v4118, %v4137
      %v4139 = vrcp.pop %v4131
      %v4140 = vmul.f32 %v4120, %v4139
      %v4141 = vrcp.pop %v4134
      %v4142 = vmul.f32 %v4122, %v4141
      %v4144 = vsel %vm1271, %v4136, 0
      %4146 = vmatprep.subr.mxu0 0.0
      %4147 = vmatpush1.msra.mxu0 %v3744
      %4148 = vmatprep.subr.mxu0 0.0
      %4149 = vmatpush1.msra.mxu0 0.0
      %4150 = vmatprep.subr.mxu0 0.0
      %4151 = vmatpush1.msra.mxu0 0.0
      %4152 = vmatprep.subr.mxu0 0.0
      %4153 = vmatpush1.msra.mxu0 0.0
      %4154 = vmatprep.subr.mxu0 0.0
      %4155 = vmatpush1.msra.mxu0 0.0
      %4156 = vmatprep.subr.mxu0 0.0
      %4157 = vmatpush1.msra.mxu0 0.0
      %4158 = vmatprep.subr.mxu0 0.0
      %4159 = vmatpush1.msra.mxu0 0.0
      %4160 = vmatprep.subr.mxu0 0.0
      %4161 = vmatpush1.msra.mxu0 0.0
      %4162 = vmatprep.subr.mxu0 0.0
      %4163 = vmatpush1.msra.mxu0 0.0
      %4164 = vmatprep.subr.mxu0 0.0
      %4165 = vmatpush1.msra.mxu0 0.0
      %4166 = vmatprep.subr.mxu0 0.0
      %4167 = vmatpush1.msra.mxu0 0.0
      %4168 = vmatprep.subr.mxu0 0.0
      %4169 = vmatpush1.msra.mxu0 0.0
      %4170 = vmatprep.subr.mxu0 0.0
      %4171 = vmatpush1.msra.mxu0 0.0
      %4172 = vmatprep.subr.mxu0 0.0
      %4173 = vmatpush1.msra.mxu0 0.0
      %4174 = vmatprep.subr.mxu0 0.0
      %4175 = vmatpush1.msra.mxu0 0.0
      %4176 = vmatprep.subr.mxu0 0.0
      %4177 = vmatpush1.msra.mxu0 0.0
      %4178 = vmatprep.subr.mxu0 0.0
      %4179 = vmatpush1.msra.mxu0 0.0
      %4180 = vmatprep.subr.mxu0 0.0
      %4181 = vmatpush1.msra.mxu0 0.0
      %4182 = vmatprep.subr.mxu0 0.0
      %4183 = vmatpush1.msra.mxu0 0.0
      %4184 = vmatprep.subr.mxu0 0.0
      %4185 = vmatpush1.msra.mxu0 0.0
      %4186 = vmatprep.subr.mxu0 0.0
      %4187 = vmatpush1.msra.mxu0 0.0
      %4188 = vmatprep.subr.mxu0 0.0
      %4189 = vmatpush1.msra.mxu0 0.0
      %4190 = vmatprep.subr.mxu0 0.0
      %4191 = vmatpush1.msra.mxu0 0.0
      %4192 = vmatprep.subr.mxu0 0.0
      %4193 = vmatpush1.msra.mxu0 0.0
      %4194 = vmatprep.subr.mxu0 0.0
      %4195 = vmatpush1.msra.mxu0 0.0
      %4196 = vmatprep.subr.mxu0 0.0
      %4197 = vmatpush1.msra.mxu0 0.0
      %4198 = vmatprep.subr.mxu0 0.0
      %4199 = vmatpush1.msra.mxu0 0.0
      %4200 = vmatprep.subr.mxu0 0.0
      %4201 = vmatpush1.msra.mxu0 0.0
      %4202 = vmatprep.subr.mxu0 0.0
      %4203 = vmatpush1.msra.mxu0 0.0
      %4204 = vmatprep.subr.mxu0 0.0
      %4205 = vmatpush1.msra.mxu0 0.0
      %4206 = vmatprep.subr.mxu0 0.0
      %4207 = vmatpush1.msra.mxu0 0.0
      %4208 = vmatprep.subr.mxu0 0.0
      %4209 = vmatpush1.msra.mxu0 0.0
      %4210 = vmatprep.mubr.f32.mxu0 0.0
      %4211 = vmatmul.mubr.f32.gmra.mrb[0].mxu0 %v4144
      %v4212 = vpop.f32.mrb[0].mxu0
      %v4213 = vadd.f32 0.0, %v4212
      %v4214 = vpop.f32.mrb[0].mxu0
      %4215 = vdwg.mxu0
      %v4217 = vsel %vm1271, %v4138, 0
      %4219 = vmatprep.subr.mxu0 0.0
      %4220 = vmatpush1.msra.mxu0 %v3746
      %4221 = vmatprep.subr.mxu0 0.0
      %4222 = vmatpush1.msra.mxu0 0.0
      %4223 = vmatprep.subr.mxu0 0.0
      %4224 = vmatpush1.msra.mxu0 0.0
      %4225 = vmatprep.subr.mxu0 0.0
      %4226 = vmatpush1.msra.mxu0 0.0
      %4227 = vmatprep.subr.mxu0 0.0
      %4228 = vmatpush1.msra.mxu0 0.0
      %4229 = vmatprep.subr.mxu0 0.0
      %4230 = vmatpush1.msra.mxu0 0.0
      %4231 = vmatprep.subr.mxu0 0.0
      %4232 = vmatpush1.msra.mxu0 0.0
      %4233 = vmatprep.subr.mxu0 0.0
      %4234 = vmatpush1.msra.mxu0 0.0
      %4235 = vmatprep.subr.mxu0 0.0
      %4236 = vmatpush1.msra.mxu0 0.0
      %4237 = vmatprep.subr.mxu0 0.0
      %4238 = vmatpush1.msra.mxu0 0.0
      %4239 = vmatprep.subr.mxu0 0.0
      %4240 = vmatpush1.msra.mxu0 0.0
      %4241 = vmatprep.subr.mxu0 0.0
      %4242 = vmatpush1.msra.mxu0 0.0
      %4243 = vmatprep.subr.mxu0 0.0
      %4244 = vmatpush1.msra.mxu0 0.0
      %4245 = vmatprep.subr.mxu0 0.0
      %4246 = vmatpush1.msra.mxu0 0.0
      %4247 = vmatprep.subr.mxu0 0.0
      %4248 = vmatpush1.msra.mxu0 0.0
      %4249 = vmatprep.subr.mxu0 0.0
      %4250 = vmatpush1.msra.mxu0 0.0
      %4251 = vmatprep.subr.mxu0 0.0
      %4252 = vmatpush1.msra.mxu0 0.0
      %4253 = vmatprep.subr.mxu0 0.0
      %4254 = vmatpush1.msra.mxu0 0.0
      %4255 = vmatprep.subr.mxu0 0.0
      %4256 = vmatpush1.msra.mxu0 0.0
      %4257 = vmatprep.subr.mxu0 0.0
      %4258 = vmatpush1.msra.mxu0 0.0
      %4259 = vmatprep.subr.mxu0 0.0
      %4260 = vmatpush1.msra.mxu0 0.0
      %4261 = vmatprep.subr.mxu0 0.0
      %4262 = vmatpush1.msra.mxu0 0.0
      %4263 = vmatprep.subr.mxu0 0.0
      %4264 = vmatpush1.msra.mxu0 0.0
      %4265 = vmatprep.subr.mxu0 0.0
      %4266 = vmatpush1.msra.mxu0 0.0
      %4267 = vmatprep.subr.mxu0 0.0
      %4268 = vmatpush1.msra.mxu0 0.0
      %4269 = vmatprep.subr.mxu0 0.0
      %4270 = vmatpush1.msra.mxu0 0.0
      %4271 = vmatprep.subr.mxu0 0.0
      %4272 = vmatpush1.msra.mxu0 0.0
      %4273 = vmatprep.subr.mxu0 0.0
      %4274 = vmatpush1.msra.mxu0 0.0
      %4275 = vmatprep.subr.mxu0 0.0
      %4276 = vmatpush1.msra.mxu0 0.0
      %4277 = vmatprep.subr.mxu0 0.0
      %4278 = vmatpush1.msra.mxu0 0.0
      %4279 = vmatprep.subr.mxu0 0.0
      %4280 = vmatpush1.msra.mxu0 0.0
      %4281 = vmatprep.subr.mxu0 0.0
      %4282 = vmatpush1.msra.mxu0 0.0
      %4283 = vmatprep.mubr.f32.mxu0 0.0
      %4284 = vmatmul.mubr.f32.gmra.mrb[0].mxu0 %v4217
      %v4285 = vpop.f32.mrb[0].mxu0
      %v4286 = vadd.f32 0.0, %v4285
      %v4287 = vpop.f32.mrb[0].mxu0
      %4288 = vdwg.mxu0
      %v4290 = vsel %vm1271, %v4140, 0
      %4292 = vmatprep.subr.mxu0 0.0
      %4293 = vmatpush1.msra.mxu0 %v3815
      %4294 = vmatprep.subr.mxu0 0.0
      %4295 = vmatpush1.msra.mxu0 0.0
      %4296 = vmatprep.subr.mxu0 0.0
      %4297 = vmatpush1.msra.mxu0 0.0
      %4298 = vmatprep.subr.mxu0 0.0
      %4299 = vmatpush1.msra.mxu0 0.0
      %4300 = vmatprep.subr.mxu0 0.0
      %4301 = vmatpush1.msra.mxu0 0.0
      %4302 = vmatprep.subr.mxu0 0.0
      %4303 = vmatpush1.msra.mxu0 0.0
      %4304 = vmatprep.subr.mxu0 0.0
      %4305 = vmatpush1.msra.mxu0 0.0
      %4306 = vmatprep.subr.mxu0 0.0
      %4307 = vmatpush1.msra.mxu0 0.0
      %4308 = vmatprep.subr.mxu0 0.0
      %4309 = vmatpush1.msra.mxu0 0.0
      %4310 = vmatprep.subr.mxu0 0.0
      %4311 = vmatpush1.msra.mxu0 0.0
      %4312 = vmatprep.subr.mxu0 0.0
      %4313 = vmatpush1.msra.mxu0 0.0
      %4314 = vmatprep.subr.mxu0 0.0
      %4315 = vmatpush1.msra.mxu0 0.0
      %4316 = vmatprep.subr.mxu0 0.0
      %4317 = vmatpush1.msra.mxu0 0.0
      %4318 = vmatprep.subr.mxu0 0.0
      %4319 = vmatpush1.msra.mxu0 0.0
      %4320 = vmatprep.subr.mxu0 0.0
      %4321 = vmatpush1.msra.mxu0 0.0
      %4322 = vmatprep.subr.mxu0 0.0
      %4323 = vmatpush1.msra.mxu0 0.0
      %4324 = vmatprep.subr.mxu0 0.0
      %4325 = vmatpush1.msra.mxu0 0.0
      %4326 = vmatprep.subr.mxu0 0.0
      %4327 = vmatpush1.msra.mxu0 0.0
      %4328 = vmatprep.subr.mxu0 0.0
      %4329 = vmatpush1.msra.mxu0 0.0
      %4330 = vmatprep.subr.mxu0 0.0
      %4331 = vmatpush1.msra.mxu0 0.0
      %4332 = vmatprep.subr.mxu0 0.0
      %4333 = vmatpush1.msra.mxu0 0.0
      %4334 = vmatprep.subr.mxu0 0.0
      %4335 = vmatpush1.msra.mxu0 0.0
      %4336 = vmatprep.subr.mxu0 0.0
      %4337 = vmatpush1.msra.mxu0 0.0
      %4338 = vmatprep.subr.mxu0 0.0
      %4339 = vmatpush1.msra.mxu0 0.0
      %4340 = vmatprep.subr.mxu0 0.0
      %4341 = vmatpush1.msra.mxu0 0.0
      %4342 = vmatprep.subr.mxu0 0.0
      %4343 = vmatpush1.msra.mxu0 0.0
      %4344 = vmatprep.subr.mxu0 0.0
      %4345 = vmatpush1.msra.mxu0 0.0
      %4346 = vmatprep.subr.mxu0 0.0
      %4347 = vmatpush1.msra.mxu0 0.0
      %4348 = vmatprep.subr.mxu0 0.0
      %4349 = vmatpush1.msra.mxu0 0.0
      %4350 = vmatprep.subr.mxu0 0.0
      %4351 = vmatpush1.msra.mxu0 0.0
      %4352 = vmatprep.subr.mxu0 0.0
      %4353 = vmatpush1.msra.mxu0 0.0
      %4354 = vmatprep.subr.mxu0 0.0
      %4355 = vmatpush1.msra.mxu0 0.0
      %4356 = vmatprep.mubr.f32.mxu0 0.0
      %4357 = vmatmul.mubr.f32.gmra.mrb[0].mxu0 %v4290
      %v4358 = vpop.f32.mrb[0].mxu0
      %v4359 = vadd.f32 0.0, %v4358
      %v4360 = vpop.f32.mrb[0].mxu0
      %4361 = vdwg.mxu0
      %v4363 = vsel %vm1271, %v4142, 0
      %4365 = vmatprep.subr.mxu0 0.0
      %4366 = vmatpush1.msra.mxu0 %v3817
      %4367 = vmatprep.subr.mxu0 0.0
      %4368 = vmatpush1.msra.mxu0 0.0
      %4369 = vmatprep.subr.mxu0 0.0
      %4370 = vmatpush1.msra.mxu0 0.0
      %4371 = vmatprep.subr.mxu0 0.0
      %4372 = vmatpush1.msra.mxu0 0.0
      %4373 = vmatprep.subr.mxu0 0.0
      %4374 = vmatpush1.msra.mxu0 0.0
      %4375 = vmatprep.subr.mxu0 0.0
      %4376 = vmatpush1.msra.mxu0 0.0
      %4377 = vmatprep.subr.mxu0 0.0
      %4378 = vmatpush1.msra.mxu0 0.0
      %4379 = vmatprep.subr.mxu0 0.0
      %4380 = vmatpush1.msra.mxu0 0.0
      %4381 = vmatprep.subr.mxu0 0.0
      %4382 = vmatpush1.msra.mxu0 0.0
      %4383 = vmatprep.subr.mxu0 0.0
      %4384 = vmatpush1.msra.mxu0 0.0
      %4385 = vmatprep.subr.mxu0 0.0
      %4386 = vmatpush1.msra.mxu0 0.0
      %4387 = vmatprep.subr.mxu0 0.0
      %4388 = vmatpush1.msra.mxu0 0.0
      %4389 = vmatprep.subr.mxu0 0.0
      %4390 = vmatpush1.msra.mxu0 0.0
      %4391 = vmatprep.subr.mxu0 0.0
      %4392 = vmatpush1.msra.mxu0 0.0
      %4393 = vmatprep.subr.mxu0 0.0
      %4394 = vmatpush1.msra.mxu0 0.0
      %4395 = vmatprep.subr.mxu0 0.0
      %4396 = vmatpush1.msra.mxu0 0.0
      %4397 = vmatprep.subr.mxu0 0.0
      %4398 = vmatpush1.msra.mxu0 0.0
      %4399 = vmatprep.subr.mxu0 0.0
      %4400 = vmatpush1.msra.mxu0 0.0
      %4401 = vmatprep.subr.mxu0 0.0
      %4402 = vmatpush1.msra.mxu0 0.0
      %4403 = vmatprep.subr.mxu0 0.0
      %4404 = vmatpush1.msra.mxu0 0.0
      %4405 = vmatprep.subr.mxu0 0.0
      %4406 = vmatpush1.msra.mxu0 0.0
      %4407 = vmatprep.subr.mxu0 0.0
      %4408 = vmatpush1.msra.mxu0 0.0
      %4409 = vmatprep.subr.mxu0 0.0
      %4410 = vmatpush1.msra.mxu0 0.0
      %4411 = vmatprep.subr.mxu0 0.0
      %4412 = vmatpush1.msra.mxu0 0.0
      %4413 = vmatprep.subr.mxu0 0.0
      %4414 = vmatpush1.msra.mxu0 0.0
      %4415 = vmatprep.subr.mxu0 0.0
      %4416 = vmatpush1.msra.mxu0 0.0
      %4417 = vmatprep.subr.mxu0 0.0
      %4418 = vmatpush1.msra.mxu0 0.0
      %4419 = vmatprep.subr.mxu0 0.0
      %4420 = vmatpush1.msra.mxu0 0.0
      %4421 = vmatprep.subr.mxu0 0.0
      %4422 = vmatpush1.msra.mxu0 0.0
      %4423 = vmatprep.subr.mxu0 0.0
      %4424 = vmatpush1.msra.mxu0 0.0
      %4425 = vmatprep.subr.mxu0 0.0
      %4426 = vmatpush1.msra.mxu0 0.0
      %4427 = vmatprep.subr.mxu0 0.0
      %4428 = vmatpush1.msra.mxu0 0.0
      %4429 = vmatprep.mubr.f32.mxu0 0.0
      %4430 = vmatmul.mubr.f32.gmra.mrb[0].mxu0 %v4363
      %v4431 = vpop.f32.mrb[0].mxu0
      %v4432 = vadd.f32 0.0, %v4431
      %v4433 = vpop.f32.mrb[0].mxu0
      %4434 = vdwg.mxu0
      %s4435 = scalar_lea.vmem %s4, 512
      %v4436 = vld [vmem:[%s4435] sm:$0xff]
      %v4437 = vld [vmem:[%s4435 + $0x8] sm:$0xff]
      %v4438 = vld [vmem:[%s4435 + $0x10] sm:$0xff]
      %v4439 = vld [vmem:[%s4435 + $0x18] sm:$0xff]
      %v4440 = vld [vmem:[%s4435 + $0x20] sm:$0xff]
      %v4441 = vld [vmem:[%s4435 + $0x28] sm:$0xff]
      %v4442 = vld [vmem:[%s4435 + $0x30] sm:$0xff]
      %v4443 = vld [vmem:[%s4435 + $0x38] sm:$0xff]
      %v4444 = vld [vmem:[%s4435 + $0x40] sm:$0xff]
      %v4445 = vld [vmem:[%s4435 + $0x48] sm:$0xff]
      %v4446 = vld [vmem:[%s4435 + $0x50] sm:$0xff]
      %v4447 = vld [vmem:[%s4435 + $0x58] sm:$0xff]
      %v4448 = vld [vmem:[%s4435 + $0x60] sm:$0xff]
      %v4449 = vld [vmem:[%s4435 + $0x68] sm:$0xff]
      %v4450 = vld [vmem:[%s4435 + $0x70] sm:$0xff]
      %v4451 = vld [vmem:[%s4435 + $0x78] sm:$0xff]
      %v4452 = vld [vmem:[%s4435 + $0x80] sm:$0xff]
      %v4453 = vld [vmem:[%s4435 + $0x88] sm:$0xff]
      %v4454 = vld [vmem:[%s4435 + $0x90] sm:$0xff]
      %v4455 = vld [vmem:[%s4435 + $0x98] sm:$0xff]
      %v4456 = vld [vmem:[%s4435 + $0xa0] sm:$0xff]
      %v4457 = vld [vmem:[%s4435 + $0xa8] sm:$0xff]
      %v4458 = vld [vmem:[%s4435 + $0xb0] sm:$0xff]
      %v4459 = vld [vmem:[%s4435 + $0xb8] sm:$0xff]
      %v4460 = vld [vmem:[%s4435 + $0xc0] sm:$0xff]
      %v4461 = vld [vmem:[%s4435 + $0xc8] sm:$0xff]
      %v4462 = vld [vmem:[%s4435 + $0xd0] sm:$0xff]
      %v4463 = vld [vmem:[%s4435 + $0xd8] sm:$0xff]
      %v4464 = vld [vmem:[%s4435 + $0xe0] sm:$0xff]
      %v4465 = vld [vmem:[%s4435 + $0xe8] sm:$0xff]
      %v4466 = vld [vmem:[%s4435 + $0xf0] sm:$0xff]
      %v4467 = vld [vmem:[%s4435 + $0xf8] sm:$0xff]
      %v4468 = vld [vmem:[%s4435 + $0x100] sm:$0xff]
      %v4469 = vld [vmem:[%s4435 + $0x108] sm:$0xff]
      %v4470 = vld [vmem:[%s4435 + $0x110] sm:$0xff]
      %v4471 = vld [vmem:[%s4435 + $0x118] sm:$0xff]
      %v4472 = vld [vmem:[%s4435 + $0x120] sm:$0xff]
      %v4473 = vld [vmem:[%s4435 + $0x128] sm:$0xff]
      %v4474 = vld [vmem:[%s4435 + $0x130] sm:$0xff]
      %v4475 = vld [vmem:[%s4435 + $0x138] sm:$0xff]
      %v4476 = vld [vmem:[%s4435 + $0x140] sm:$0xff]
      %v4477 = vld [vmem:[%s4435 + $0x148] sm:$0xff]
      %v4478 = vld [vmem:[%s4435 + $0x150] sm:$0xff]
      %v4479 = vld [vmem:[%s4435 + $0x158] sm:$0xff]
      %v4480 = vld [vmem:[%s4435 + $0x160] sm:$0xff]
      %v4481 = vld [vmem:[%s4435 + $0x168] sm:$0xff]
      %v4482 = vld [vmem:[%s4435 + $0x170] sm:$0xff]
      %v4483 = vld [vmem:[%s4435 + $0x178] sm:$0xff]
      %v4484 = vld [vmem:[%s4435 + $0x180] sm:$0xff]
      %v4485 = vld [vmem:[%s4435 + $0x188] sm:$0xff]
      %v4486 = vld [vmem:[%s4435 + $0x190] sm:$0xff]
      %v4487 = vld [vmem:[%s4435 + $0x198] sm:$0xff]
      %v4488 = vld [vmem:[%s4435 + $0x1a0] sm:$0xff]
      %v4489 = vld [vmem:[%s4435 + $0x1a8] sm:$0xff]
      %v4490 = vld [vmem:[%s4435 + $0x1b0] sm:$0xff]
      %v4491 = vld [vmem:[%s4435 + $0x1b8] sm:$0xff]
      %v4492 = vld [vmem:[%s4435 + $0x1c0] sm:$0xff]
      %v4493 = vld [vmem:[%s4435 + $0x1c8] sm:$0xff]
      %v4494 = vld [vmem:[%s4435 + $0x1d0] sm:$0xff]
      %v4495 = vld [vmem:[%s4435 + $0x1d8] sm:$0xff]
      %v4496 = vld [vmem:[%s4435 + $0x1e0] sm:$0xff]
      %v4497 = vld [vmem:[%s4435 + $0x1e8] sm:$0xff]
      %v4498 = vld [vmem:[%s4435 + $0x1f0] sm:$0xff]
      %v4499 = vld [vmem:[%s4435 + $0x1f8] sm:$0xff]
      %4500 = vmatprep.subr.mxu0 0.0
      %4501 = vmatpush1.msra.mxu0 %v4436
      %4502 = vmatprep.subr.mxu0 0.0
      %4503 = vmatpush1.msra.mxu0 %v4437
      %4504 = vmatprep.subr.mxu0 0.0
      %4505 = vmatpush1.msra.mxu0 %v4438
      %4506 = vmatprep.subr.mxu0 0.0
      %4507 = vmatpush1.msra.mxu0 %v4439
      %4508 = vmatprep.subr.mxu0 0.0
      %4509 = vmatpush1.msra.mxu0 %v4440
      %4510 = vmatprep.subr.mxu0 0.0
      %4511 = vmatpush1.msra.mxu0 %v4441
      %4512 = vmatprep.subr.mxu0 0.0
      %4513 = vmatpush1.msra.mxu0 %v4442
      %4514 = vmatprep.subr.mxu0 0.0
      %4515 = vmatpush1.msra.mxu0 %v4443
      %4516 = vmatprep.subr.mxu0 0.0
      %4517 = vmatpush1.msra.mxu0 %v4444
      %4518 = vmatprep.subr.mxu0 0.0
      %4519 = vmatpush1.msra.mxu0 %v4445
      %4520 = vmatprep.subr.mxu0 0.0
      %4521 = vmatpush1.msra.mxu0 %v4446
      %4522 = vmatprep.subr.mxu0 0.0
      %4523 = vmatpush1.msra.mxu0 %v4447
      %4524 = vmatprep.subr.mxu0 0.0
      %4525 = vmatpush1.msra.mxu0 %v4448
      %4526 = vmatprep.subr.mxu0 0.0
      %4527 = vmatpush1.msra.mxu0 %v4449
      %4528 = vmatprep.subr.mxu0 0.0
      %4529 = vmatpush1.msra.mxu0 %v4450
      %4530 = vmatprep.subr.mxu0 0.0
      %4531 = vmatpush1.msra.mxu0 %v4451
      %4532 = vmatprep.subr.mxu0 0.0
      %4533 = vmatpush1.msra.mxu0 %v4452
      %4534 = vmatprep.subr.mxu0 0.0
      %4535 = vmatpush1.msra.mxu0 %v4453
      %4536 = vmatprep.subr.mxu0 0.0
      %4537 = vmatpush1.msra.mxu0 %v4454
      %4538 = vmatprep.subr.mxu0 0.0
      %4539 = vmatpush1.msra.mxu0 %v4455
      %4540 = vmatprep.subr.mxu0 0.0
      %4541 = vmatpush1.msra.mxu0 %v4456
      %4542 = vmatprep.subr.mxu0 0.0
      %4543 = vmatpush1.msra.mxu0 %v4457
      %4544 = vmatprep.subr.mxu0 0.0
      %4545 = vmatpush1.msra.mxu0 %v4458
      %4546 = vmatprep.subr.mxu0 0.0
      %4547 = vmatpush1.msra.mxu0 %v4459
      %4548 = vmatprep.subr.mxu0 0.0
      %4549 = vmatpush1.msra.mxu0 %v4460
      %4550 = vmatprep.subr.mxu0 0.0
      %4551 = vmatpush1.msra.mxu0 %v4461
      %4552 = vmatprep.subr.mxu0 0.0
      %4553 = vmatpush1.msra.mxu0 %v4462
      %4554 = vmatprep.subr.mxu0 0.0
      %4555 = vmatpush1.msra.mxu0 %v4463
      %4556 = vmatprep.subr.mxu0 0.0
      %4557 = vmatpush1.msra.mxu0 %v4464
      %4558 = vmatprep.subr.mxu0 0.0
      %4559 = vmatpush1.msra.mxu0 %v4465
      %4560 = vmatprep.subr.mxu0 0.0
      %4561 = vmatpush1.msra.mxu0 %v4466
      %4562 = vmatprep.subr.mxu0 0.0
      %4563 = vmatpush1.msra.mxu0 %v4467
      %4564 = vmatprep.mubr.f32.mxu0 %v4286
      %4565 = vmatmul.mubr.f32.gmra.mrb[0].mxu0 %v4213
      %v4566 = vpop.f32.mrb[0].mxu0
      %v4567 = vadd.f32 0.0, %v4566
      %v4568 = vpop.f32.mrb[0].mxu0
      %4569 = vdwg.mxu0
      %4570 = vmatprep.subr.mxu0 0.0
      %4571 = vmatpush1.msra.mxu0 %v4468
      %4572 = vmatprep.subr.mxu0 0.0
      %4573 = vmatpush1.msra.mxu0 %v4469
      %4574 = vmatprep.subr.mxu0 0.0
      %4575 = vmatpush1.msra.mxu0 %v4470
      %4576 = vmatprep.subr.mxu0 0.0
      %4577 = vmatpush1.msra.mxu0 %v4471
      %4578 = vmatprep.subr.mxu0 0.0
      %4579 = vmatpush1.msra.mxu0 %v4472
      %4580 = vmatprep.subr.mxu0 0.0
      %4581 = vmatpush1.msra.mxu0 %v4473
      %4582 = vmatprep.subr.mxu0 0.0
      %4583 = vmatpush1.msra.mxu0 %v4474
      %4584 = vmatprep.subr.mxu0 0.0
      %4585 = vmatpush1.msra.mxu0 %v4475
      %4586 = vmatprep.subr.mxu0 0.0
      %4587 = vmatpush1.msra.mxu0 %v4476
      %4588 = vmatprep.subr.mxu0 0.0
      %4589 = vmatpush1.msra.mxu0 %v4477
      %4590 = vmatprep.subr.mxu0 0.0
      %4591 = vmatpush1.msra.mxu0 %v4478
      %4592 = vmatprep.subr.mxu0 0.0
      %4593 = vmatpush1.msra.mxu0 %v4479
      %4594 = vmatprep.subr.mxu0 0.0
      %4595 = vmatpush1.msra.mxu0 %v4480
      %4596 = vmatprep.subr.mxu0 0.0
      %4597 = vmatpush1.msra.mxu0 %v4481
      %4598 = vmatprep.subr.mxu0 0.0
      %4599 = vmatpush1.msra.mxu0 %v4482
      %4600 = vmatprep.subr.mxu0 0.0
      %4601 = vmatpush1.msra.mxu0 %v4483
      %4602 = vmatprep.subr.mxu0 0.0
      %4603 = vmatpush1.msra.mxu0 %v4484
      %4604 = vmatprep.subr.mxu0 0.0
      %4605 = vmatpush1.msra.mxu0 %v4485
      %4606 = vmatprep.subr.mxu0 0.0
      %4607 = vmatpush1.msra.mxu0 %v4486
      %4608 = vmatprep.subr.mxu0 0.0
      %4609 = vmatpush1.msra.mxu0 %v4487
      %4610 = vmatprep.subr.mxu0 0.0
      %4611 = vmatpush1.msra.mxu0 %v4488
      %4612 = vmatprep.subr.mxu0 0.0
      %4613 = vmatpush1.msra.mxu0 %v4489
      %4614 = vmatprep.subr.mxu0 0.0
      %4615 = vmatpush1.msra.mxu0 %v4490
      %4616 = vmatprep.subr.mxu0 0.0
      %4617 = vmatpush1.msra.mxu0 %v4491
      %4618 = vmatprep.subr.mxu0 0.0
      %4619 = vmatpush1.msra.mxu0 %v4492
      %4620 = vmatprep.subr.mxu0 0.0
      %4621 = vmatpush1.msra.mxu0 %v4493
      %4622 = vmatprep.subr.mxu0 0.0
      %4623 = vmatpush1.msra.mxu0 %v4494
      %4624 = vmatprep.subr.mxu0 0.0
      %4625 = vmatpush1.msra.mxu0 %v4495
      %4626 = vmatprep.subr.mxu0 0.0
      %4627 = vmatpush1.msra.mxu0 %v4496
      %4628 = vmatprep.subr.mxu0 0.0
      %4629 = vmatpush1.msra.mxu0 %v4497
      %4630 = vmatprep.subr.mxu0 0.0
      %4631 = vmatpush1.msra.mxu0 %v4498
      %4632 = vmatprep.subr.mxu0 0.0
      %4633 = vmatpush1.msra.mxu0 %v4499
      %4634 = vmatprep.mubr.f32.mxu0 %v4432
      %4635 = vmatmul.mubr.f32.gmra.mrb[0].mxu0 %v4359
      %v4636 = vpop.f32.mrb[0].mxu0
      %v4637 = vadd.f32 %v4567, %v4636
      %v4638 = vpop.f32.mrb[0].mxu0
      %4639 = vdwg.mxu0
      %v4640 = vadd.f32 %v3323, %v4637
      %s4641 = scalar_lea.vmem %s5, 1
      %v4642 = vld [vmem:[%s4641] sm:$0x1]
      %v4643 = vmul.f32 %v4640, %v4640
      %v4644 = vsel %vm554, %v4643, 0.0
      %4645 = vadd.xlane.f32.xlu0 %v4644
      %v4646 = vpop.xlane.xlu0 %4645
      %v4647 = vmul.f32 %v4646, %v494
      %v4648 = vadd.f32 %v4647, 1e-06
      %v4649 = vrsqrt.pop %v4648
      %v4650 = vmul.f32 %v4640, %v4649
      %v4652 = vlaneseq
      %v4653 = vshrl.u32 %v4652, 7
      %v4654 = vsub.s32 0, %v4653
      %v4655 = vrot.slane %v4642, %v4654
      %v4657 = vmul.f32 %v4650, %v4655
      %s4658 = scalar_lea.vmem %s6, 128
      %v4659 = vld [vmem:[%s4658] sm:$0xff]
      %v4660 = vld [vmem:[%s4658 + $0x8] sm:$0xff]
      %v4661 = vld [vmem:[%s4658 + $0x10] sm:$0xff]
      %v4662 = vld [vmem:[%s4658 + $0x18] sm:$0xff]
      %v4663 = vld [vmem:[%s4658 + $0x20] sm:$0xff]
      %v4664 = vld [vmem:[%s4658 + $0x28] sm:$0xff]
      %v4665 = vld [vmem:[%s4658 + $0x30] sm:$0xff]
      %v4666 = vld [vmem:[%s4658 + $0x38] sm:$0xff]
      %v4667 = vld [vmem:[%s4658 + $0x40] sm:$0xff]
      %v4668 = vld [vmem:[%s4658 + $0x48] sm:$0xff]
      %v4669 = vld [vmem:[%s4658 + $0x50] sm:$0xff]
      %v4670 = vld [vmem:[%s4658 + $0x58] sm:$0xff]
      %v4671 = vld [vmem:[%s4658 + $0x60] sm:$0xff]
      %v4672 = vld [vmem:[%s4658 + $0x68] sm:$0xff]
      %v4673 = vld [vmem:[%s4658 + $0x70] sm:$0xff]
      %v4674 = vld [vmem:[%s4658 + $0x78] sm:$0xff]
      %v4676 = vsel %vm554, %v4657, 0
      %4678 = vmatprep.subr.mxu0 %v4660
      %4679 = vmatpush1.msra.mxu0 %v4659
      %4680 = vmatprep.subr.mxu0 %v4664
      %4681 = vmatpush1.msra.mxu0 %v4663
      %4682 = vmatprep.subr.mxu0 %v4668
      %4683 = vmatpush1.msra.mxu0 %v4667
      %4684 = vmatprep.subr.mxu0 %v4672
      %4685 = vmatpush1.msra.mxu0 %v4671
      %4686 = vmatprep.subr.mxu0 0.0
      %4687 = vmatpush1.msra.mxu0 0.0
      %4688 = vmatprep.subr.mxu0 0.0
      %4689 = vmatpush1.msra.mxu0 0.0
      %4690 = vmatprep.subr.mxu0 0.0
      %4691 = vmatpush1.msra.mxu0 0.0
      %4692 = vmatprep.subr.mxu0 0.0
      %4693 = vmatpush1.msra.mxu0 0.0
      %4694 = vmatprep.subr.mxu0 0.0
      %4695 = vmatpush1.msra.mxu0 0.0
      %4696 = vmatprep.subr.mxu0 0.0
      %4697 = vmatpush1.msra.mxu0 0.0
      %4698 = vmatprep.subr.mxu0 0.0
      %4699 = vmatpush1.msra.mxu0 0.0
      %4700 = vmatprep.subr.mxu0 0.0
      %4701 = vmatpush1.msra.mxu0 0.0
      %4702 = vmatprep.subr.mxu0 0.0
      %4703 = vmatpush1.msra.mxu0 0.0
      %4704 = vmatprep.subr.mxu0 0.0
      %4705 = vmatpush1.msra.mxu0 0.0
      %4706 = vmatprep.subr.mxu0 0.0
      %4707 = vmatpush1.msra.mxu0 0.0
      %4708 = vmatprep.subr.mxu0 0.0
      %4709 = vmatpush1.msra.mxu0 0.0
      %4710 = vmatprep.subr.mxu0 0.0
      %4711 = vmatpush1.msra.mxu0 0.0
      %4712 = vmatprep.subr.mxu0 0.0
      %4713 = vmatpush1.msra.mxu0 0.0
      %4714 = vmatprep.subr.mxu0 0.0
      %4715 = vmatpush1.msra.mxu0 0.0
      %4716 = vmatprep.subr.mxu0 0.0
      %4717 = vmatpush1.msra.mxu0 0.0
      %4718 = vmatprep.subr.mxu0 0.0
      %4719 = vmatpush1.msra.mxu0 0.0
      %4720 = vmatprep.subr.mxu0 0.0
      %4721 = vmatpush1.msra.mxu0 0.0
      %4722 = vmatprep.subr.mxu0 0.0
      %4723 = vmatpush1.msra.mxu0 0.0
      %4724 = vmatprep.subr.mxu0 0.0
      %4725 = vmatpush1.msra.mxu0 0.0
      %4726 = vmatprep.subr.mxu0 0.0
      %4727 = vmatpush1.msra.mxu0 0.0
      %4728 = vmatprep.subr.mxu0 0.0
      %4729 = vmatpush1.msra.mxu0 0.0
      %4730 = vmatprep.subr.mxu0 0.0
      %4731 = vmatpush1.msra.mxu0 0.0
      %4732 = vmatprep.subr.mxu0 0.0
      %4733 = vmatpush1.msra.mxu0 0.0
      %4734 = vmatprep.subr.mxu0 0.0
      %4735 = vmatpush1.msra.mxu0 0.0
      %4736 = vmatprep.subr.mxu0 0.0
      %4737 = vmatpush1.msra.mxu0 0.0
      %4738 = vmatprep.subr.mxu0 0.0
      %4739 = vmatpush1.msra.mxu0 0.0
      %4740 = vmatprep.subr.mxu0 0.0
      %4741 = vmatpush1.msra.mxu0 0.0
      %4742 = vmatprep.mubr.f32.mxu0 0.0
      %4743 = vmatmul.mubr.f32.gmra.mrb[0].mxu0 %v4676
      %v4744 = vpop.f32.mrb[0].mxu0
      %v4745 = vadd.f32 0.0, %v4744
      %v4746 = vpop.f32.mrb[0].mxu0
      %v4747 = vadd.f32 0.0, %v4746
      %4748 = vdwg.mxu0
      %4749 = vmatprep.subr.mxu0 %v4662
      %4750 = vmatpush1.msra.mxu0 %v4661
      %4751 = vmatprep.subr.mxu0 %v4666
      %4752 = vmatpush1.msra.mxu0 %v4665
      %4753 = vmatprep.subr.mxu0 %v4670
      %4754 = vmatpush1.msra.mxu0 %v4669
      %4755 = vmatprep.subr.mxu0 %v4674
      %4756 = vmatpush1.msra.mxu0 %v4673
      %4757 = vmatprep.subr.mxu0 0.0
      %4758 = vmatpush1.msra.mxu0 0.0
      %4759 = vmatprep.subr.mxu0 0.0
      %4760 = vmatpush1.msra.mxu0 0.0
      %4761 = vmatprep.subr.mxu0 0.0
      %4762 = vmatpush1.msra.mxu0 0.0
      %4763 = vmatprep.subr.mxu0 0.0
      %4764 = vmatpush1.msra.mxu0 0.0
      %4765 = vmatprep.subr.mxu0 0.0
      %4766 = vmatpush1.msra.mxu0 0.0
      %4767 = vmatprep.subr.mxu0 0.0
      %4768 = vmatpush1.msra.mxu0 0.0
      %4769 = vmatprep.subr.mxu0 0.0
      %4770 = vmatpush1.msra.mxu0 0.0
      %4771 = vmatprep.subr.mxu0 0.0
      %4772 = vmatpush1.msra.mxu0 0.0
      %4773 = vmatprep.subr.mxu0 0.0
      %4774 = vmatpush1.msra.mxu0 0.0
      %4775 = vmatprep.subr.mxu0 0.0
      %4776 = vmatpush1.msra.mxu0 0.0
      %4777 = vmatprep.subr.mxu0 0.0
      %4778 = vmatpush1.msra.mxu0 0.0
      %4779 = vmatprep.subr.mxu0 0.0
      %4780 = vmatpush1.msra.mxu0 0.0
      %4781 = vmatprep.subr.mxu0 0.0
      %4782 = vmatpush1.msra.mxu0 0.0
      %4783 = vmatprep.subr.mxu0 0.0
      %4784 = vmatpush1.msra.mxu0 0.0
      %4785 = vmatprep.subr.mxu0 0.0
      %4786 = vmatpush1.msra.mxu0 0.0
      %4787 = vmatprep.subr.mxu0 0.0
      %4788 = vmatpush1.msra.mxu0 0.0
      %4789 = vmatprep.subr.mxu0 0.0
      %4790 = vmatpush1.msra.mxu0 0.0
      %4791 = vmatprep.subr.mxu0 0.0
      %4792 = vmatpush1.msra.mxu0 0.0
      %4793 = vmatprep.subr.mxu0 0.0
      %4794 = vmatpush1.msra.mxu0 0.0
      %4795 = vmatprep.subr.mxu0 0.0
      %4796 = vmatpush1.msra.mxu0 0.0
      %4797 = vmatprep.subr.mxu0 0.0
      %4798 = vmatpush1.msra.mxu0 0.0
      %4799 = vmatprep.subr.mxu0 0.0
      %4800 = vmatpush1.msra.mxu0 0.0
      %4801 = vmatprep.subr.mxu0 0.0
      %4802 = vmatpush1.msra.mxu0 0.0
      %4803 = vmatprep.subr.mxu0 0.0
      %4804 = vmatpush1.msra.mxu0 0.0
      %4805 = vmatprep.subr.mxu0 0.0
      %4806 = vmatpush1.msra.mxu0 0.0
      %4807 = vmatprep.subr.mxu0 0.0
      %4808 = vmatpush1.msra.mxu0 0.0
      %4809 = vmatprep.subr.mxu0 0.0
      %4810 = vmatpush1.msra.mxu0 0.0
      %4811 = vmatprep.subr.mxu0 0.0
      %4812 = vmatpush1.msra.mxu0 0.0
      %4813 = vmatprep.mubr.f32.mxu0 0.0
      %4814 = vmatmul.mubr.f32.gmra.mrb[0].mxu0 %v4676
      %v4815 = vpop.f32.mrb[0].mxu0
      %v4816 = vadd.f32 0.0, %v4815
      %v4817 = vpop.f32.mrb[0].mxu0
      %v4818 = vadd.f32 0.0, %v4817
      %4819 = vdwg.mxu0
      %s4820 = scalar_lea.vmem %s7, 256
      %v4821 = vld [vmem:[%s4820] sm:$0xff]
      %v4822 = vld [vmem:[%s4820 + $0x8] sm:$0xff]
      %v4823 = vld [vmem:[%s4820 + $0x10] sm:$0xff]
      %v4824 = vld [vmem:[%s4820 + $0x18] sm:$0xff]
      %v4825 = vld [vmem:[%s4820 + $0x20] sm:$0xff]
      %v4826 = vld [vmem:[%s4820 + $0x28] sm:$0xff]
      %v4827 = vld [vmem:[%s4820 + $0x30] sm:$0xff]
      %v4828 = vld [vmem:[%s4820 + $0x38] sm:$0xff]
      %v4829 = vld [vmem:[%s4820 + $0x40] sm:$0xff]
      %v4830 = vld [vmem:[%s4820 + $0x48] sm:$0xff]
      %v4831 = vld [vmem:[%s4820 + $0x50] sm:$0xff]
      %v4832 = vld [vmem:[%s4820 + $0x58] sm:$0xff]
      %v4833 = vld [vmem:[%s4820 + $0x60] sm:$0xff]
      %v4834 = vld [vmem:[%s4820 + $0x68] sm:$0xff]
      %v4835 = vld [vmem:[%s4820 + $0x70] sm:$0xff]
      %v4836 = vld [vmem:[%s4820 + $0x78] sm:$0xff]
      %v4837 = vld [vmem:[%s4820 + $0x80] sm:$0xff]
      %v4838 = vld [vmem:[%s4820 + $0x88] sm:$0xff]
      %v4839 = vld [vmem:[%s4820 + $0x90] sm:$0xff]
      %v4840 = vld [vmem:[%s4820 + $0x98] sm:$0xff]
      %v4841 = vld [vmem:[%s4820 + $0xa0] sm:$0xff]
      %v4842 = vld [vmem:[%s4820 + $0xa8] sm:$0xff]
      %v4843 = vld [vmem:[%s4820 + $0xb0] sm:$0xff]
      %v4844 = vld [vmem:[%s4820 + $0xb8] sm:$0xff]
      %v4845 = vld [vmem:[%s4820 + $0xc0] sm:$0xff]
      %v4846 = vld [vmem:[%s4820 + $0xc8] sm:$0xff]
      %v4847 = vld [vmem:[%s4820 + $0xd0] sm:$0xff]
      %v4848 = vld [vmem:[%s4820 + $0xd8] sm:$0xff]
      %v4849 = vld [vmem:[%s4820 + $0xe0] sm:$0xff]
      %v4850 = vld [vmem:[%s4820 + $0xe8] sm:$0xff]
      %v4851 = vld [vmem:[%s4820 + $0xf0] sm:$0xff]
      %v4852 = vld [vmem:[%s4820 + $0xf8] sm:$0xff]
      %4853 = vmatprep.subr.mxu0 %v4822
      %4854 = vmatpush1.msra.mxu0 %v4821
      %4855 = vmatprep.subr.mxu0 %v4830
      %4856 = vmatpush1.msra.mxu0 %v4829
      %4857 = vmatprep.subr.mxu0 %v4838
      %4858 = vmatpush1.msra.mxu0 %v4837
      %4859 = vmatprep.subr.mxu0 %v4846
      %4860 = vmatpush1.msra.mxu0 %v4845
      %4861 = vmatprep.subr.mxu0 0.0
      %4862 = vmatpush1.msra.mxu0 0.0
      %4863 = vmatprep.subr.mxu0 0.0
      %4864 = vmatpush1.msra.mxu0 0.0
      %4865 = vmatprep.subr.mxu0 0.0
      %4866 = vmatpush1.msra.mxu0 0.0
      %4867 = vmatprep.subr.mxu0 0.0
      %4868 = vmatpush1.msra.mxu0 0.0
      %4869 = vmatprep.subr.mxu0 0.0
      %4870 = vmatpush1.msra.mxu0 0.0
      %4871 = vmatprep.subr.mxu0 0.0
      %4872 = vmatpush1.msra.mxu0 0.0
      %4873 = vmatprep.subr.mxu0 0.0
      %4874 = vmatpush1.msra.mxu0 0.0
      %4875 = vmatprep.subr.mxu0 0.0
      %4876 = vmatpush1.msra.mxu0 0.0
      %4877 = vmatprep.subr.mxu0 0.0
      %4878 = vmatpush1.msra.mxu0 0.0
      %4879 = vmatprep.subr.mxu0 0.0
      %4880 = vmatpush1.msra.mxu0 0.0
      %4881 = vmatprep.subr.mxu0 0.0
      %4882 = vmatpush1.msra.mxu0 0.0
      %4883 = vmatprep.subr.mxu0 0.0
      %4884 = vmatpush1.msra.mxu0 0.0
      %4885 = vmatprep.subr.mxu0 0.0
      %4886 = vmatpush1.msra.mxu0 0.0
      %4887 = vmatprep.subr.mxu0 0.0
      %4888 = vmatpush1.msra.mxu0 0.0
      %4889 = vmatprep.subr.mxu0 0.0
      %4890 = vmatpush1.msra.mxu0 0.0
      %4891 = vmatprep.subr.mxu0 0.0
      %4892 = vmatpush1.msra.mxu0 0.0
      %4893 = vmatprep.subr.mxu0 0.0
      %4894 = vmatpush1.msra.mxu0 0.0
      %4895 = vmatprep.subr.mxu0 0.0
      %4896 = vmatpush1.msra.mxu0 0.0
      %4897 = vmatprep.subr.mxu0 0.0
      %4898 = vmatpush1.msra.mxu0 0.0
      %4899 = vmatprep.subr.mxu0 0.0
      %4900 = vmatpush1.msra.mxu0 0.0
      %4901 = vmatprep.subr.mxu0 0.0
      %4902 = vmatpush1.msra.mxu0 0.0
      %4903 = vmatprep.subr.mxu0 0.0
      %4904 = vmatpush1.msra.mxu0 0.0
      %4905 = vmatprep.subr.mxu0 0.0
      %4906 = vmatpush1.msra.mxu0 0.0
      %4907 = vmatprep.subr.mxu0 0.0
      %4908 = vmatpush1.msra.mxu0 0.0
      %4909 = vmatprep.subr.mxu0 0.0
      %4910 = vmatpush1.msra.mxu0 0.0
      %4911 = vmatprep.subr.mxu0 0.0
      %4912 = vmatpush1.msra.mxu0 0.0
      %4913 = vmatprep.subr.mxu0 0.0
      %4914 = vmatpush1.msra.mxu0 0.0
      %4915 = vmatprep.subr.mxu0 0.0
      %4916 = vmatpush1.msra.mxu0 0.0
      %4917 = vmatprep.mubr.f32.mxu0 0.0
      %4918 = vmatmul.mubr.f32.gmra.mrb[0].mxu0 %v2022
      %v4919 = vpop.f32.mrb[0].mxu0
      %v4920 = vadd.f32 0.0, %v4919
      %v4921 = vpop.f32.mrb[0].mxu0
      %v4922 = vadd.f32 0.0, %v4921
      %4923 = vdwg.mxu0
      %4924 = vmatprep.subr.mxu0 %v4824
      %4925 = vmatpush1.msra.mxu0 %v4823
      %4926 = vmatprep.subr.mxu0 %v4832
      %4927 = vmatpush1.msra.mxu0 %v4831
      %4928 = vmatprep.subr.mxu0 %v4840
      %4929 = vmatpush1.msra.mxu0 %v4839
      %4930 = vmatprep.subr.mxu0 %v4848
      %4931 = vmatpush1.msra.mxu0 %v4847
      %4932 = vmatprep.subr.mxu0 0.0
      %4933 = vmatpush1.msra.mxu0 0.0
      %4934 = vmatprep.subr.mxu0 0.0
      %4935 = vmatpush1.msra.mxu0 0.0
      %4936 = vmatprep.subr.mxu0 0.0
      %4937 = vmatpush1.msra.mxu0 0.0
      %4938 = vmatprep.subr.mxu0 0.0
      %4939 = vmatpush1.msra.mxu0 0.0
      %4940 = vmatprep.subr.mxu0 0.0
      %4941 = vmatpush1.msra.mxu0 0.0
      %4942 = vmatprep.subr.mxu0 0.0
      %4943 = vmatpush1.msra.mxu0 0.0
      %4944 = vmatprep.subr.mxu0 0.0
      %4945 = vmatpush1.msra.mxu0 0.0
      %4946 = vmatprep.subr.mxu0 0.0
      %4947 = vmatpush1.msra.mxu0 0.0
      %4948 = vmatprep.subr.mxu0 0.0
      %4949 = vmatpush1.msra.mxu0 0.0
      %4950 = vmatprep.subr.mxu0 0.0
      %4951 = vmatpush1.msra.mxu0 0.0
      %4952 = vmatprep.subr.mxu0 0.0
      %4953 = vmatpush1.msra.mxu0 0.0
      %4954 = vmatprep.subr.mxu0 0.0
      %4955 = vmatpush1.msra.mxu0 0.0
      %4956 = vmatprep.subr.mxu0 0.0
      %4957 = vmatpush1.msra.mxu0 0.0
      %4958 = vmatprep.subr.mxu0 0.0
      %4959 = vmatpush1.msra.mxu0 0.0
      %4960 = vmatprep.subr.mxu0 0.0
      %4961 = vmatpush1.msra.mxu0 0.0
      %4962 = vmatprep.subr.mxu0 0.0
      %4963 = vmatpush1.msra.mxu0 0.0
      %4964 = vmatprep.subr.mxu0 0.0
      %4965 = vmatpush1.msra.mxu0 0.0
      %4966 = vmatprep.subr.mxu0 0.0
      %4967 = vmatpush1.msra.mxu0 0.0
      %4968 = vmatprep.subr.mxu0 0.0
      %4969 = vmatpush1.msra.mxu0 0.0
      %4970 = vmatprep.subr.mxu0 0.0
      %4971 = vmatpush1.msra.mxu0 0.0
      %4972 = vmatprep.subr.mxu0 0.0
      %4973 = vmatpush1.msra.mxu0 0.0
      %4974 = vmatprep.subr.mxu0 0.0
      %4975 = vmatpush1.msra.mxu0 0.0
      %4976 = vmatprep.subr.mxu0 0.0
      %4977 = vmatpush1.msra.mxu0 0.0
      %4978 = vmatprep.subr.mxu0 0.0
      %4979 = vmatpush1.msra.mxu0 0.0
      %4980 = vmatprep.subr.mxu0 0.0
      %4981 = vmatpush1.msra.mxu0 0.0
      %4982 = vmatprep.subr.mxu0 0.0
      %4983 = vmatpush1.msra.mxu0 0.0
      %4984 = vmatprep.subr.mxu0 0.0
      %4985 = vmatpush1.msra.mxu0 0.0
      %4986 = vmatprep.subr.mxu0 0.0
      %4987 = vmatpush1.msra.mxu0 0.0
      %4988 = vmatprep.mubr.f32.mxu0 0.0
      %4989 = vmatmul.mubr.f32.gmra.mrb[0].mxu0 %v2022
      %v4990 = vpop.f32.mrb[0].mxu0
      %v4991 = vadd.f32 0.0, %v4990
      %v4992 = vpop.f32.mrb[0].mxu0
      %v4993 = vadd.f32 0.0, %v4992
      %4994 = vdwg.mxu0
      %4995 = vmatprep.subr.mxu0 %v4826
      %4996 = vmatpush1.msra.mxu0 %v4825
      %4997 = vmatprep.subr.mxu0 %v4834
      %4998 = vmatpush1.msra.mxu0 %v4833
      %4999 = vmatprep.subr.mxu0 %v4842
      %5000 = vmatpush1.msra.mxu0 %v4841
      %5001 = vmatprep.subr.mxu0 %v4850
      %5002 = vmatpush1.msra.mxu0 %v4849
      %5003 = vmatprep.subr.mxu0 0.0
      %5004 = vmatpush1.msra.mxu0 0.0
      %5005 = vmatprep.subr.mxu0 0.0
      %5006 = vmatpush1.msra.mxu0 0.0
      %5007 = vmatprep.subr.mxu0 0.0
      %5008 = vmatpush1.msra.mxu0 0.0
      %5009 = vmatprep.subr.mxu0 0.0
      %5010 = vmatpush1.msra.mxu0 0.0
      %5011 = vmatprep.subr.mxu0 0.0
      %5012 = vmatpush1.msra.mxu0 0.0
      %5013 = vmatprep.subr.mxu0 0.0
      %5014 = vmatpush1.msra.mxu0 0.0
      %5015 = vmatprep.subr.mxu0 0.0
      %5016 = vmatpush1.msra.mxu0 0.0
      %5017 = vmatprep.subr.mxu0 0.0
      %5018 = vmatpush1.msra.mxu0 0.0
      %5019 = vmatprep.subr.mxu0 0.0
      %5020 = vmatpush1.msra.mxu0 0.0
      %5021 = vmatprep.subr.mxu0 0.0
      %5022 = vmatpush1.msra.mxu0 0.0
      %5023 = vmatprep.subr.mxu0 0.0
      %5024 = vmatpush1.msra.mxu0 0.0
      %5025 = vmatprep.subr.mxu0 0.0
      %5026 = vmatpush1.msra.mxu0 0.0
      %5027 = vmatprep.subr.mxu0 0.0
      %5028 = vmatpush1.msra.mxu0 0.0
      %5029 = vmatprep.subr.mxu0 0.0
      %5030 = vmatpush1.msra.mxu0 0.0
      %5031 = vmatprep.subr.mxu0 0.0
      %5032 = vmatpush1.msra.mxu0 0.0
      %5033 = vmatprep.subr.mxu0 0.0
      %5034 = vmatpush1.msra.mxu0 0.0
      %5035 = vmatprep.subr.mxu0 0.0
      %5036 = vmatpush1.msra.mxu0 0.0
      %5037 = vmatprep.subr.mxu0 0.0
      %5038 = vmatpush1.msra.mxu0 0.0
      %5039 = vmatprep.subr.mxu0 0.0
      %5040 = vmatpush1.msra.mxu0 0.0
      %5041 = vmatprep.subr.mxu0 0.0
      %5042 = vmatpush1.msra.mxu0 0.0
      %5043 = vmatprep.subr.mxu0 0.0
      %5044 = vmatpush1.msra.mxu0 0.0
      %5045 = vmatprep.subr.mxu0 0.0
      %5046 = vmatpush1.msra.mxu0 0.0
      %5047 = vmatprep.subr.mxu0 0.0
      %5048 = vmatpush1.msra.mxu0 0.0
      %5049 = vmatprep.subr.mxu0 0.0
      %5050 = vmatpush1.msra.mxu0 0.0
      %5051 = vmatprep.subr.mxu0 0.0
      %5052 = vmatpush1.msra.mxu0 0.0
      %5053 = vmatprep.subr.mxu0 0.0
      %5054 = vmatpush1.msra.mxu0 0.0
      %5055 = vmatprep.subr.mxu0 0.0
      %5056 = vmatpush1.msra.mxu0 0.0
      %5057 = vmatprep.subr.mxu0 0.0
      %5058 = vmatpush1.msra.mxu0 0.0
      %5059 = vmatprep.mubr.f32.mxu0 0.0
      %5060 = vmatmul.mubr.f32.gmra.mrb[0].mxu0 %v2022
      %v5061 = vpop.f32.mrb[0].mxu0
      %v5062 = vadd.f32 0.0, %v5061
      %v5063 = vpop.f32.mrb[0].mxu0
      %v5064 = vadd.f32 0.0, %v5063
      %5065 = vdwg.mxu0
      %5066 = vmatprep.subr.mxu0 %v4828
      %5067 = vmatpush1.msra.mxu0 %v4827
      %5068 = vmatprep.subr.mxu0 %v4836
      %5069 = vmatpush1.msra.mxu0 %v4835
      %5070 = vmatprep.subr.mxu0 %v4844
      %5071 = vmatpush1.msra.mxu0 %v4843
      %5072 = vmatprep.subr.mxu0 %v4852
      %5073 = vmatpush1.msra.mxu0 %v4851
      %5074 = vmatprep.subr.mxu0 0.0
      %5075 = vmatpush1.msra.mxu0 0.0
      %5076 = vmatprep.subr.mxu0 0.0
      %5077 = vmatpush1.msra.mxu0 0.0
      %5078 = vmatprep.subr.mxu0 0.0
      %5079 = vmatpush1.msra.mxu0 0.0
      %5080 = vmatprep.subr.mxu0 0.0
      %5081 = vmatpush1.msra.mxu0 0.0
      %5082 = vmatprep.subr.mxu0 0.0
      %5083 = vmatpush1.msra.mxu0 0.0
      %5084 = vmatprep.subr.mxu0 0.0
      %5085 = vmatpush1.msra.mxu0 0.0
      %5086 = vmatprep.subr.mxu0 0.0
      %5087 = vmatpush1.msra.mxu0 0.0
      %5088 = vmatprep.subr.mxu0 0.0
      %5089 = vmatpush1.msra.mxu0 0.0
      %5090 = vmatprep.subr.mxu0 0.0
      %5091 = vmatpush1.msra.mxu0 0.0
      %5092 = vmatprep.subr.mxu0 0.0
      %5093 = vmatpush1.msra.mxu0 0.0
      %5094 = vmatprep.subr.mxu0 0.0
      %5095 = vmatpush1.msra.mxu0 0.0
      %5096 = vmatprep.subr.mxu0 0.0
      %5097 = vmatpush1.msra.mxu0 0.0
      %5098 = vmatprep.subr.mxu0 0.0
      %5099 = vmatpush1.msra.mxu0 0.0
      %5100 = vmatprep.subr.mxu0 0.0
      %5101 = vmatpush1.msra.mxu0 0.0
      %5102 = vmatprep.subr.mxu0 0.0
      %5103 = vmatpush1.msra.mxu0 0.0
      %5104 = vmatprep.subr.mxu0 0.0
      %5105 = vmatpush1.msra.mxu0 0.0
      %5106 = vmatprep.subr.mxu0 0.0
      %5107 = vmatpush1.msra.mxu0 0.0
      %5108 = vmatprep.subr.mxu0 0.0
      %5109 = vmatpush1.msra.mxu0 0.0
      %5110 = vmatprep.subr.mxu0 0.0
      %5111 = vmatpush1.msra.mxu0 0.0
      %5112 = vmatprep.subr.mxu0 0.0
      %5113 = vmatpush1.msra.mxu0 0.0
      %5114 = vmatprep.subr.mxu0 0.0
      %5115 = vmatpush1.msra.mxu0 0.0
      %5116 = vmatprep.subr.mxu0 0.0
      %5117 = vmatpush1.msra.mxu0 0.0
      %5118 = vmatprep.subr.mxu0 0.0
      %5119 = vmatpush1.msra.mxu0 0.0
      %5120 = vmatprep.subr.mxu0 0.0
      %5121 = vmatpush1.msra.mxu0 0.0
      %5122 = vmatprep.subr.mxu0 0.0
      %5123 = vmatpush1.msra.mxu0 0.0
      %5124 = vmatprep.subr.mxu0 0.0
      %5125 = vmatpush1.msra.mxu0 0.0
      %5126 = vmatprep.subr.mxu0 0.0
      %5127 = vmatpush1.msra.mxu0 0.0
      %5128 = vmatprep.subr.mxu0 0.0
      %5129 = vmatpush1.msra.mxu0 0.0
      %5130 = vmatprep.mubr.f32.mxu0 0.0
      %5131 = vmatmul.mubr.f32.gmra.mrb[0].mxu0 %v2022
      %v5132 = vpop.f32.mrb[0].mxu0
      %v5133 = vadd.f32 0.0, %v5132
      %v5134 = vpop.f32.mrb[0].mxu0
      %v5135 = vadd.f32 0.0, %v5134
      %5136 = vdwg.mxu0
      %5137 = vmatprep.subr.mxu0 0.0
      %5138 = vmatpush1.xpose.msra.mxu0 %v4920
      %5139 = vmatprep.subr.mxu0 0.0
      %5140 = vmatpush1.xpose.msra.mxu0 0.0
      %5141 = vmatprep.subr.mxu0 0.0
      %5142 = vmatpush1.xpose.msra.mxu0 0.0
      %5143 = vmatprep.subr.mxu0 0.0
      %5144 = vmatpush1.xpose.msra.mxu0 0.0
      %5145 = vmatprep.subr.mxu0 0.0
      %5146 = vmatpush1.xpose.msra.mxu0 0.0
      %5147 = vmatprep.subr.mxu0 0.0
      %5148 = vmatpush1.xpose.msra.mxu0 0.0
      %5149 = vmatprep.subr.mxu0 0.0
      %5150 = vmatpush1.xpose.msra.mxu0 0.0
      %5151 = vmatprep.subr.mxu0 0.0
      %5152 = vmatpush1.xpose.msra.mxu0 0.0
      %5153 = vmatprep.subr.mxu0 0.0
      %5154 = vmatpush1.xpose.msra.mxu0 0.0
      %5155 = vmatprep.subr.mxu0 0.0
      %5156 = vmatpush1.xpose.msra.mxu0 0.0
      %5157 = vmatprep.subr.mxu0 0.0
      %5158 = vmatpush1.xpose.msra.mxu0 0.0
      %5159 = vmatprep.subr.mxu0 0.0
      %5160 = vmatpush1.xpose.msra.mxu0 0.0
      %5161 = vmatprep.subr.mxu0 0.0
      %5162 = vmatpush1.xpose.msra.mxu0 0.0
      %5163 = vmatprep.subr.mxu0 0.0
      %5164 = vmatpush1.xpose.msra.mxu0 0.0
      %5165 = vmatprep.subr.mxu0 0.0
      %5166 = vmatpush1.xpose.msra.mxu0 0.0
      %5167 = vmatprep.subr.mxu0 0.0
      %5168 = vmatpush1.xpose.msra.mxu0 0.0
      %5169 = vmatprep.subr.mxu0 0.0
      %5170 = vmatpush1.xpose.msra.mxu0 0.0
      %5171 = vmatprep.subr.mxu0 0.0
      %5172 = vmatpush1.xpose.msra.mxu0 0.0
      %5173 = vmatprep.subr.mxu0 0.0
      %5174 = vmatpush1.xpose.msra.mxu0 0.0
      %5175 = vmatprep.subr.mxu0 0.0
      %5176 = vmatpush1.xpose.msra.mxu0 0.0
      %5177 = vmatprep.subr.mxu0 0.0
      %5178 = vmatpush1.xpose.msra.mxu0 0.0
      %5179 = vmatprep.subr.mxu0 0.0
      %5180 = vmatpush1.xpose.msra.mxu0 0.0
      %5181 = vmatprep.subr.mxu0 0.0
      %5182 = vmatpush1.xpose.msra.mxu0 0.0
      %5183 = vmatprep.subr.mxu0 0.0
      %5184 = vmatpush1.xpose.msra.mxu0 0.0
      %5185 = vmatprep.subr.mxu0 0.0
      %5186 = vmatpush1.xpose.msra.mxu0 0.0
      %5187 = vmatprep.subr.mxu0 0.0
      %5188 = vmatpush1.xpose.msra.mxu0 0.0
      %5189 = vmatprep.subr.mxu0 0.0
      %5190 = vmatpush1.xpose.msra.mxu0 0.0
      %5191 = vmatprep.subr.mxu0 0.0
      %5192 = vmatpush1.xpose.msra.mxu0 0.0
      %5193 = vmatprep.subr.mxu0 0.0
      %5194 = vmatpush1.xpose.msra.mxu0 0.0
      %5195 = vmatprep.subr.mxu0 0.0
      %5196 = vmatpush1.xpose.msra.mxu0 0.0
      %5197 = vmatprep.subr.mxu0 0.0
      %5198 = vmatpush1.xpose.msra.mxu0 0.0
      %5199 = vmatprep.subr.mxu0 0.0
      %5200 = vmatpush1.xpose.msra.mxu0 0.0
      %5201 = vmatprep.mubr.f32.mxu0 0.0
      %5202 = vmatmul.mubr.f32.gmra.mrb[0].mxu0 %v4745
      %v5203 = vpop.f32.mrb[0].mxu0
      %v5204 = vadd.f32 0.0, %v5203
      %v5205 = vpop.f32.mrb[0].mxu0
      %5206 = vdwg.mxu0
      %5207 = vmatprep.subr.mxu0 0.0
      %5208 = vmatpush1.xpose.msra.mxu0 %v4922
      %5209 = vmatprep.subr.mxu0 0.0
      %5210 = vmatpush1.xpose.msra.mxu0 0.0
      %5211 = vmatprep.subr.mxu0 0.0
      %5212 = vmatpush1.xpose.msra.mxu0 0.0
      %5213 = vmatprep.subr.mxu0 0.0
      %5214 = vmatpush1.xpose.msra.mxu0 0.0
      %5215 = vmatprep.subr.mxu0 0.0
      %5216 = vmatpush1.xpose.msra.mxu0 0.0
      %5217 = vmatprep.subr.mxu0 0.0
      %5218 = vmatpush1.xpose.msra.mxu0 0.0
      %5219 = vmatprep.subr.mxu0 0.0
      %5220 = vmatpush1.xpose.msra.mxu0 0.0
      %5221 = vmatprep.subr.mxu0 0.0
      %5222 = vmatpush1.xpose.msra.mxu0 0.0
      %5223 = vmatprep.subr.mxu0 0.0
      %5224 = vmatpush1.xpose.msra.mxu0 0.0
      %5225 = vmatprep.subr.mxu0 0.0
      %5226 = vmatpush1.xpose.msra.mxu0 0.0
      %5227 = vmatprep.subr.mxu0 0.0
      %5228 = vmatpush1.xpose.msra.mxu0 0.0
      %5229 = vmatprep.subr.mxu0 0.0
      %5230 = vmatpush1.xpose.msra.mxu0 0.0
      %5231 = vmatprep.subr.mxu0 0.0
      %5232 = vmatpush1.xpose.msra.mxu0 0.0
      %5233 = vmatprep.subr.mxu0 0.0
      %5234 = vmatpush1.xpose.msra.mxu0 0.0
      %5235 = vmatprep.subr.mxu0 0.0
      %5236 = vmatpush1.xpose.msra.mxu0 0.0
      %5237 = vmatprep.subr.mxu0 0.0
      %5238 = vmatpush1.xpose.msra.mxu0 0.0
      %5239 = vmatprep.subr.mxu0 0.0
      %5240 = vmatpush1.xpose.msra.mxu0 0.0
      %5241 = vmatprep.subr.mxu0 0.0
      %5242 = vmatpush1.xpose.msra.mxu0 0.0
      %5243 = vmatprep.subr.mxu0 0.0
      %5244 = vmatpush1.xpose.msra.mxu0 0.0
      %5245 = vmatprep.subr.mxu0 0.0
      %5246 = vmatpush1.xpose.msra.mxu0 0.0
      %5247 = vmatprep.subr.mxu0 0.0
      %5248 = vmatpush1.xpose.msra.mxu0 0.0
      %5249 = vmatprep.subr.mxu0 0.0
      %5250 = vmatpush1.xpose.msra.mxu0 0.0
      %5251 = vmatprep.subr.mxu0 0.0
      %5252 = vmatpush1.xpose.msra.mxu0 0.0
      %5253 = vmatprep.subr.mxu0 0.0
      %5254 = vmatpush1.xpose.msra.mxu0 0.0
      %5255 = vmatprep.subr.mxu0 0.0
      %5256 = vmatpush1.xpose.msra.mxu0 0.0
      %5257 = vmatprep.subr.mxu0 0.0
      %5258 = vmatpush1.xpose.msra.mxu0 0.0
      %5259 = vmatprep.subr.mxu0 0.0
      %5260 = vmatpush1.xpose.msra.mxu0 0.0
      %5261 = vmatprep.subr.mxu0 0.0
      %5262 = vmatpush1.xpose.msra.mxu0 0.0
      %5263 = vmatprep.subr.mxu0 0.0
      %5264 = vmatpush1.xpose.msra.mxu0 0.0
      %5265 = vmatprep.subr.mxu0 0.0
      %5266 = vmatpush1.xpose.msra.mxu0 0.0
      %5267 = vmatprep.subr.mxu0 0.0
      %5268 = vmatpush1.xpose.msra.mxu0 0.0
      %5269 = vmatprep.subr.mxu0 0.0
      %5270 = vmatpush1.xpose.msra.mxu0 0.0
      %5271 = vmatprep.mubr.f32.mxu0 0.0
      %5272 = vmatmul.mubr.f32.gmra.mrb[0].mxu0 %v4747
      %v5273 = vpop.f32.mrb[0].mxu0
      %v5274 = vadd.f32 0.0, %v5273
      %v5275 = vpop.f32.mrb[0].mxu0
      %5276 = vdwg.mxu0
      %5277 = vmatprep.subr.mxu0 0.0
      %5278 = vmatpush1.xpose.msra.mxu0 %v4991
      %5279 = vmatprep.subr.mxu0 0.0
      %5280 = vmatpush1.xpose.msra.mxu0 0.0
      %5281 = vmatprep.subr.mxu0 0.0
      %5282 = vmatpush1.xpose.msra.mxu0 0.0
      %5283 = vmatprep.subr.mxu0 0.0
      %5284 = vmatpush1.xpose.msra.mxu0 0.0
      %5285 = vmatprep.subr.mxu0 0.0
      %5286 = vmatpush1.xpose.msra.mxu0 0.0
      %5287 = vmatprep.subr.mxu0 0.0
      %5288 = vmatpush1.xpose.msra.mxu0 0.0
      %5289 = vmatprep.subr.mxu0 0.0
      %5290 = vmatpush1.xpose.msra.mxu0 0.0
      %5291 = vmatprep.subr.mxu0 0.0
      %5292 = vmatpush1.xpose.msra.mxu0 0.0
      %5293 = vmatprep.subr.mxu0 0.0
      %5294 = vmatpush1.xpose.msra.mxu0 0.0
      %5295 = vmatprep.subr.mxu0 0.0
      %5296 = vmatpush1.xpose.msra.mxu0 0.0
      %5297 = vmatprep.subr.mxu0 0.0
      %5298 = vmatpush1.xpose.msra.mxu0 0.0
      %5299 = vmatprep.subr.mxu0 0.0
      %5300 = vmatpush1.xpose.msra.mxu0 0.0
      %5301 = vmatprep.subr.mxu0 0.0
      %5302 = vmatpush1.xpose.msra.mxu0 0.0
      %5303 = vmatprep.subr.mxu0 0.0
      %5304 = vmatpush1.xpose.msra.mxu0 0.0
      %5305 = vmatprep.subr.mxu0 0.0
      %5306 = vmatpush1.xpose.msra.mxu0 0.0
      %5307 = vmatprep.subr.mxu0 0.0
      %5308 = vmatpush1.xpose.msra.mxu0 0.0
      %5309 = vmatprep.subr.mxu0 0.0
      %5310 = vmatpush1.xpose.msra.mxu0 0.0
      %5311 = vmatprep.subr.mxu0 0.0
      %5312 = vmatpush1.xpose.msra.mxu0 0.0
      %5313 = vmatprep.subr.mxu0 0.0
      %5314 = vmatpush1.xpose.msra.mxu0 0.0
      %5315 = vmatprep.subr.mxu0 0.0
      %5316 = vmatpush1.xpose.msra.mxu0 0.0
      %5317 = vmatprep.subr.mxu0 0.0
      %5318 = vmatpush1.xpose.msra.mxu0 0.0
      %5319 = vmatprep.subr.mxu0 0.0
      %5320 = vmatpush1.xpose.msra.mxu0 0.0
      %5321 = vmatprep.subr.mxu0 0.0
      %5322 = vmatpush1.xpose.msra.mxu0 0.0
      %5323 = vmatprep.subr.mxu0 0.0
      %5324 = vmatpush1.xpose.msra.mxu0 0.0
      %5325 = vmatprep.subr.mxu0 0.0
      %5326 = vmatpush1.xpose.msra.mxu0 0.0
      %5327 = vmatprep.subr.mxu0 0.0
      %5328 = vmatpush1.xpose.msra.mxu0 0.0
      %5329 = vmatprep.subr.mxu0 0.0
      %5330 = vmatpush1.xpose.msra.mxu0 0.0
      %5331 = vmatprep.subr.mxu0 0.0
      %5332 = vmatpush1.xpose.msra.mxu0 0.0
      %5333 = vmatprep.subr.mxu0 0.0
      %5334 = vmatpush1.xpose.msra.mxu0 0.0
      %5335 = vmatprep.subr.mxu0 0.0
      %5336 = vmatpush1.xpose.msra.mxu0 0.0
      %5337 = vmatprep.subr.mxu0 0.0
      %5338 = vmatpush1.xpose.msra.mxu0 0.0
      %5339 = vmatprep.subr.mxu0 0.0
      %5340 = vmatpush1.xpose.msra.mxu0 0.0
      %5341 = vmatprep.mubr.f32.mxu0 0.0
      %5342 = vmatmul.mubr.f32.gmra.mrb[0].mxu0 %v4816
      %v5343 = vpop.f32.mrb[0].mxu0
      %v5344 = vadd.f32 0.0, %v5343
      %v5345 = vpop.f32.mrb[0].mxu0
      %5346 = vdwg.mxu0
      %5347 = vmatprep.subr.mxu0 0.0
      %5348 = vmatpush1.xpose.msra.mxu0 %v4993
      %5349 = vmatprep.subr.mxu0 0.0
      %5350 = vmatpush1.xpose.msra.mxu0 0.0
      %5351 = vmatprep.subr.mxu0 0.0
      %5352 = vmatpush1.xpose.msra.mxu0 0.0
      %5353 = vmatprep.subr.mxu0 0.0
      %5354 = vmatpush1.xpose.msra.mxu0 0.0
      %5355 = vmatprep.subr.mxu0 0.0
      %5356 = vmatpush1.xpose.msra.mxu0 0.0
      %5357 = vmatprep.subr.mxu0 0.0
      %5358 = vmatpush1.xpose.msra.mxu0 0.0
      %5359 = vmatprep.subr.mxu0 0.0
      %5360 = vmatpush1.xpose.msra.mxu0 0.0
      %5361 = vmatprep.subr.mxu0 0.0
      %5362 = vmatpush1.xpose.msra.mxu0 0.0
      %5363 = vmatprep.subr.mxu0 0.0
      %5364 = vmatpush1.xpose.msra.mxu0 0.0
      %5365 = vmatprep.subr.mxu0 0.0
      %5366 = vmatpush1.xpose.msra.mxu0 0.0
      %5367 = vmatprep.subr.mxu0 0.0
      %5368 = vmatpush1.xpose.msra.mxu0 0.0
      %5369 = vmatprep.subr.mxu0 0.0
      %5370 = vmatpush1.xpose.msra.mxu0 0.0
      %5371 = vmatprep.subr.mxu0 0.0
      %5372 = vmatpush1.xpose.msra.mxu0 0.0
      %5373 = vmatprep.subr.mxu0 0.0
      %5374 = vmatpush1.xpose.msra.mxu0 0.0
      %5375 = vmatprep.subr.mxu0 0.0
      %5376 = vmatpush1.xpose.msra.mxu0 0.0
      %5377 = vmatprep.subr.mxu0 0.0
      %5378 = vmatpush1.xpose.msra.mxu0 0.0
      %5379 = vmatprep.subr.mxu0 0.0
      %5380 = vmatpush1.xpose.msra.mxu0 0.0
      %5381 = vmatprep.subr.mxu0 0.0
      %5382 = vmatpush1.xpose.msra.mxu0 0.0
      %5383 = vmatprep.subr.mxu0 0.0
      %5384 = vmatpush1.xpose.msra.mxu0 0.0
      %5385 = vmatprep.subr.mxu0 0.0
      %5386 = vmatpush1.xpose.msra.mxu0 0.0
      %5387 = vmatprep.subr.mxu0 0.0
      %5388 = vmatpush1.xpose.msra.mxu0 0.0
      %5389 = vmatprep.subr.mxu0 0.0
      %5390 = vmatpush1.xpose.msra.mxu0 0.0
      %5391 = vmatprep.subr.mxu0 0.0
      %5392 = vmatpush1.xpose.msra.mxu0 0.0
      %5393 = vmatprep.subr.mxu0 0.0
      %5394 = vmatpush1.xpose.msra.mxu0 0.0
      %5395 = vmatprep.subr.mxu0 0.0
      %5396 = vmatpush1.xpose.msra.mxu0 0.0
      %5397 = vmatprep.subr.mxu0 0.0
      %5398 = vmatpush1.xpose.msra.mxu0 0.0
      %5399 = vmatprep.subr.mxu0 0.0
      %5400 = vmatpush1.xpose.msra.mxu0 0.0
      %5401 = vmatprep.subr.mxu0 0.0
      %5402 = vmatpush1.xpose.msra.mxu0 0.0
      %5403 = vmatprep.subr.mxu0 0.0
      %5404 = vmatpush1.xpose.msra.mxu0 0.0
      %5405 = vmatprep.subr.mxu0 0.0
      %5406 = vmatpush1.xpose.msra.mxu0 0.0
      %5407 = vmatprep.subr.mxu0 0.0
      %5408 = vmatpush1.xpose.msra.mxu0 0.0
      %5409 = vmatprep.subr.mxu0 0.0
      %5410 = vmatpush1.xpose.msra.mxu0 0.0
      %5411 = vmatprep.mubr.f32.mxu0 0.0
      %5412 = vmatmul.mubr.f32.gmra.mrb[0].mxu0 %v4818
      %v5413 = vpop.f32.mrb[0].mxu0
      %v5414 = vadd.f32 0.0, %v5413
      %v5415 = vpop.f32.mrb[0].mxu0
      %5416 = vdwg.mxu0
      %v5417 = vsel %vm2588, %v5204, -inf
      %5418 = vmax.xlane.f32.xlu0 %v5417
      %v5419 = vpop.xlane.xlu0 %5418
      %v5420 = vsel %vm2588, %v5274, -inf
      %5421 = vmax.xlane.f32.xlu0 %v5420
      %v5422 = vpop.xlane.xlu0 %5421
      %v5423 = vsel %vm2588, %v5344, -inf
      %5424 = vmax.xlane.f32.xlu0 %v5423
      %v5425 = vpop.xlane.xlu0 %5424
      %v5426 = vsel %vm2588, %v5414, -inf
      %5427 = vmax.xlane.f32.xlu0 %v5426
      %v5428 = vpop.xlane.xlu0 %5427
      %v5429 = vsub.f32 %v5204, %v5419
      %v5430 = vsub.f32 %v5274, %v5422
      %v5431 = vsub.f32 %v5344, %v5425
      %v5432 = vsub.f32 %v5414, %v5428
      %v5433 = vmul.f32 %v5429, 1.442695
      %v5434 = vpow.pop %v5433
      %v5435 = vmul.f32 %v5430, 1.442695
      %v5436 = vpow.pop %v5435
      %v5437 = vmul.f32 %v5431, 1.442695
      %v5438 = vpow.pop %v5437
      %v5439 = vmul.f32 %v5432, 1.442695
      %v5440 = vpow.pop %v5439
      %v5441 = vsel %vm2588, %v5434, 0.0
      %5442 = vadd.xlane.f32.xlu0 %v5441
      %v5443 = vpop.xlane.xlu0 %5442
      %v5444 = vsel %vm2588, %v5436, 0.0
      %5445 = vadd.xlane.f32.xlu0 %v5444
      %v5446 = vpop.xlane.xlu0 %5445
      %v5447 = vsel %vm2588, %v5438, 0.0
      %5448 = vadd.xlane.f32.xlu0 %v5447
      %v5449 = vpop.xlane.xlu0 %5448
      %v5450 = vsel %vm2588, %v5440, 0.0
      %5451 = vadd.xlane.f32.xlu0 %v5450
      %v5452 = vpop.xlane.xlu0 %5451
      %v5453 = vrcp.pop %v5443
      %v5454 = vmul.f32 %v5434, %v5453
      %v5455 = vrcp.pop %v5446
      %v5456 = vmul.f32 %v5436, %v5455
      %v5457 = vrcp.pop %v5449
      %v5458 = vmul.f32 %v5438, %v5457
      %v5459 = vrcp.pop %v5452
      %v5460 = vmul.f32 %v5440, %v5459
      %v5462 = vsel %vm2588, %v5454, 0
      %v5465 = vsel %vm2636, %v5062, 0
      %5467 = vmatprep.subr.mxu0 0.0
      %5468 = vmatpush1.msra.mxu0 %v5465
      %5469 = vmatprep.subr.mxu0 0.0
      %5470 = vmatpush1.msra.mxu0 0.0
      %5471 = vmatprep.subr.mxu0 0.0
      %5472 = vmatpush1.msra.mxu0 0.0
      %5473 = vmatprep.subr.mxu0 0.0
      %5474 = vmatpush1.msra.mxu0 0.0
      %5475 = vmatprep.subr.mxu0 0.0
      %5476 = vmatpush1.msra.mxu0 0.0
      %5477 = vmatprep.subr.mxu0 0.0
      %5478 = vmatpush1.msra.mxu0 0.0
      %5479 = vmatprep.subr.mxu0 0.0
      %5480 = vmatpush1.msra.mxu0 0.0
      %5481 = vmatprep.subr.mxu0 0.0
      %5482 = vmatpush1.msra.mxu0 0.0
      %5483 = vmatprep.subr.mxu0 0.0
      %5484 = vmatpush1.msra.mxu0 0.0
      %5485 = vmatprep.subr.mxu0 0.0
      %5486 = vmatpush1.msra.mxu0 0.0
      %5487 = vmatprep.subr.mxu0 0.0
      %5488 = vmatpush1.msra.mxu0 0.0
      %5489 = vmatprep.subr.mxu0 0.0
      %5490 = vmatpush1.msra.mxu0 0.0
      %5491 = vmatprep.subr.mxu0 0.0
      %5492 = vmatpush1.msra.mxu0 0.0
      %5493 = vmatprep.subr.mxu0 0.0
      %5494 = vmatpush1.msra.mxu0 0.0
      %5495 = vmatprep.subr.mxu0 0.0
      %5496 = vmatpush1.msra.mxu0 0.0
      %5497 = vmatprep.subr.mxu0 0.0
      %5498 = vmatpush1.msra.mxu0 0.0
      %5499 = vmatprep.subr.mxu0 0.0
      %5500 = vmatpush1.msra.mxu0 0.0
      %5501 = vmatprep.subr.mxu0 0.0
      %5502 = vmatpush1.msra.mxu0 0.0
      %5503 = vmatprep.subr.mxu0 0.0
      %5504 = vmatpush1.msra.mxu0 0.0
      %5505 = vmatprep.subr.mxu0 0.0
      %5506 = vmatpush1.msra.mxu0 0.0
      %5507 = vmatprep.subr.mxu0 0.0
      %5508 = vmatpush1.msra.mxu0 0.0
      %5509 = vmatprep.subr.mxu0 0.0
      %5510 = vmatpush1.msra.mxu0 0.0
      %5511 = vmatprep.subr.mxu0 0.0
      %5512 = vmatpush1.msra.mxu0 0.0
      %5513 = vmatprep.subr.mxu0 0.0
      %5514 = vmatpush1.msra.mxu0 0.0
      %5515 = vmatprep.subr.mxu0 0.0
      %5516 = vmatpush1.msra.mxu0 0.0
      %5517 = vmatprep.subr.mxu0 0.0
      %5518 = vmatpush1.msra.mxu0 0.0
      %5519 = vmatprep.subr.mxu0 0.0
      %5520 = vmatpush1.msra.mxu0 0.0
      %5521 = vmatprep.subr.mxu0 0.0
      %5522 = vmatpush1.msra.mxu0 0.0
      %5523 = vmatprep.subr.mxu0 0.0
      %5524 = vmatpush1.msra.mxu0 0.0
      %5525 = vmatprep.subr.mxu0 0.0
      %5526 = vmatpush1.msra.mxu0 0.0
      %5527 = vmatprep.subr.mxu0 0.0
      %5528 = vmatpush1.msra.mxu0 0.0
      %5529 = vmatprep.subr.mxu0 0.0
      %5530 = vmatpush1.msra.mxu0 0.0
      %5531 = vmatprep.mubr.f32.mxu0 0.0
      %5532 = vmatmul.mubr.f32.gmra.mrb[0].mxu0 %v5462
      %v5533 = vpop.f32.mrb[0].mxu0
      %v5534 = vadd.f32 0.0, %v5533
      %v5535 = vpop.f32.mrb[0].mxu0
      %5536 = vdwg.mxu0
      %v5538 = vsel %vm2588, %v5456, 0
      %v5541 = vsel %vm2636, %v5064, 0
      %5543 = vmatprep.subr.mxu0 0.0
      %5544 = vmatpush1.msra.mxu0 %v5541
      %5545 = vmatprep.subr.mxu0 0.0
      %5546 = vmatpush1.msra.mxu0 0.0
      %5547 = vmatprep.subr.mxu0 0.0
      %5548 = vmatpush1.msra.mxu0 0.0
      %5549 = vmatprep.subr.mxu0 0.0
      %5550 = vmatpush1.msra.mxu0 0.0
      %5551 = vmatprep.subr.mxu0 0.0
      %5552 = vmatpush1.msra.mxu0 0.0
      %5553 = vmatprep.subr.mxu0 0.0
      %5554 = vmatpush1.msra.mxu0 0.0
      %5555 = vmatprep.subr.mxu0 0.0
      %5556 = vmatpush1.msra.mxu0 0.0
      %5557 = vmatprep.subr.mxu0 0.0
      %5558 = vmatpush1.msra.mxu0 0.0
      %5559 = vmatprep.subr.mxu0 0.0
      %5560 = vmatpush1.msra.mxu0 0.0
      %5561 = vmatprep.subr.mxu0 0.0
      %5562 = vmatpush1.msra.mxu0 0.0
      %5563 = vmatprep.subr.mxu0 0.0
      %5564 = vmatpush1.msra.mxu0 0.0
      %5565 = vmatprep.subr.mxu0 0.0
      %5566 = vmatpush1.msra.mxu0 0.0
      %5567 = vmatprep.subr.mxu0 0.0
      %5568 = vmatpush1.msra.mxu0 0.0
      %5569 = vmatprep.subr.mxu0 0.0
      %5570 = vmatpush1.msra.mxu0 0.0
      %5571 = vmatprep.subr.mxu0 0.0
      %5572 = vmatpush1.msra.mxu0 0.0
      %5573 = vmatprep.subr.mxu0 0.0
      %5574 = vmatpush1.msra.mxu0 0.0
      %5575 = vmatprep.subr.mxu0 0.0
      %5576 = vmatpush1.msra.mxu0 0.0
      %5577 = vmatprep.subr.mxu0 0.0
      %5578 = vmatpush1.msra.mxu0 0.0
      %5579 = vmatprep.subr.mxu0 0.0
      %5580 = vmatpush1.msra.mxu0 0.0
      %5581 = vmatprep.subr.mxu0 0.0
      %5582 = vmatpush1.msra.mxu0 0.0
      %5583 = vmatprep.subr.mxu0 0.0
      %5584 = vmatpush1.msra.mxu0 0.0
      %5585 = vmatprep.subr.mxu0 0.0
      %5586 = vmatpush1.msra.mxu0 0.0
      %5587 = vmatprep.subr.mxu0 0.0
      %5588 = vmatpush1.msra.mxu0 0.0
      %5589 = vmatprep.subr.mxu0 0.0
      %5590 = vmatpush1.msra.mxu0 0.0
      %5591 = vmatprep.subr.mxu0 0.0
      %5592 = vmatpush1.msra.mxu0 0.0
      %5593 = vmatprep.subr.mxu0 0.0
      %5594 = vmatpush1.msra.mxu0 0.0
      %5595 = vmatprep.subr.mxu0 0.0
      %5596 = vmatpush1.msra.mxu0 0.0
      %5597 = vmatprep.subr.mxu0 0.0
      %5598 = vmatpush1.msra.mxu0 0.0
      %5599 = vmatprep.subr.mxu0 0.0
      %5600 = vmatpush1.msra.mxu0 0.0
      %5601 = vmatprep.subr.mxu0 0.0
      %5602 = vmatpush1.msra.mxu0 0.0
      %5603 = vmatprep.subr.mxu0 0.0
      %5604 = vmatpush1.msra.mxu0 0.0
      %5605 = vmatprep.subr.mxu0 0.0
      %5606 = vmatpush1.msra.mxu0 0.0
      %5607 = vmatprep.mubr.f32.mxu0 0.0
      %5608 = vmatmul.mubr.f32.gmra.mrb[0].mxu0 %v5538
      %v5609 = vpop.f32.mrb[0].mxu0
      %v5610 = vadd.f32 0.0, %v5609
      %v5611 = vpop.f32.mrb[0].mxu0
      %5612 = vdwg.mxu0
      %v5614 = vsel %vm2588, %v5458, 0
      %v5617 = vsel %vm2636, %v5133, 0
      %5619 = vmatprep.subr.mxu0 0.0
      %5620 = vmatpush1.msra.mxu0 %v5617
      %5621 = vmatprep.subr.mxu0 0.0
      %5622 = vmatpush1.msra.mxu0 0.0
      %5623 = vmatprep.subr.mxu0 0.0
      %5624 = vmatpush1.msra.mxu0 0.0
      %5625 = vmatprep.subr.mxu0 0.0
      %5626 = vmatpush1.msra.mxu0 0.0
      %5627 = vmatprep.subr.mxu0 0.0
      %5628 = vmatpush1.msra.mxu0 0.0
      %5629 = vmatprep.subr.mxu0 0.0
      %5630 = vmatpush1.msra.mxu0 0.0
      %5631 = vmatprep.subr.mxu0 0.0
      %5632 = vmatpush1.msra.mxu0 0.0
      %5633 = vmatprep.subr.mxu0 0.0
      %5634 = vmatpush1.msra.mxu0 0.0
      %5635 = vmatprep.subr.mxu0 0.0
      %5636 = vmatpush1.msra.mxu0 0.0
      %5637 = vmatprep.subr.mxu0 0.0
      %5638 = vmatpush1.msra.mxu0 0.0
      %5639 = vmatprep.subr.mxu0 0.0
      %5640 = vmatpush1.msra.mxu0 0.0
      %5641 = vmatprep.subr.mxu0 0.0
      %5642 = vmatpush1.msra.mxu0 0.0
      %5643 = vmatprep.subr.mxu0 0.0
      %5644 = vmatpush1.msra.mxu0 0.0
      %5645 = vmatprep.subr.mxu0 0.0
      %5646 = vmatpush1.msra.mxu0 0.0
      %5647 = vmatprep.subr.mxu0 0.0
      %5648 = vmatpush1.msra.mxu0 0.0
      %5649 = vmatprep.subr.mxu0 0.0
      %5650 = vmatpush1.msra.mxu0 0.0
      %5651 = vmatprep.subr.mxu0 0.0
      %5652 = vmatpush1.msra.mxu0 0.0
      %5653 = vmatprep.subr.mxu0 0.0
      %5654 = vmatpush1.msra.mxu0 0.0
      %5655 = vmatprep.subr.mxu0 0.0
      %5656 = vmatpush1.msra.mxu0 0.0
      %5657 = vmatprep.subr.mxu0 0.0
      %5658 = vmatpush1.msra.mxu0 0.0
      %5659 = vmatprep.subr.mxu0 0.0
      %5660 = vmatpush1.msra.mxu0 0.0
      %5661 = vmatprep.subr.mxu0 0.0
      %5662 = vmatpush1.msra.mxu0 0.0
      %5663 = vmatprep.subr.mxu0 0.0
      %5664 = vmatpush1.msra.mxu0 0.0
      %5665 = vmatprep.subr.mxu0 0.0
      %5666 = vmatpush1.msra.mxu0 0.0
      %5667 = vmatprep.subr.mxu0 0.0
      %5668 = vmatpush1.msra.mxu0 0.0
      %5669 = vmatprep.subr.mxu0 0.0
      %5670 = vmatpush1.msra.mxu0 0.0
      %5671 = vmatprep.subr.mxu0 0.0
      %5672 = vmatpush1.msra.mxu0 0.0
      %5673 = vmatprep.subr.mxu0 0.0
      %5674 = vmatpush1.msra.mxu0 0.0
      %5675 = vmatprep.subr.mxu0 0.0
      %5676 = vmatpush1.msra.mxu0 0.0
      %5677 = vmatprep.subr.mxu0 0.0
      %5678 = vmatpush1.msra.mxu0 0.0
      %5679 = vmatprep.subr.mxu0 0.0
      %5680 = vmatpush1.msra.mxu0 0.0
      %5681 = vmatprep.subr.mxu0 0.0
      %5682 = vmatpush1.msra.mxu0 0.0
      %5683 = vmatprep.mubr.f32.mxu0 0.0
      %5684 = vmatmul.mubr.f32.gmra.mrb[0].mxu0 %v5614
      %v5685 = vpop.f32.mrb[0].mxu0
      %v5686 = vadd.f32 0.0, %v5685
      %v5687 = vpop.f32.mrb[0].mxu0
      %5688 = vdwg.mxu0
      %v5690 = vsel %vm2588, %v5460, 0
      %v5693 = vsel %vm2636, %v5135, 0
      %5695 = vmatprep.subr.mxu0 0.0
      %5696 = vmatpush1.msra.mxu0 %v5693
      %5697 = vmatprep.subr.mxu0 0.0
      %5698 = vmatpush1.msra.mxu0 0.0
      %5699 = vmatprep.subr.mxu0 0.0
      %5700 = vmatpush1.msra.mxu0 0.0
      %5701 = vmatprep.subr.mxu0 0.0
      %5702 = vmatpush1.msra.mxu0 0.0
      %5703 = vmatprep.subr.mxu0 0.0
      %5704 = vmatpush1.msra.mxu0 0.0
      %5705 = vmatprep.subr.mxu0 0.0
      %5706 = vmatpush1.msra.mxu0 0.0
      %5707 = vmatprep.subr.mxu0 0.0
      %5708 = vmatpush1.msra.mxu0 0.0
      %5709 = vmatprep.subr.mxu0 0.0
      %5710 = vmatpush1.msra.mxu0 0.0
      %5711 = vmatprep.subr.mxu0 0.0
      %5712 = vmatpush1.msra.mxu0 0.0
      %5713 = vmatprep.subr.mxu0 0.0
      %5714 = vmatpush1.msra.mxu0 0.0
      %5715 = vmatprep.subr.mxu0 0.0
      %5716 = vmatpush1.msra.mxu0 0.0
      %5717 = vmatprep.subr.mxu0 0.0
      %5718 = vmatpush1.msra.mxu0 0.0
      %5719 = vmatprep.subr.mxu0 0.0
      %5720 = vmatpush1.msra.mxu0 0.0
      %5721 = vmatprep.subr.mxu0 0.0
      %5722 = vmatpush1.msra.mxu0 0.0
      %5723 = vmatprep.subr.mxu0 0.0
      %5724 = vmatpush1.msra.mxu0 0.0
      %5725 = vmatprep.subr.mxu0 0.0
      %5726 = vmatpush1.msra.mxu0 0.0
      %5727 = vmatprep.subr.mxu0 0.0
      %5728 = vmatpush1.msra.mxu0 0.0
      %5729 = vmatprep.subr.mxu0 0.0
      %5730 = vmatpush1.msra.mxu0 0.0
      %5731 = vmatprep.subr.mxu0 0.0
      %5732 = vmatpush1.msra.mxu0 0.0
      %5733 = vmatprep.subr.mxu0 0.0
      %5734 = vmatpush1.msra.mxu0 0.0
      %5735 = vmatprep.subr.mxu0 0.0
      %5736 = vmatpush1.msra.mxu0 0.0
      %5737 = vmatprep.subr.mxu0 0.0
      %5738 = vmatpush1.msra.mxu0 0.0
      %5739 = vmatprep.subr.mxu0 0.0
      %5740 = vmatpush1.msra.mxu0 0.0
      %5741 = vmatprep.subr.mxu0 0.0
      %5742 = vmatpush1.msra.mxu0 0.0
      %5743 = vmatprep.subr.mxu0 0.0
      %5744 = vmatpush1.msra.mxu0 0.0
      %5745 = vmatprep.subr.mxu0 0.0
      %5746 = vmatpush1.msra.mxu0 0.0
      %5747 = vmatprep.subr.mxu0 0.0
      %5748 = vmatpush1.msra.mxu0 0.0
      %5749 = vmatprep.subr.mxu0 0.0
      %5750 = vmatpush1.msra.mxu0 0.0
      %5751 = vmatprep.subr.mxu0 0.0
      %5752 = vmatpush1.msra.mxu0 0.0
      %5753 = vmatprep.subr.mxu0 0.0
      %5754 = vmatpush1.msra.mxu0 0.0
      %5755 = vmatprep.subr.mxu0 0.0
      %5756 = vmatpush1.msra.mxu0 0.0
      %5757 = vmatprep.subr.mxu0 0.0
      %5758 = vmatpush1.msra.mxu0 0.0
      %5759 = vmatprep.mubr.f32.mxu0 0.0
      %5760 = vmatmul.mubr.f32.gmra.mrb[0].mxu0 %v5690
      %v5761 = vpop.f32.mrb[0].mxu0
      %v5762 = vadd.f32 0.0, %v5761
      %v5763 = vpop.f32.mrb[0].mxu0
      %5764 = vdwg.mxu0
      %s5765 = scalar_lea.vmem %s8, 512
      %v5766 = vld [vmem:[%s5765] sm:$0xff]
      %v5767 = vld [vmem:[%s5765 + $0x8] sm:$0xff]
      %v5768 = vld [vmem:[%s5765 + $0x10] sm:$0xff]
      %v5769 = vld [vmem:[%s5765 + $0x18] sm:$0xff]
      %v5770 = vld [vmem:[%s5765 + $0x20] sm:$0xff]
      %v5771 = vld [vmem:[%s5765 + $0x28] sm:$0xff]
      %v5772 = vld [vmem:[%s5765 + $0x30] sm:$0xff]
      %v5773 = vld [vmem:[%s5765 + $0x38] sm:$0xff]
      %v5774 = vld [vmem:[%s5765 + $0x40] sm:$0xff]
      %v5775 = vld [vmem:[%s5765 + $0x48] sm:$0xff]
      %v5776 = vld [vmem:[%s5765 + $0x50] sm:$0xff]
      %v5777 = vld [vmem:[%s5765 + $0x58] sm:$0xff]
      %v5778 = vld [vmem:[%s5765 + $0x60] sm:$0xff]
      %v5779 = vld [vmem:[%s5765 + $0x68] sm:$0xff]
      %v5780 = vld [vmem:[%s5765 + $0x70] sm:$0xff]
      %v5781 = vld [vmem:[%s5765 + $0x78] sm:$0xff]
      %v5782 = vld [vmem:[%s5765 + $0x80] sm:$0xff]
      %v5783 = vld [vmem:[%s5765 + $0x88] sm:$0xff]
      %v5784 = vld [vmem:[%s5765 + $0x90] sm:$0xff]
      %v5785 = vld [vmem:[%s5765 + $0x98] sm:$0xff]
      %v5786 = vld [vmem:[%s5765 + $0xa0] sm:$0xff]
      %v5787 = vld [vmem:[%s5765 + $0xa8] sm:$0xff]
      %v5788 = vld [vmem:[%s5765 + $0xb0] sm:$0xff]
      %v5789 = vld [vmem:[%s5765 + $0xb8] sm:$0xff]
      %v5790 = vld [vmem:[%s5765 + $0xc0] sm:$0xff]
      %v5791 = vld [vmem:[%s5765 + $0xc8] sm:$0xff]
      %v5792 = vld [vmem:[%s5765 + $0xd0] sm:$0xff]
      %v5793 = vld [vmem:[%s5765 + $0xd8] sm:$0xff]
      %v5794 = vld [vmem:[%s5765 + $0xe0] sm:$0xff]
      %v5795 = vld [vmem:[%s5765 + $0xe8] sm:$0xff]
      %v5796 = vld [vmem:[%s5765 + $0xf0] sm:$0xff]
      %v5797 = vld [vmem:[%s5765 + $0xf8] sm:$0xff]
      %v5798 = vld [vmem:[%s5765 + $0x100] sm:$0xff]
      %v5799 = vld [vmem:[%s5765 + $0x108] sm:$0xff]
      %v5800 = vld [vmem:[%s5765 + $0x110] sm:$0xff]
      %v5801 = vld [vmem:[%s5765 + $0x118] sm:$0xff]
      %v5802 = vld [vmem:[%s5765 + $0x120] sm:$0xff]
      %v5803 = vld [vmem:[%s5765 + $0x128] sm:$0xff]
      %v5804 = vld [vmem:[%s5765 + $0x130] sm:$0xff]
      %v5805 = vld [vmem:[%s5765 + $0x138] sm:$0xff]
      %v5806 = vld [vmem:[%s5765 + $0x140] sm:$0xff]
      %v5807 = vld [vmem:[%s5765 + $0x148] sm:$0xff]
      %v5808 = vld [vmem:[%s5765 + $0x150] sm:$0xff]
      %v5809 = vld [vmem:[%s5765 + $0x158] sm:$0xff]
      %v5810 = vld [vmem:[%s5765 + $0x160] sm:$0xff]
      %v5811 = vld [vmem:[%s5765 + $0x168] sm:$0xff]
      %v5812 = vld [vmem:[%s5765 + $0x170] sm:$0xff]
      %v5813 = vld [vmem:[%s5765 + $0x178] sm:$0xff]
      %v5814 = vld [vmem:[%s5765 + $0x180] sm:$0xff]
      %v5815 = vld [vmem:[%s5765 + $0x188] sm:$0xff]
      %v5816 = vld [vmem:[%s5765 + $0x190] sm:$0xff]
      %v5817 = vld [vmem:[%s5765 + $0x198] sm:$0xff]
      %v5818 = vld [vmem:[%s5765 + $0x1a0] sm:$0xff]
      %v5819 = vld [vmem:[%s5765 + $0x1a8] sm:$0xff]
      %v5820 = vld [vmem:[%s5765 + $0x1b0] sm:$0xff]
      %v5821 = vld [vmem:[%s5765 + $0x1b8] sm:$0xff]
      %v5822 = vld [vmem:[%s5765 + $0x1c0] sm:$0xff]
      %v5823 = vld [vmem:[%s5765 + $0x1c8] sm:$0xff]
      %v5824 = vld [vmem:[%s5765 + $0x1d0] sm:$0xff]
      %v5825 = vld [vmem:[%s5765 + $0x1d8] sm:$0xff]
      %v5826 = vld [vmem:[%s5765 + $0x1e0] sm:$0xff]
      %v5827 = vld [vmem:[%s5765 + $0x1e8] sm:$0xff]
      %v5828 = vld [vmem:[%s5765 + $0x1f0] sm:$0xff]
      %v5829 = vld [vmem:[%s5765 + $0x1f8] sm:$0xff]
      %5830 = vmatprep.subr.mxu0 0.0
      %5831 = vmatpush1.msra.mxu0 %v5766
      %5832 = vmatprep.subr.mxu0 0.0
      %5833 = vmatpush1.msra.mxu0 %v5767
      %5834 = vmatprep.subr.mxu0 0.0
      %5835 = vmatpush1.msra.mxu0 %v5768
      %5836 = vmatprep.subr.mxu0 0.0
      %5837 = vmatpush1.msra.mxu0 %v5769
      %5838 = vmatprep.subr.mxu0 0.0
      %5839 = vmatpush1.msra.mxu0 %v5770
      %5840 = vmatprep.subr.mxu0 0.0
      %5841 = vmatpush1.msra.mxu0 %v5771
      %5842 = vmatprep.subr.mxu0 0.0
      %5843 = vmatpush1.msra.mxu0 %v5772
      %5844 = vmatprep.subr.mxu0 0.0
      %5845 = vmatpush1.msra.mxu0 %v5773
      %5846 = vmatprep.subr.mxu0 0.0
      %5847 = vmatpush1.msra.mxu0 %v5774
      %5848 = vmatprep.subr.mxu0 0.0
      %5849 = vmatpush1.msra.mxu0 %v5775
      %5850 = vmatprep.subr.mxu0 0.0
      %5851 = vmatpush1.msra.mxu0 %v5776
      %5852 = vmatprep.subr.mxu0 0.0
      %5853 = vmatpush1.msra.mxu0 %v5777
      %5854 = vmatprep.subr.mxu0 0.0
      %5855 = vmatpush1.msra.mxu0 %v5778
      %5856 = vmatprep.subr.mxu0 0.0
      %5857 = vmatpush1.msra.mxu0 %v5779
      %5858 = vmatprep.subr.mxu0 0.0
      %5859 = vmatpush1.msra.mxu0 %v5780
      %5860 = vmatprep.subr.mxu0 0.0
      %5861 = vmatpush1.msra.mxu0 %v5781
      %5862 = vmatprep.subr.mxu0 0.0
      %5863 = vmatpush1.msra.mxu0 %v5782
      %5864 = vmatprep.subr.mxu0 0.0
      %5865 = vmatpush1.msra.mxu0 %v5783
      %5866 = vmatprep.subr.mxu0 0.0
      %5867 = vmatpush1.msra.mxu0 %v5784
      %5868 = vmatprep.subr.mxu0 0.0
      %5869 = vmatpush1.msra.mxu0 %v5785
      %5870 = vmatprep.subr.mxu0 0.0
      %5871 = vmatpush1.msra.mxu0 %v5786
      %5872 = vmatprep.subr.mxu0 0.0
      %5873 = vmatpush1.msra.mxu0 %v5787
      %5874 = vmatprep.subr.mxu0 0.0
      %5875 = vmatpush1.msra.mxu0 %v5788
      %5876 = vmatprep.subr.mxu0 0.0
      %5877 = vmatpush1.msra.mxu0 %v5789
      %5878 = vmatprep.subr.mxu0 0.0
      %5879 = vmatpush1.msra.mxu0 %v5790
      %5880 = vmatprep.subr.mxu0 0.0
      %5881 = vmatpush1.msra.mxu0 %v5791
      %5882 = vmatprep.subr.mxu0 0.0
      %5883 = vmatpush1.msra.mxu0 %v5792
      %5884 = vmatprep.subr.mxu0 0.0
      %5885 = vmatpush1.msra.mxu0 %v5793
      %5886 = vmatprep.subr.mxu0 0.0
      %5887 = vmatpush1.msra.mxu0 %v5794
      %5888 = vmatprep.subr.mxu0 0.0
      %5889 = vmatpush1.msra.mxu0 %v5795
      %5890 = vmatprep.subr.mxu0 0.0
      %5891 = vmatpush1.msra.mxu0 %v5796
      %5892 = vmatprep.subr.mxu0 0.0
      %5893 = vmatpush1.msra.mxu0 %v5797
      %5894 = vmatprep.mubr.f32.mxu0 %v5610
      %5895 = vmatmul.mubr.f32.gmra.mrb[0].mxu0 %v5534
      %v5896 = vpop.f32.mrb[0].mxu0
      %v5897 = vadd.f32 0.0, %v5896
      %v5898 = vpop.f32.mrb[0].mxu0
      %5899 = vdwg.mxu0
      %5900 = vmatprep.subr.mxu0 0.0
      %5901 = vmatpush1.msra.mxu0 %v5798
      %5902 = vmatprep.subr.mxu0 0.0
      %5903 = vmatpush1.msra.mxu0 %v5799
      %5904 = vmatprep.subr.mxu0 0.0
      %5905 = vmatpush1.msra.mxu0 %v5800
      %5906 = vmatprep.subr.mxu0 0.0
      %5907 = vmatpush1.msra.mxu0 %v5801
      %5908 = vmatprep.subr.mxu0 0.0
      %5909 = vmatpush1.msra.mxu0 %v5802
      %5910 = vmatprep.subr.mxu0 0.0
      %5911 = vmatpush1.msra.mxu0 %v5803
      %5912 = vmatprep.subr.mxu0 0.0
      %5913 = vmatpush1.msra.mxu0 %v5804
      %5914 = vmatprep.subr.mxu0 0.0
      %5915 = vmatpush1.msra.mxu0 %v5805
      %5916 = vmatprep.subr.mxu0 0.0
      %5917 = vmatpush1.msra.mxu0 %v5806
      %5918 = vmatprep.subr.mxu0 0.0
      %5919 = vmatpush1.msra.mxu0 %v5807
      %5920 = vmatprep.subr.mxu0 0.0
      %5921 = vmatpush1.msra.mxu0 %v5808
      %5922 = vmatprep.subr.mxu0 0.0
      %5923 = vmatpush1.msra.mxu0 %v5809
      %5924 = vmatprep.subr.mxu0 0.0
      %5925 = vmatpush1.msra.mxu0 %v5810
      %5926 = vmatprep.subr.mxu0 0.0
      %5927 = vmatpush1.msra.mxu0 %v5811
      %5928 = vmatprep.subr.mxu0 0.0
      %5929 = vmatpush1.msra.mxu0 %v5812
      %5930 = vmatprep.subr.mxu0 0.0
      %5931 = vmatpush1.msra.mxu0 %v5813
      %5932 = vmatprep.subr.mxu0 0.0
      %5933 = vmatpush1.msra.mxu0 %v5814
      %5934 = vmatprep.subr.mxu0 0.0
      %5935 = vmatpush1.msra.mxu0 %v5815
      %5936 = vmatprep.subr.mxu0 0.0
      %5937 = vmatpush1.msra.mxu0 %v5816
      %5938 = vmatprep.subr.mxu0 0.0
      %5939 = vmatpush1.msra.mxu0 %v5817
      %5940 = vmatprep.subr.mxu0 0.0
      %5941 = vmatpush1.msra.mxu0 %v5818
      %5942 = vmatprep.subr.mxu0 0.0
      %5943 = vmatpush1.msra.mxu0 %v5819
      %5944 = vmatprep.subr.mxu0 0.0
      %5945 = vmatpush1.msra.mxu0 %v5820
      %5946 = vmatprep.subr.mxu0 0.0
      %5947 = vmatpush1.msra.mxu0 %v5821
      %5948 = vmatprep.subr.mxu0 0.0
      %5949 = vmatpush1.msra.mxu0 %v5822
      %5950 = vmatprep.subr.mxu0 0.0
      %5951 = vmatpush1.msra.mxu0 %v5823
      %5952 = vmatprep.subr.mxu0 0.0
      %5953 = vmatpush1.msra.mxu0 %v5824
      %5954 = vmatprep.subr.mxu0 0.0
      %5955 = vmatpush1.msra.mxu0 %v5825
      %5956 = vmatprep.subr.mxu0 0.0
      %5957 = vmatpush1.msra.mxu0 %v5826
      %5958 = vmatprep.subr.mxu0 0.0
      %5959 = vmatpush1.msra.mxu0 %v5827
      %5960 = vmatprep.subr.mxu0 0.0
      %5961 = vmatpush1.msra.mxu0 %v5828
      %5962 = vmatprep.subr.mxu0 0.0
      %5963 = vmatpush1.msra.mxu0 %v5829
      %5964 = vmatprep.mubr.f32.mxu0 %v5762
      %5965 = vmatmul.mubr.f32.gmra.mrb[0].mxu0 %v5686
      %v5966 = vpop.f32.mrb[0].mxu0
      %v5967 = vadd.f32 %v5897, %v5966
      %v5968 = vpop.f32.mrb[0].mxu0
      %5969 = vdwg.mxu0
      %v5970 = vadd.f32 %v4640, %v5967
      %s5971 = scalar_lea.vmem %s9, 1
      %v5972 = vld [vmem:[%s5971] sm:$0x1]
      %v5973 = vmul.f32 %v5970, %v5970
      %v5974 = vsel %vm554, %v5973, 0.0
      %5975 = vadd.xlane.f32.xlu0 %v5974
      %v5976 = vpop.xlane.xlu0 %5975
      %v5977 = vmul.f32 %v5976, %v494
      %v5978 = vadd.f32 %v5977, 1e-06
      %v5979 = vrsqrt.pop %v5978
      %v5980 = vmul.f32 %v5970, %v5979
      %v5982 = vlaneseq
      %v5983 = vshrl.u32 %v5982, 7
      %v5984 = vsub.s32 0, %v5983
      %v5985 = vrot.slane %v5972, %v5984
      %v5987 = vmul.f32 %v5980, %v5985
      %s5988 = scalar_lea.vmem %s10, 32
      %v5989 = vld [vmem:[%s5988] sm:$0xff]
      %v5990 = vld [vmem:[%s5988 + $0x8] sm:$0xff]
      %v5991 = vld [vmem:[%s5988 + $0x10] sm:$0xff]
      %v5992 = vld [vmem:[%s5988 + $0x18] sm:$0xff]
      %v5994 = vsel %vm554, %v5987, 0
      %5996 = vmatprep.subr.mxu0 0.0
      %5997 = vmatpush1.msra.mxu0 %v5989
      %5998 = vmatprep.subr.mxu0 0.0
      %5999 = vmatpush1.msra.mxu0 %v5990
      %6000 = vmatprep.subr.mxu0 0.0
      %6001 = vmatpush1.msra.mxu0 %v5991
      %6002 = vmatprep.subr.mxu0 0.0
      %6003 = vmatpush1.msra.mxu0 %v5992
      %6004 = vmatprep.subr.mxu0 0.0
      %6005 = vmatpush1.msra.mxu0 0.0
      %6006 = vmatprep.subr.mxu0 0.0
      %6007 = vmatpush1.msra.mxu0 0.0
      %6008 = vmatprep.subr.mxu0 0.0
      %6009 = vmatpush1.msra.mxu0 0.0
      %6010 = vmatprep.subr.mxu0 0.0
      %6011 = vmatpush1.msra.mxu0 0.0
      %6012 = vmatprep.subr.mxu0 0.0
      %6013 = vmatpush1.msra.mxu0 0.0
      %6014 = vmatprep.subr.mxu0 0.0
      %6015 = vmatpush1.msra.mxu0 0.0
      %6016 = vmatprep.subr.mxu0 0.0
      %6017 = vmatpush1.msra.mxu0 0.0
      %6018 = vmatprep.subr.mxu0 0.0
      %6019 = vmatpush1.msra.mxu0 0.0
      %6020 = vmatprep.subr.mxu0 0.0
      %6021 = vmatpush1.msra.mxu0 0.0
      %6022 = vmatprep.subr.mxu0 0.0
      %6023 = vmatpush1.msra.mxu0 0.0
      %6024 = vmatprep.subr.mxu0 0.0
      %6025 = vmatpush1.msra.mxu0 0.0
      %6026 = vmatprep.subr.mxu0 0.0
      %6027 = vmatpush1.msra.mxu0 0.0
      %6028 = vmatprep.subr.mxu0 0.0
      %6029 = vmatpush1.msra.mxu0 0.0
      %6030 = vmatprep.subr.mxu0 0.0
      %6031 = vmatpush1.msra.mxu0 0.0
      %6032 = vmatprep.subr.mxu0 0.0
      %6033 = vmatpush1.msra.mxu0 0.0
      %6034 = vmatprep.subr.mxu0 0.0
      %6035 = vmatpush1.msra.mxu0 0.0
      %6036 = vmatprep.subr.mxu0 0.0
      %6037 = vmatpush1.msra.mxu0 0.0
      %6038 = vmatprep.subr.mxu0 0.0
      %6039 = vmatpush1.msra.mxu0 0.0
      %6040 = vmatprep.subr.mxu0 0.0
      %6041 = vmatpush1.msra.mxu0 0.0
      %6042 = vmatprep.subr.mxu0 0.0
      %6043 = vmatpush1.msra.mxu0 0.0
      %6044 = vmatprep.subr.mxu0 0.0
      %6045 = vmatpush1.msra.mxu0 0.0
      %6046 = vmatprep.subr.mxu0 0.0
      %6047 = vmatpush1.msra.mxu0 0.0
      %6048 = vmatprep.subr.mxu0 0.0
      %6049 = vmatpush1.msra.mxu0 0.0
      %6050 = vmatprep.subr.mxu0 0.0
      %6051 = vmatpush1.msra.mxu0 0.0
      %6052 = vmatprep.subr.mxu0 0.0
      %6053 = vmatpush1.msra.mxu0 0.0
      %6054 = vmatprep.subr.mxu0 0.0
      %6055 = vmatpush1.msra.mxu0 0.0
      %6056 = vmatprep.subr.mxu0 0.0
      %6057 = vmatpush1.msra.mxu0 0.0
      %6058 = vmatprep.subr.mxu0 0.0
      %6059 = vmatpush1.msra.mxu0 0.0
      %6060 = vmatprep.mubr.f32.mxu0 0.0
      %6061 = vmatmul.mubr.f32.gmra.mrb[0].mxu0 %v5994
      %v6062 = vpop.f32.mrb[0].mxu0
      %v6063 = vadd.f32 0.0, %v6062
      %v6064 = vpop.f32.mrb[0].mxu0
      %6065 = vdwg.mxu0
      %v6066 = vmax.f32 %v6063, 0.0
      %s6067 = scalar_lea.vmem %s11, 128
      %v6068 = vld [vmem:[%s6067] sm:$0xff]
      %v6069 = vld [vmem:[%s6067 + $0x8] sm:$0xff]
      %v6070 = vld [vmem:[%s6067 + $0x10] sm:$0xff]
      %v6071 = vld [vmem:[%s6067 + $0x18] sm:$0xff]
      %v6072 = vld [vmem:[%s6067 + $0x20] sm:$0xff]
      %v6073 = vld [vmem:[%s6067 + $0x28] sm:$0xff]
      %v6074 = vld [vmem:[%s6067 + $0x30] sm:$0xff]
      %v6075 = vld [vmem:[%s6067 + $0x38] sm:$0xff]
      %v6076 = vld [vmem:[%s6067 + $0x40] sm:$0xff]
      %v6077 = vld [vmem:[%s6067 + $0x48] sm:$0xff]
      %v6078 = vld [vmem:[%s6067 + $0x50] sm:$0xff]
      %v6079 = vld [vmem:[%s6067 + $0x58] sm:$0xff]
      %v6080 = vld [vmem:[%s6067 + $0x60] sm:$0xff]
      %v6081 = vld [vmem:[%s6067 + $0x68] sm:$0xff]
      %v6082 = vld [vmem:[%s6067 + $0x70] sm:$0xff]
      %v6083 = vld [vmem:[%s6067 + $0x78] sm:$0xff]
      %6084 = vmatprep.subr.mxu0 0.0
      %6085 = vmatpush1.msra.mxu0 %v6068
      %6086 = vmatprep.subr.mxu0 0.0
      %6087 = vmatpush1.msra.mxu0 %v6069
      %6088 = vmatprep.subr.mxu0 0.0
      %6089 = vmatpush1.msra.mxu0 %v6070
      %6090 = vmatprep.subr.mxu0 0.0
      %6091 = vmatpush1.msra.mxu0 %v6071
      %6092 = vmatprep.subr.mxu0 0.0
      %6093 = vmatpush1.msra.mxu0 %v6072
      %6094 = vmatprep.subr.mxu0 0.0
      %6095 = vmatpush1.msra.mxu0 %v6073
      %6096 = vmatprep.subr.mxu0 0.0
      %6097 = vmatpush1.msra.mxu0 %v6074
      %6098 = vmatprep.subr.mxu0 0.0
      %6099 = vmatpush1.msra.mxu0 %v6075
      %6100 = vmatprep.subr.mxu0 0.0
      %6101 = vmatpush1.msra.mxu0 %v6076
      %6102 = vmatprep.subr.mxu0 0.0
      %6103 = vmatpush1.msra.mxu0 %v6077
      %6104 = vmatprep.subr.mxu0 0.0
      %6105 = vmatpush1.msra.mxu0 %v6078
      %6106 = vmatprep.subr.mxu0 0.0
      %6107 = vmatpush1.msra.mxu0 %v6079
      %6108 = vmatprep.subr.mxu0 0.0
      %6109 = vmatpush1.msra.mxu0 %v6080
      %6110 = vmatprep.subr.mxu0 0.0
      %6111 = vmatpush1.msra.mxu0 %v6081
      %6112 = vmatprep.subr.mxu0 0.0
      %6113 = vmatpush1.msra.mxu0 %v6082
      %6114 = vmatprep.subr.mxu0 0.0
      %6115 = vmatpush1.msra.mxu0 %v6083
      %6116 = vmatprep.subr.mxu0 0.0
      %6117 = vmatpush1.msra.mxu0 0.0
      %6118 = vmatprep.subr.mxu0 0.0
      %6119 = vmatpush1.msra.mxu0 0.0
      %6120 = vmatprep.subr.mxu0 0.0
      %6121 = vmatpush1.msra.mxu0 0.0
      %6122 = vmatprep.subr.mxu0 0.0
      %6123 = vmatpush1.msra.mxu0 0.0
      %6124 = vmatprep.subr.mxu0 0.0
      %6125 = vmatpush1.msra.mxu0 0.0
      %6126 = vmatprep.subr.mxu0 0.0
      %6127 = vmatpush1.msra.mxu0 0.0
      %6128 = vmatprep.subr.mxu0 0.0
      %6129 = vmatpush1.msra.mxu0 0.0
      %6130 = vmatprep.subr.mxu0 0.0
      %6131 = vmatpush1.msra.mxu0 0.0
      %6132 = vmatprep.subr.mxu0 0.0
      %6133 = vmatpush1.msra.mxu0 0.0
      %6134 = vmatprep.subr.mxu0 0.0
      %6135 = vmatpush1.msra.mxu0 0.0
      %6136 = vmatprep.subr.mxu0 0.0
      %6137 = vmatpush1.msra.mxu0 0.0
      %6138 = vmatprep.subr.mxu0 0.0
      %6139 = vmatpush1.msra.mxu0 0.0
      %6140 = vmatprep.subr.mxu0 0.0
      %6141 = vmatpush1.msra.mxu0 0.0
      %6142 = vmatprep.subr.mxu0 0.0
      %6143 = vmatpush1.msra.mxu0 0.0
      %6144 = vmatprep.subr.mxu0 0.0
      %6145 = vmatpush1.msra.mxu0 0.0
      %6146 = vmatprep.subr.mxu0 0.0
      %6147 = vmatpush1.msra.mxu0 0.0
      %6148 = vmatprep.mubr.f32.mxu0 0.0
      %6149 = vmatmul.mubr.f32.gmra.mrb[0].mxu0 %v6066
      %v6150 = vpop.f32.mrb[0].mxu0
      %v6151 = vadd.f32 0.0, %v6150
      %v6152 = vpop.f32.mrb[0].mxu0
      %6153 = vdwg.mxu0
      %v6154 = vadd.f32 %v5970, %v6151
      %v6155 = vld [vmem:[%s12] sm:$0x1]
      %v6156 = vmul.f32 %v6154, %v6154
      %v6157 = vsel %vm554, %v6156, 0.0
      %6158 = vadd.xlane.f32.xlu0 %v6157
      %v6159 = vpop.xlane.xlu0 %6158
      %v6160 = vmul.f32 %v6159, %v494
      %v6161 = vadd.f32 %v6160, 1e-06
      %v6162 = vrsqrt.pop %v6161
      %v6163 = vmul.f32 %v6154, %v6162
      %v6165 = vlaneseq
      %v6166 = vshrl.u32 %v6165, 7
      %v6167 = vsub.s32 0, %v6166
      %v6168 = vrot.slane %v6155, %v6167
      %v6170 = vmul.f32 %v6163, %v6168
      %v6171 = vld [vmem:[%s13] sm:$0xff]
      %v6172 = vld [vmem:[%s13 + $0x8] sm:$0xff]
      %v6173 = vld [vmem:[%s13 + $0x10] sm:$0xff]
      %v6174 = vld [vmem:[%s13 + $0x18] sm:$0xff]
      %v6175 = vld [vmem:[%s14] sm:$0x1]
      %v6177 = vlaneseq
      %v6178 = vshrl.u32 %v6177, 7
      %v6179 = vsub.s32 0, %v6178
      %v6180 = vrot.slane %v6175, %v6179
      %v6183 = vsel %vm554, %v6170, 0
      %6185 = vmatprep.subr.mxu0 0.0
      %6186 = vmatpush1.msra.mxu0 %v6171
      %6187 = vmatprep.subr.mxu0 0.0
      %6188 = vmatpush1.msra.mxu0 %v6172
      %6189 = vmatprep.subr.mxu0 0.0
      %6190 = vmatpush1.msra.mxu0 %v6173
      %6191 = vmatprep.subr.mxu0 0.0
      %6192 = vmatpush1.msra.mxu0 %v6174
      %6193 = vmatprep.subr.mxu0 0.0
      %6194 = vmatpush1.msra.mxu0 0.0
      %6195 = vmatprep.subr.mxu0 0.0
      %6196 = vmatpush1.msra.mxu0 0.0
      %6197 = vmatprep.subr.mxu0 0.0
      %6198 = vmatpush1.msra.mxu0 0.0
      %6199 = vmatprep.subr.mxu0 0.0
      %6200 = vmatpush1.msra.mxu0 0.0
      %6201 = vmatprep.subr.mxu0 0.0
      %6202 = vmatpush1.msra.mxu0 0.0
      %6203 = vmatprep.subr.mxu0 0.0
      %6204 = vmatpush1.msra.mxu0 0.0
      %6205 = vmatprep.subr.mxu0 0.0
      %6206 = vmatpush1.msra.mxu0 0.0
      %6207 = vmatprep.subr.mxu0 0.0
      %6208 = vmatpush1.msra.mxu0 0.0
      %6209 = vmatprep.subr.mxu0 0.0
      %6210 = vmatpush1.msra.mxu0 0.0
      %6211 = vmatprep.subr.mxu0 0.0
      %6212 = vmatpush1.msra.mxu0 0.0
      %6213 = vmatprep.subr.mxu0 0.0
      %6214 = vmatpush1.msra.mxu0 0.0
      %6215 = vmatprep.subr.mxu0 0.0
      %6216 = vmatpush1.msra.mxu0 0.0
      %6217 = vmatprep.subr.mxu0 0.0
      %6218 = vmatpush1.msra.mxu0 0.0
      %6219 = vmatprep.subr.mxu0 0.0
      %6220 = vmatpush1.msra.mxu0 0.0
      %6221 = vmatprep.subr.mxu0 0.0
      %6222 = vmatpush1.msra.mxu0 0.0
      %6223 = vmatprep.subr.mxu0 0.0
      %6224 = vmatpush1.msra.mxu0 0.0
      %6225 = vmatprep.subr.mxu0 0.0
      %6226 = vmatpush1.msra.mxu0 0.0
      %6227 = vmatprep.subr.mxu0 0.0
      %6228 = vmatpush1.msra.mxu0 0.0
      %6229 = vmatprep.subr.mxu0 0.0
      %6230 = vmatpush1.msra.mxu0 0.0
      %6231 = vmatprep.subr.mxu0 0.0
      %6232 = vmatpush1.msra.mxu0 0.0
      %6233 = vmatprep.subr.mxu0 0.0
      %6234 = vmatpush1.msra.mxu0 0.0
      %6235 = vmatprep.subr.mxu0 0.0
      %6236 = vmatpush1.msra.mxu0 0.0
      %6237 = vmatprep.subr.mxu0 0.0
      %6238 = vmatpush1.msra.mxu0 0.0
      %6239 = vmatprep.subr.mxu0 0.0
      %6240 = vmatpush1.msra.mxu0 0.0
      %6241 = vmatprep.subr.mxu0 0.0
      %6242 = vmatpush1.msra.mxu0 0.0
      %6243 = vmatprep.subr.mxu0 0.0
      %6244 = vmatpush1.msra.mxu0 0.0
      %6245 = vmatprep.subr.mxu0 0.0
      %6246 = vmatpush1.msra.mxu0 0.0
      %6247 = vmatprep.subr.mxu0 0.0
      %6248 = vmatpush1.msra.mxu0 0.0
      %6249 = vmatprep.mubr.f32.mxu0 0.0
      %6250 = vmatmul.mubr.f32.gmra.mrb[0].mxu0 %v6183
      %v6251 = vpop.f32.mrb[0].mxu0
      %v6252 = vadd.f32 %v6180, %v6251
      %v6253 = vpop.f32.mrb[0].mxu0
      %6254 = vdwg.mxu0
      %6255 = vst [vmem:[%s489] sm:$0xff] %v6252
      %p6256 = scmp.lt.s32.totalorder %s26, 1
      %s6257 = scalar_select %p6256, %s26, 1
      %s6258 = smul.addr %s6257, 8
      %s6259 = scalar_lea.vmem %s15, %s6258
      // Predicated region
      $region81: #{_forward_jit.1} parent=79 // pred_check
        %p6260 = pneg %p364
      $region82: #{_forward_jit.1} parent=79 // pred_check_branch
        %6262 = sbr.rel (%p6260) target = $region84
      $region83: #{_forward_jit.1} parent=79 // pred_region
        _
      $region84: #{_forward_jit.1} parent=79 // pred_fallthru
        _
    $region80: #{_forward_jit.1} parent=5 // pred_fallthru
      _
    %p6263 = scmp.le.s32.totalorder 2, %s21
    // Predicated region
    $region85: #{_forward_jit.1} parent=5 // pred_check
      %p6264 = pneg %p6263
    $region86: #{_forward_jit.1} parent=5 // pred_check_branch
      %6266 = sbr.rel (%p6264) target = $region88
    $region87: #{_forward_jit.1} parent=5 // pred_region
      %s6267 = ssub.s32 %s21, 2
      // Predicated region
      $region89: #{_forward_jit.1} parent=87 // pred_check
        %p6268 = pneg %p370
      $region90: #{_forward_jit.1} parent=87 // pred_check_branch
        %6270 = sbr.rel (%p6268) target = $region92
      $region91: #{_forward_jit.1} parent=87 // pred_region
        %p6271 = scmp.lt.s32.totalorder %s27, 1
        %s6272 = scalar_select %p6271, %s27, 1
        %s6273 = smul.addr %s6272, 8
        %s6274 = scalar_lea.vmem %s15, %s6273
      $region92: #{_forward_jit.1} parent=87 // pred_fallthru
        _
    $region88: #{_forward_jit.1} parent=5 // pred_fallthru
      _
  $region6: #{_forward_jit.1} parent=0 // loop_footer
    %s25 = sadd.s32 1, %s21
  $region7: #{_forward_jit.1} parent=0 // loop_footer_branch
    %20 = sbr.rel target = $region3
  $region8: #{_forward_jit.1} parent=0 // loop_exit
    _

</llo_original>
